<compile_context>
chip_gen: v7x
topology: tpu7x:2x2x1
jax: 0.10.0
libtpu: 0.0.40
codegen_flags: <defaults>
</compile_context>

<pallas_src>
import jax
import jax.numpy as jnp
from jax.experimental import pallas as pl
from jax.experimental.pallas import tpu as pltpu

INPUT_SIZE = 7
HIDDENS = (15, 20, 30, 40)
NUM_CLASSES = 1
NUM_LAYERS = len(HIDDENS)
LANE = 128           # one gate slot per 128-lane vreg width
G4 = 4 * LANE        # gate-stacked width [i | f | o | g]


# ----------------------------------------------------------------------------
# Kernel: whole sequence in one invocation, all weights resident in VMEM.
# ----------------------------------------------------------------------------
def lstm_kernel(x_ref, w0x_ref, w0h_ref, wcat_ref, b_ref, wlin_ref, blin_ref,
                out_ref):
    B, T = out_ref.shape

    b_all = b_ref[...]                                   # (4, G4), tiny

    # Layer-1 input projection for every timestep in one dot (M = T*B), with
    # the layer-1 bias folded in once.
    xw0 = (jnp.dot(x_ref[...], w0x_ref[...],
                   preferred_element_type=jnp.float32)
           + b_all[0:1, :])                              # (T*B, G4)

    h = [jnp.zeros((B, LANE), jnp.float32) for _ in range(NUM_LAYERS)]
    c = [jnp.zeros((B, LANE), jnp.float32) for _ in range(NUM_LAYERS)]
    h_top = [None] * T

    # Wavefront over (layer, time): cell (l, t) runs at wave w = l + t; all
    # cells of a wave depend only on the previous wave, so their dots can
    # pipeline through the MXU.  T is small & static -> fully unrolled.
    for wave in range(T + NUM_LAYERS - 1):
        h_prev = list(h)
        c_prev = list(c)
        for l in range(NUM_LAYERS):
            t = wave - l
            if t < 0 or t >= T:
                continue
            if l == 0:
                # x-part precomputed; only the recurrent dot is per-step.
                z = xw0[t * B:(t + 1) * B, :] + jnp.dot(
                    h_prev[0], w0h_ref[...],
                    preferred_element_type=jnp.float32)
            else:
                # One fused dot per cell: [h_{l-1} | h_l] @ [W_ih; W_hh].
                lhs = jnp.concatenate([h_prev[l - 1], h_prev[l]], axis=1)
                z = (jnp.dot(lhs, wcat_ref[l - 1],
                             preferred_element_type=jnp.float32)
                     + b_all[l:l + 1, :])                # (B, G4)
            # Gate slots [i | f | o | g], 128 lanes each -> aligned slices.
            s = jax.nn.sigmoid(z[:, :3 * LANE])
            g = jnp.tanh(z[:, 3 * LANE:])
            i_g = s[:, :LANE]
            f_g = s[:, LANE:2 * LANE]
            o_g = s[:, 2 * LANE:3 * LANE]
            c[l] = f_g * c_prev[l] + i_g * g
            h[l] = o_g * jnp.tanh(c[l])
            if l == NUM_LAYERS - 1:
                h_top[t] = h[l]

    # Final Linear(40 -> 1), hoisted out of the recurrence: VPU mul + lane
    # reduce per timestep, one lane-dense (B, T) store at the end.
    wl = wlin_ref[...]                                   # (1, LANE)
    bl = blin_ref[...]                                   # (1, 1)
    cols = [jnp.sum(h_top[t] * wl, axis=1, keepdims=True) for t in range(T)]
    out_ref[...] = jnp.concatenate(cols, axis=1) + bl


# ----------------------------------------------------------------------------
# Wrapper
# ----------------------------------------------------------------------------
def lstm_forward(x, kernel_params):
    B, L = x.shape
    assert L % INPUT_SIZE == 0
    T = L // INPUT_SIZE
    # (T*B, 7): row t*B + b is timestep t of batch element b.
    x_flat = (x.reshape(B, T, INPUT_SIZE)
               .transpose(1, 0, 2)
               .reshape(T * B, INPUT_SIZE))

    n_in = 1 + len(kernel_params)
    in_specs = [pl.BlockSpec(memory_space=pltpu.MemorySpace.VMEM)
                for _ in range(n_in)]
    out_specs = pl.BlockSpec(memory_space=pltpu.MemorySpace.VMEM)

    flops = int(2 * T * B * INPUT_SIZE * G4          # layer-1 x projection
                + 2 * T * B * LANE * G4              # layer-1 recurrent dots
                + 2 * T * B * 3 * (2 * LANE) * G4)   # layers 2-4 fused dots
    transcendentals = int(T * NUM_LAYERS * B * 5 * LANE)
    bytes_accessed = int(4 * (x_flat.size
                              + sum(int(p.size) for p in kernel_params)
                              + B * T))

    return pl.pallas_call(
        lstm_kernel,
        out_shape=jax.ShapeDtypeStruct((B, T), jnp.float32),
        in_specs=in_specs,
        out_specs=out_specs,
        cost_estimate=pl.CostEstimate(flops=flops,
                                      transcendentals=transcendentals,
                                      bytes_accessed=bytes_accessed),
    )(x_flat, *kernel_params)


# ----------------------------------------------------------------------------
# Parameter init (PyTorch layout) and kernel-layout repacking
# ----------------------------------------------------------------------------
def init_torch_params(key):
    """PyTorch-style params: per layer (w_ih (4H,din), w_hh (4H,H), b_ih, b_hh),
    then linear weight (1,40) and bias (1,).  Uniform(-1/sqrt(H), 1/sqrt(H))."""
    dims = [(INPUT_SIZE, HIDDENS[0]), (HIDDENS[0], HIDDENS[1]),
            (HIDDENS[1], HIDDENS[2]), (HIDDENS[2], HIDDENS[3])]
    keys = jax.random.split(key, len(dims) * 4 + 2)
    ki = 0
    params = []
    for din, H in dims:
        bound = 1.0 / jnp.sqrt(H)
        w_ih = jax.random.uniform(keys[ki], (4 * H, din), jnp.float32, -bound, bound); ki += 1
        w_hh = jax.random.uniform(keys[ki], (4 * H, H), jnp.float32, -bound, bound); ki += 1
        b_ih = jax.random.uniform(keys[ki], (4 * H,), jnp.float32, -bound, bound); ki += 1
        b_hh = jax.random.uniform(keys[ki], (4 * H,), jnp.float32, -bound, bound); ki += 1
        params += [w_ih, w_hh, b_ih, b_hh]
    bound = 1.0 / jnp.sqrt(HIDDENS[3])
    w_lin = jax.random.uniform(keys[ki], (NUM_CLASSES, HIDDENS[3]), jnp.float32, -bound, bound); ki += 1
    b_lin = jax.random.uniform(keys[ki], (NUM_CLASSES,), jnp.float32, -bound, bound); ki += 1
    params += [w_lin, b_lin]
    return params


def pack_params(torch_params):
    """Repack PyTorch-layout weights for the fused-gate, lane-padded kernel.

    Gate slots on the lane axis: [i | f | o | g], each its own 128-lane slot
    (PyTorch's row-block order is [i, f, g, o]).  Outputs:
      w0x  (7, 512)        layer-1 input-projection weight
      w0h  (128, 512)      layer-1 recurrent weight (K zero-padded)
      wcat (3, 256, 512)   layers 2-4: [W_ih; W_hh] stacked on K, zero-padded
      b    (4, 512)        per-layer summed biases (b_ih + b_hh)
      wlin (1, 128)        linear weight, zero-padded
      blin (1, 1)          linear bias
    """
    dims = [(INPUT_SIZE, HIDDENS[0]), (HIDDENS[0], HIDDENS[1]),
            (HIDDENS[1], HIDDENS[2]), (HIDDENS[2], HIDDENS[3])]
    SLOT_OF = (0, 1, 3, 2)   # PyTorch gate index (i,f,g,o) -> kernel lane slot

    def place_w(w, din, H):
        out = jnp.zeros((din, G4), jnp.float32)
        for gidx in range(4):
            blk = w[gidx * H:(gidx + 1) * H, :]          # (H, din)
            s = SLOT_OF[gidx]
            out = out.at[:, s * LANE:s * LANE + H].set(blk.T)
        return out

    def place_b(b, H):
        out = jnp.zeros((G4,), jnp.float32)
        for gidx in range(4):
            s = SLOT_OF[gidx]
            out = out.at[s * LANE:s * LANE + H].set(b[gidx * H:(gidx + 1) * H])
        return out

    # Layer 1: split input projection (precomputed in kernel) from recurrence.
    din0, H0 = dims[0]
    w_ih, w_hh, b_ih, b_hh = torch_params[0:4]
    w0x = place_w(w_ih, din0, H0)                                # (7, 512)
    w0h = jnp.zeros((LANE, G4), jnp.float32)
    w0h = w0h.at[:H0, :].set(place_w(w_hh, H0, H0))              # (128, 512)
    b_rows = [place_b(b_ih + b_hh, H0)]

    # Layers 2-4: K-concat [W_ih; W_hh] with 128-row K slots.
    wcats = []
    idx = 4
    for l in range(1, NUM_LAYERS):
        din, H = dims[l]
        w_ih, w_hh, b_ih, b_hh = torch_params[idx:idx + 4]
        idx += 4
        wc = jnp.zeros((2 * LANE, G4), jnp.float32)
        wc = wc.at[:din, :].set(place_w(w_ih, din, H))
        wc = wc.at[LANE:LANE + H, :].set(place_w(w_hh, H, H))
        wcats.append(wc)
        b_rows.append(place_b(b_ih + b_hh, H))
    wcat = jnp.stack(wcats, axis=0)                              # (3, 256, 512)
    b_all = jnp.stack(b_rows, axis=0)                            # (4, 512)

    w_lin, b_lin = torch_params[idx], torch_params[idx + 1]
    wlin = jnp.zeros((1, LANE), jnp.float32).at[0, :HIDDENS[3]].set(w_lin[0])
    blin = b_lin.reshape(1, 1)
    return [w0x, w0h, wcat, b_all, wlin, blin]


# ----------------------------------------------------------------------------
# Pure-JAX reference with PyTorch semantics (independent of the repacking)
# ----------------------------------------------------------------------------
def lstm_ref(x, torch_params):
    B, L = x.shape
    T = L // INPUT_SIZE

    def cell(xt, h, c, w_ih, w_hh, b_ih, b_hh, H):
        z = xt @ w_ih.T + b_ih + h @ w_hh.T + b_hh       # (B, 4H), order i,f,g,o
        i = jax.nn.sigmoid(z[:, :H])
        f = jax.nn.sigmoid(z[:, H:2 * H])
        g = jnp.tanh(z[:, 2 * H:3 * H])
        o = jax.nn.sigmoid(z[:, 3 * H:])
        c = f * c + i * g
        h = o * jnp.tanh(c)
        return h, c

    hs = [jnp.zeros((B, H), jnp.float32) for H in HIDDENS]
    cs = [jnp.zeros((B, H), jnp.float32) for H in HIDDENS]
    w_lin, b_lin = torch_params[16], torch_params[17]
    outs = []
    for t in range(T):
        inp = x[:, t * INPUT_SIZE:(t + 1) * INPUT_SIZE]
        for l in range(4):
            w_ih, w_hh, b_ih, b_hh = torch_params[4 * l:4 * l + 4]
            hs[l], cs[l] = cell(inp, hs[l], cs[l], w_ih, w_hh, b_ih, b_hh, HIDDENS[l])
            inp = hs[l]
        outs.append(hs[3] @ w_lin.T + b_lin)
    return jnp.concatenate(outs, axis=1)


if __name__ == "__main__":
    key = jax.random.PRNGKey(0)
    k_param, k_x = jax.random.split(key)

    torch_params = init_torch_params(k_param)
    kernel_params = pack_params(torch_params)

    batch, seq = 2, 8
    x = jax.random.normal(k_x, (batch, seq * INPUT_SIZE), jnp.float32)  # (2, 56)

    out = lstm_forward(x, kernel_params)
    out = jax.block_until_ready(out)

    ref = lstm_ref(x, torch_params)
    assert out.shape == (batch, seq), out.shape
    assert jnp.allclose(out, ref, atol=1e-3, rtol=1e-3), \
        f"max abs diff {jnp.max(jnp.abs(out - ref))}"

    print("KERNEL_OK")
</pallas_src>

<mosaic_0001>
module attributes {stable_mosaic.version = 11 : i64} {
  func.func @lstm_kernel(%arg0: memref<16x7xf32, #tpu.memory_space<vmem>>, %arg1: memref<7x512xf32, #tpu.memory_space<vmem>>, %arg2: memref<128x512xf32, #tpu.memory_space<vmem>>, %arg3: memref<3x256x512xf32, #tpu.memory_space<vmem>>, %arg4: memref<4x512xf32, #tpu.memory_space<vmem>>, %arg5: memref<1x128xf32, #tpu.memory_space<vmem>>, %arg6: memref<1x1xf32, #tpu.memory_space<vmem>>, %arg7: memref<2x8xf32, #tpu.memory_space<vmem>>) attributes {dimension_semantics = [], scalar_prefetch = 0 : i64, scratch_operands = 0 : i64, tpu.core_type = #tpu.core_type<tc>} {
    %c0 = arith.constant 0 : index
    %c0_0 = arith.constant 0 : index
    %0 = vector.load %arg4[%c0, %c0_0] : memref<4x512xf32, #tpu.memory_space<vmem>>, vector<4x512xf32>
    %c0_1 = arith.constant 0 : index
    %c0_2 = arith.constant 0 : index
    %1 = vector.load %arg0[%c0_1, %c0_2] : memref<16x7xf32, #tpu.memory_space<vmem>>, vector<16x7xf32>
    %c0_3 = arith.constant 0 : index
    %c0_4 = arith.constant 0 : index
    %2 = vector.load %arg1[%c0_3, %c0_4] : memref<7x512xf32, #tpu.memory_space<vmem>>, vector<7x512xf32>
    %cst = arith.constant dense<0.000000e+00> : vector<16x512xf32>
    %3 = tpu.matmul %1, %2, %cst {dimension_numbers = #tpu.dot_dimension_numbers<[1], [0], [0], [1], [0, 0, 1, 1], [], []>} : vector<16x7xf32>, vector<7x512xf32>, vector<16x512xf32> -> vector<16x512xf32>
    %4 = vector.extract_strided_slice %0 {offsets = [0, 0], sizes = [1, 512], strides = [1, 1]} : vector<4x512xf32> to vector<1x512xf32>
    %5 = vector.broadcast %4 : vector<1x512xf32> to vector<16x512xf32>
    %6 = arith.addf %3, %5 : vector<16x512xf32>
    %cst_5 = arith.constant 0.000000e+00 : f32
    %7 = vector.broadcast %cst_5 : f32 to vector<2x128xf32>
    %cst_6 = arith.constant 0.000000e+00 : f32
    %8 = vector.broadcast %cst_6 : f32 to vector<2x128xf32>
    %cst_7 = arith.constant 0.000000e+00 : f32
    %9 = vector.broadcast %cst_7 : f32 to vector<2x128xf32>
    %cst_8 = arith.constant 0.000000e+00 : f32
    %10 = vector.broadcast %cst_8 : f32 to vector<2x128xf32>
    %cst_9 = arith.constant 0.000000e+00 : f32
    %11 = vector.broadcast %cst_9 : f32 to vector<2x128xf32>
    %cst_10 = arith.constant 0.000000e+00 : f32
    %12 = vector.broadcast %cst_10 : f32 to vector<2x128xf32>
    %cst_11 = arith.constant 0.000000e+00 : f32
    %13 = vector.broadcast %cst_11 : f32 to vector<2x128xf32>
    %cst_12 = arith.constant 0.000000e+00 : f32
    %14 = vector.broadcast %cst_12 : f32 to vector<2x128xf32>
    %15 = vector.extract_strided_slice %6 {offsets = [0, 0], sizes = [2, 512], strides = [1, 1]} : vector<16x512xf32> to vector<2x512xf32>
    %c0_13 = arith.constant 0 : index
    %c0_14 = arith.constant 0 : index
    %16 = vector.load %arg2[%c0_13, %c0_14] : memref<128x512xf32, #tpu.memory_space<vmem>>, vector<128x512xf32>
    %cst_15 = arith.constant dense<0.000000e+00> : vector<2x512xf32>
    %17 = tpu.matmul %7, %16, %cst_15 {dimension_numbers = #tpu.dot_dimension_numbers<[1], [0], [0], [1], [0, 0, 1, 1], [], []>} : vector<2x128xf32>, vector<128x512xf32>, vector<2x512xf32> -> vector<2x512xf32>
    %18 = arith.addf %15, %17 : vector<2x512xf32>
    %19 = vector.extract_strided_slice %18 {offsets = [0, 0], sizes = [2, 384], strides = [1, 1]} : vector<2x512xf32> to vector<2x384xf32>
    %20 = arith.negf %19 : vector<2x384xf32>
    %21 = math.exp %20 : vector<2x384xf32>
    %cst_16 = arith.constant 1.000000e+00 : f32
    %22 = vector.broadcast %cst_16 : f32 to vector<2x384xf32>
    %23 = arith.addf %22, %21 : vector<2x384xf32>
    %24 = arith.divf %22, %23 : vector<2x384xf32>
    %25 = vector.extract_strided_slice %18 {offsets = [0, 384], sizes = [2, 128], strides = [1, 1]} : vector<2x512xf32> to vector<2x128xf32>
    %26 = math.tanh %25 : vector<2x128xf32>
    %27 = vector.extract_strided_slice %24 {offsets = [0, 0], sizes = [2, 128], strides = [1, 1]} : vector<2x384xf32> to vector<2x128xf32>
    %28 = vector.extract_strided_slice %24 {offsets = [0, 128], sizes = [2, 128], strides = [1, 1]} : vector<2x384xf32> to vector<2x128xf32>
    %29 = vector.extract_strided_slice %24 {offsets = [0, 256], sizes = [2, 128], strides = [1, 1]} : vector<2x384xf32> to vector<2x128xf32>
    %30 = arith.mulf %28, %11 : vector<2x128xf32>
    %31 = arith.mulf %27, %26 : vector<2x128xf32>
    %32 = arith.addf %30, %31 : vector<2x128xf32>
    %33 = math.tanh %32 : vector<2x128xf32>
    %34 = arith.mulf %29, %33 : vector<2x128xf32>
    %35 = vector.extract_strided_slice %6 {offsets = [2, 0], sizes = [2, 512], strides = [1, 1]} : vector<16x512xf32> to vector<2x512xf32>
    %c0_17 = arith.constant 0 : index
    %c0_18 = arith.constant 0 : index
    %36 = vector.load %arg2[%c0_17, %c0_18] : memref<128x512xf32, #tpu.memory_space<vmem>>, vector<128x512xf32>
    %cst_19 = arith.constant dense<0.000000e+00> : vector<2x512xf32>
    %37 = tpu.matmul %34, %36, %cst_19 {dimension_numbers = #tpu.dot_dimension_numbers<[1], [0], [0], [1], [0, 0, 1, 1], [], []>} : vector<2x128xf32>, vector<128x512xf32>, vector<2x512xf32> -> vector<2x512xf32>
    %38 = arith.addf %35, %37 : vector<2x512xf32>
    %39 = vector.extract_strided_slice %38 {offsets = [0, 0], sizes = [2, 384], strides = [1, 1]} : vector<2x512xf32> to vector<2x384xf32>
    %40 = arith.negf %39 : vector<2x384xf32>
    %41 = math.exp %40 : vector<2x384xf32>
    %cst_20 = arith.constant 1.000000e+00 : f32
    %42 = vector.broadcast %cst_20 : f32 to vector<2x384xf32>
    %43 = arith.addf %42, %41 : vector<2x384xf32>
    %44 = arith.divf %42, %43 : vector<2x384xf32>
    %45 = vector.extract_strided_slice %38 {offsets = [0, 384], sizes = [2, 128], strides = [1, 1]} : vector<2x512xf32> to vector<2x128xf32>
    %46 = math.tanh %45 : vector<2x128xf32>
    %47 = vector.extract_strided_slice %44 {offsets = [0, 0], sizes = [2, 128], strides = [1, 1]} : vector<2x384xf32> to vector<2x128xf32>
    %48 = vector.extract_strided_slice %44 {offsets = [0, 128], sizes = [2, 128], strides = [1, 1]} : vector<2x384xf32> to vector<2x128xf32>
    %49 = vector.extract_strided_slice %44 {offsets = [0, 256], sizes = [2, 128], strides = [1, 1]} : vector<2x384xf32> to vector<2x128xf32>
    %50 = arith.mulf %48, %32 : vector<2x128xf32>
    %51 = arith.mulf %47, %46 : vector<2x128xf32>
    %52 = arith.addf %50, %51 : vector<2x128xf32>
    %53 = math.tanh %52 : vector<2x128xf32>
    %54 = arith.mulf %49, %53 : vector<2x128xf32>
    %55 = tpu.concatenate %34, %8 in 1 : vector<2x128xf32>, vector<2x128xf32> -> vector<2x256xf32>
    %c0_21 = arith.constant 0 : index
    %c0_22 = arith.constant 0 : index
    %c0_23 = arith.constant 0 : index
    %56 = vector.load %arg3[%c0_21, %c0_22, %c0_23] : memref<3x256x512xf32, #tpu.memory_space<vmem>>, vector<1x256x512xf32>
    %57 = vector.shape_cast %56 : vector<1x256x512xf32> to vector<256x512xf32>
    %cst_24 = arith.constant dense<0.000000e+00> : vector<2x512xf32>
    %58 = tpu.matmul %55, %57, %cst_24 {dimension_numbers = #tpu.dot_dimension_numbers<[1], [0], [0], [1], [0, 0, 1, 1], [], []>} : vector<2x256xf32>, vector<256x512xf32>, vector<2x512xf32> -> vector<2x512xf32>
    %59 = vector.extract_strided_slice %0 {offsets = [1, 0], sizes = [1, 512], strides = [1, 1]} : vector<4x512xf32> to vector<1x512xf32>
    %60 = vector.broadcast %59 : vector<1x512xf32> to vector<2x512xf32>
    %61 = arith.addf %58, %60 : vector<2x512xf32>
    %62 = vector.extract_strided_slice %61 {offsets = [0, 0], sizes = [2, 384], strides = [1, 1]} : vector<2x512xf32> to vector<2x384xf32>
    %63 = arith.negf %62 : vector<2x384xf32>
    %64 = math.exp %63 : vector<2x384xf32>
    %cst_25 = arith.constant 1.000000e+00 : f32
    %65 = vector.broadcast %cst_25 : f32 to vector<2x384xf32>
    %66 = arith.addf %65, %64 : vector<2x384xf32>
    %67 = arith.divf %65, %66 : vector<2x384xf32>
    %68 = vector.extract_strided_slice %61 {offsets = [0, 384], sizes = [2, 128], strides = [1, 1]} : vector<2x512xf32> to vector<2x128xf32>
    %69 = math.tanh %68 : vector<2x128xf32>
    %70 = vector.extract_strided_slice %67 {offsets = [0, 0], sizes = [2, 128], strides = [1, 1]} : vector<2x384xf32> to vector<2x128xf32>
    %71 = vector.extract_strided_slice %67 {offsets = [0, 128], sizes = [2, 128], strides = [1, 1]} : vector<2x384xf32> to vector<2x128xf32>
    %72 = vector.extract_strided_slice %67 {offsets = [0, 256], sizes = [2, 128], strides = [1, 1]} : vector<2x384xf32> to vector<2x128xf32>
    %73 = arith.mulf %71, %12 : vector<2x128xf32>
    %74 = arith.mulf %70, %69 : vector<2x128xf32>
    %75 = arith.addf %73, %74 : vector<2x128xf32>
    %76 = math.tanh %75 : vector<2x128xf32>
    %77 = arith.mulf %72, %76 : vector<2x128xf32>
    %78 = vector.extract_strided_slice %6 {offsets = [4, 0], sizes = [2, 512], strides = [1, 1]} : vector<16x512xf32> to vector<2x512xf32>
    %c0_26 = arith.constant 0 : index
    %c0_27 = arith.constant 0 : index
    %79 = vector.load %arg2[%c0_26, %c0_27] : memref<128x512xf32, #tpu.memory_space<vmem>>, vector<128x512xf32>
    %cst_28 = arith.constant dense<0.000000e+00> : vector<2x512xf32>
    %80 = tpu.matmul %54, %79, %cst_28 {dimension_numbers = #tpu.dot_dimension_numbers<[1], [0], [0], [1], [0, 0, 1, 1], [], []>} : vector<2x128xf32>, vector<128x512xf32>, vector<2x512xf32> -> vector<2x512xf32>
    %81 = arith.addf %78, %80 : vector<2x512xf32>
    %82 = vector.extract_strided_slice %81 {offsets = [0, 0], sizes = [2, 384], strides = [1, 1]} : vector<2x512xf32> to vector<2x384xf32>
    %83 = arith.negf %82 : vector<2x384xf32>
    %84 = math.exp %83 : vector<2x384xf32>
    %cst_29 = arith.constant 1.000000e+00 : f32
    %85 = vector.broadcast %cst_29 : f32 to vector<2x384xf32>
    %86 = arith.addf %85, %84 : vector<2x384xf32>
    %87 = arith.divf %85, %86 : vector<2x384xf32>
    %88 = vector.extract_strided_slice %81 {offsets = [0, 384], sizes = [2, 128], strides = [1, 1]} : vector<2x512xf32> to vector<2x128xf32>
    %89 = math.tanh %88 : vector<2x128xf32>
    %90 = vector.extract_strided_slice %87 {offsets = [0, 0], sizes = [2, 128], strides = [1, 1]} : vector<2x384xf32> to vector<2x128xf32>
    %91 = vector.extract_strided_slice %87 {offsets = [0, 128], sizes = [2, 128], strides = [1, 1]} : vector<2x384xf32> to vector<2x128xf32>
    %92 = vector.extract_strided_slice %87 {offsets = [0, 256], sizes = [2, 128], strides = [1, 1]} : vector<2x384xf32> to vector<2x128xf32>
    %93 = arith.mulf %91, %52 : vector<2x128xf32>
    %94 = arith.mulf %90, %89 : vector<2x128xf32>
    %95 = arith.addf %93, %94 : vector<2x128xf32>
    %96 = math.tanh %95 : vector<2x128xf32>
    %97 = arith.mulf %92, %96 : vector<2x128xf32>
    %98 = tpu.concatenate %54, %77 in 1 : vector<2x128xf32>, vector<2x128xf32> -> vector<2x256xf32>
    %c0_30 = arith.constant 0 : index
    %c0_31 = arith.constant 0 : index
    %c0_32 = arith.constant 0 : index
    %99 = vector.load %arg3[%c0_30, %c0_31, %c0_32] : memref<3x256x512xf32, #tpu.memory_space<vmem>>, vector<1x256x512xf32>
    %100 = vector.shape_cast %99 : vector<1x256x512xf32> to vector<256x512xf32>
    %cst_33 = arith.constant dense<0.000000e+00> : vector<2x512xf32>
    %101 = tpu.matmul %98, %100, %cst_33 {dimension_numbers = #tpu.dot_dimension_numbers<[1], [0], [0], [1], [0, 0, 1, 1], [], []>} : vector<2x256xf32>, vector<256x512xf32>, vector<2x512xf32> -> vector<2x512xf32>
    %102 = vector.extract_strided_slice %0 {offsets = [1, 0], sizes = [1, 512], strides = [1, 1]} : vector<4x512xf32> to vector<1x512xf32>
    %103 = vector.broadcast %102 : vector<1x512xf32> to vector<2x512xf32>
    %104 = arith.addf %101, %103 : vector<2x512xf32>
    %105 = vector.extract_strided_slice %104 {offsets = [0, 0], sizes = [2, 384], strides = [1, 1]} : vector<2x512xf32> to vector<2x384xf32>
    %106 = arith.negf %105 : vector<2x384xf32>
    %107 = math.exp %106 : vector<2x384xf32>
    %cst_34 = arith.constant 1.000000e+00 : f32
    %108 = vector.broadcast %cst_34 : f32 to vector<2x384xf32>
    %109 = arith.addf %108, %107 : vector<2x384xf32>
    %110 = arith.divf %108, %109 : vector<2x384xf32>
    %111 = vector.extract_strided_slice %104 {offsets = [0, 384], sizes = [2, 128], strides = [1, 1]} : vector<2x512xf32> to vector<2x128xf32>
    %112 = math.tanh %111 : vector<2x128xf32>
    %113 = vector.extract_strided_slice %110 {offsets = [0, 0], sizes = [2, 128], strides = [1, 1]} : vector<2x384xf32> to vector<2x128xf32>
    %114 = vector.extract_strided_slice %110 {offsets = [0, 128], sizes = [2, 128], strides = [1, 1]} : vector<2x384xf32> to vector<2x128xf32>
    %115 = vector.extract_strided_slice %110 {offsets = [0, 256], sizes = [2, 128], strides = [1, 1]} : vector<2x384xf32> to vector<2x128xf32>
    %116 = arith.mulf %114, %75 : vector<2x128xf32>
    %117 = arith.mulf %113, %112 : vector<2x128xf32>
    %118 = arith.addf %116, %117 : vector<2x128xf32>
    %119 = math.tanh %118 : vector<2x128xf32>
    %120 = arith.mulf %115, %119 : vector<2x128xf32>
    %121 = tpu.concatenate %77, %9 in 1 : vector<2x128xf32>, vector<2x128xf32> -> vector<2x256xf32>
    %c1 = arith.constant 1 : index
    %c0_35 = arith.constant 0 : index
    %c0_36 = arith.constant 0 : index
    %122 = vector.load %arg3[%c1, %c0_35, %c0_36] : memref<3x256x512xf32, #tpu.memory_space<vmem>>, vector<1x256x512xf32>
    %123 = vector.shape_cast %122 : vector<1x256x512xf32> to vector<256x512xf32>
    %cst_37 = arith.constant dense<0.000000e+00> : vector<2x512xf32>
    %124 = tpu.matmul %121, %123, %cst_37 {dimension_numbers = #tpu.dot_dimension_numbers<[1], [0], [0], [1], [0, 0, 1, 1], [], []>} : vector<2x256xf32>, vector<256x512xf32>, vector<2x512xf32> -> vector<2x512xf32>
    %125 = vector.extract_strided_slice %0 {offsets = [2, 0], sizes = [1, 512], strides = [1, 1]} : vector<4x512xf32> to vector<1x512xf32>
    %126 = vector.broadcast %125 : vector<1x512xf32> to vector<2x512xf32>
    %127 = arith.addf %124, %126 : vector<2x512xf32>
    %128 = vector.extract_strided_slice %127 {offsets = [0, 0], sizes = [2, 384], strides = [1, 1]} : vector<2x512xf32> to vector<2x384xf32>
    %129 = arith.negf %128 : vector<2x384xf32>
    %130 = math.exp %129 : vector<2x384xf32>
    %cst_38 = arith.constant 1.000000e+00 : f32
    %131 = vector.broadcast %cst_38 : f32 to vector<2x384xf32>
    %132 = arith.addf %131, %130 : vector<2x384xf32>
    %133 = arith.divf %131, %132 : vector<2x384xf32>
    %134 = vector.extract_strided_slice %127 {offsets = [0, 384], sizes = [2, 128], strides = [1, 1]} : vector<2x512xf32> to vector<2x128xf32>
    %135 = math.tanh %134 : vector<2x128xf32>
    %136 = vector.extract_strided_slice %133 {offsets = [0, 0], sizes = [2, 128], strides = [1, 1]} : vector<2x384xf32> to vector<2x128xf32>
    %137 = vector.extract_strided_slice %133 {offsets = [0, 128], sizes = [2, 128], strides = [1, 1]} : vector<2x384xf32> to vector<2x128xf32>
    %138 = vector.extract_strided_slice %133 {offsets = [0, 256], sizes = [2, 128], strides = [1, 1]} : vector<2x384xf32> to vector<2x128xf32>
    %139 = arith.mulf %137, %13 : vector<2x128xf32>
    %140 = arith.mulf %136, %135 : vector<2x128xf32>
    %141 = arith.addf %139, %140 : vector<2x128xf32>
    %142 = math.tanh %141 : vector<2x128xf32>
    %143 = arith.mulf %138, %142 : vector<2x128xf32>
    %144 = vector.extract_strided_slice %6 {offsets = [6, 0], sizes = [2, 512], strides = [1, 1]} : vector<16x512xf32> to vector<2x512xf32>
    %c0_39 = arith.constant 0 : index
    %c0_40 = arith.constant 0 : index
    %145 = vector.load %arg2[%c0_39, %c0_40] : memref<128x512xf32, #tpu.memory_space<vmem>>, vector<128x512xf32>
    %cst_41 = arith.constant dense<0.000000e+00> : vector<2x512xf32>
    %146 = tpu.matmul %97, %145, %cst_41 {dimension_numbers = #tpu.dot_dimension_numbers<[1], [0], [0], [1], [0, 0, 1, 1], [], []>} : vector<2x128xf32>, vector<128x512xf32>, vector<2x512xf32> -> vector<2x512xf32>
    %147 = arith.addf %144, %146 : vector<2x512xf32>
    %148 = vector.extract_strided_slice %147 {offsets = [0, 0], sizes = [2, 384], strides = [1, 1]} : vector<2x512xf32> to vector<2x384xf32>
    %149 = arith.negf %148 : vector<2x384xf32>
    %150 = math.exp %149 : vector<2x384xf32>
    %cst_42 = arith.constant 1.000000e+00 : f32
    %151 = vector.broadcast %cst_42 : f32 to vector<2x384xf32>
    %152 = arith.addf %151, %150 : vector<2x384xf32>
    %153 = arith.divf %151, %152 : vector<2x384xf32>
    %154 = vector.extract_strided_slice %147 {offsets = [0, 384], sizes = [2, 128], strides = [1, 1]} : vector<2x512xf32> to vector<2x128xf32>
    %155 = math.tanh %154 : vector<2x128xf32>
    %156 = vector.extract_strided_slice %153 {offsets = [0, 0], sizes = [2, 128], strides = [1, 1]} : vector<2x384xf32> to vector<2x128xf32>
    %157 = vector.extract_strided_slice %153 {offsets = [0, 128], sizes = [2, 128], strides = [1, 1]} : vector<2x384xf32> to vector<2x128xf32>
    %158 = vector.extract_strided_slice %153 {offsets = [0, 256], sizes = [2, 128], strides = [1, 1]} : vector<2x384xf32> to vector<2x128xf32>
    %159 = arith.mulf %157, %95 : vector<2x128xf32>
    %160 = arith.mulf %156, %155 : vector<2x128xf32>
    %161 = arith.addf %159, %160 : vector<2x128xf32>
    %162 = math.tanh %161 : vector<2x128xf32>
    %163 = arith.mulf %158, %162 : vector<2x128xf32>
    %164 = tpu.concatenate %97, %120 in 1 : vector<2x128xf32>, vector<2x128xf32> -> vector<2x256xf32>
    %c0_43 = arith.constant 0 : index
    %c0_44 = arith.constant 0 : index
    %c0_45 = arith.constant 0 : index
    %165 = vector.load %arg3[%c0_43, %c0_44, %c0_45] : memref<3x256x512xf32, #tpu.memory_space<vmem>>, vector<1x256x512xf32>
    %166 = vector.shape_cast %165 : vector<1x256x512xf32> to vector<256x512xf32>
    %cst_46 = arith.constant dense<0.000000e+00> : vector<2x512xf32>
    %167 = tpu.matmul %164, %166, %cst_46 {dimension_numbers = #tpu.dot_dimension_numbers<[1], [0], [0], [1], [0, 0, 1, 1], [], []>} : vector<2x256xf32>, vector<256x512xf32>, vector<2x512xf32> -> vector<2x512xf32>
    %168 = vector.extract_strided_slice %0 {offsets = [1, 0], sizes = [1, 512], strides = [1, 1]} : vector<4x512xf32> to vector<1x512xf32>
    %169 = vector.broadcast %168 : vector<1x512xf32> to vector<2x512xf32>
    %170 = arith.addf %167, %169 : vector<2x512xf32>
    %171 = vector.extract_strided_slice %170 {offsets = [0, 0], sizes = [2, 384], strides = [1, 1]} : vector<2x512xf32> to vector<2x384xf32>
    %172 = arith.negf %171 : vector<2x384xf32>
    %173 = math.exp %172 : vector<2x384xf32>
    %cst_47 = arith.constant 1.000000e+00 : f32
    %174 = vector.broadcast %cst_47 : f32 to vector<2x384xf32>
    %175 = arith.addf %174, %173 : vector<2x384xf32>
    %176 = arith.divf %174, %175 : vector<2x384xf32>
    %177 = vector.extract_strided_slice %170 {offsets = [0, 384], sizes = [2, 128], strides = [1, 1]} : vector<2x512xf32> to vector<2x128xf32>
    %178 = math.tanh %177 : vector<2x128xf32>
    %179 = vector.extract_strided_slice %176 {offsets = [0, 0], sizes = [2, 128], strides = [1, 1]} : vector<2x384xf32> to vector<2x128xf32>
    %180 = vector.extract_strided_slice %176 {offsets = [0, 128], sizes = [2, 128], strides = [1, 1]} : vector<2x384xf32> to vector<2x128xf32>
    %181 = vector.extract_strided_slice %176 {offsets = [0, 256], sizes = [2, 128], strides = [1, 1]} : vector<2x384xf32> to vector<2x128xf32>
    %182 = arith.mulf %180, %118 : vector<2x128xf32>
    %183 = arith.mulf %179, %178 : vector<2x128xf32>
    %184 = arith.addf %182, %183 : vector<2x128xf32>
    %185 = math.tanh %184 : vector<2x128xf32>
    %186 = arith.mulf %181, %185 : vector<2x128xf32>
    %187 = tpu.concatenate %120, %143 in 1 : vector<2x128xf32>, vector<2x128xf32> -> vector<2x256xf32>
    %c1_48 = arith.constant 1 : index
    %c0_49 = arith.constant 0 : index
    %c0_50 = arith.constant 0 : index
    %188 = vector.load %arg3[%c1_48, %c0_49, %c0_50] : memref<3x256x512xf32, #tpu.memory_space<vmem>>, vector<1x256x512xf32>
    %189 = vector.shape_cast %188 : vector<1x256x512xf32> to vector<256x512xf32>
    %cst_51 = arith.constant dense<0.000000e+00> : vector<2x512xf32>
    %190 = tpu.matmul %187, %189, %cst_51 {dimension_numbers = #tpu.dot_dimension_numbers<[1], [0], [0], [1], [0, 0, 1, 1], [], []>} : vector<2x256xf32>, vector<256x512xf32>, vector<2x512xf32> -> vector<2x512xf32>
    %191 = vector.extract_strided_slice %0 {offsets = [2, 0], sizes = [1, 512], strides = [1, 1]} : vector<4x512xf32> to vector<1x512xf32>
    %192 = vector.broadcast %191 : vector<1x512xf32> to vector<2x512xf32>
    %193 = arith.addf %190, %192 : vector<2x512xf32>
    %194 = vector.extract_strided_slice %193 {offsets = [0, 0], sizes = [2, 384], strides = [1, 1]} : vector<2x512xf32> to vector<2x384xf32>
    %195 = arith.negf %194 : vector<2x384xf32>
    %196 = math.exp %195 : vector<2x384xf32>
    %cst_52 = arith.constant 1.000000e+00 : f32
    %197 = vector.broadcast %cst_52 : f32 to vector<2x384xf32>
    %198 = arith.addf %197, %196 : vector<2x384xf32>
    %199 = arith.divf %197, %198 : vector<2x384xf32>
    %200 = vector.extract_strided_slice %193 {offsets = [0, 384], sizes = [2, 128], strides = [1, 1]} : vector<2x512xf32> to vector<2x128xf32>
    %201 = math.tanh %200 : vector<2x128xf32>
    %202 = vector.extract_strided_slice %199 {offsets = [0, 0], sizes = [2, 128], strides = [1, 1]} : vector<2x384xf32> to vector<2x128xf32>
    %203 = vector.extract_strided_slice %199 {offsets = [0, 128], sizes = [2, 128], strides = [1, 1]} : vector<2x384xf32> to vector<2x128xf32>
    %204 = vector.extract_strided_slice %199 {offsets = [0, 256], sizes = [2, 128], strides = [1, 1]} : vector<2x384xf32> to vector<2x128xf32>
    %205 = arith.mulf %203, %141 : vector<2x128xf32>
    %206 = arith.mulf %202, %201 : vector<2x128xf32>
    %207 = arith.addf %205, %206 : vector<2x128xf32>
    %208 = math.tanh %207 : vector<2x128xf32>
    %209 = arith.mulf %204, %208 : vector<2x128xf32>
    %210 = tpu.concatenate %143, %10 in 1 : vector<2x128xf32>, vector<2x128xf32> -> vector<2x256xf32>
    %c2 = arith.constant 2 : index
    %c0_53 = arith.constant 0 : index
    %c0_54 = arith.constant 0 : index
    %211 = vector.load %arg3[%c2, %c0_53, %c0_54] : memref<3x256x512xf32, #tpu.memory_space<vmem>>, vector<1x256x512xf32>
    %212 = vector.shape_cast %211 : vector<1x256x512xf32> to vector<256x512xf32>
    %cst_55 = arith.constant dense<0.000000e+00> : vector<2x512xf32>
    %213 = tpu.matmul %210, %212, %cst_55 {dimension_numbers = #tpu.dot_dimension_numbers<[1], [0], [0], [1], [0, 0, 1, 1], [], []>} : vector<2x256xf32>, vector<256x512xf32>, vector<2x512xf32> -> vector<2x512xf32>
    %214 = vector.extract_strided_slice %0 {offsets = [3, 0], sizes = [1, 512], strides = [1, 1]} : vector<4x512xf32> to vector<1x512xf32>
    %215 = vector.broadcast %214 : vector<1x512xf32> to vector<2x512xf32>
    %216 = arith.addf %213, %215 : vector<2x512xf32>
    %217 = vector.extract_strided_slice %216 {offsets = [0, 0], sizes = [2, 384], strides = [1, 1]} : vector<2x512xf32> to vector<2x384xf32>
    %218 = arith.negf %217 : vector<2x384xf32>
    %219 = math.exp %218 : vector<2x384xf32>
    %cst_56 = arith.constant 1.000000e+00 : f32
    %220 = vector.broadcast %cst_56 : f32 to vector<2x384xf32>
    %221 = arith.addf %220, %219 : vector<2x384xf32>
    %222 = arith.divf %220, %221 : vector<2x384xf32>
    %223 = vector.extract_strided_slice %216 {offsets = [0, 384], sizes = [2, 128], strides = [1, 1]} : vector<2x512xf32> to vector<2x128xf32>
    %224 = math.tanh %223 : vector<2x128xf32>
    %225 = vector.extract_strided_slice %222 {offsets = [0, 0], sizes = [2, 128], strides = [1, 1]} : vector<2x384xf32> to vector<2x128xf32>
    %226 = vector.extract_strided_slice %222 {offsets = [0, 128], sizes = [2, 128], strides = [1, 1]} : vector<2x384xf32> to vector<2x128xf32>
    %227 = vector.extract_strided_slice %222 {offsets = [0, 256], sizes = [2, 128], strides = [1, 1]} : vector<2x384xf32> to vector<2x128xf32>
    %228 = arith.mulf %226, %14 : vector<2x128xf32>
    %229 = arith.mulf %225, %224 : vector<2x128xf32>
    %230 = arith.addf %228, %229 : vector<2x128xf32>
    %231 = math.tanh %230 : vector<2x128xf32>
    %232 = arith.mulf %227, %231 : vector<2x128xf32>
    %233 = vector.extract_strided_slice %6 {offsets = [8, 0], sizes = [2, 512], strides = [1, 1]} : vector<16x512xf32> to vector<2x512xf32>
    %c0_57 = arith.constant 0 : index
    %c0_58 = arith.constant 0 : index
    %234 = vector.load %arg2[%c0_57, %c0_58] : memref<128x512xf32, #tpu.memory_space<vmem>>, vector<128x512xf32>
    %cst_59 = arith.constant dense<0.000000e+00> : vector<2x512xf32>
    %235 = tpu.matmul %163, %234, %cst_59 {dimension_numbers = #tpu.dot_dimension_numbers<[1], [0], [0], [1], [0, 0, 1, 1], [], []>} : vector<2x128xf32>, vector<128x512xf32>, vector<2x512xf32> -> vector<2x512xf32>
    %236 = arith.addf %233, %235 : vector<2x512xf32>
    %237 = vector.extract_strided_slice %236 {offsets = [0, 0], sizes = [2, 384], strides = [1, 1]} : vector<2x512xf32> to vector<2x384xf32>
    %238 = arith.negf %237 : vector<2x384xf32>
    %239 = math.exp %238 : vector<2x384xf32>
    %cst_60 = arith.constant 1.000000e+00 : f32
    %240 = vector.broadcast %cst_60 : f32 to vector<2x384xf32>
    %241 = arith.addf %240, %239 : vector<2x384xf32>
    %242 = arith.divf %240, %241 : vector<2x384xf32>
    %243 = vector.extract_strided_slice %236 {offsets = [0, 384], sizes = [2, 128], strides = [1, 1]} : vector<2x512xf32> to vector<2x128xf32>
    %244 = math.tanh %243 : vector<2x128xf32>
    %245 = vector.extract_strided_slice %242 {offsets = [0, 0], sizes = [2, 128], strides = [1, 1]} : vector<2x384xf32> to vector<2x128xf32>
    %246 = vector.extract_strided_slice %242 {offsets = [0, 128], sizes = [2, 128], strides = [1, 1]} : vector<2x384xf32> to vector<2x128xf32>
    %247 = vector.extract_strided_slice %242 {offsets = [0, 256], sizes = [2, 128], strides = [1, 1]} : vector<2x384xf32> to vector<2x128xf32>
    %248 = arith.mulf %246, %161 : vector<2x128xf32>
    %249 = arith.mulf %245, %244 : vector<2x128xf32>
    %250 = arith.addf %248, %249 : vector<2x128xf32>
    %251 = math.tanh %250 : vector<2x128xf32>
    %252 = arith.mulf %247, %251 : vector<2x128xf32>
    %253 = tpu.concatenate %163, %186 in 1 : vector<2x128xf32>, vector<2x128xf32> -> vector<2x256xf32>
    %c0_61 = arith.constant 0 : index
    %c0_62 = arith.constant 0 : index
    %c0_63 = arith.constant 0 : index
    %254 = vector.load %arg3[%c0_61, %c0_62, %c0_63] : memref<3x256x512xf32, #tpu.memory_space<vmem>>, vector<1x256x512xf32>
    %255 = vector.shape_cast %254 : vector<1x256x512xf32> to vector<256x512xf32>
    %cst_64 = arith.constant dense<0.000000e+00> : vector<2x512xf32>
    %256 = tpu.matmul %253, %255, %cst_64 {dimension_numbers = #tpu.dot_dimension_numbers<[1], [0], [0], [1], [0, 0, 1, 1], [], []>} : vector<2x256xf32>, vector<256x512xf32>, vector<2x512xf32> -> vector<2x512xf32>
    %257 = vector.extract_strided_slice %0 {offsets = [1, 0], sizes = [1, 512], strides = [1, 1]} : vector<4x512xf32> to vector<1x512xf32>
    %258 = vector.broadcast %257 : vector<1x512xf32> to vector<2x512xf32>
    %259 = arith.addf %256, %258 : vector<2x512xf32>
    %260 = vector.extract_strided_slice %259 {offsets = [0, 0], sizes = [2, 384], strides = [1, 1]} : vector<2x512xf32> to vector<2x384xf32>
    %261 = arith.negf %260 : vector<2x384xf32>
    %262 = math.exp %261 : vector<2x384xf32>
    %cst_65 = arith.constant 1.000000e+00 : f32
    %263 = vector.broadcast %cst_65 : f32 to vector<2x384xf32>
    %264 = arith.addf %263, %262 : vector<2x384xf32>
    %265 = arith.divf %263, %264 : vector<2x384xf32>
    %266 = vector.extract_strided_slice %259 {offsets = [0, 384], sizes = [2, 128], strides = [1, 1]} : vector<2x512xf32> to vector<2x128xf32>
    %267 = math.tanh %266 : vector<2x128xf32>
    %268 = vector.extract_strided_slice %265 {offsets = [0, 0], sizes = [2, 128], strides = [1, 1]} : vector<2x384xf32> to vector<2x128xf32>
    %269 = vector.extract_strided_slice %265 {offsets = [0, 128], sizes = [2, 128], strides = [1, 1]} : vector<2x384xf32> to vector<2x128xf32>
    %270 = vector.extract_strided_slice %265 {offsets = [0, 256], sizes = [2, 128], strides = [1, 1]} : vector<2x384xf32> to vector<2x128xf32>
    %271 = arith.mulf %269, %184 : vector<2x128xf32>
    %272 = arith.mulf %268, %267 : vector<2x128xf32>
    %273 = arith.addf %271, %272 : vector<2x128xf32>
    %274 = math.tanh %273 : vector<2x128xf32>
    %275 = arith.mulf %270, %274 : vector<2x128xf32>
    %276 = tpu.concatenate %186, %209 in 1 : vector<2x128xf32>, vector<2x128xf32> -> vector<2x256xf32>
    %c1_66 = arith.constant 1 : index
    %c0_67 = arith.constant 0 : index
    %c0_68 = arith.constant 0 : index
    %277 = vector.load %arg3[%c1_66, %c0_67, %c0_68] : memref<3x256x512xf32, #tpu.memory_space<vmem>>, vector<1x256x512xf32>
    %278 = vector.shape_cast %277 : vector<1x256x512xf32> to vector<256x512xf32>
    %cst_69 = arith.constant dense<0.000000e+00> : vector<2x512xf32>
    %279 = tpu.matmul %276, %278, %cst_69 {dimension_numbers = #tpu.dot_dimension_numbers<[1], [0], [0], [1], [0, 0, 1, 1], [], []>} : vector<2x256xf32>, vector<256x512xf32>, vector<2x512xf32> -> vector<2x512xf32>
    %280 = vector.extract_strided_slice %0 {offsets = [2, 0], sizes = [1, 512], strides = [1, 1]} : vector<4x512xf32> to vector<1x512xf32>
    %281 = vector.broadcast %280 : vector<1x512xf32> to vector<2x512xf32>
    %282 = arith.addf %279, %281 : vector<2x512xf32>
    %283 = vector.extract_strided_slice %282 {offsets = [0, 0], sizes = [2, 384], strides = [1, 1]} : vector<2x512xf32> to vector<2x384xf32>
    %284 = arith.negf %283 : vector<2x384xf32>
    %285 = math.exp %284 : vector<2x384xf32>
    %cst_70 = arith.constant 1.000000e+00 : f32
    %286 = vector.broadcast %cst_70 : f32 to vector<2x384xf32>
    %287 = arith.addf %286, %285 : vector<2x384xf32>
    %288 = arith.divf %286, %287 : vector<2x384xf32>
    %289 = vector.extract_strided_slice %282 {offsets = [0, 384], sizes = [2, 128], strides = [1, 1]} : vector<2x512xf32> to vector<2x128xf32>
    %290 = math.tanh %289 : vector<2x128xf32>
    %291 = vector.extract_strided_slice %288 {offsets = [0, 0], sizes = [2, 128], strides = [1, 1]} : vector<2x384xf32> to vector<2x128xf32>
    %292 = vector.extract_strided_slice %288 {offsets = [0, 128], sizes = [2, 128], strides = [1, 1]} : vector<2x384xf32> to vector<2x128xf32>
    %293 = vector.extract_strided_slice %288 {offsets = [0, 256], sizes = [2, 128], strides = [1, 1]} : vector<2x384xf32> to vector<2x128xf32>
    %294 = arith.mulf %292, %207 : vector<2x128xf32>
    %295 = arith.mulf %291, %290 : vector<2x128xf32>
    %296 = arith.addf %294, %295 : vector<2x128xf32>
    %297 = math.tanh %296 : vector<2x128xf32>
    %298 = arith.mulf %293, %297 : vector<2x128xf32>
    %299 = tpu.concatenate %209, %232 in 1 : vector<2x128xf32>, vector<2x128xf32> -> vector<2x256xf32>
    %c2_71 = arith.constant 2 : index
    %c0_72 = arith.constant 0 : index
    %c0_73 = arith.constant 0 : index
    %300 = vector.load %arg3[%c2_71, %c0_72, %c0_73] : memref<3x256x512xf32, #tpu.memory_space<vmem>>, vector<1x256x512xf32>
    %301 = vector.shape_cast %300 : vector<1x256x512xf32> to vector<256x512xf32>
    %cst_74 = arith.constant dense<0.000000e+00> : vector<2x512xf32>
    %302 = tpu.matmul %299, %301, %cst_74 {dimension_numbers = #tpu.dot_dimension_numbers<[1], [0], [0], [1], [0, 0, 1, 1], [], []>} : vector<2x256xf32>, vector<256x512xf32>, vector<2x512xf32> -> vector<2x512xf32>
    %303 = vector.extract_strided_slice %0 {offsets = [3, 0], sizes = [1, 512], strides = [1, 1]} : vector<4x512xf32> to vector<1x512xf32>
    %304 = vector.broadcast %303 : vector<1x512xf32> to vector<2x512xf32>
    %305 = arith.addf %302, %304 : vector<2x512xf32>
    %306 = vector.extract_strided_slice %305 {offsets = [0, 0], sizes = [2, 384], strides = [1, 1]} : vector<2x512xf32> to vector<2x384xf32>
    %307 = arith.negf %306 : vector<2x384xf32>
    %308 = math.exp %307 : vector<2x384xf32>
    %cst_75 = arith.constant 1.000000e+00 : f32
    %309 = vector.broadcast %cst_75 : f32 to vector<2x384xf32>
    %310 = arith.addf %309, %308 : vector<2x384xf32>
    %311 = arith.divf %309, %310 : vector<2x384xf32>
    %312 = vector.extract_strided_slice %305 {offsets = [0, 384], sizes = [2, 128], strides = [1, 1]} : vector<2x512xf32> to vector<2x128xf32>
    %313 = math.tanh %312 : vector<2x128xf32>
    %314 = vector.extract_strided_slice %311 {offsets = [0, 0], sizes = [2, 128], strides = [1, 1]} : vector<2x384xf32> to vector<2x128xf32>
    %315 = vector.extract_strided_slice %311 {offsets = [0, 128], sizes = [2, 128], strides = [1, 1]} : vector<2x384xf32> to vector<2x128xf32>
    %316 = vector.extract_strided_slice %311 {offsets = [0, 256], sizes = [2, 128], strides = [1, 1]} : vector<2x384xf32> to vector<2x128xf32>
    %317 = arith.mulf %315, %230 : vector<2x128xf32>
    %318 = arith.mulf %314, %313 : vector<2x128xf32>
    %319 = arith.addf %317, %318 : vector<2x128xf32>
    %320 = math.tanh %319 : vector<2x128xf32>
    %321 = arith.mulf %316, %320 : vector<2x128xf32>
    %322 = vector.extract_strided_slice %6 {offsets = [10, 0], sizes = [2, 512], strides = [1, 1]} : vector<16x512xf32> to vector<2x512xf32>
    %c0_76 = arith.constant 0 : index
    %c0_77 = arith.constant 0 : index
    %323 = vector.load %arg2[%c0_76, %c0_77] : memref<128x512xf32, #tpu.memory_space<vmem>>, vector<128x512xf32>
    %cst_78 = arith.constant dense<0.000000e+00> : vector<2x512xf32>
    %324 = tpu.matmul %252, %323, %cst_78 {dimension_numbers = #tpu.dot_dimension_numbers<[1], [0], [0], [1], [0, 0, 1, 1], [], []>} : vector<2x128xf32>, vector<128x512xf32>, vector<2x512xf32> -> vector<2x512xf32>
    %325 = arith.addf %322, %324 : vector<2x512xf32>
    %326 = vector.extract_strided_slice %325 {offsets = [0, 0], sizes = [2, 384], strides = [1, 1]} : vector<2x512xf32> to vector<2x384xf32>
    %327 = arith.negf %326 : vector<2x384xf32>
    %328 = math.exp %327 : vector<2x384xf32>
    %cst_79 = arith.constant 1.000000e+00 : f32
    %329 = vector.broadcast %cst_79 : f32 to vector<2x384xf32>
    %330 = arith.addf %329, %328 : vector<2x384xf32>
    %331 = arith.divf %329, %330 : vector<2x384xf32>
    %332 = vector.extract_strided_slice %325 {offsets = [0, 384], sizes = [2, 128], strides = [1, 1]} : vector<2x512xf32> to vector<2x128xf32>
    %333 = math.tanh %332 : vector<2x128xf32>
    %334 = vector.extract_strided_slice %331 {offsets = [0, 0], sizes = [2, 128], strides = [1, 1]} : vector<2x384xf32> to vector<2x128xf32>
    %335 = vector.extract_strided_slice %331 {offsets = [0, 128], sizes = [2, 128], strides = [1, 1]} : vector<2x384xf32> to vector<2x128xf32>
    %336 = vector.extract_strided_slice %331 {offsets = [0, 256], sizes = [2, 128], strides = [1, 1]} : vector<2x384xf32> to vector<2x128xf32>
    %337 = arith.mulf %335, %250 : vector<2x128xf32>
    %338 = arith.mulf %334, %333 : vector<2x128xf32>
    %339 = arith.addf %337, %338 : vector<2x128xf32>
    %340 = math.tanh %339 : vector<2x128xf32>
    %341 = arith.mulf %336, %340 : vector<2x128xf32>
    %342 = tpu.concatenate %252, %275 in 1 : vector<2x128xf32>, vector<2x128xf32> -> vector<2x256xf32>
    %c0_80 = arith.constant 0 : index
    %c0_81 = arith.constant 0 : index
    %c0_82 = arith.constant 0 : index
    %343 = vector.load %arg3[%c0_80, %c0_81, %c0_82] : memref<3x256x512xf32, #tpu.memory_space<vmem>>, vector<1x256x512xf32>
    %344 = vector.shape_cast %343 : vector<1x256x512xf32> to vector<256x512xf32>
    %cst_83 = arith.constant dense<0.000000e+00> : vector<2x512xf32>
    %345 = tpu.matmul %342, %344, %cst_83 {dimension_numbers = #tpu.dot_dimension_numbers<[1], [0], [0], [1], [0, 0, 1, 1], [], []>} : vector<2x256xf32>, vector<256x512xf32>, vector<2x512xf32> -> vector<2x512xf32>
    %346 = vector.extract_strided_slice %0 {offsets = [1, 0], sizes = [1, 512], strides = [1, 1]} : vector<4x512xf32> to vector<1x512xf32>
    %347 = vector.broadcast %346 : vector<1x512xf32> to vector<2x512xf32>
    %348 = arith.addf %345, %347 : vector<2x512xf32>
    %349 = vector.extract_strided_slice %348 {offsets = [0, 0], sizes = [2, 384], strides = [1, 1]} : vector<2x512xf32> to vector<2x384xf32>
    %350 = arith.negf %349 : vector<2x384xf32>
    %351 = math.exp %350 : vector<2x384xf32>
    %cst_84 = arith.constant 1.000000e+00 : f32
    %352 = vector.broadcast %cst_84 : f32 to vector<2x384xf32>
    %353 = arith.addf %352, %351 : vector<2x384xf32>
    %354 = arith.divf %352, %353 : vector<2x384xf32>
    %355 = vector.extract_strided_slice %348 {offsets = [0, 384], sizes = [2, 128], strides = [1, 1]} : vector<2x512xf32> to vector<2x128xf32>
    %356 = math.tanh %355 : vector<2x128xf32>
    %357 = vector.extract_strided_slice %354 {offsets = [0, 0], sizes = [2, 128], strides = [1, 1]} : vector<2x384xf32> to vector<2x128xf32>
    %358 = vector.extract_strided_slice %354 {offsets = [0, 128], sizes = [2, 128], strides = [1, 1]} : vector<2x384xf32> to vector<2x128xf32>
    %359 = vector.extract_strided_slice %354 {offsets = [0, 256], sizes = [2, 128], strides = [1, 1]} : vector<2x384xf32> to vector<2x128xf32>
    %360 = arith.mulf %358, %273 : vector<2x128xf32>
    %361 = arith.mulf %357, %356 : vector<2x128xf32>
    %362 = arith.addf %360, %361 : vector<2x128xf32>
    %363 = math.tanh %362 : vector<2x128xf32>
    %364 = arith.mulf %359, %363 : vector<2x128xf32>
    %365 = tpu.concatenate %275, %298 in 1 : vector<2x128xf32>, vector<2x128xf32> -> vector<2x256xf32>
    %c1_85 = arith.constant 1 : index
    %c0_86 = arith.constant 0 : index
    %c0_87 = arith.constant 0 : index
    %366 = vector.load %arg3[%c1_85, %c0_86, %c0_87] : memref<3x256x512xf32, #tpu.memory_space<vmem>>, vector<1x256x512xf32>
    %367 = vector.shape_cast %366 : vector<1x256x512xf32> to vector<256x512xf32>
    %cst_88 = arith.constant dense<0.000000e+00> : vector<2x512xf32>
    %368 = tpu.matmul %365, %367, %cst_88 {dimension_numbers = #tpu.dot_dimension_numbers<[1], [0], [0], [1], [0, 0, 1, 1], [], []>} : vector<2x256xf32>, vector<256x512xf32>, vector<2x512xf32> -> vector<2x512xf32>
    %369 = vector.extract_strided_slice %0 {offsets = [2, 0], sizes = [1, 512], strides = [1, 1]} : vector<4x512xf32> to vector<1x512xf32>
    %370 = vector.broadcast %369 : vector<1x512xf32> to vector<2x512xf32>
    %371 = arith.addf %368, %370 : vector<2x512xf32>
    %372 = vector.extract_strided_slice %371 {offsets = [0, 0], sizes = [2, 384], strides = [1, 1]} : vector<2x512xf32> to vector<2x384xf32>
    %373 = arith.negf %372 : vector<2x384xf32>
    %374 = math.exp %373 : vector<2x384xf32>
    %cst_89 = arith.constant 1.000000e+00 : f32
    %375 = vector.broadcast %cst_89 : f32 to vector<2x384xf32>
    %376 = arith.addf %375, %374 : vector<2x384xf32>
    %377 = arith.divf %375, %376 : vector<2x384xf32>
    %378 = vector.extract_strided_slice %371 {offsets = [0, 384], sizes = [2, 128], strides = [1, 1]} : vector<2x512xf32> to vector<2x128xf32>
    %379 = math.tanh %378 : vector<2x128xf32>
    %380 = vector.extract_strided_slice %377 {offsets = [0, 0], sizes = [2, 128], strides = [1, 1]} : vector<2x384xf32> to vector<2x128xf32>
    %381 = vector.extract_strided_slice %377 {offsets = [0, 128], sizes = [2, 128], strides = [1, 1]} : vector<2x384xf32> to vector<2x128xf32>
    %382 = vector.extract_strided_slice %377 {offsets = [0, 256], sizes = [2, 128], strides = [1, 1]} : vector<2x384xf32> to vector<2x128xf32>
    %383 = arith.mulf %381, %296 : vector<2x128xf32>
    %384 = arith.mulf %380, %379 : vector<2x128xf32>
    %385 = arith.addf %383, %384 : vector<2x128xf32>
    %386 = math.tanh %385 : vector<2x128xf32>
    %387 = arith.mulf %382, %386 : vector<2x128xf32>
    %388 = tpu.concatenate %298, %321 in 1 : vector<2x128xf32>, vector<2x128xf32> -> vector<2x256xf32>
    %c2_90 = arith.constant 2 : index
    %c0_91 = arith.constant 0 : index
    %c0_92 = arith.constant 0 : index
    %389 = vector.load %arg3[%c2_90, %c0_91, %c0_92] : memref<3x256x512xf32, #tpu.memory_space<vmem>>, vector<1x256x512xf32>
    %390 = vector.shape_cast %389 : vector<1x256x512xf32> to vector<256x512xf32>
    %cst_93 = arith.constant dense<0.000000e+00> : vector<2x512xf32>
    %391 = tpu.matmul %388, %390, %cst_93 {dimension_numbers = #tpu.dot_dimension_numbers<[1], [0], [0], [1], [0, 0, 1, 1], [], []>} : vector<2x256xf32>, vector<256x512xf32>, vector<2x512xf32> -> vector<2x512xf32>
    %392 = vector.extract_strided_slice %0 {offsets = [3, 0], sizes = [1, 512], strides = [1, 1]} : vector<4x512xf32> to vector<1x512xf32>
    %393 = vector.broadcast %392 : vector<1x512xf32> to vector<2x512xf32>
    %394 = arith.addf %391, %393 : vector<2x512xf32>
    %395 = vector.extract_strided_slice %394 {offsets = [0, 0], sizes = [2, 384], strides = [1, 1]} : vector<2x512xf32> to vector<2x384xf32>
    %396 = arith.negf %395 : vector<2x384xf32>
    %397 = math.exp %396 : vector<2x384xf32>
    %cst_94 = arith.constant 1.000000e+00 : f32
    %398 = vector.broadcast %cst_94 : f32 to vector<2x384xf32>
    %399 = arith.addf %398, %397 : vector<2x384xf32>
    %400 = arith.divf %398, %399 : vector<2x384xf32>
    %401 = vector.extract_strided_slice %394 {offsets = [0, 384], sizes = [2, 128], strides = [1, 1]} : vector<2x512xf32> to vector<2x128xf32>
    %402 = math.tanh %401 : vector<2x128xf32>
    %403 = vector.extract_strided_slice %400 {offsets = [0, 0], sizes = [2, 128], strides = [1, 1]} : vector<2x384xf32> to vector<2x128xf32>
    %404 = vector.extract_strided_slice %400 {offsets = [0, 128], sizes = [2, 128], strides = [1, 1]} : vector<2x384xf32> to vector<2x128xf32>
    %405 = vector.extract_strided_slice %400 {offsets = [0, 256], sizes = [2, 128], strides = [1, 1]} : vector<2x384xf32> to vector<2x128xf32>
    %406 = arith.mulf %404, %319 : vector<2x128xf32>
    %407 = arith.mulf %403, %402 : vector<2x128xf32>
    %408 = arith.addf %406, %407 : vector<2x128xf32>
    %409 = math.tanh %408 : vector<2x128xf32>
    %410 = arith.mulf %405, %409 : vector<2x128xf32>
    %411 = vector.extract_strided_slice %6 {offsets = [12, 0], sizes = [2, 512], strides = [1, 1]} : vector<16x512xf32> to vector<2x512xf32>
    %c0_95 = arith.constant 0 : index
    %c0_96 = arith.constant 0 : index
    %412 = vector.load %arg2[%c0_95, %c0_96] : memref<128x512xf32, #tpu.memory_space<vmem>>, vector<128x512xf32>
    %cst_97 = arith.constant dense<0.000000e+00> : vector<2x512xf32>
    %413 = tpu.matmul %341, %412, %cst_97 {dimension_numbers = #tpu.dot_dimension_numbers<[1], [0], [0], [1], [0, 0, 1, 1], [], []>} : vector<2x128xf32>, vector<128x512xf32>, vector<2x512xf32> -> vector<2x512xf32>
    %414 = arith.addf %411, %413 : vector<2x512xf32>
    %415 = vector.extract_strided_slice %414 {offsets = [0, 0], sizes = [2, 384], strides = [1, 1]} : vector<2x512xf32> to vector<2x384xf32>
    %416 = arith.negf %415 : vector<2x384xf32>
    %417 = math.exp %416 : vector<2x384xf32>
    %cst_98 = arith.constant 1.000000e+00 : f32
    %418 = vector.broadcast %cst_98 : f32 to vector<2x384xf32>
    %419 = arith.addf %418, %417 : vector<2x384xf32>
    %420 = arith.divf %418, %419 : vector<2x384xf32>
    %421 = vector.extract_strided_slice %414 {offsets = [0, 384], sizes = [2, 128], strides = [1, 1]} : vector<2x512xf32> to vector<2x128xf32>
    %422 = math.tanh %421 : vector<2x128xf32>
    %423 = vector.extract_strided_slice %420 {offsets = [0, 0], sizes = [2, 128], strides = [1, 1]} : vector<2x384xf32> to vector<2x128xf32>
    %424 = vector.extract_strided_slice %420 {offsets = [0, 128], sizes = [2, 128], strides = [1, 1]} : vector<2x384xf32> to vector<2x128xf32>
    %425 = vector.extract_strided_slice %420 {offsets = [0, 256], sizes = [2, 128], strides = [1, 1]} : vector<2x384xf32> to vector<2x128xf32>
    %426 = arith.mulf %424, %339 : vector<2x128xf32>
    %427 = arith.mulf %423, %422 : vector<2x128xf32>
    %428 = arith.addf %426, %427 : vector<2x128xf32>
    %429 = math.tanh %428 : vector<2x128xf32>
    %430 = arith.mulf %425, %429 : vector<2x128xf32>
    %431 = tpu.concatenate %341, %364 in 1 : vector<2x128xf32>, vector<2x128xf32> -> vector<2x256xf32>
    %c0_99 = arith.constant 0 : index
    %c0_100 = arith.constant 0 : index
    %c0_101 = arith.constant 0 : index
    %432 = vector.load %arg3[%c0_99, %c0_100, %c0_101] : memref<3x256x512xf32, #tpu.memory_space<vmem>>, vector<1x256x512xf32>
    %433 = vector.shape_cast %432 : vector<1x256x512xf32> to vector<256x512xf32>
    %cst_102 = arith.constant dense<0.000000e+00> : vector<2x512xf32>
    %434 = tpu.matmul %431, %433, %cst_102 {dimension_numbers = #tpu.dot_dimension_numbers<[1], [0], [0], [1], [0, 0, 1, 1], [], []>} : vector<2x256xf32>, vector<256x512xf32>, vector<2x512xf32> -> vector<2x512xf32>
    %435 = vector.extract_strided_slice %0 {offsets = [1, 0], sizes = [1, 512], strides = [1, 1]} : vector<4x512xf32> to vector<1x512xf32>
    %436 = vector.broadcast %435 : vector<1x512xf32> to vector<2x512xf32>
    %437 = arith.addf %434, %436 : vector<2x512xf32>
    %438 = vector.extract_strided_slice %437 {offsets = [0, 0], sizes = [2, 384], strides = [1, 1]} : vector<2x512xf32> to vector<2x384xf32>
    %439 = arith.negf %438 : vector<2x384xf32>
    %440 = math.exp %439 : vector<2x384xf32>
    %cst_103 = arith.constant 1.000000e+00 : f32
    %441 = vector.broadcast %cst_103 : f32 to vector<2x384xf32>
    %442 = arith.addf %441, %440 : vector<2x384xf32>
    %443 = arith.divf %441, %442 : vector<2x384xf32>
    %444 = vector.extract_strided_slice %437 {offsets = [0, 384], sizes = [2, 128], strides = [1, 1]} : vector<2x512xf32> to vector<2x128xf32>
    %445 = math.tanh %444 : vector<2x128xf32>
    %446 = vector.extract_strided_slice %443 {offsets = [0, 0], sizes = [2, 128], strides = [1, 1]} : vector<2x384xf32> to vector<2x128xf32>
    %447 = vector.extract_strided_slice %443 {offsets = [0, 128], sizes = [2, 128], strides = [1, 1]} : vector<2x384xf32> to vector<2x128xf32>
    %448 = vector.extract_strided_slice %443 {offsets = [0, 256], sizes = [2, 128], strides = [1, 1]} : vector<2x384xf32> to vector<2x128xf32>
    %449 = arith.mulf %447, %362 : vector<2x128xf32>
    %450 = arith.mulf %446, %445 : vector<2x128xf32>
    %451 = arith.addf %449, %450 : vector<2x128xf32>
    %452 = math.tanh %451 : vector<2x128xf32>
    %453 = arith.mulf %448, %452 : vector<2x128xf32>
    %454 = tpu.concatenate %364, %387 in 1 : vector<2x128xf32>, vector<2x128xf32> -> vector<2x256xf32>
    %c1_104 = arith.constant 1 : index
    %c0_105 = arith.constant 0 : index
    %c0_106 = arith.constant 0 : index
    %455 = vector.load %arg3[%c1_104, %c0_105, %c0_106] : memref<3x256x512xf32, #tpu.memory_space<vmem>>, vector<1x256x512xf32>
    %456 = vector.shape_cast %455 : vector<1x256x512xf32> to vector<256x512xf32>
    %cst_107 = arith.constant dense<0.000000e+00> : vector<2x512xf32>
    %457 = tpu.matmul %454, %456, %cst_107 {dimension_numbers = #tpu.dot_dimension_numbers<[1], [0], [0], [1], [0, 0, 1, 1], [], []>} : vector<2x256xf32>, vector<256x512xf32>, vector<2x512xf32> -> vector<2x512xf32>
    %458 = vector.extract_strided_slice %0 {offsets = [2, 0], sizes = [1, 512], strides = [1, 1]} : vector<4x512xf32> to vector<1x512xf32>
    %459 = vector.broadcast %458 : vector<1x512xf32> to vector<2x512xf32>
    %460 = arith.addf %457, %459 : vector<2x512xf32>
    %461 = vector.extract_strided_slice %460 {offsets = [0, 0], sizes = [2, 384], strides = [1, 1]} : vector<2x512xf32> to vector<2x384xf32>
    %462 = arith.negf %461 : vector<2x384xf32>
    %463 = math.exp %462 : vector<2x384xf32>
    %cst_108 = arith.constant 1.000000e+00 : f32
    %464 = vector.broadcast %cst_108 : f32 to vector<2x384xf32>
    %465 = arith.addf %464, %463 : vector<2x384xf32>
    %466 = arith.divf %464, %465 : vector<2x384xf32>
    %467 = vector.extract_strided_slice %460 {offsets = [0, 384], sizes = [2, 128], strides = [1, 1]} : vector<2x512xf32> to vector<2x128xf32>
    %468 = math.tanh %467 : vector<2x128xf32>
    %469 = vector.extract_strided_slice %466 {offsets = [0, 0], sizes = [2, 128], strides = [1, 1]} : vector<2x384xf32> to vector<2x128xf32>
    %470 = vector.extract_strided_slice %466 {offsets = [0, 128], sizes = [2, 128], strides = [1, 1]} : vector<2x384xf32> to vector<2x128xf32>
    %471 = vector.extract_strided_slice %466 {offsets = [0, 256], sizes = [2, 128], strides = [1, 1]} : vector<2x384xf32> to vector<2x128xf32>
    %472 = arith.mulf %470, %385 : vector<2x128xf32>
    %473 = arith.mulf %469, %468 : vector<2x128xf32>
    %474 = arith.addf %472, %473 : vector<2x128xf32>
    %475 = math.tanh %474 : vector<2x128xf32>
    %476 = arith.mulf %471, %475 : vector<2x128xf32>
    %477 = tpu.concatenate %387, %410 in 1 : vector<2x128xf32>, vector<2x128xf32> -> vector<2x256xf32>
    %c2_109 = arith.constant 2 : index
    %c0_110 = arith.constant 0 : index
    %c0_111 = arith.constant 0 : index
    %478 = vector.load %arg3[%c2_109, %c0_110, %c0_111] : memref<3x256x512xf32, #tpu.memory_space<vmem>>, vector<1x256x512xf32>
    %479 = vector.shape_cast %478 : vector<1x256x512xf32> to vector<256x512xf32>
    %cst_112 = arith.constant dense<0.000000e+00> : vector<2x512xf32>
    %480 = tpu.matmul %477, %479, %cst_112 {dimension_numbers = #tpu.dot_dimension_numbers<[1], [0], [0], [1], [0, 0, 1, 1], [], []>} : vector<2x256xf32>, vector<256x512xf32>, vector<2x512xf32> -> vector<2x512xf32>
    %481 = vector.extract_strided_slice %0 {offsets = [3, 0], sizes = [1, 512], strides = [1, 1]} : vector<4x512xf32> to vector<1x512xf32>
    %482 = vector.broadcast %481 : vector<1x512xf32> to vector<2x512xf32>
    %483 = arith.addf %480, %482 : vector<2x512xf32>
    %484 = vector.extract_strided_slice %483 {offsets = [0, 0], sizes = [2, 384], strides = [1, 1]} : vector<2x512xf32> to vector<2x384xf32>
    %485 = arith.negf %484 : vector<2x384xf32>
    %486 = math.exp %485 : vector<2x384xf32>
    %cst_113 = arith.constant 1.000000e+00 : f32
    %487 = vector.broadcast %cst_113 : f32 to vector<2x384xf32>
    %488 = arith.addf %487, %486 : vector<2x384xf32>
    %489 = arith.divf %487, %488 : vector<2x384xf32>
    %490 = vector.extract_strided_slice %483 {offsets = [0, 384], sizes = [2, 128], strides = [1, 1]} : vector<2x512xf32> to vector<2x128xf32>
    %491 = math.tanh %490 : vector<2x128xf32>
    %492 = vector.extract_strided_slice %489 {offsets = [0, 0], sizes = [2, 128], strides = [1, 1]} : vector<2x384xf32> to vector<2x128xf32>
    %493 = vector.extract_strided_slice %489 {offsets = [0, 128], sizes = [2, 128], strides = [1, 1]} : vector<2x384xf32> to vector<2x128xf32>
    %494 = vector.extract_strided_slice %489 {offsets = [0, 256], sizes = [2, 128], strides = [1, 1]} : vector<2x384xf32> to vector<2x128xf32>
    %495 = arith.mulf %493, %408 : vector<2x128xf32>
    %496 = arith.mulf %492, %491 : vector<2x128xf32>
    %497 = arith.addf %495, %496 : vector<2x128xf32>
    %498 = math.tanh %497 : vector<2x128xf32>
    %499 = arith.mulf %494, %498 : vector<2x128xf32>
    %500 = vector.extract_strided_slice %6 {offsets = [14, 0], sizes = [2, 512], strides = [1, 1]} : vector<16x512xf32> to vector<2x512xf32>
    %c0_114 = arith.constant 0 : index
    %c0_115 = arith.constant 0 : index
    %501 = vector.load %arg2[%c0_114, %c0_115] : memref<128x512xf32, #tpu.memory_space<vmem>>, vector<128x512xf32>
    %cst_116 = arith.constant dense<0.000000e+00> : vector<2x512xf32>
    %502 = tpu.matmul %430, %501, %cst_116 {dimension_numbers = #tpu.dot_dimension_numbers<[1], [0], [0], [1], [0, 0, 1, 1], [], []>} : vector<2x128xf32>, vector<128x512xf32>, vector<2x512xf32> -> vector<2x512xf32>
    %503 = arith.addf %500, %502 : vector<2x512xf32>
    %504 = vector.extract_strided_slice %503 {offsets = [0, 0], sizes = [2, 384], strides = [1, 1]} : vector<2x512xf32> to vector<2x384xf32>
    %505 = arith.negf %504 : vector<2x384xf32>
    %506 = math.exp %505 : vector<2x384xf32>
    %cst_117 = arith.constant 1.000000e+00 : f32
    %507 = vector.broadcast %cst_117 : f32 to vector<2x384xf32>
    %508 = arith.addf %507, %506 : vector<2x384xf32>
    %509 = arith.divf %507, %508 : vector<2x384xf32>
    %510 = vector.extract_strided_slice %503 {offsets = [0, 384], sizes = [2, 128], strides = [1, 1]} : vector<2x512xf32> to vector<2x128xf32>
    %511 = math.tanh %510 : vector<2x128xf32>
    %512 = vector.extract_strided_slice %509 {offsets = [0, 0], sizes = [2, 128], strides = [1, 1]} : vector<2x384xf32> to vector<2x128xf32>
    %513 = vector.extract_strided_slice %509 {offsets = [0, 128], sizes = [2, 128], strides = [1, 1]} : vector<2x384xf32> to vector<2x128xf32>
    %514 = vector.extract_strided_slice %509 {offsets = [0, 256], sizes = [2, 128], strides = [1, 1]} : vector<2x384xf32> to vector<2x128xf32>
    %515 = arith.mulf %513, %428 : vector<2x128xf32>
    %516 = arith.mulf %512, %511 : vector<2x128xf32>
    %517 = arith.addf %515, %516 : vector<2x128xf32>
    %518 = math.tanh %517 : vector<2x128xf32>
    %519 = arith.mulf %514, %518 : vector<2x128xf32>
    %520 = tpu.concatenate %430, %453 in 1 : vector<2x128xf32>, vector<2x128xf32> -> vector<2x256xf32>
    %c0_118 = arith.constant 0 : index
    %c0_119 = arith.constant 0 : index
    %c0_120 = arith.constant 0 : index
    %521 = vector.load %arg3[%c0_118, %c0_119, %c0_120] : memref<3x256x512xf32, #tpu.memory_space<vmem>>, vector<1x256x512xf32>
    %522 = vector.shape_cast %521 : vector<1x256x512xf32> to vector<256x512xf32>
    %cst_121 = arith.constant dense<0.000000e+00> : vector<2x512xf32>
    %523 = tpu.matmul %520, %522, %cst_121 {dimension_numbers = #tpu.dot_dimension_numbers<[1], [0], [0], [1], [0, 0, 1, 1], [], []>} : vector<2x256xf32>, vector<256x512xf32>, vector<2x512xf32> -> vector<2x512xf32>
    %524 = vector.extract_strided_slice %0 {offsets = [1, 0], sizes = [1, 512], strides = [1, 1]} : vector<4x512xf32> to vector<1x512xf32>
    %525 = vector.broadcast %524 : vector<1x512xf32> to vector<2x512xf32>
    %526 = arith.addf %523, %525 : vector<2x512xf32>
    %527 = vector.extract_strided_slice %526 {offsets = [0, 0], sizes = [2, 384], strides = [1, 1]} : vector<2x512xf32> to vector<2x384xf32>
    %528 = arith.negf %527 : vector<2x384xf32>
    %529 = math.exp %528 : vector<2x384xf32>
    %cst_122 = arith.constant 1.000000e+00 : f32
    %530 = vector.broadcast %cst_122 : f32 to vector<2x384xf32>
    %531 = arith.addf %530, %529 : vector<2x384xf32>
    %532 = arith.divf %530, %531 : vector<2x384xf32>
    %533 = vector.extract_strided_slice %526 {offsets = [0, 384], sizes = [2, 128], strides = [1, 1]} : vector<2x512xf32> to vector<2x128xf32>
    %534 = math.tanh %533 : vector<2x128xf32>
    %535 = vector.extract_strided_slice %532 {offsets = [0, 0], sizes = [2, 128], strides = [1, 1]} : vector<2x384xf32> to vector<2x128xf32>
    %536 = vector.extract_strided_slice %532 {offsets = [0, 128], sizes = [2, 128], strides = [1, 1]} : vector<2x384xf32> to vector<2x128xf32>
    %537 = vector.extract_strided_slice %532 {offsets = [0, 256], sizes = [2, 128], strides = [1, 1]} : vector<2x384xf32> to vector<2x128xf32>
    %538 = arith.mulf %536, %451 : vector<2x128xf32>
    %539 = arith.mulf %535, %534 : vector<2x128xf32>
    %540 = arith.addf %538, %539 : vector<2x128xf32>
    %541 = math.tanh %540 : vector<2x128xf32>
    %542 = arith.mulf %537, %541 : vector<2x128xf32>
    %543 = tpu.concatenate %453, %476 in 1 : vector<2x128xf32>, vector<2x128xf32> -> vector<2x256xf32>
    %c1_123 = arith.constant 1 : index
    %c0_124 = arith.constant 0 : index
    %c0_125 = arith.constant 0 : index
    %544 = vector.load %arg3[%c1_123, %c0_124, %c0_125] : memref<3x256x512xf32, #tpu.memory_space<vmem>>, vector<1x256x512xf32>
    %545 = vector.shape_cast %544 : vector<1x256x512xf32> to vector<256x512xf32>
    %cst_126 = arith.constant dense<0.000000e+00> : vector<2x512xf32>
    %546 = tpu.matmul %543, %545, %cst_126 {dimension_numbers = #tpu.dot_dimension_numbers<[1], [0], [0], [1], [0, 0, 1, 1], [], []>} : vector<2x256xf32>, vector<256x512xf32>, vector<2x512xf32> -> vector<2x512xf32>
    %547 = vector.extract_strided_slice %0 {offsets = [2, 0], sizes = [1, 512], strides = [1, 1]} : vector<4x512xf32> to vector<1x512xf32>
    %548 = vector.broadcast %547 : vector<1x512xf32> to vector<2x512xf32>
    %549 = arith.addf %546, %548 : vector<2x512xf32>
    %550 = vector.extract_strided_slice %549 {offsets = [0, 0], sizes = [2, 384], strides = [1, 1]} : vector<2x512xf32> to vector<2x384xf32>
    %551 = arith.negf %550 : vector<2x384xf32>
    %552 = math.exp %551 : vector<2x384xf32>
    %cst_127 = arith.constant 1.000000e+00 : f32
    %553 = vector.broadcast %cst_127 : f32 to vector<2x384xf32>
    %554 = arith.addf %553, %552 : vector<2x384xf32>
    %555 = arith.divf %553, %554 : vector<2x384xf32>
    %556 = vector.extract_strided_slice %549 {offsets = [0, 384], sizes = [2, 128], strides = [1, 1]} : vector<2x512xf32> to vector<2x128xf32>
    %557 = math.tanh %556 : vector<2x128xf32>
    %558 = vector.extract_strided_slice %555 {offsets = [0, 0], sizes = [2, 128], strides = [1, 1]} : vector<2x384xf32> to vector<2x128xf32>
    %559 = vector.extract_strided_slice %555 {offsets = [0, 128], sizes = [2, 128], strides = [1, 1]} : vector<2x384xf32> to vector<2x128xf32>
    %560 = vector.extract_strided_slice %555 {offsets = [0, 256], sizes = [2, 128], strides = [1, 1]} : vector<2x384xf32> to vector<2x128xf32>
    %561 = arith.mulf %559, %474 : vector<2x128xf32>
    %562 = arith.mulf %558, %557 : vector<2x128xf32>
    %563 = arith.addf %561, %562 : vector<2x128xf32>
    %564 = math.tanh %563 : vector<2x128xf32>
    %565 = arith.mulf %560, %564 : vector<2x128xf32>
    %566 = tpu.concatenate %476, %499 in 1 : vector<2x128xf32>, vector<2x128xf32> -> vector<2x256xf32>
    %c2_128 = arith.constant 2 : index
    %c0_129 = arith.constant 0 : index
    %c0_130 = arith.constant 0 : index
    %567 = vector.load %arg3[%c2_128, %c0_129, %c0_130] : memref<3x256x512xf32, #tpu.memory_space<vmem>>, vector<1x256x512xf32>
    %568 = vector.shape_cast %567 : vector<1x256x512xf32> to vector<256x512xf32>
    %cst_131 = arith.constant dense<0.000000e+00> : vector<2x512xf32>
    %569 = tpu.matmul %566, %568, %cst_131 {dimension_numbers = #tpu.dot_dimension_numbers<[1], [0], [0], [1], [0, 0, 1, 1], [], []>} : vector<2x256xf32>, vector<256x512xf32>, vector<2x512xf32> -> vector<2x512xf32>
    %570 = vector.extract_strided_slice %0 {offsets = [3, 0], sizes = [1, 512], strides = [1, 1]} : vector<4x512xf32> to vector<1x512xf32>
    %571 = vector.broadcast %570 : vector<1x512xf32> to vector<2x512xf32>
    %572 = arith.addf %569, %571 : vector<2x512xf32>
    %573 = vector.extract_strided_slice %572 {offsets = [0, 0], sizes = [2, 384], strides = [1, 1]} : vector<2x512xf32> to vector<2x384xf32>
    %574 = arith.negf %573 : vector<2x384xf32>
    %575 = math.exp %574 : vector<2x384xf32>
    %cst_132 = arith.constant 1.000000e+00 : f32
    %576 = vector.broadcast %cst_132 : f32 to vector<2x384xf32>
    %577 = arith.addf %576, %575 : vector<2x384xf32>
    %578 = arith.divf %576, %577 : vector<2x384xf32>
    %579 = vector.extract_strided_slice %572 {offsets = [0, 384], sizes = [2, 128], strides = [1, 1]} : vector<2x512xf32> to vector<2x128xf32>
    %580 = math.tanh %579 : vector<2x128xf32>
    %581 = vector.extract_strided_slice %578 {offsets = [0, 0], sizes = [2, 128], strides = [1, 1]} : vector<2x384xf32> to vector<2x128xf32>
    %582 = vector.extract_strided_slice %578 {offsets = [0, 128], sizes = [2, 128], strides = [1, 1]} : vector<2x384xf32> to vector<2x128xf32>
    %583 = vector.extract_strided_slice %578 {offsets = [0, 256], sizes = [2, 128], strides = [1, 1]} : vector<2x384xf32> to vector<2x128xf32>
    %584 = arith.mulf %582, %497 : vector<2x128xf32>
    %585 = arith.mulf %581, %580 : vector<2x128xf32>
    %586 = arith.addf %584, %585 : vector<2x128xf32>
    %587 = math.tanh %586 : vector<2x128xf32>
    %588 = arith.mulf %583, %587 : vector<2x128xf32>
    %589 = tpu.concatenate %519, %542 in 1 : vector<2x128xf32>, vector<2x128xf32> -> vector<2x256xf32>
    %c0_133 = arith.constant 0 : index
    %c0_134 = arith.constant 0 : index
    %c0_135 = arith.constant 0 : index
    %590 = vector.load %arg3[%c0_133, %c0_134, %c0_135] : memref<3x256x512xf32, #tpu.memory_space<vmem>>, vector<1x256x512xf32>
    %591 = vector.shape_cast %590 : vector<1x256x512xf32> to vector<256x512xf32>
    %cst_136 = arith.constant dense<0.000000e+00> : vector<2x512xf32>
    %592 = tpu.matmul %589, %591, %cst_136 {dimension_numbers = #tpu.dot_dimension_numbers<[1], [0], [0], [1], [0, 0, 1, 1], [], []>} : vector<2x256xf32>, vector<256x512xf32>, vector<2x512xf32> -> vector<2x512xf32>
    %593 = vector.extract_strided_slice %0 {offsets = [1, 0], sizes = [1, 512], strides = [1, 1]} : vector<4x512xf32> to vector<1x512xf32>
    %594 = vector.broadcast %593 : vector<1x512xf32> to vector<2x512xf32>
    %595 = arith.addf %592, %594 : vector<2x512xf32>
    %596 = vector.extract_strided_slice %595 {offsets = [0, 0], sizes = [2, 384], strides = [1, 1]} : vector<2x512xf32> to vector<2x384xf32>
    %597 = arith.negf %596 : vector<2x384xf32>
    %598 = math.exp %597 : vector<2x384xf32>
    %cst_137 = arith.constant 1.000000e+00 : f32
    %599 = vector.broadcast %cst_137 : f32 to vector<2x384xf32>
    %600 = arith.addf %599, %598 : vector<2x384xf32>
    %601 = arith.divf %599, %600 : vector<2x384xf32>
    %602 = vector.extract_strided_slice %595 {offsets = [0, 384], sizes = [2, 128], strides = [1, 1]} : vector<2x512xf32> to vector<2x128xf32>
    %603 = math.tanh %602 : vector<2x128xf32>
    %604 = vector.extract_strided_slice %601 {offsets = [0, 0], sizes = [2, 128], strides = [1, 1]} : vector<2x384xf32> to vector<2x128xf32>
    %605 = vector.extract_strided_slice %601 {offsets = [0, 128], sizes = [2, 128], strides = [1, 1]} : vector<2x384xf32> to vector<2x128xf32>
    %606 = vector.extract_strided_slice %601 {offsets = [0, 256], sizes = [2, 128], strides = [1, 1]} : vector<2x384xf32> to vector<2x128xf32>
    %607 = arith.mulf %605, %540 : vector<2x128xf32>
    %608 = arith.mulf %604, %603 : vector<2x128xf32>
    %609 = arith.addf %607, %608 : vector<2x128xf32>
    %610 = math.tanh %609 : vector<2x128xf32>
    %611 = arith.mulf %606, %610 : vector<2x128xf32>
    %612 = tpu.concatenate %542, %565 in 1 : vector<2x128xf32>, vector<2x128xf32> -> vector<2x256xf32>
    %c1_138 = arith.constant 1 : index
    %c0_139 = arith.constant 0 : index
    %c0_140 = arith.constant 0 : index
    %613 = vector.load %arg3[%c1_138, %c0_139, %c0_140] : memref<3x256x512xf32, #tpu.memory_space<vmem>>, vector<1x256x512xf32>
    %614 = vector.shape_cast %613 : vector<1x256x512xf32> to vector<256x512xf32>
    %cst_141 = arith.constant dense<0.000000e+00> : vector<2x512xf32>
    %615 = tpu.matmul %612, %614, %cst_141 {dimension_numbers = #tpu.dot_dimension_numbers<[1], [0], [0], [1], [0, 0, 1, 1], [], []>} : vector<2x256xf32>, vector<256x512xf32>, vector<2x512xf32> -> vector<2x512xf32>
    %616 = vector.extract_strided_slice %0 {offsets = [2, 0], sizes = [1, 512], strides = [1, 1]} : vector<4x512xf32> to vector<1x512xf32>
    %617 = vector.broadcast %616 : vector<1x512xf32> to vector<2x512xf32>
    %618 = arith.addf %615, %617 : vector<2x512xf32>
    %619 = vector.extract_strided_slice %618 {offsets = [0, 0], sizes = [2, 384], strides = [1, 1]} : vector<2x512xf32> to vector<2x384xf32>
    %620 = arith.negf %619 : vector<2x384xf32>
    %621 = math.exp %620 : vector<2x384xf32>
    %cst_142 = arith.constant 1.000000e+00 : f32
    %622 = vector.broadcast %cst_142 : f32 to vector<2x384xf32>
    %623 = arith.addf %622, %621 : vector<2x384xf32>
    %624 = arith.divf %622, %623 : vector<2x384xf32>
    %625 = vector.extract_strided_slice %618 {offsets = [0, 384], sizes = [2, 128], strides = [1, 1]} : vector<2x512xf32> to vector<2x128xf32>
    %626 = math.tanh %625 : vector<2x128xf32>
    %627 = vector.extract_strided_slice %624 {offsets = [0, 0], sizes = [2, 128], strides = [1, 1]} : vector<2x384xf32> to vector<2x128xf32>
    %628 = vector.extract_strided_slice %624 {offsets = [0, 128], sizes = [2, 128], strides = [1, 1]} : vector<2x384xf32> to vector<2x128xf32>
    %629 = vector.extract_strided_slice %624 {offsets = [0, 256], sizes = [2, 128], strides = [1, 1]} : vector<2x384xf32> to vector<2x128xf32>
    %630 = arith.mulf %628, %563 : vector<2x128xf32>
    %631 = arith.mulf %627, %626 : vector<2x128xf32>
    %632 = arith.addf %630, %631 : vector<2x128xf32>
    %633 = math.tanh %632 : vector<2x128xf32>
    %634 = arith.mulf %629, %633 : vector<2x128xf32>
    %635 = tpu.concatenate %565, %588 in 1 : vector<2x128xf32>, vector<2x128xf32> -> vector<2x256xf32>
    %c2_143 = arith.constant 2 : index
    %c0_144 = arith.constant 0 : index
    %c0_145 = arith.constant 0 : index
    %636 = vector.load %arg3[%c2_143, %c0_144, %c0_145] : memref<3x256x512xf32, #tpu.memory_space<vmem>>, vector<1x256x512xf32>
    %637 = vector.shape_cast %636 : vector<1x256x512xf32> to vector<256x512xf32>
    %cst_146 = arith.constant dense<0.000000e+00> : vector<2x512xf32>
    %638 = tpu.matmul %635, %637, %cst_146 {dimension_numbers = #tpu.dot_dimension_numbers<[1], [0], [0], [1], [0, 0, 1, 1], [], []>} : vector<2x256xf32>, vector<256x512xf32>, vector<2x512xf32> -> vector<2x512xf32>
    %639 = vector.extract_strided_slice %0 {offsets = [3, 0], sizes = [1, 512], strides = [1, 1]} : vector<4x512xf32> to vector<1x512xf32>
    %640 = vector.broadcast %639 : vector<1x512xf32> to vector<2x512xf32>
    %641 = arith.addf %638, %640 : vector<2x512xf32>
    %642 = vector.extract_strided_slice %641 {offsets = [0, 0], sizes = [2, 384], strides = [1, 1]} : vector<2x512xf32> to vector<2x384xf32>
    %643 = arith.negf %642 : vector<2x384xf32>
    %644 = math.exp %643 : vector<2x384xf32>
    %cst_147 = arith.constant 1.000000e+00 : f32
    %645 = vector.broadcast %cst_147 : f32 to vector<2x384xf32>
    %646 = arith.addf %645, %644 : vector<2x384xf32>
    %647 = arith.divf %645, %646 : vector<2x384xf32>
    %648 = vector.extract_strided_slice %641 {offsets = [0, 384], sizes = [2, 128], strides = [1, 1]} : vector<2x512xf32> to vector<2x128xf32>
    %649 = math.tanh %648 : vector<2x128xf32>
    %650 = vector.extract_strided_slice %647 {offsets = [0, 0], sizes = [2, 128], strides = [1, 1]} : vector<2x384xf32> to vector<2x128xf32>
    %651 = vector.extract_strided_slice %647 {offsets = [0, 128], sizes = [2, 128], strides = [1, 1]} : vector<2x384xf32> to vector<2x128xf32>
    %652 = vector.extract_strided_slice %647 {offsets = [0, 256], sizes = [2, 128], strides = [1, 1]} : vector<2x384xf32> to vector<2x128xf32>
    %653 = arith.mulf %651, %586 : vector<2x128xf32>
    %654 = arith.mulf %650, %649 : vector<2x128xf32>
    %655 = arith.addf %653, %654 : vector<2x128xf32>
    %656 = math.tanh %655 : vector<2x128xf32>
    %657 = arith.mulf %652, %656 : vector<2x128xf32>
    %658 = tpu.concatenate %611, %634 in 1 : vector<2x128xf32>, vector<2x128xf32> -> vector<2x256xf32>
    %c1_148 = arith.constant 1 : index
    %c0_149 = arith.constant 0 : index
    %c0_150 = arith.constant 0 : index
    %659 = vector.load %arg3[%c1_148, %c0_149, %c0_150] : memref<3x256x512xf32, #tpu.memory_space<vmem>>, vector<1x256x512xf32>
    %660 = vector.shape_cast %659 : vector<1x256x512xf32> to vector<256x512xf32>
    %cst_151 = arith.constant dense<0.000000e+00> : vector<2x512xf32>
    %661 = tpu.matmul %658, %660, %cst_151 {dimension_numbers = #tpu.dot_dimension_numbers<[1], [0], [0], [1], [0, 0, 1, 1], [], []>} : vector<2x256xf32>, vector<256x512xf32>, vector<2x512xf32> -> vector<2x512xf32>
    %662 = vector.extract_strided_slice %0 {offsets = [2, 0], sizes = [1, 512], strides = [1, 1]} : vector<4x512xf32> to vector<1x512xf32>
    %663 = vector.broadcast %662 : vector<1x512xf32> to vector<2x512xf32>
    %664 = arith.addf %661, %663 : vector<2x512xf32>
    %665 = vector.extract_strided_slice %664 {offsets = [0, 0], sizes = [2, 384], strides = [1, 1]} : vector<2x512xf32> to vector<2x384xf32>
    %666 = arith.negf %665 : vector<2x384xf32>
    %667 = math.exp %666 : vector<2x384xf32>
    %cst_152 = arith.constant 1.000000e+00 : f32
    %668 = vector.broadcast %cst_152 : f32 to vector<2x384xf32>
    %669 = arith.addf %668, %667 : vector<2x384xf32>
    %670 = arith.divf %668, %669 : vector<2x384xf32>
    %671 = vector.extract_strided_slice %664 {offsets = [0, 384], sizes = [2, 128], strides = [1, 1]} : vector<2x512xf32> to vector<2x128xf32>
    %672 = math.tanh %671 : vector<2x128xf32>
    %673 = vector.extract_strided_slice %670 {offsets = [0, 0], sizes = [2, 128], strides = [1, 1]} : vector<2x384xf32> to vector<2x128xf32>
    %674 = vector.extract_strided_slice %670 {offsets = [0, 128], sizes = [2, 128], strides = [1, 1]} : vector<2x384xf32> to vector<2x128xf32>
    %675 = vector.extract_strided_slice %670 {offsets = [0, 256], sizes = [2, 128], strides = [1, 1]} : vector<2x384xf32> to vector<2x128xf32>
    %676 = arith.mulf %674, %632 : vector<2x128xf32>
    %677 = arith.mulf %673, %672 : vector<2x128xf32>
    %678 = arith.addf %676, %677 : vector<2x128xf32>
    %679 = math.tanh %678 : vector<2x128xf32>
    %680 = arith.mulf %675, %679 : vector<2x128xf32>
    %681 = tpu.concatenate %634, %657 in 1 : vector<2x128xf32>, vector<2x128xf32> -> vector<2x256xf32>
    %c2_153 = arith.constant 2 : index
    %c0_154 = arith.constant 0 : index
    %c0_155 = arith.constant 0 : index
    %682 = vector.load %arg3[%c2_153, %c0_154, %c0_155] : memref<3x256x512xf32, #tpu.memory_space<vmem>>, vector<1x256x512xf32>
    %683 = vector.shape_cast %682 : vector<1x256x512xf32> to vector<256x512xf32>
    %cst_156 = arith.constant dense<0.000000e+00> : vector<2x512xf32>
    %684 = tpu.matmul %681, %683, %cst_156 {dimension_numbers = #tpu.dot_dimension_numbers<[1], [0], [0], [1], [0, 0, 1, 1], [], []>} : vector<2x256xf32>, vector<256x512xf32>, vector<2x512xf32> -> vector<2x512xf32>
    %685 = vector.extract_strided_slice %0 {offsets = [3, 0], sizes = [1, 512], strides = [1, 1]} : vector<4x512xf32> to vector<1x512xf32>
    %686 = vector.broadcast %685 : vector<1x512xf32> to vector<2x512xf32>
    %687 = arith.addf %684, %686 : vector<2x512xf32>
    %688 = vector.extract_strided_slice %687 {offsets = [0, 0], sizes = [2, 384], strides = [1, 1]} : vector<2x512xf32> to vector<2x384xf32>
    %689 = arith.negf %688 : vector<2x384xf32>
    %690 = math.exp %689 : vector<2x384xf32>
    %cst_157 = arith.constant 1.000000e+00 : f32
    %691 = vector.broadcast %cst_157 : f32 to vector<2x384xf32>
    %692 = arith.addf %691, %690 : vector<2x384xf32>
    %693 = arith.divf %691, %692 : vector<2x384xf32>
    %694 = vector.extract_strided_slice %687 {offsets = [0, 384], sizes = [2, 128], strides = [1, 1]} : vector<2x512xf32> to vector<2x128xf32>
    %695 = math.tanh %694 : vector<2x128xf32>
    %696 = vector.extract_strided_slice %693 {offsets = [0, 0], sizes = [2, 128], strides = [1, 1]} : vector<2x384xf32> to vector<2x128xf32>
    %697 = vector.extract_strided_slice %693 {offsets = [0, 128], sizes = [2, 128], strides = [1, 1]} : vector<2x384xf32> to vector<2x128xf32>
    %698 = vector.extract_strided_slice %693 {offsets = [0, 256], sizes = [2, 128], strides = [1, 1]} : vector<2x384xf32> to vector<2x128xf32>
    %699 = arith.mulf %697, %655 : vector<2x128xf32>
    %700 = arith.mulf %696, %695 : vector<2x128xf32>
    %701 = arith.addf %699, %700 : vector<2x128xf32>
    %702 = math.tanh %701 : vector<2x128xf32>
    %703 = arith.mulf %698, %702 : vector<2x128xf32>
    %704 = tpu.concatenate %680, %703 in 1 : vector<2x128xf32>, vector<2x128xf32> -> vector<2x256xf32>
    %c2_158 = arith.constant 2 : index
    %c0_159 = arith.constant 0 : index
    %c0_160 = arith.constant 0 : index
    %705 = vector.load %arg3[%c2_158, %c0_159, %c0_160] : memref<3x256x512xf32, #tpu.memory_space<vmem>>, vector<1x256x512xf32>
    %706 = vector.shape_cast %705 : vector<1x256x512xf32> to vector<256x512xf32>
    %cst_161 = arith.constant dense<0.000000e+00> : vector<2x512xf32>
    %707 = tpu.matmul %704, %706, %cst_161 {dimension_numbers = #tpu.dot_dimension_numbers<[1], [0], [0], [1], [0, 0, 1, 1], [], []>} : vector<2x256xf32>, vector<256x512xf32>, vector<2x512xf32> -> vector<2x512xf32>
    %708 = vector.extract_strided_slice %0 {offsets = [3, 0], sizes = [1, 512], strides = [1, 1]} : vector<4x512xf32> to vector<1x512xf32>
    %709 = vector.broadcast %708 : vector<1x512xf32> to vector<2x512xf32>
    %710 = arith.addf %707, %709 : vector<2x512xf32>
    %711 = vector.extract_strided_slice %710 {offsets = [0, 0], sizes = [2, 384], strides = [1, 1]} : vector<2x512xf32> to vector<2x384xf32>
    %712 = arith.negf %711 : vector<2x384xf32>
    %713 = math.exp %712 : vector<2x384xf32>
    %cst_162 = arith.constant 1.000000e+00 : f32
    %714 = vector.broadcast %cst_162 : f32 to vector<2x384xf32>
    %715 = arith.addf %714, %713 : vector<2x384xf32>
    %716 = arith.divf %714, %715 : vector<2x384xf32>
    %717 = vector.extract_strided_slice %710 {offsets = [0, 384], sizes = [2, 128], strides = [1, 1]} : vector<2x512xf32> to vector<2x128xf32>
    %718 = math.tanh %717 : vector<2x128xf32>
    %719 = vector.extract_strided_slice %716 {offsets = [0, 0], sizes = [2, 128], strides = [1, 1]} : vector<2x384xf32> to vector<2x128xf32>
    %720 = vector.extract_strided_slice %716 {offsets = [0, 128], sizes = [2, 128], strides = [1, 1]} : vector<2x384xf32> to vector<2x128xf32>
    %721 = vector.extract_strided_slice %716 {offsets = [0, 256], sizes = [2, 128], strides = [1, 1]} : vector<2x384xf32> to vector<2x128xf32>
    %722 = arith.mulf %720, %701 : vector<2x128xf32>
    %723 = arith.mulf %719, %718 : vector<2x128xf32>
    %724 = arith.addf %722, %723 : vector<2x128xf32>
    %725 = math.tanh %724 : vector<2x128xf32>
    %726 = arith.mulf %721, %725 : vector<2x128xf32>
    %c0_163 = arith.constant 0 : index
    %c0_164 = arith.constant 0 : index
    %727 = vector.load %arg5[%c0_163, %c0_164] : memref<1x128xf32, #tpu.memory_space<vmem>>, vector<1x128xf32>
    %c0_165 = arith.constant 0 : index
    %c0_166 = arith.constant 0 : index
    %728 = vector.load %arg6[%c0_165, %c0_166] : memref<1x1xf32, #tpu.memory_space<vmem>>, vector<1x1xf32>
    %729 = vector.broadcast %727 : vector<1x128xf32> to vector<2x128xf32>
    %730 = arith.mulf %232, %729 : vector<2x128xf32>
    %cst_167 = arith.constant dense<0.000000e+00> : vector<2xf32>
    %731 = vector.multi_reduction <add>, %730, %cst_167 [1] : vector<2x128xf32> to vector<2xf32>
    %732 = vector.shape_cast %731 : vector<2xf32> to vector<2x1xf32>
    %733 = vector.broadcast %727 : vector<1x128xf32> to vector<2x128xf32>
    %734 = arith.mulf %321, %733 : vector<2x128xf32>
    %cst_168 = arith.constant dense<0.000000e+00> : vector<2xf32>
    %735 = vector.multi_reduction <add>, %734, %cst_168 [1] : vector<2x128xf32> to vector<2xf32>
    %736 = vector.shape_cast %735 : vector<2xf32> to vector<2x1xf32>
    %737 = vector.broadcast %727 : vector<1x128xf32> to vector<2x128xf32>
    %738 = arith.mulf %410, %737 : vector<2x128xf32>
    %cst_169 = arith.constant dense<0.000000e+00> : vector<2xf32>
    %739 = vector.multi_reduction <add>, %738, %cst_169 [1] : vector<2x128xf32> to vector<2xf32>
    %740 = vector.shape_cast %739 : vector<2xf32> to vector<2x1xf32>
    %741 = vector.broadcast %727 : vector<1x128xf32> to vector<2x128xf32>
    %742 = arith.mulf %499, %741 : vector<2x128xf32>
    %cst_170 = arith.constant dense<0.000000e+00> : vector<2xf32>
    %743 = vector.multi_reduction <add>, %742, %cst_170 [1] : vector<2x128xf32> to vector<2xf32>
    %744 = vector.shape_cast %743 : vector<2xf32> to vector<2x1xf32>
    %745 = vector.broadcast %727 : vector<1x128xf32> to vector<2x128xf32>
    %746 = arith.mulf %588, %745 : vector<2x128xf32>
    %cst_171 = arith.constant dense<0.000000e+00> : vector<2xf32>
    %747 = vector.multi_reduction <add>, %746, %cst_171 [1] : vector<2x128xf32> to vector<2xf32>
    %748 = vector.shape_cast %747 : vector<2xf32> to vector<2x1xf32>
    %749 = vector.broadcast %727 : vector<1x128xf32> to vector<2x128xf32>
    %750 = arith.mulf %657, %749 : vector<2x128xf32>
    %cst_172 = arith.constant dense<0.000000e+00> : vector<2xf32>
    %751 = vector.multi_reduction <add>, %750, %cst_172 [1] : vector<2x128xf32> to vector<2xf32>
    %752 = vector.shape_cast %751 : vector<2xf32> to vector<2x1xf32>
    %753 = vector.broadcast %727 : vector<1x128xf32> to vector<2x128xf32>
    %754 = arith.mulf %703, %753 : vector<2x128xf32>
    %cst_173 = arith.constant dense<0.000000e+00> : vector<2xf32>
    %755 = vector.multi_reduction <add>, %754, %cst_173 [1] : vector<2x128xf32> to vector<2xf32>
    %756 = vector.shape_cast %755 : vector<2xf32> to vector<2x1xf32>
    %757 = vector.broadcast %727 : vector<1x128xf32> to vector<2x128xf32>
    %758 = arith.mulf %726, %757 : vector<2x128xf32>
    %cst_174 = arith.constant dense<0.000000e+00> : vector<2xf32>
    %759 = vector.multi_reduction <add>, %758, %cst_174 [1] : vector<2x128xf32> to vector<2xf32>
    %760 = vector.shape_cast %759 : vector<2xf32> to vector<2x1xf32>
    %761 = tpu.concatenate %732, %736, %740, %744, %748, %752, %756, %760 in 1 : vector<2x1xf32>, vector<2x1xf32>, vector<2x1xf32>, vector<2x1xf32>, vector<2x1xf32>, vector<2x1xf32>, vector<2x1xf32>, vector<2x1xf32> -> vector<2x8xf32>
    %762 = vector.broadcast %728 : vector<1x1xf32> to vector<2x8xf32>
    %763 = arith.addf %761, %762 : vector<2x8xf32>
    %c0_175 = arith.constant 0 : index
    %c0_176 = arith.constant 0 : index
    %764 = vector.load %arg7[%c0_175, %c0_176] : memref<2x8xf32, #tpu.memory_space<vmem>>, vector<2x8xf32>
    tpu.vector_store %arg7[%c0_175, %c0_176], %763 {strides = array<i32>} : memref<2x8xf32, #tpu.memory_space<vmem>>, vector<2x8xf32>,
    return
  }
}

</mosaic_0001>

<llo_original>
// kernel: tpu_custom_call.1
$region0: #{tpu_custom_call.1}
  #allocation0 [shape = 'u32[]', space=smem, size = 0x4, offset = 0x4, fixed_abs, tag = 'smem constant byte address 0x4 - core index']
  #allocation1 [shape = 'u32[144,128]{1,0:T(1,128)}', space=vmem, size = 0x12000, scoped, tag = 'internal scratch']
  #allocation2 [shape = 'f32[1,1]{1,0:T(1,128)S(1)}', space=vmem, size = 0x200, scoped, tag = 'scoped memory for tpu_custom_call.1']
  %s0 = inlined_call_operand.vmem [shape: f32[16,7], index: 0, kind: input, shape index: {}]
  %s1 = inlined_call_operand.hbm [shape: f32[7,512], index: 1, kind: input, shape index: {}]
  %s2 = inlined_call_operand.hbm [shape: f32[128,512], index: 2, kind: input, shape index: {}]
  %s3 = inlined_call_operand.hbm [shape: f32[3,256,512], index: 3, kind: input, shape index: {}]
  %s4 = inlined_call_operand.hbm [shape: f32[4,512], index: 4, kind: input, shape index: {}]
  %s5 = inlined_call_operand.hbm [shape: f32[1,128], index: 5, kind: input, shape index: {}]
  %s6 = inlined_call_operand.<no memory space> [shape: f32[1,1], index: 6, kind: input, shape index: {}]
  %s7 = inlined_call_operand.hbm [shape: f32[2,8], index: 7, kind: output, shape index: {}]
  %s8 = sld [smem:[#allocation0]]
  $region58: #{tpu_custom_call.1} parent=0
    _
  %s10 = ssub.s32 1, %s8
  %s11 = scalar_select 0, %s10, %s8
  %v12 = vstv %s6
  %13 = vst [vmem:[#allocation2] sm:$0x1] %v12
  $region1: #{tpu_custom_call.1} parent=0
    #allocation3 [shape = 'u8[16384]{0}', space=vmem, size = 0x4000, scoped, tag = 'input window, operand 1, single buffered']
    #allocation4 [shape = 's32[1]{0}', space=sflag, size = 0x4, scoped, tag = 'scoped memory for tpu_custom_call.1']
    #allocation5 [shape = 's32[1]{0}', space=sflag, size = 0x4, scoped, tag = 'scoped memory for tpu_custom_call.1']
    #allocation6 [shape = 'u8[262144]{0}', space=vmem, size = 0x40000, scoped, tag = 'input window, operand 2, single buffered']
    #allocation7 [shape = 's32[1]{0}', space=sflag, size = 0x4, scoped, tag = 'scoped memory for tpu_custom_call.1']
    #allocation8 [shape = 'u8[1572864]{0}', space=vmem, size = 0x180000, scoped, tag = 'input window, operand 3, single buffered']
    #allocation9 [shape = 'u8[8192]{0}', space=vmem, size = 0x2000, scoped, tag = 'input window, operand 4, single buffered']
    #allocation10 [shape = 's32[1]{0}', space=sflag, size = 0x4, scoped, tag = 'scoped memory for tpu_custom_call.1']
    #allocation11 [shape = 'u8[512]{0}', space=vmem, size = 0x400, scoped, tag = 'input window, operand 5, single buffered']
    #allocation12 [shape = 'u8[1024]{0}', space=vmem, size = 0x400, scoped, tag = 'output window, operand 0, single buffered']
    %14 = vsyncpa [#allocation4], 0
    %15 = vsyncpa [#allocation7], 0
    %16 = vsyncpa [#allocation10], 0
    %17 = vsyncpa [#allocation5], 0
    // Predicated region
    $region2: #{tpu_custom_call.1} parent=1 // pred_check
      _
    $region3: #{tpu_custom_call.1} parent=1 // pred_check_branch
      %19 = sbr.rel (0) target = $region5
    $region4: #{tpu_custom_call.1} parent=1 // pred_region
      _
    $region5: #{tpu_custom_call.1} parent=1 // pred_fallthru
      _
    // Predicated region
    $region6: #{tpu_custom_call.1} parent=1 // pred_check
      _
    $region7: #{tpu_custom_call.1} parent=1 // pred_check_branch
      %21 = sbr.rel (0) target = $region9
    $region8: #{tpu_custom_call.1} parent=1 // pred_region
      %s23 = ssub.s32 512, 512
      %24 = vsyncadd [#allocation4], %s23
      %s26 = sshll.u32 [#allocation3], 4
      %s27 = int_to_ptr.vmem [resolvable:$true] %s26
      %29 = dma.hbm_to_vmem [thread:$0]  %s1, 512, %s27, [#allocation4]
    $region9: #{tpu_custom_call.1} parent=1 // pred_fallthru
      _
    // Predicated region
    $region10: #{tpu_custom_call.1} parent=1 // pred_check
      _
    $region11: #{tpu_custom_call.1} parent=1 // pred_check_branch
      %31 = sbr.rel (0) target = $region13
    $region12: #{tpu_custom_call.1} parent=1 // pred_region
      %s33 = ssub.s32 8192, 8192
      %34 = vsyncadd [#allocation7], %s33
      %s35 = sshll.u32 [#allocation6], 4
      %s36 = int_to_ptr.vmem [resolvable:$true] %s35
      %41 = dma.hbm_to_vmem [thread:$0]  %s2, 8192, %s36, [#allocation7], 512, 512, 32
    $region13: #{tpu_custom_call.1} parent=1 // pred_fallthru
      _
    // Predicated region
    $region14: #{tpu_custom_call.1} parent=1 // pred_check
      _
    $region15: #{tpu_custom_call.1} parent=1 // pred_check_branch
      %43 = sbr.rel (0) target = $region17
    $region16: #{tpu_custom_call.1} parent=1 // pred_region
      %s45 = ssub.s32 49152, 49152
      %46 = vsyncadd [#allocation7], %s45
      %s47 = sshll.u32 [#allocation8], 4
      %s48 = int_to_ptr.vmem [resolvable:$true] %s47
      %53 = dma.hbm_to_vmem [thread:$0]  %s3, 49152, %s48, [#allocation7], 512, 512, 32
    $region17: #{tpu_custom_call.1} parent=1 // pred_fallthru
      _
    // Predicated region
    $region18: #{tpu_custom_call.1} parent=1 // pred_check
      _
    $region19: #{tpu_custom_call.1} parent=1 // pred_check_branch
      %55 = sbr.rel (0) target = $region21
    $region20: #{tpu_custom_call.1} parent=1 // pred_region
      %s57 = ssub.s32 256, 256
      %58 = vsyncadd [#allocation10], %s57
      %s60 = sshll.u32 [#allocation9], 4
      %s61 = int_to_ptr.vmem [resolvable:$true] %s60
      %63 = dma.hbm_to_vmem [thread:$0]  %s4, 256, %s61, [#allocation10]
    $region21: #{tpu_custom_call.1} parent=1 // pred_fallthru
      _
    // Predicated region
    $region22: #{tpu_custom_call.1} parent=1 // pred_check
      _
    $region23: #{tpu_custom_call.1} parent=1 // pred_check_branch
      %65 = sbr.rel (0) target = $region25
    $region24: #{tpu_custom_call.1} parent=1 // pred_region
      %s67 = ssub.s32 16, 16
      %68 = vsyncadd [#allocation10], %s67
      %s70 = sshll.u32 [#allocation11], 4
      %s71 = int_to_ptr.vmem [resolvable:$true] %s70
      %73 = dma.hbm_to_vmem [thread:$0]  %s5, 16, %s71, [#allocation10]
    $region25: #{tpu_custom_call.1} parent=1 // pred_fallthru
      _
    // Predicated region
    $region26: #{tpu_custom_call.1} parent=1 // pred_check
      _
    $region27: #{tpu_custom_call.1} parent=1 // pred_check_branch
      %75 = sbr.rel (0) target = $region29
    $region28: #{tpu_custom_call.1} parent=1 // pred_region
      _
    $region29: #{tpu_custom_call.1} parent=1 // pred_fallthru
      _
    // Predicated region
    $region30: #{tpu_custom_call.1} parent=1 // pred_check
      _
    $region31: #{tpu_custom_call.1} parent=1 // pred_check_branch
      %77 = sbr.rel (0) target = $region33
    $region32: #{tpu_custom_call.1} parent=1 // pred_region
      %78 = dma.done [#allocation4], 512
    $region33: #{tpu_custom_call.1} parent=1 // pred_fallthru
      _
    // Predicated region
    $region34: #{tpu_custom_call.1} parent=1 // pred_check
      _
    $region35: #{tpu_custom_call.1} parent=1 // pred_check_branch
      %80 = sbr.rel (0) target = $region37
    $region36: #{tpu_custom_call.1} parent=1 // pred_region
      %81 = dma.done [#allocation7], 8192
    $region37: #{tpu_custom_call.1} parent=1 // pred_fallthru
      _
    // Predicated region
    $region38: #{tpu_custom_call.1} parent=1 // pred_check
      _
    $region39: #{tpu_custom_call.1} parent=1 // pred_check_branch
      %83 = sbr.rel (0) target = $region41
    $region40: #{tpu_custom_call.1} parent=1 // pred_region
      %84 = dma.done [#allocation7], 49152
    $region41: #{tpu_custom_call.1} parent=1 // pred_fallthru
      _
    // Predicated region
    $region42: #{tpu_custom_call.1} parent=1 // pred_check
      _
    $region43: #{tpu_custom_call.1} parent=1 // pred_check_branch
      %86 = sbr.rel (0) target = $region45
    $region44: #{tpu_custom_call.1} parent=1 // pred_region
      %87 = dma.done [#allocation10], 256
    $region45: #{tpu_custom_call.1} parent=1 // pred_fallthru
      _
    // Predicated region
    $region46: #{tpu_custom_call.1} parent=1 // pred_check
      _
    $region47: #{tpu_custom_call.1} parent=1 // pred_check_branch
      %89 = sbr.rel (0) target = $region49
    $region48: #{tpu_custom_call.1} parent=1 // pred_region
      %90 = dma.done [#allocation10], 16
    $region49: #{tpu_custom_call.1} parent=1 // pred_fallthru
      _
    %v91 = vld [vmem:[#allocation9] sm:$0xff]
    %v92 = vld [vmem:[#allocation9 + $0x8] sm:$0xff]
    %v93 = vld [vmem:[%s0] sm:$0xff]
    %v94 = vld [vmem:[%s0 + $0x8] sm:$0xff]
    %v95 = vld [vmem:[#allocation3] sm:$0x7f]
    %v96 = vld [vmem:[#allocation3 + $0x8] sm:$0x7f]
    %v97 = vld [vmem:[#allocation3 + $0x10] sm:$0x7f]
    %v98 = vld [vmem:[#allocation3 + $0x18] sm:$0x7f]
    %v101 = vlaneseq
    %v102 = vshrl.u32 %v101, 7
    %v103 = vsub.s32 0, %v102
    %v104 = vrot.slane %v91, %v103
    %v105 = vlaneseq
    %v106 = vshrl.u32 %v105, 7
    %v107 = vsub.s32 4, %v106
    %v108 = vrot.slane %v91, %v107
    %v109 = vlaneseq
    %v110 = vshrl.u32 %v109, 7
    %v111 = vsub.s32 0, %v110
    %v112 = vrot.slane %v92, %v111
    %v113 = vlaneseq
    %v114 = vshrl.u32 %v113, 7
    %v115 = vsub.s32 4, %v114
    %v116 = vrot.slane %v92, %v115
    %v121 = vlaneseq
    %v122 = vshrl.u32 %v121, 7
    %v123 = vsub.s32 0, %v122
    %v124 = vrot.slane %v104, %v123
    %v125 = vlaneseq
    %v126 = vshrl.u32 %v125, 7
    %v127 = vsub.s32 0, %v126
    %v128 = vrot.slane %v108, %v127
    %v129 = vlaneseq
    %v130 = vshrl.u32 %v129, 7
    %v131 = vsub.s32 0, %v130
    %v132 = vrot.slane %v112, %v131
    %v133 = vlaneseq
    %v134 = vshrl.u32 %v133, 7
    %v135 = vsub.s32 0, %v134
    %v136 = vrot.slane %v116, %v135
    %vm137 = vcmask 56320
    %v139 = vsel %vm137, %v93, 0
    %v142 = vsel %vm137, %v94, 0
    %vm144 = vcmask 1046528
    %v146 = vsel %vm144, %v95, 0
    %v149 = vsel %vm144, %v96, 0
    %v152 = vsel %vm144, %v97, 0
    %v155 = vsel %vm144, %v98, 0
    %157 = vmatprep.subr.mxu0 %v149
    %158 = vmatpush1.msra.mxu0 %v146
    %159 = vmatprep.subr.mxu0 0.0
    %160 = vmatpush1.msra.mxu0 0.0
    %161 = vmatprep.subr.mxu0 0.0
    %162 = vmatpush1.msra.mxu0 0.0
    %163 = vmatprep.subr.mxu0 0.0
    %164 = vmatpush1.msra.mxu0 0.0
    %165 = vmatprep.subr.mxu0 0.0
    %166 = vmatpush1.msra.mxu0 0.0
    %167 = vmatprep.subr.mxu0 0.0
    %168 = vmatpush1.msra.mxu0 0.0
    %169 = vmatprep.subr.mxu0 0.0
    %170 = vmatpush1.msra.mxu0 0.0
    %171 = vmatprep.subr.mxu0 0.0
    %172 = vmatpush1.msra.mxu0 0.0
    %173 = vmatprep.subr.mxu0 0.0
    %174 = vmatpush1.msra.mxu0 0.0
    %175 = vmatprep.subr.mxu0 0.0
    %176 = vmatpush1.msra.mxu0 0.0
    %177 = vmatprep.subr.mxu0 0.0
    %178 = vmatpush1.msra.mxu0 0.0
    %179 = vmatprep.subr.mxu0 0.0
    %180 = vmatpush1.msra.mxu0 0.0
    %181 = vmatprep.subr.mxu0 0.0
    %182 = vmatpush1.msra.mxu0 0.0
    %183 = vmatprep.subr.mxu0 0.0
    %184 = vmatpush1.msra.mxu0 0.0
    %185 = vmatprep.subr.mxu0 0.0
    %186 = vmatpush1.msra.mxu0 0.0
    %187 = vmatprep.subr.mxu0 0.0
    %188 = vmatpush1.msra.mxu0 0.0
    %189 = vmatprep.subr.mxu0 0.0
    %190 = vmatpush1.msra.mxu0 0.0
    %191 = vmatprep.subr.mxu0 0.0
    %192 = vmatpush1.msra.mxu0 0.0
    %193 = vmatprep.subr.mxu0 0.0
    %194 = vmatpush1.msra.mxu0 0.0
    %195 = vmatprep.subr.mxu0 0.0
    %196 = vmatpush1.msra.mxu0 0.0
    %197 = vmatprep.subr.mxu0 0.0
    %198 = vmatpush1.msra.mxu0 0.0
    %199 = vmatprep.subr.mxu0 0.0
    %200 = vmatpush1.msra.mxu0 0.0
    %201 = vmatprep.subr.mxu0 0.0
    %202 = vmatpush1.msra.mxu0 0.0
    %203 = vmatprep.subr.mxu0 0.0
    %204 = vmatpush1.msra.mxu0 0.0
    %205 = vmatprep.subr.mxu0 0.0
    %206 = vmatpush1.msra.mxu0 0.0
    %207 = vmatprep.subr.mxu0 0.0
    %208 = vmatpush1.msra.mxu0 0.0
    %209 = vmatprep.subr.mxu0 0.0
    %210 = vmatpush1.msra.mxu0 0.0
    %211 = vmatprep.subr.mxu0 0.0
    %212 = vmatpush1.msra.mxu0 0.0
    %213 = vmatprep.subr.mxu0 0.0
    %214 = vmatpush1.msra.mxu0 0.0
    %215 = vmatprep.subr.mxu0 0.0
    %216 = vmatpush1.msra.mxu0 0.0
    %217 = vmatprep.subr.mxu0 0.0
    %218 = vmatpush1.msra.mxu0 0.0
    %219 = vmatprep.subr.mxu0 0.0
    %220 = vmatpush1.msra.mxu0 0.0
    %221 = vmatprep.mubr.f32.mxu0 0.0
    %222 = vmatmul.mubr.f32.gmra.mrb[0].mxu0 %v139
    %v223 = vpop.f32.mrb[0].mxu0
    %v224 = vadd.f32 %v124, %v223
    %v225 = vpop.f32.mrb[0].mxu0
    %v226 = vadd.f32 %v128, %v225
    %227 = vmatprep.mubr.f32.mxu0 0.0
    %228 = vmatmul.mubr.f32.gmra.mrb[0].mxu0 %v142
    %v229 = vpop.f32.mrb[0].mxu0
    %v230 = vadd.f32 %v124, %v229
    %v231 = vpop.f32.mrb[0].mxu0
    %v232 = vadd.f32 %v128, %v231
    %233 = vdwg.mxu0
    %234 = vmatprep.subr.mxu0 %v155
    %235 = vmatpush1.msra.mxu0 %v152
    %236 = vmatprep.subr.mxu0 0.0
    %237 = vmatpush1.msra.mxu0 0.0
    %238 = vmatprep.subr.mxu0 0.0
    %239 = vmatpush1.msra.mxu0 0.0
    %240 = vmatprep.subr.mxu0 0.0
    %241 = vmatpush1.msra.mxu0 0.0
    %242 = vmatprep.subr.mxu0 0.0
    %243 = vmatpush1.msra.mxu0 0.0
    %244 = vmatprep.subr.mxu0 0.0
    %245 = vmatpush1.msra.mxu0 0.0
    %246 = vmatprep.subr.mxu0 0.0
    %247 = vmatpush1.msra.mxu0 0.0
    %248 = vmatprep.subr.mxu0 0.0
    %249 = vmatpush1.msra.mxu0 0.0
    %250 = vmatprep.subr.mxu0 0.0
    %251 = vmatpush1.msra.mxu0 0.0
    %252 = vmatprep.subr.mxu0 0.0
    %253 = vmatpush1.msra.mxu0 0.0
    %254 = vmatprep.subr.mxu0 0.0
    %255 = vmatpush1.msra.mxu0 0.0
    %256 = vmatprep.subr.mxu0 0.0
    %257 = vmatpush1.msra.mxu0 0.0
    %258 = vmatprep.subr.mxu0 0.0
    %259 = vmatpush1.msra.mxu0 0.0
    %260 = vmatprep.subr.mxu0 0.0
    %261 = vmatpush1.msra.mxu0 0.0
    %262 = vmatprep.subr.mxu0 0.0
    %263 = vmatpush1.msra.mxu0 0.0
    %264 = vmatprep.subr.mxu0 0.0
    %265 = vmatpush1.msra.mxu0 0.0
    %266 = vmatprep.subr.mxu0 0.0
    %267 = vmatpush1.msra.mxu0 0.0
    %268 = vmatprep.subr.mxu0 0.0
    %269 = vmatpush1.msra.mxu0 0.0
    %270 = vmatprep.subr.mxu0 0.0
    %271 = vmatpush1.msra.mxu0 0.0
    %272 = vmatprep.subr.mxu0 0.0
    %273 = vmatpush1.msra.mxu0 0.0
    %274 = vmatprep.subr.mxu0 0.0
    %275 = vmatpush1.msra.mxu0 0.0
    %276 = vmatprep.subr.mxu0 0.0
    %277 = vmatpush1.msra.mxu0 0.0
    %278 = vmatprep.subr.mxu0 0.0
    %279 = vmatpush1.msra.mxu0 0.0
    %280 = vmatprep.subr.mxu0 0.0
    %281 = vmatpush1.msra.mxu0 0.0
    %282 = vmatprep.subr.mxu0 0.0
    %283 = vmatpush1.msra.mxu0 0.0
    %284 = vmatprep.subr.mxu0 0.0
    %285 = vmatpush1.msra.mxu0 0.0
    %286 = vmatprep.subr.mxu0 0.0
    %287 = vmatpush1.msra.mxu0 0.0
    %288 = vmatprep.subr.mxu0 0.0
    %289 = vmatpush1.msra.mxu0 0.0
    %290 = vmatprep.subr.mxu0 0.0
    %291 = vmatpush1.msra.mxu0 0.0
    %292 = vmatprep.subr.mxu0 0.0
    %293 = vmatpush1.msra.mxu0 0.0
    %294 = vmatprep.subr.mxu0 0.0
    %295 = vmatpush1.msra.mxu0 0.0
    %296 = vmatprep.subr.mxu0 0.0
    %297 = vmatpush1.msra.mxu0 0.0
    %298 = vmatprep.mubr.f32.mxu0 0.0
    %299 = vmatmul.mubr.f32.gmra.mrb[0].mxu0 %v139
    %v300 = vpop.f32.mrb[0].mxu0
    %v301 = vadd.f32 %v132, %v300
    %v302 = vpop.f32.mrb[0].mxu0
    %v303 = vadd.f32 %v136, %v302
    %304 = vmatprep.mubr.f32.mxu0 0.0
    %305 = vmatmul.mubr.f32.gmra.mrb[0].mxu0 %v142
    %v306 = vpop.f32.mrb[0].mxu0
    %v307 = vadd.f32 %v132, %v306
    %v308 = vpop.f32.mrb[0].mxu0
    %v309 = vadd.f32 %v136, %v308
    %310 = vdwg.mxu0
    %v311 = vld [vmem:[#allocation6] sm:$0xff]
    %v312 = vld [vmem:[#allocation6 + $0x8] sm:$0xff]
    %v313 = vld [vmem:[#allocation6 + $0x10] sm:$0xff]
    %v314 = vld [vmem:[#allocation6 + $0x18] sm:$0xff]
    %v315 = vld [vmem:[#allocation6 + $0x20] sm:$0xff]
    %v316 = vld [vmem:[#allocation6 + $0x28] sm:$0xff]
    %v317 = vld [vmem:[#allocation6 + $0x30] sm:$0xff]
    %v318 = vld [vmem:[#allocation6 + $0x38] sm:$0xff]
    %v319 = vld [vmem:[#allocation6 + $0x40] sm:$0xff]
    %v320 = vld [vmem:[#allocation6 + $0x48] sm:$0xff]
    %v321 = vld [vmem:[#allocation6 + $0x50] sm:$0xff]
    %v322 = vld [vmem:[#allocation6 + $0x58] sm:$0xff]
    %v323 = vld [vmem:[#allocation6 + $0x60] sm:$0xff]
    %v324 = vld [vmem:[#allocation6 + $0x68] sm:$0xff]
    %v325 = vld [vmem:[#allocation6 + $0x70] sm:$0xff]
    %v326 = vld [vmem:[#allocation6 + $0x78] sm:$0xff]
    %v327 = vld [vmem:[#allocation6 + $0x80] sm:$0xff]
    %v328 = vld [vmem:[#allocation6 + $0x88] sm:$0xff]
    %v329 = vld [vmem:[#allocation6 + $0x90] sm:$0xff]
    %v330 = vld [vmem:[#allocation6 + $0x98] sm:$0xff]
    %v331 = vld [vmem:[#allocation6 + $0xa0] sm:$0xff]
    %v332 = vld [vmem:[#allocation6 + $0xa8] sm:$0xff]
    %v333 = vld [vmem:[#allocation6 + $0xb0] sm:$0xff]
    %v334 = vld [vmem:[#allocation6 + $0xb8] sm:$0xff]
    %v335 = vld [vmem:[#allocation6 + $0xc0] sm:$0xff]
    %v336 = vld [vmem:[#allocation6 + $0xc8] sm:$0xff]
    %v337 = vld [vmem:[#allocation6 + $0xd0] sm:$0xff]
    %v338 = vld [vmem:[#allocation6 + $0xd8] sm:$0xff]
    %v339 = vld [vmem:[#allocation6 + $0xe0] sm:$0xff]
    %v340 = vld [vmem:[#allocation6 + $0xe8] sm:$0xff]
    %v341 = vld [vmem:[#allocation6 + $0xf0] sm:$0xff]
    %v342 = vld [vmem:[#allocation6 + $0xf8] sm:$0xff]
    %v343 = vld [vmem:[#allocation6 + $0x100] sm:$0xff]
    %v344 = vld [vmem:[#allocation6 + $0x108] sm:$0xff]
    %v345 = vld [vmem:[#allocation6 + $0x110] sm:$0xff]
    %v346 = vld [vmem:[#allocation6 + $0x118] sm:$0xff]
    %v347 = vld [vmem:[#allocation6 + $0x120] sm:$0xff]
    %v348 = vld [vmem:[#allocation6 + $0x128] sm:$0xff]
    %v349 = vld [vmem:[#allocation6 + $0x130] sm:$0xff]
    %v350 = vld [vmem:[#allocation6 + $0x138] sm:$0xff]
    %v351 = vld [vmem:[#allocation6 + $0x140] sm:$0xff]
    %v352 = vld [vmem:[#allocation6 + $0x148] sm:$0xff]
    %v353 = vld [vmem:[#allocation6 + $0x150] sm:$0xff]
    %v354 = vld [vmem:[#allocation6 + $0x158] sm:$0xff]
    %v355 = vld [vmem:[#allocation6 + $0x160] sm:$0xff]
    %v356 = vld [vmem:[#allocation6 + $0x168] sm:$0xff]
    %v357 = vld [vmem:[#allocation6 + $0x170] sm:$0xff]
    %v358 = vld [vmem:[#allocation6 + $0x178] sm:$0xff]
    %v359 = vld [vmem:[#allocation6 + $0x180] sm:$0xff]
    %v360 = vld [vmem:[#allocation6 + $0x188] sm:$0xff]
    %v361 = vld [vmem:[#allocation6 + $0x190] sm:$0xff]
    %v362 = vld [vmem:[#allocation6 + $0x198] sm:$0xff]
    %v363 = vld [vmem:[#allocation6 + $0x1a0] sm:$0xff]
    %v364 = vld [vmem:[#allocation6 + $0x1a8] sm:$0xff]
    %v365 = vld [vmem:[#allocation6 + $0x1b0] sm:$0xff]
    %v366 = vld [vmem:[#allocation6 + $0x1b8] sm:$0xff]
    %v367 = vld [vmem:[#allocation6 + $0x1c0] sm:$0xff]
    %v368 = vld [vmem:[#allocation6 + $0x1c8] sm:$0xff]
    %v369 = vld [vmem:[#allocation6 + $0x1d0] sm:$0xff]
    %v370 = vld [vmem:[#allocation6 + $0x1d8] sm:$0xff]
    %v371 = vld [vmem:[#allocation6 + $0x1e0] sm:$0xff]
    %v372 = vld [vmem:[#allocation6 + $0x1e8] sm:$0xff]
    %v373 = vld [vmem:[#allocation6 + $0x1f0] sm:$0xff]
    %v374 = vld [vmem:[#allocation6 + $0x1f8] sm:$0xff]
    %375 = vmatprep.subr.mxu0 %v312
    %376 = vmatpush1.msra.mxu0 %v311
    %377 = vmatprep.subr.mxu0 %v316
    %378 = vmatpush1.msra.mxu0 %v315
    %379 = vmatprep.subr.mxu0 %v320
    %380 = vmatpush1.msra.mxu0 %v319
    %381 = vmatprep.subr.mxu0 %v324
    %382 = vmatpush1.msra.mxu0 %v323
    %383 = vmatprep.subr.mxu0 %v328
    %384 = vmatpush1.msra.mxu0 %v327
    %385 = vmatprep.subr.mxu0 %v332
    %386 = vmatpush1.msra.mxu0 %v331
    %387 = vmatprep.subr.mxu0 %v336
    %388 = vmatpush1.msra.mxu0 %v335
    %389 = vmatprep.subr.mxu0 %v340
    %390 = vmatpush1.msra.mxu0 %v339
    %391 = vmatprep.subr.mxu0 %v344
    %392 = vmatpush1.msra.mxu0 %v343
    %393 = vmatprep.subr.mxu0 %v348
    %394 = vmatpush1.msra.mxu0 %v347
    %395 = vmatprep.subr.mxu0 %v352
    %396 = vmatpush1.msra.mxu0 %v351
    %397 = vmatprep.subr.mxu0 %v356
    %398 = vmatpush1.msra.mxu0 %v355
    %399 = vmatprep.subr.mxu0 %v360
    %400 = vmatpush1.msra.mxu0 %v359
    %401 = vmatprep.subr.mxu0 %v364
    %402 = vmatpush1.msra.mxu0 %v363
    %403 = vmatprep.subr.mxu0 %v368
    %404 = vmatpush1.msra.mxu0 %v367
    %405 = vmatprep.subr.mxu0 %v372
    %406 = vmatpush1.msra.mxu0 %v371
    %407 = vmatprep.subr.mxu0 0.0
    %408 = vmatpush1.msra.mxu0 0.0
    %409 = vmatprep.subr.mxu0 0.0
    %410 = vmatpush1.msra.mxu0 0.0
    %411 = vmatprep.subr.mxu0 0.0
    %412 = vmatpush1.msra.mxu0 0.0
    %413 = vmatprep.subr.mxu0 0.0
    %414 = vmatpush1.msra.mxu0 0.0
    %415 = vmatprep.subr.mxu0 0.0
    %416 = vmatpush1.msra.mxu0 0.0
    %417 = vmatprep.subr.mxu0 0.0
    %418 = vmatpush1.msra.mxu0 0.0
    %419 = vmatprep.subr.mxu0 0.0
    %420 = vmatpush1.msra.mxu0 0.0
    %421 = vmatprep.subr.mxu0 0.0
    %422 = vmatpush1.msra.mxu0 0.0
    %423 = vmatprep.subr.mxu0 0.0
    %424 = vmatpush1.msra.mxu0 0.0
    %425 = vmatprep.subr.mxu0 0.0
    %426 = vmatpush1.msra.mxu0 0.0
    %427 = vmatprep.subr.mxu0 0.0
    %428 = vmatpush1.msra.mxu0 0.0
    %429 = vmatprep.subr.mxu0 0.0
    %430 = vmatpush1.msra.mxu0 0.0
    %431 = vmatprep.subr.mxu0 0.0
    %432 = vmatpush1.msra.mxu0 0.0
    %433 = vmatprep.subr.mxu0 0.0
    %434 = vmatpush1.msra.mxu0 0.0
    %435 = vmatprep.subr.mxu0 0.0
    %436 = vmatpush1.msra.mxu0 0.0
    %437 = vmatprep.subr.mxu0 0.0
    %438 = vmatpush1.msra.mxu0 0.0
    %439 = vmatprep.mubr.f32.mxu0 0.0
    %440 = vmatmul.mubr.f32.gmra.mrb[0].mxu0 0.0
    %v441 = vpop.f32.mrb[0].mxu0
    %v442 = vadd.f32 0.0, %v441
    %v443 = vpop.f32.mrb[0].mxu0
    %v444 = vadd.f32 0.0, %v443
    %445 = vdwg.mxu0
    %446 = vmatprep.subr.mxu0 %v314
    %447 = vmatpush1.msra.mxu0 %v313
    %448 = vmatprep.subr.mxu0 %v318
    %449 = vmatpush1.msra.mxu0 %v317
    %450 = vmatprep.subr.mxu0 %v322
    %451 = vmatpush1.msra.mxu0 %v321
    %452 = vmatprep.subr.mxu0 %v326
    %453 = vmatpush1.msra.mxu0 %v325
    %454 = vmatprep.subr.mxu0 %v330
    %455 = vmatpush1.msra.mxu0 %v329
    %456 = vmatprep.subr.mxu0 %v334
    %457 = vmatpush1.msra.mxu0 %v333
    %458 = vmatprep.subr.mxu0 %v338
    %459 = vmatpush1.msra.mxu0 %v337
    %460 = vmatprep.subr.mxu0 %v342
    %461 = vmatpush1.msra.mxu0 %v341
    %462 = vmatprep.subr.mxu0 %v346
    %463 = vmatpush1.msra.mxu0 %v345
    %464 = vmatprep.subr.mxu0 %v350
    %465 = vmatpush1.msra.mxu0 %v349
    %466 = vmatprep.subr.mxu0 %v354
    %467 = vmatpush1.msra.mxu0 %v353
    %468 = vmatprep.subr.mxu0 %v358
    %469 = vmatpush1.msra.mxu0 %v357
    %470 = vmatprep.subr.mxu0 %v362
    %471 = vmatpush1.msra.mxu0 %v361
    %472 = vmatprep.subr.mxu0 %v366
    %473 = vmatpush1.msra.mxu0 %v365
    %474 = vmatprep.subr.mxu0 %v370
    %475 = vmatpush1.msra.mxu0 %v369
    %476 = vmatprep.subr.mxu0 %v374
    %477 = vmatpush1.msra.mxu0 %v373
    %478 = vmatprep.subr.mxu0 0.0
    %479 = vmatpush1.msra.mxu0 0.0
    %480 = vmatprep.subr.mxu0 0.0
    %481 = vmatpush1.msra.mxu0 0.0
    %482 = vmatprep.subr.mxu0 0.0
    %483 = vmatpush1.msra.mxu0 0.0
    %484 = vmatprep.subr.mxu0 0.0
    %485 = vmatpush1.msra.mxu0 0.0
    %486 = vmatprep.subr.mxu0 0.0
    %487 = vmatpush1.msra.mxu0 0.0
    %488 = vmatprep.subr.mxu0 0.0
    %489 = vmatpush1.msra.mxu0 0.0
    %490 = vmatprep.subr.mxu0 0.0
    %491 = vmatpush1.msra.mxu0 0.0
    %492 = vmatprep.subr.mxu0 0.0
    %493 = vmatpush1.msra.mxu0 0.0
    %494 = vmatprep.subr.mxu0 0.0
    %495 = vmatpush1.msra.mxu0 0.0
    %496 = vmatprep.subr.mxu0 0.0
    %497 = vmatpush1.msra.mxu0 0.0
    %498 = vmatprep.subr.mxu0 0.0
    %499 = vmatpush1.msra.mxu0 0.0
    %500 = vmatprep.subr.mxu0 0.0
    %501 = vmatpush1.msra.mxu0 0.0
    %502 = vmatprep.subr.mxu0 0.0
    %503 = vmatpush1.msra.mxu0 0.0
    %504 = vmatprep.subr.mxu0 0.0
    %505 = vmatpush1.msra.mxu0 0.0
    %506 = vmatprep.subr.mxu0 0.0
    %507 = vmatpush1.msra.mxu0 0.0
    %508 = vmatprep.subr.mxu0 0.0
    %509 = vmatpush1.msra.mxu0 0.0
    %510 = vmatprep.mubr.f32.mxu0 0.0
    %511 = vmatmul.mubr.f32.gmra.mrb[0].mxu0 0.0
    %v512 = vpop.f32.mrb[0].mxu0
    %v513 = vadd.f32 0.0, %v512
    %v514 = vpop.f32.mrb[0].mxu0
    %v515 = vadd.f32 0.0, %v514
    %516 = vdwg.mxu0
    %v517 = vadd.f32 %v224, %v442
    %v518 = vadd.f32 %v226, %v444
    %v519 = vadd.f32 %v301, %v513
    %v520 = vadd.f32 %v303, %v515
    %v521 = vxor.u32 %v517, 2147483648
    %v522 = vxor.u32 %v518, 2147483648
    %v523 = vxor.u32 %v519, 2147483648
    %v524 = vmul.f32 %v521, 1.442695
    %v525 = vpow.pop %v524
    %v526 = vmul.f32 %v522, 1.442695
    %v527 = vpow.pop %v526
    %v528 = vmul.f32 %v523, 1.442695
    %v529 = vpow.pop %v528
    %v530 = vadd.f32 %v525, 1.0
    %v531 = vadd.f32 %v527, 1.0
    %v532 = vadd.f32 %v529, 1.0
    %v533 = vrcp.pop %v530
    %v534 = vmul.f32 1.0, %v533
    %v535 = vrcp.pop %v531
    %v536 = vmul.f32 1.0, %v535
    %v537 = vrcp.pop %v532
    %v538 = vmul.f32 1.0, %v537
    %v539 = vtanh.pop %v520
    %v540 = vmul.f32 %v536, 0.0
    %v541 = vmul.f32 %v534, %v539
    %v542 = vadd.f32 %v540, %v541
    %v543 = vtanh.pop %v542
    %v544 = vmul.f32 %v538, %v543
    %545 = vmatprep.subr.mxu0 %v312
    %546 = vmatpush1.msra.mxu0 %v311
    %547 = vmatprep.subr.mxu0 %v316
    %548 = vmatpush1.msra.mxu0 %v315
    %549 = vmatprep.subr.mxu0 %v320
    %550 = vmatpush1.msra.mxu0 %v319
    %551 = vmatprep.subr.mxu0 %v324
    %552 = vmatpush1.msra.mxu0 %v323
    %553 = vmatprep.subr.mxu0 %v328
    %554 = vmatpush1.msra.mxu0 %v327
    %555 = vmatprep.subr.mxu0 %v332
    %556 = vmatpush1.msra.mxu0 %v331
    %557 = vmatprep.subr.mxu0 %v336
    %558 = vmatpush1.msra.mxu0 %v335
    %559 = vmatprep.subr.mxu0 %v340
    %560 = vmatpush1.msra.mxu0 %v339
    %561 = vmatprep.subr.mxu0 %v344
    %562 = vmatpush1.msra.mxu0 %v343
    %563 = vmatprep.subr.mxu0 %v348
    %564 = vmatpush1.msra.mxu0 %v347
    %565 = vmatprep.subr.mxu0 %v352
    %566 = vmatpush1.msra.mxu0 %v351
    %567 = vmatprep.subr.mxu0 %v356
    %568 = vmatpush1.msra.mxu0 %v355
    %569 = vmatprep.subr.mxu0 %v360
    %570 = vmatpush1.msra.mxu0 %v359
    %571 = vmatprep.subr.mxu0 %v364
    %572 = vmatpush1.msra.mxu0 %v363
    %573 = vmatprep.subr.mxu0 %v368
    %574 = vmatpush1.msra.mxu0 %v367
    %575 = vmatprep.subr.mxu0 %v372
    %576 = vmatpush1.msra.mxu0 %v371
    %577 = vmatprep.subr.mxu0 0.0
    %578 = vmatpush1.msra.mxu0 0.0
    %579 = vmatprep.subr.mxu0 0.0
    %580 = vmatpush1.msra.mxu0 0.0
    %581 = vmatprep.subr.mxu0 0.0
    %582 = vmatpush1.msra.mxu0 0.0
    %583 = vmatprep.subr.mxu0 0.0
    %584 = vmatpush1.msra.mxu0 0.0
    %585 = vmatprep.subr.mxu0 0.0
    %586 = vmatpush1.msra.mxu0 0.0
    %587 = vmatprep.subr.mxu0 0.0
    %588 = vmatpush1.msra.mxu0 0.0
    %589 = vmatprep.subr.mxu0 0.0
    %590 = vmatpush1.msra.mxu0 0.0
    %591 = vmatprep.subr.mxu0 0.0
    %592 = vmatpush1.msra.mxu0 0.0
    %593 = vmatprep.subr.mxu0 0.0
    %594 = vmatpush1.msra.mxu0 0.0
    %595 = vmatprep.subr.mxu0 0.0
    %596 = vmatpush1.msra.mxu0 0.0
    %597 = vmatprep.subr.mxu0 0.0
    %598 = vmatpush1.msra.mxu0 0.0
    %599 = vmatprep.subr.mxu0 0.0
    %600 = vmatpush1.msra.mxu0 0.0
    %601 = vmatprep.subr.mxu0 0.0
    %602 = vmatpush1.msra.mxu0 0.0
    %603 = vmatprep.subr.mxu0 0.0
    %604 = vmatpush1.msra.mxu0 0.0
    %605 = vmatprep.subr.mxu0 0.0
    %606 = vmatpush1.msra.mxu0 0.0
    %607 = vmatprep.subr.mxu0 0.0
    %608 = vmatpush1.msra.mxu0 0.0
    %609 = vmatprep.mubr.f32.mxu0 0.0
    %610 = vmatmul.mubr.f32.gmra.mrb[0].mxu0 %v544
    %v611 = vpop.f32.mrb[0].mxu0
    %v612 = vadd.f32 0.0, %v611
    %v613 = vpop.f32.mrb[0].mxu0
    %v614 = vadd.f32 0.0, %v613
    %615 = vdwg.mxu0
    %616 = vmatprep.subr.mxu0 %v314
    %617 = vmatpush1.msra.mxu0 %v313
    %618 = vmatprep.subr.mxu0 %v318
    %619 = vmatpush1.msra.mxu0 %v317
    %620 = vmatprep.subr.mxu0 %v322
    %621 = vmatpush1.msra.mxu0 %v321
    %622 = vmatprep.subr.mxu0 %v326
    %623 = vmatpush1.msra.mxu0 %v325
    %624 = vmatprep.subr.mxu0 %v330
    %625 = vmatpush1.msra.mxu0 %v329
    %626 = vmatprep.subr.mxu0 %v334
    %627 = vmatpush1.msra.mxu0 %v333
    %628 = vmatprep.subr.mxu0 %v338
    %629 = vmatpush1.msra.mxu0 %v337
    %630 = vmatprep.subr.mxu0 %v342
    %631 = vmatpush1.msra.mxu0 %v341
    %632 = vmatprep.subr.mxu0 %v346
    %633 = vmatpush1.msra.mxu0 %v345
    %634 = vmatprep.subr.mxu0 %v350
    %635 = vmatpush1.msra.mxu0 %v349
    %636 = vmatprep.subr.mxu0 %v354
    %637 = vmatpush1.msra.mxu0 %v353
    %638 = vmatprep.subr.mxu0 %v358
    %639 = vmatpush1.msra.mxu0 %v357
    %640 = vmatprep.subr.mxu0 %v362
    %641 = vmatpush1.msra.mxu0 %v361
    %642 = vmatprep.subr.mxu0 %v366
    %643 = vmatpush1.msra.mxu0 %v365
    %644 = vmatprep.subr.mxu0 %v370
    %645 = vmatpush1.msra.mxu0 %v369
    %646 = vmatprep.subr.mxu0 %v374
    %647 = vmatpush1.msra.mxu0 %v373
    %648 = vmatprep.subr.mxu0 0.0
    %649 = vmatpush1.msra.mxu0 0.0
    %650 = vmatprep.subr.mxu0 0.0
    %651 = vmatpush1.msra.mxu0 0.0
    %652 = vmatprep.subr.mxu0 0.0
    %653 = vmatpush1.msra.mxu0 0.0
    %654 = vmatprep.subr.mxu0 0.0
    %655 = vmatpush1.msra.mxu0 0.0
    %656 = vmatprep.subr.mxu0 0.0
    %657 = vmatpush1.msra.mxu0 0.0
    %658 = vmatprep.subr.mxu0 0.0
    %659 = vmatpush1.msra.mxu0 0.0
    %660 = vmatprep.subr.mxu0 0.0
    %661 = vmatpush1.msra.mxu0 0.0
    %662 = vmatprep.subr.mxu0 0.0
    %663 = vmatpush1.msra.mxu0 0.0
    %664 = vmatprep.subr.mxu0 0.0
    %665 = vmatpush1.msra.mxu0 0.0
    %666 = vmatprep.subr.mxu0 0.0
    %667 = vmatpush1.msra.mxu0 0.0
    %668 = vmatprep.subr.mxu0 0.0
    %669 = vmatpush1.msra.mxu0 0.0
    %670 = vmatprep.subr.mxu0 0.0
    %671 = vmatpush1.msra.mxu0 0.0
    %672 = vmatprep.subr.mxu0 0.0
    %673 = vmatpush1.msra.mxu0 0.0
    %674 = vmatprep.subr.mxu0 0.0
    %675 = vmatpush1.msra.mxu0 0.0
    %676 = vmatprep.subr.mxu0 0.0
    %677 = vmatpush1.msra.mxu0 0.0
    %678 = vmatprep.subr.mxu0 0.0
    %679 = vmatpush1.msra.mxu0 0.0
    %680 = vmatprep.mubr.f32.mxu0 0.0
    %681 = vmatmul.mubr.f32.gmra.mrb[0].mxu0 %v544
    %v682 = vpop.f32.mrb[0].mxu0
    %v683 = vadd.f32 0.0, %v682
    %v684 = vpop.f32.mrb[0].mxu0
    %v685 = vadd.f32 0.0, %v684
    %686 = vdwg.mxu0
    %v691 = vrot.slane %v612, 6
    %v692 = vrot.slane %v614, 6
    %v693 = vrot.slane %v683, 6
    %v694 = vrot.slane %v685, 6
    %v699 = vadd.f32 %v224, %v691
    %v700 = vadd.f32 %v226, %v692
    %v701 = vadd.f32 %v301, %v693
    %v702 = vadd.f32 %v303, %v694
    %v703 = vxor.u32 %v699, 2147483648
    %v704 = vxor.u32 %v700, 2147483648
    %v705 = vxor.u32 %v701, 2147483648
    %v706 = vmul.f32 %v703, 1.442695
    %v707 = vpow.pop %v706
    %v708 = vmul.f32 %v704, 1.442695
    %v709 = vpow.pop %v708
    %v710 = vmul.f32 %v705, 1.442695
    %v711 = vpow.pop %v710
    %v712 = vadd.f32 %v707, 1.0
    %v713 = vadd.f32 %v709, 1.0
    %v714 = vadd.f32 %v711, 1.0
    %v715 = vrcp.pop %v712
    %v716 = vmul.f32 1.0, %v715
    %v717 = vrcp.pop %v713
    %v718 = vmul.f32 1.0, %v717
    %v719 = vrcp.pop %v714
    %v720 = vmul.f32 1.0, %v719
    %v721 = vtanh.pop %v702
    %v723 = vrot.slane %v542, 6
    %v725 = vmul.f32 %v718, %v723
    %v726 = vmul.f32 %v716, %v721
    %v727 = vadd.f32 %v725, %v726
    %v728 = vtanh.pop %v727
    %v729 = vmul.f32 %v720, %v728
    %v730 = vld [vmem:[#allocation8] sm:$0xff]
    %v731 = vld [vmem:[#allocation8 + $0x8] sm:$0xff]
    %v732 = vld [vmem:[#allocation8 + $0x10] sm:$0xff]
    %v733 = vld [vmem:[#allocation8 + $0x18] sm:$0xff]
    %v734 = vld [vmem:[#allocation8 + $0x20] sm:$0xff]
    %v735 = vld [vmem:[#allocation8 + $0x28] sm:$0xff]
    %v736 = vld [vmem:[#allocation8 + $0x30] sm:$0xff]
    %v737 = vld [vmem:[#allocation8 + $0x38] sm:$0xff]
    %v738 = vld [vmem:[#allocation8 + $0x40] sm:$0xff]
    %v739 = vld [vmem:[#allocation8 + $0x48] sm:$0xff]
    %v740 = vld [vmem:[#allocation8 + $0x50] sm:$0xff]
    %v741 = vld [vmem:[#allocation8 + $0x58] sm:$0xff]
    %v742 = vld [vmem:[#allocation8 + $0x60] sm:$0xff]
    %v743 = vld [vmem:[#allocation8 + $0x68] sm:$0xff]
    %v744 = vld [vmem:[#allocation8 + $0x70] sm:$0xff]
    %v745 = vld [vmem:[#allocation8 + $0x78] sm:$0xff]
    %v746 = vld [vmem:[#allocation8 + $0x80] sm:$0xff]
    %v747 = vld [vmem:[#allocation8 + $0x88] sm:$0xff]
    %v748 = vld [vmem:[#allocation8 + $0x90] sm:$0xff]
    %v749 = vld [vmem:[#allocation8 + $0x98] sm:$0xff]
    %v750 = vld [vmem:[#allocation8 + $0xa0] sm:$0xff]
    %v751 = vld [vmem:[#allocation8 + $0xa8] sm:$0xff]
    %v752 = vld [vmem:[#allocation8 + $0xb0] sm:$0xff]
    %v753 = vld [vmem:[#allocation8 + $0xb8] sm:$0xff]
    %v754 = vld [vmem:[#allocation8 + $0xc0] sm:$0xff]
    %v755 = vld [vmem:[#allocation8 + $0xc8] sm:$0xff]
    %v756 = vld [vmem:[#allocation8 + $0xd0] sm:$0xff]
    %v757 = vld [vmem:[#allocation8 + $0xd8] sm:$0xff]
    %v758 = vld [vmem:[#allocation8 + $0xe0] sm:$0xff]
    %v759 = vld [vmem:[#allocation8 + $0xe8] sm:$0xff]
    %v760 = vld [vmem:[#allocation8 + $0xf0] sm:$0xff]
    %v761 = vld [vmem:[#allocation8 + $0xf8] sm:$0xff]
    %v762 = vld [vmem:[#allocation8 + $0x100] sm:$0xff]
    %v763 = vld [vmem:[#allocation8 + $0x108] sm:$0xff]
    %v764 = vld [vmem:[#allocation8 + $0x110] sm:$0xff]
    %v765 = vld [vmem:[#allocation8 + $0x118] sm:$0xff]
    %v766 = vld [vmem:[#allocation8 + $0x120] sm:$0xff]
    %v767 = vld [vmem:[#allocation8 + $0x128] sm:$0xff]
    %v768 = vld [vmem:[#allocation8 + $0x130] sm:$0xff]
    %v769 = vld [vmem:[#allocation8 + $0x138] sm:$0xff]
    %v770 = vld [vmem:[#allocation8 + $0x140] sm:$0xff]
    %v771 = vld [vmem:[#allocation8 + $0x148] sm:$0xff]
    %v772 = vld [vmem:[#allocation8 + $0x150] sm:$0xff]
    %v773 = vld [vmem:[#allocation8 + $0x158] sm:$0xff]
    %v774 = vld [vmem:[#allocation8 + $0x160] sm:$0xff]
    %v775 = vld [vmem:[#allocation8 + $0x168] sm:$0xff]
    %v776 = vld [vmem:[#allocation8 + $0x170] sm:$0xff]
    %v777 = vld [vmem:[#allocation8 + $0x178] sm:$0xff]
    %v778 = vld [vmem:[#allocation8 + $0x180] sm:$0xff]
    %v779 = vld [vmem:[#allocation8 + $0x188] sm:$0xff]
    %v780 = vld [vmem:[#allocation8 + $0x190] sm:$0xff]
    %v781 = vld [vmem:[#allocation8 + $0x198] sm:$0xff]
    %v782 = vld [vmem:[#allocation8 + $0x1a0] sm:$0xff]
    %v783 = vld [vmem:[#allocation8 + $0x1a8] sm:$0xff]
    %v784 = vld [vmem:[#allocation8 + $0x1b0] sm:$0xff]
    %v785 = vld [vmem:[#allocation8 + $0x1b8] sm:$0xff]
    %v786 = vld [vmem:[#allocation8 + $0x1c0] sm:$0xff]
    %v787 = vld [vmem:[#allocation8 + $0x1c8] sm:$0xff]
    %v788 = vld [vmem:[#allocation8 + $0x1d0] sm:$0xff]
    %v789 = vld [vmem:[#allocation8 + $0x1d8] sm:$0xff]
    %v790 = vld [vmem:[#allocation8 + $0x1e0] sm:$0xff]
    %v791 = vld [vmem:[#allocation8 + $0x1e8] sm:$0xff]
    %v792 = vld [vmem:[#allocation8 + $0x1f0] sm:$0xff]
    %v793 = vld [vmem:[#allocation8 + $0x1f8] sm:$0xff]
    %v794 = vld [vmem:[#allocation8 + $0x200] sm:$0xff]
    %v795 = vld [vmem:[#allocation8 + $0x208] sm:$0xff]
    %v796 = vld [vmem:[#allocation8 + $0x210] sm:$0xff]
    %v797 = vld [vmem:[#allocation8 + $0x218] sm:$0xff]
    %v798 = vld [vmem:[#allocation8 + $0x220] sm:$0xff]
    %v799 = vld [vmem:[#allocation8 + $0x228] sm:$0xff]
    %v800 = vld [vmem:[#allocation8 + $0x230] sm:$0xff]
    %v801 = vld [vmem:[#allocation8 + $0x238] sm:$0xff]
    %v802 = vld [vmem:[#allocation8 + $0x240] sm:$0xff]
    %v803 = vld [vmem:[#allocation8 + $0x248] sm:$0xff]
    %v804 = vld [vmem:[#allocation8 + $0x250] sm:$0xff]
    %v805 = vld [vmem:[#allocation8 + $0x258] sm:$0xff]
    %v806 = vld [vmem:[#allocation8 + $0x260] sm:$0xff]
    %v807 = vld [vmem:[#allocation8 + $0x268] sm:$0xff]
    %v808 = vld [vmem:[#allocation8 + $0x270] sm:$0xff]
    %v809 = vld [vmem:[#allocation8 + $0x278] sm:$0xff]
    %v810 = vld [vmem:[#allocation8 + $0x280] sm:$0xff]
    %v811 = vld [vmem:[#allocation8 + $0x288] sm:$0xff]
    %v812 = vld [vmem:[#allocation8 + $0x290] sm:$0xff]
    %v813 = vld [vmem:[#allocation8 + $0x298] sm:$0xff]
    %v814 = vld [vmem:[#allocation8 + $0x2a0] sm:$0xff]
    %v815 = vld [vmem:[#allocation8 + $0x2a8] sm:$0xff]
    %v816 = vld [vmem:[#allocation8 + $0x2b0] sm:$0xff]
    %v817 = vld [vmem:[#allocation8 + $0x2b8] sm:$0xff]
    %v818 = vld [vmem:[#allocation8 + $0x2c0] sm:$0xff]
    %v819 = vld [vmem:[#allocation8 + $0x2c8] sm:$0xff]
    %v820 = vld [vmem:[#allocation8 + $0x2d0] sm:$0xff]
    %v821 = vld [vmem:[#allocation8 + $0x2d8] sm:$0xff]
    %v822 = vld [vmem:[#allocation8 + $0x2e0] sm:$0xff]
    %v823 = vld [vmem:[#allocation8 + $0x2e8] sm:$0xff]
    %v824 = vld [vmem:[#allocation8 + $0x2f0] sm:$0xff]
    %v825 = vld [vmem:[#allocation8 + $0x2f8] sm:$0xff]
    %v826 = vld [vmem:[#allocation8 + $0x300] sm:$0xff]
    %v827 = vld [vmem:[#allocation8 + $0x308] sm:$0xff]
    %v828 = vld [vmem:[#allocation8 + $0x310] sm:$0xff]
    %v829 = vld [vmem:[#allocation8 + $0x318] sm:$0xff]
    %v830 = vld [vmem:[#allocation8 + $0x320] sm:$0xff]
    %v831 = vld [vmem:[#allocation8 + $0x328] sm:$0xff]
    %v832 = vld [vmem:[#allocation8 + $0x330] sm:$0xff]
    %v833 = vld [vmem:[#allocation8 + $0x338] sm:$0xff]
    %v834 = vld [vmem:[#allocation8 + $0x340] sm:$0xff]
    %v835 = vld [vmem:[#allocation8 + $0x348] sm:$0xff]
    %v836 = vld [vmem:[#allocation8 + $0x350] sm:$0xff]
    %v837 = vld [vmem:[#allocation8 + $0x358] sm:$0xff]
    %v838 = vld [vmem:[#allocation8 + $0x360] sm:$0xff]
    %v839 = vld [vmem:[#allocation8 + $0x368] sm:$0xff]
    %v840 = vld [vmem:[#allocation8 + $0x370] sm:$0xff]
    %v841 = vld [vmem:[#allocation8 + $0x378] sm:$0xff]
    %v842 = vld [vmem:[#allocation8 + $0x380] sm:$0xff]
    %v843 = vld [vmem:[#allocation8 + $0x388] sm:$0xff]
    %v844 = vld [vmem:[#allocation8 + $0x390] sm:$0xff]
    %v845 = vld [vmem:[#allocation8 + $0x398] sm:$0xff]
    %v846 = vld [vmem:[#allocation8 + $0x3a0] sm:$0xff]
    %v847 = vld [vmem:[#allocation8 + $0x3a8] sm:$0xff]
    %v848 = vld [vmem:[#allocation8 + $0x3b0] sm:$0xff]
    %v849 = vld [vmem:[#allocation8 + $0x3b8] sm:$0xff]
    %v850 = vld [vmem:[#allocation8 + $0x3c0] sm:$0xff]
    %v851 = vld [vmem:[#allocation8 + $0x3c8] sm:$0xff]
    %v852 = vld [vmem:[#allocation8 + $0x3d0] sm:$0xff]
    %v853 = vld [vmem:[#allocation8 + $0x3d8] sm:$0xff]
    %v854 = vld [vmem:[#allocation8 + $0x3e0] sm:$0xff]
    %v855 = vld [vmem:[#allocation8 + $0x3e8] sm:$0xff]
    %v856 = vld [vmem:[#allocation8 + $0x3f0] sm:$0xff]
    %v857 = vld [vmem:[#allocation8 + $0x3f8] sm:$0xff]
    %v858 = vlaneseq
    %v859 = vshrl.u32 %v858, 7
    %v860 = vsub.s32 1, %v859
    %v861 = vrot.slane %v91, %v860
    %v862 = vlaneseq
    %v863 = vshrl.u32 %v862, 7
    %v864 = vsub.s32 5, %v863
    %v865 = vrot.slane %v91, %v864
    %v866 = vlaneseq
    %v867 = vshrl.u32 %v866, 7
    %v868 = vsub.s32 1, %v867
    %v869 = vrot.slane %v92, %v868
    %v870 = vlaneseq
    %v871 = vshrl.u32 %v870, 7
    %v872 = vsub.s32 5, %v871
    %v873 = vrot.slane %v92, %v872
    %v878 = vlaneseq
    %v879 = vshrl.u32 %v878, 7
    %v880 = vsub.s32 1, %v879
    %v881 = vrot.slane %v861, %v880
    %v882 = vlaneseq
    %v883 = vshrl.u32 %v882, 7
    %v884 = vsub.s32 1, %v883
    %v885 = vrot.slane %v865, %v884
    %v886 = vlaneseq
    %v887 = vshrl.u32 %v886, 7
    %v888 = vsub.s32 1, %v887
    %v889 = vrot.slane %v869, %v888
    %v890 = vlaneseq
    %v891 = vshrl.u32 %v890, 7
    %v892 = vsub.s32 1, %v891
    %v893 = vrot.slane %v873, %v892
    %894 = vmatprep.subr.mxu0 %v731
    %895 = vmatpush1.msra.mxu0 %v730
    %896 = vmatprep.subr.mxu0 %v735
    %897 = vmatpush1.msra.mxu0 %v734
    %898 = vmatprep.subr.mxu0 %v739
    %899 = vmatpush1.msra.mxu0 %v738
    %900 = vmatprep.subr.mxu0 %v743
    %901 = vmatpush1.msra.mxu0 %v742
    %902 = vmatprep.subr.mxu0 %v747
    %903 = vmatpush1.msra.mxu0 %v746
    %904 = vmatprep.subr.mxu0 %v751
    %905 = vmatpush1.msra.mxu0 %v750
    %906 = vmatprep.subr.mxu0 %v755
    %907 = vmatpush1.msra.mxu0 %v754
    %908 = vmatprep.subr.mxu0 %v759
    %909 = vmatpush1.msra.mxu0 %v758
    %910 = vmatprep.subr.mxu0 %v763
    %911 = vmatpush1.msra.mxu0 %v762
    %912 = vmatprep.subr.mxu0 %v767
    %913 = vmatpush1.msra.mxu0 %v766
    %914 = vmatprep.subr.mxu0 %v771
    %915 = vmatpush1.msra.mxu0 %v770
    %916 = vmatprep.subr.mxu0 %v775
    %917 = vmatpush1.msra.mxu0 %v774
    %918 = vmatprep.subr.mxu0 %v779
    %919 = vmatpush1.msra.mxu0 %v778
    %920 = vmatprep.subr.mxu0 %v783
    %921 = vmatpush1.msra.mxu0 %v782
    %922 = vmatprep.subr.mxu0 %v787
    %923 = vmatpush1.msra.mxu0 %v786
    %924 = vmatprep.subr.mxu0 %v791
    %925 = vmatpush1.msra.mxu0 %v790
    %926 = vmatprep.subr.mxu0 %v795
    %927 = vmatpush1.msra.mxu0 %v794
    %928 = vmatprep.subr.mxu0 %v799
    %929 = vmatpush1.msra.mxu0 %v798
    %930 = vmatprep.subr.mxu0 %v803
    %931 = vmatpush1.msra.mxu0 %v802
    %932 = vmatprep.subr.mxu0 %v807
    %933 = vmatpush1.msra.mxu0 %v806
    %934 = vmatprep.subr.mxu0 %v811
    %935 = vmatpush1.msra.mxu0 %v810
    %936 = vmatprep.subr.mxu0 %v815
    %937 = vmatpush1.msra.mxu0 %v814
    %938 = vmatprep.subr.mxu0 %v819
    %939 = vmatpush1.msra.mxu0 %v818
    %940 = vmatprep.subr.mxu0 %v823
    %941 = vmatpush1.msra.mxu0 %v822
    %942 = vmatprep.subr.mxu0 %v827
    %943 = vmatpush1.msra.mxu0 %v826
    %944 = vmatprep.subr.mxu0 %v831
    %945 = vmatpush1.msra.mxu0 %v830
    %946 = vmatprep.subr.mxu0 %v835
    %947 = vmatpush1.msra.mxu0 %v834
    %948 = vmatprep.subr.mxu0 %v839
    %949 = vmatpush1.msra.mxu0 %v838
    %950 = vmatprep.subr.mxu0 %v843
    %951 = vmatpush1.msra.mxu0 %v842
    %952 = vmatprep.subr.mxu0 %v847
    %953 = vmatpush1.msra.mxu0 %v846
    %954 = vmatprep.subr.mxu0 %v851
    %955 = vmatpush1.msra.mxu0 %v850
    %956 = vmatprep.subr.mxu0 %v855
    %957 = vmatpush1.msra.mxu0 %v854
    %958 = vmatprep.mubr.f32.mxu0 0.0
    %959 = vmatmul.mubr.f32.gmra.mrb[0].mxu0 %v544
    %v960 = vpop.f32.mrb[0].mxu0
    %v961 = vadd.f32 %v881, %v960
    %v962 = vpop.f32.mrb[0].mxu0
    %v963 = vadd.f32 %v885, %v962
    %964 = vdwg.mxu0
    %965 = vmatprep.subr.mxu0 %v733
    %966 = vmatpush1.msra.mxu0 %v732
    %967 = vmatprep.subr.mxu0 %v737
    %968 = vmatpush1.msra.mxu0 %v736
    %969 = vmatprep.subr.mxu0 %v741
    %970 = vmatpush1.msra.mxu0 %v740
    %971 = vmatprep.subr.mxu0 %v745
    %972 = vmatpush1.msra.mxu0 %v744
    %973 = vmatprep.subr.mxu0 %v749
    %974 = vmatpush1.msra.mxu0 %v748
    %975 = vmatprep.subr.mxu0 %v753
    %976 = vmatpush1.msra.mxu0 %v752
    %977 = vmatprep.subr.mxu0 %v757
    %978 = vmatpush1.msra.mxu0 %v756
    %979 = vmatprep.subr.mxu0 %v761
    %980 = vmatpush1.msra.mxu0 %v760
    %981 = vmatprep.subr.mxu0 %v765
    %982 = vmatpush1.msra.mxu0 %v764
    %983 = vmatprep.subr.mxu0 %v769
    %984 = vmatpush1.msra.mxu0 %v768
    %985 = vmatprep.subr.mxu0 %v773
    %986 = vmatpush1.msra.mxu0 %v772
    %987 = vmatprep.subr.mxu0 %v777
    %988 = vmatpush1.msra.mxu0 %v776
    %989 = vmatprep.subr.mxu0 %v781
    %990 = vmatpush1.msra.mxu0 %v780
    %991 = vmatprep.subr.mxu0 %v785
    %992 = vmatpush1.msra.mxu0 %v784
    %993 = vmatprep.subr.mxu0 %v789
    %994 = vmatpush1.msra.mxu0 %v788
    %995 = vmatprep.subr.mxu0 %v793
    %996 = vmatpush1.msra.mxu0 %v792
    %997 = vmatprep.subr.mxu0 %v797
    %998 = vmatpush1.msra.mxu0 %v796
    %999 = vmatprep.subr.mxu0 %v801
    %1000 = vmatpush1.msra.mxu0 %v800
    %1001 = vmatprep.subr.mxu0 %v805
    %1002 = vmatpush1.msra.mxu0 %v804
    %1003 = vmatprep.subr.mxu0 %v809
    %1004 = vmatpush1.msra.mxu0 %v808
    %1005 = vmatprep.subr.mxu0 %v813
    %1006 = vmatpush1.msra.mxu0 %v812
    %1007 = vmatprep.subr.mxu0 %v817
    %1008 = vmatpush1.msra.mxu0 %v816
    %1009 = vmatprep.subr.mxu0 %v821
    %1010 = vmatpush1.msra.mxu0 %v820
    %1011 = vmatprep.subr.mxu0 %v825
    %1012 = vmatpush1.msra.mxu0 %v824
    %1013 = vmatprep.subr.mxu0 %v829
    %1014 = vmatpush1.msra.mxu0 %v828
    %1015 = vmatprep.subr.mxu0 %v833
    %1016 = vmatpush1.msra.mxu0 %v832
    %1017 = vmatprep.subr.mxu0 %v837
    %1018 = vmatpush1.msra.mxu0 %v836
    %1019 = vmatprep.subr.mxu0 %v841
    %1020 = vmatpush1.msra.mxu0 %v840
    %1021 = vmatprep.subr.mxu0 %v845
    %1022 = vmatpush1.msra.mxu0 %v844
    %1023 = vmatprep.subr.mxu0 %v849
    %1024 = vmatpush1.msra.mxu0 %v848
    %1025 = vmatprep.subr.mxu0 %v853
    %1026 = vmatpush1.msra.mxu0 %v852
    %1027 = vmatprep.subr.mxu0 %v857
    %1028 = vmatpush1.msra.mxu0 %v856
    %1029 = vmatprep.mubr.f32.mxu0 0.0
    %1030 = vmatmul.mubr.f32.gmra.mrb[0].mxu0 %v544
    %v1031 = vpop.f32.mrb[0].mxu0
    %v1032 = vadd.f32 %v889, %v1031
    %v1033 = vpop.f32.mrb[0].mxu0
    %v1034 = vadd.f32 %v893, %v1033
    %1035 = vdwg.mxu0
    %v1036 = vxor.u32 %v961, 2147483648
    %v1037 = vxor.u32 %v963, 2147483648
    %v1038 = vxor.u32 %v1032, 2147483648
    %v1039 = vmul.f32 %v1036, 1.442695
    %v1040 = vpow.pop %v1039
    %v1041 = vmul.f32 %v1037, 1.442695
    %v1042 = vpow.pop %v1041
    %v1043 = vmul.f32 %v1038, 1.442695
    %v1044 = vpow.pop %v1043
    %v1045 = vadd.f32 %v1040, 1.0
    %v1046 = vadd.f32 %v1042, 1.0
    %v1047 = vadd.f32 %v1044, 1.0
    %v1048 = vrcp.pop %v1045
    %v1049 = vmul.f32 1.0, %v1048
    %v1050 = vrcp.pop %v1046
    %v1051 = vmul.f32 1.0, %v1050
    %v1052 = vrcp.pop %v1047
    %v1053 = vmul.f32 1.0, %v1052
    %v1054 = vtanh.pop %v1034
    %v1055 = vmul.f32 %v1051, 0.0
    %v1056 = vmul.f32 %v1049, %v1054
    %v1057 = vadd.f32 %v1055, %v1056
    %v1058 = vtanh.pop %v1057
    %v1059 = vmul.f32 %v1053, %v1058
    %v1061 = vrot.slane %v729, 2
    %1063 = vmatprep.subr.mxu0 %v312
    %1064 = vmatpush1.msra.mxu0 %v311
    %1065 = vmatprep.subr.mxu0 %v316
    %1066 = vmatpush1.msra.mxu0 %v315
    %1067 = vmatprep.subr.mxu0 %v320
    %1068 = vmatpush1.msra.mxu0 %v319
    %1069 = vmatprep.subr.mxu0 %v324
    %1070 = vmatpush1.msra.mxu0 %v323
    %1071 = vmatprep.subr.mxu0 %v328
    %1072 = vmatpush1.msra.mxu0 %v327
    %1073 = vmatprep.subr.mxu0 %v332
    %1074 = vmatpush1.msra.mxu0 %v331
    %1075 = vmatprep.subr.mxu0 %v336
    %1076 = vmatpush1.msra.mxu0 %v335
    %1077 = vmatprep.subr.mxu0 %v340
    %1078 = vmatpush1.msra.mxu0 %v339
    %1079 = vmatprep.subr.mxu0 %v344
    %1080 = vmatpush1.msra.mxu0 %v343
    %1081 = vmatprep.subr.mxu0 %v348
    %1082 = vmatpush1.msra.mxu0 %v347
    %1083 = vmatprep.subr.mxu0 %v352
    %1084 = vmatpush1.msra.mxu0 %v351
    %1085 = vmatprep.subr.mxu0 %v356
    %1086 = vmatpush1.msra.mxu0 %v355
    %1087 = vmatprep.subr.mxu0 %v360
    %1088 = vmatpush1.msra.mxu0 %v359
    %1089 = vmatprep.subr.mxu0 %v364
    %1090 = vmatpush1.msra.mxu0 %v363
    %1091 = vmatprep.subr.mxu0 %v368
    %1092 = vmatpush1.msra.mxu0 %v367
    %1093 = vmatprep.subr.mxu0 %v372
    %1094 = vmatpush1.msra.mxu0 %v371
    %1095 = vmatprep.subr.mxu0 0.0
    %1096 = vmatpush1.msra.mxu0 0.0
    %1097 = vmatprep.subr.mxu0 0.0
    %1098 = vmatpush1.msra.mxu0 0.0
    %1099 = vmatprep.subr.mxu0 0.0
    %1100 = vmatpush1.msra.mxu0 0.0
    %1101 = vmatprep.subr.mxu0 0.0
    %1102 = vmatpush1.msra.mxu0 0.0
    %1103 = vmatprep.subr.mxu0 0.0
    %1104 = vmatpush1.msra.mxu0 0.0
    %1105 = vmatprep.subr.mxu0 0.0
    %1106 = vmatpush1.msra.mxu0 0.0
    %1107 = vmatprep.subr.mxu0 0.0
    %1108 = vmatpush1.msra.mxu0 0.0
    %1109 = vmatprep.subr.mxu0 0.0
    %1110 = vmatpush1.msra.mxu0 0.0
    %1111 = vmatprep.subr.mxu0 0.0
    %1112 = vmatpush1.msra.mxu0 0.0
    %1113 = vmatprep.subr.mxu0 0.0
    %1114 = vmatpush1.msra.mxu0 0.0
    %1115 = vmatprep.subr.mxu0 0.0
    %1116 = vmatpush1.msra.mxu0 0.0
    %1117 = vmatprep.subr.mxu0 0.0
    %1118 = vmatpush1.msra.mxu0 0.0
    %1119 = vmatprep.subr.mxu0 0.0
    %1120 = vmatpush1.msra.mxu0 0.0
    %1121 = vmatprep.subr.mxu0 0.0
    %1122 = vmatpush1.msra.mxu0 0.0
    %1123 = vmatprep.subr.mxu0 0.0
    %1124 = vmatpush1.msra.mxu0 0.0
    %1125 = vmatprep.subr.mxu0 0.0
    %1126 = vmatpush1.msra.mxu0 0.0
    %1127 = vmatprep.mubr.f32.mxu0 0.0
    %1128 = vmatmul.mubr.f32.gmra.mrb[0].mxu0 %v1061
    %v1129 = vpop.f32.mrb[0].mxu0
    %v1130 = vadd.f32 0.0, %v1129
    %v1131 = vpop.f32.mrb[0].mxu0
    %v1132 = vadd.f32 0.0, %v1131
    %1133 = vdwg.mxu0
    %1134 = vmatprep.subr.mxu0 %v314
    %1135 = vmatpush1.msra.mxu0 %v313
    %1136 = vmatprep.subr.mxu0 %v318
    %1137 = vmatpush1.msra.mxu0 %v317
    %1138 = vmatprep.subr.mxu0 %v322
    %1139 = vmatpush1.msra.mxu0 %v321
    %1140 = vmatprep.subr.mxu0 %v326
    %1141 = vmatpush1.msra.mxu0 %v325
    %1142 = vmatprep.subr.mxu0 %v330
    %1143 = vmatpush1.msra.mxu0 %v329
    %1144 = vmatprep.subr.mxu0 %v334
    %1145 = vmatpush1.msra.mxu0 %v333
    %1146 = vmatprep.subr.mxu0 %v338
    %1147 = vmatpush1.msra.mxu0 %v337
    %1148 = vmatprep.subr.mxu0 %v342
    %1149 = vmatpush1.msra.mxu0 %v341
    %1150 = vmatprep.subr.mxu0 %v346
    %1151 = vmatpush1.msra.mxu0 %v345
    %1152 = vmatprep.subr.mxu0 %v350
    %1153 = vmatpush1.msra.mxu0 %v349
    %1154 = vmatprep.subr.mxu0 %v354
    %1155 = vmatpush1.msra.mxu0 %v353
    %1156 = vmatprep.subr.mxu0 %v358
    %1157 = vmatpush1.msra.mxu0 %v357
    %1158 = vmatprep.subr.mxu0 %v362
    %1159 = vmatpush1.msra.mxu0 %v361
    %1160 = vmatprep.subr.mxu0 %v366
    %1161 = vmatpush1.msra.mxu0 %v365
    %1162 = vmatprep.subr.mxu0 %v370
    %1163 = vmatpush1.msra.mxu0 %v369
    %1164 = vmatprep.subr.mxu0 %v374
    %1165 = vmatpush1.msra.mxu0 %v373
    %1166 = vmatprep.subr.mxu0 0.0
    %1167 = vmatpush1.msra.mxu0 0.0
    %1168 = vmatprep.subr.mxu0 0.0
    %1169 = vmatpush1.msra.mxu0 0.0
    %1170 = vmatprep.subr.mxu0 0.0
    %1171 = vmatpush1.msra.mxu0 0.0
    %1172 = vmatprep.subr.mxu0 0.0
    %1173 = vmatpush1.msra.mxu0 0.0
    %1174 = vmatprep.subr.mxu0 0.0
    %1175 = vmatpush1.msra.mxu0 0.0
    %1176 = vmatprep.subr.mxu0 0.0
    %1177 = vmatpush1.msra.mxu0 0.0
    %1178 = vmatprep.subr.mxu0 0.0
    %1179 = vmatpush1.msra.mxu0 0.0
    %1180 = vmatprep.subr.mxu0 0.0
    %1181 = vmatpush1.msra.mxu0 0.0
    %1182 = vmatprep.subr.mxu0 0.0
    %1183 = vmatpush1.msra.mxu0 0.0
    %1184 = vmatprep.subr.mxu0 0.0
    %1185 = vmatpush1.msra.mxu0 0.0
    %1186 = vmatprep.subr.mxu0 0.0
    %1187 = vmatpush1.msra.mxu0 0.0
    %1188 = vmatprep.subr.mxu0 0.0
    %1189 = vmatpush1.msra.mxu0 0.0
    %1190 = vmatprep.subr.mxu0 0.0
    %1191 = vmatpush1.msra.mxu0 0.0
    %1192 = vmatprep.subr.mxu0 0.0
    %1193 = vmatpush1.msra.mxu0 0.0
    %1194 = vmatprep.subr.mxu0 0.0
    %1195 = vmatpush1.msra.mxu0 0.0
    %1196 = vmatprep.subr.mxu0 0.0
    %1197 = vmatpush1.msra.mxu0 0.0
    %1198 = vmatprep.mubr.f32.mxu0 0.0
    %1199 = vmatmul.mubr.f32.gmra.mrb[0].mxu0 %v1061
    %v1200 = vpop.f32.mrb[0].mxu0
    %v1201 = vadd.f32 0.0, %v1200
    %v1202 = vpop.f32.mrb[0].mxu0
    %v1203 = vadd.f32 0.0, %v1202
    %1204 = vdwg.mxu0
    %v1209 = vrot.slane %v1130, 4
    %v1210 = vrot.slane %v1132, 4
    %v1211 = vrot.slane %v1201, 4
    %v1212 = vrot.slane %v1203, 4
    %v1217 = vadd.f32 %v224, %v1209
    %v1218 = vadd.f32 %v226, %v1210
    %v1219 = vadd.f32 %v301, %v1211
    %v1220 = vadd.f32 %v303, %v1212
    %v1221 = vxor.u32 %v1217, 2147483648
    %v1222 = vxor.u32 %v1218, 2147483648
    %v1223 = vxor.u32 %v1219, 2147483648
    %v1224 = vmul.f32 %v1221, 1.442695
    %v1225 = vpow.pop %v1224
    %v1226 = vmul.f32 %v1222, 1.442695
    %v1227 = vpow.pop %v1226
    %v1228 = vmul.f32 %v1223, 1.442695
    %v1229 = vpow.pop %v1228
    %v1230 = vadd.f32 %v1225, 1.0
    %v1231 = vadd.f32 %v1227, 1.0
    %v1232 = vadd.f32 %v1229, 1.0
    %v1233 = vrcp.pop %v1230
    %v1234 = vmul.f32 1.0, %v1233
    %v1235 = vrcp.pop %v1231
    %v1236 = vmul.f32 1.0, %v1235
    %v1237 = vrcp.pop %v1232
    %v1238 = vmul.f32 1.0, %v1237
    %v1239 = vtanh.pop %v1220
    %v1241 = vrot.slane %v727, 6
    %v1243 = vmul.f32 %v1236, %v1241
    %v1244 = vmul.f32 %v1234, %v1239
    %v1245 = vadd.f32 %v1243, %v1244
    %v1246 = vtanh.pop %v1245
    %v1247 = vmul.f32 %v1238, %v1246
    %v1249 = vrot.slane %v1059, 6
    %v1250 = vrot.slane %v1249, 2
    %1252 = vmatprep.subr.mxu0 %v731
    %1253 = vmatpush1.msra.mxu0 %v730
    %1254 = vmatprep.subr.mxu0 %v735
    %1255 = vmatpush1.msra.mxu0 %v734
    %1256 = vmatprep.subr.mxu0 %v739
    %1257 = vmatpush1.msra.mxu0 %v738
    %1258 = vmatprep.subr.mxu0 %v743
    %1259 = vmatpush1.msra.mxu0 %v742
    %1260 = vmatprep.subr.mxu0 %v747
    %1261 = vmatpush1.msra.mxu0 %v746
    %1262 = vmatprep.subr.mxu0 %v751
    %1263 = vmatpush1.msra.mxu0 %v750
    %1264 = vmatprep.subr.mxu0 %v755
    %1265 = vmatpush1.msra.mxu0 %v754
    %1266 = vmatprep.subr.mxu0 %v759
    %1267 = vmatpush1.msra.mxu0 %v758
    %1268 = vmatprep.subr.mxu0 %v763
    %1269 = vmatpush1.msra.mxu0 %v762
    %1270 = vmatprep.subr.mxu0 %v767
    %1271 = vmatpush1.msra.mxu0 %v766
    %1272 = vmatprep.subr.mxu0 %v771
    %1273 = vmatpush1.msra.mxu0 %v770
    %1274 = vmatprep.subr.mxu0 %v775
    %1275 = vmatpush1.msra.mxu0 %v774
    %1276 = vmatprep.subr.mxu0 %v779
    %1277 = vmatpush1.msra.mxu0 %v778
    %1278 = vmatprep.subr.mxu0 %v783
    %1279 = vmatpush1.msra.mxu0 %v782
    %1280 = vmatprep.subr.mxu0 %v787
    %1281 = vmatpush1.msra.mxu0 %v786
    %1282 = vmatprep.subr.mxu0 %v791
    %1283 = vmatpush1.msra.mxu0 %v790
    %1284 = vmatprep.subr.mxu0 %v795
    %1285 = vmatpush1.msra.mxu0 %v794
    %1286 = vmatprep.subr.mxu0 %v799
    %1287 = vmatpush1.msra.mxu0 %v798
    %1288 = vmatprep.subr.mxu0 %v803
    %1289 = vmatpush1.msra.mxu0 %v802
    %1290 = vmatprep.subr.mxu0 %v807
    %1291 = vmatpush1.msra.mxu0 %v806
    %1292 = vmatprep.subr.mxu0 %v811
    %1293 = vmatpush1.msra.mxu0 %v810
    %1294 = vmatprep.subr.mxu0 %v815
    %1295 = vmatpush1.msra.mxu0 %v814
    %1296 = vmatprep.subr.mxu0 %v819
    %1297 = vmatpush1.msra.mxu0 %v818
    %1298 = vmatprep.subr.mxu0 %v823
    %1299 = vmatpush1.msra.mxu0 %v822
    %1300 = vmatprep.subr.mxu0 %v827
    %1301 = vmatpush1.msra.mxu0 %v826
    %1302 = vmatprep.subr.mxu0 %v831
    %1303 = vmatpush1.msra.mxu0 %v830
    %1304 = vmatprep.subr.mxu0 %v835
    %1305 = vmatpush1.msra.mxu0 %v834
    %1306 = vmatprep.subr.mxu0 %v839
    %1307 = vmatpush1.msra.mxu0 %v838
    %1308 = vmatprep.subr.mxu0 %v843
    %1309 = vmatpush1.msra.mxu0 %v842
    %1310 = vmatprep.subr.mxu0 %v847
    %1311 = vmatpush1.msra.mxu0 %v846
    %1312 = vmatprep.subr.mxu0 %v851
    %1313 = vmatpush1.msra.mxu0 %v850
    %1314 = vmatprep.subr.mxu0 %v855
    %1315 = vmatpush1.msra.mxu0 %v854
    %1316 = vmatprep.mubr.f32.mxu0 %v1250
    %1317 = vmatmul.mubr.f32.gmra.mrb[0].mxu0 %v1061
    %v1318 = vpop.f32.mrb[0].mxu0
    %v1319 = vadd.f32 %v881, %v1318
    %v1320 = vpop.f32.mrb[0].mxu0
    %v1321 = vadd.f32 %v885, %v1320
    %1322 = vdwg.mxu0
    %1323 = vmatprep.subr.mxu0 %v733
    %1324 = vmatpush1.msra.mxu0 %v732
    %1325 = vmatprep.subr.mxu0 %v737
    %1326 = vmatpush1.msra.mxu0 %v736
    %1327 = vmatprep.subr.mxu0 %v741
    %1328 = vmatpush1.msra.mxu0 %v740
    %1329 = vmatprep.subr.mxu0 %v745
    %1330 = vmatpush1.msra.mxu0 %v744
    %1331 = vmatprep.subr.mxu0 %v749
    %1332 = vmatpush1.msra.mxu0 %v748
    %1333 = vmatprep.subr.mxu0 %v753
    %1334 = vmatpush1.msra.mxu0 %v752
    %1335 = vmatprep.subr.mxu0 %v757
    %1336 = vmatpush1.msra.mxu0 %v756
    %1337 = vmatprep.subr.mxu0 %v761
    %1338 = vmatpush1.msra.mxu0 %v760
    %1339 = vmatprep.subr.mxu0 %v765
    %1340 = vmatpush1.msra.mxu0 %v764
    %1341 = vmatprep.subr.mxu0 %v769
    %1342 = vmatpush1.msra.mxu0 %v768
    %1343 = vmatprep.subr.mxu0 %v773
    %1344 = vmatpush1.msra.mxu0 %v772
    %1345 = vmatprep.subr.mxu0 %v777
    %1346 = vmatpush1.msra.mxu0 %v776
    %1347 = vmatprep.subr.mxu0 %v781
    %1348 = vmatpush1.msra.mxu0 %v780
    %1349 = vmatprep.subr.mxu0 %v785
    %1350 = vmatpush1.msra.mxu0 %v784
    %1351 = vmatprep.subr.mxu0 %v789
    %1352 = vmatpush1.msra.mxu0 %v788
    %1353 = vmatprep.subr.mxu0 %v793
    %1354 = vmatpush1.msra.mxu0 %v792
    %1355 = vmatprep.subr.mxu0 %v797
    %1356 = vmatpush1.msra.mxu0 %v796
    %1357 = vmatprep.subr.mxu0 %v801
    %1358 = vmatpush1.msra.mxu0 %v800
    %1359 = vmatprep.subr.mxu0 %v805
    %1360 = vmatpush1.msra.mxu0 %v804
    %1361 = vmatprep.subr.mxu0 %v809
    %1362 = vmatpush1.msra.mxu0 %v808
    %1363 = vmatprep.subr.mxu0 %v813
    %1364 = vmatpush1.msra.mxu0 %v812
    %1365 = vmatprep.subr.mxu0 %v817
    %1366 = vmatpush1.msra.mxu0 %v816
    %1367 = vmatprep.subr.mxu0 %v821
    %1368 = vmatpush1.msra.mxu0 %v820
    %1369 = vmatprep.subr.mxu0 %v825
    %1370 = vmatpush1.msra.mxu0 %v824
    %1371 = vmatprep.subr.mxu0 %v829
    %1372 = vmatpush1.msra.mxu0 %v828
    %1373 = vmatprep.subr.mxu0 %v833
    %1374 = vmatpush1.msra.mxu0 %v832
    %1375 = vmatprep.subr.mxu0 %v837
    %1376 = vmatpush1.msra.mxu0 %v836
    %1377 = vmatprep.subr.mxu0 %v841
    %1378 = vmatpush1.msra.mxu0 %v840
    %1379 = vmatprep.subr.mxu0 %v845
    %1380 = vmatpush1.msra.mxu0 %v844
    %1381 = vmatprep.subr.mxu0 %v849
    %1382 = vmatpush1.msra.mxu0 %v848
    %1383 = vmatprep.subr.mxu0 %v853
    %1384 = vmatpush1.msra.mxu0 %v852
    %1385 = vmatprep.subr.mxu0 %v857
    %1386 = vmatpush1.msra.mxu0 %v856
    %1387 = vmatprep.mubr.f32.mxu0 %v1250
    %1388 = vmatmul.mubr.f32.gmra.mrb[0].mxu0 %v1061
    %v1389 = vpop.f32.mrb[0].mxu0
    %v1390 = vadd.f32 %v889, %v1389
    %v1391 = vpop.f32.mrb[0].mxu0
    %v1392 = vadd.f32 %v893, %v1391
    %1393 = vdwg.mxu0
    %v1394 = vxor.u32 %v1319, 2147483648
    %v1395 = vxor.u32 %v1321, 2147483648
    %v1396 = vxor.u32 %v1390, 2147483648
    %v1397 = vmul.f32 %v1394, 1.442695
    %v1398 = vpow.pop %v1397
    %v1399 = vmul.f32 %v1395, 1.442695
    %v1400 = vpow.pop %v1399
    %v1401 = vmul.f32 %v1396, 1.442695
    %v1402 = vpow.pop %v1401
    %v1403 = vadd.f32 %v1398, 1.0
    %v1404 = vadd.f32 %v1400, 1.0
    %v1405 = vadd.f32 %v1402, 1.0
    %v1406 = vrcp.pop %v1403
    %v1407 = vmul.f32 1.0, %v1406
    %v1408 = vrcp.pop %v1404
    %v1409 = vmul.f32 1.0, %v1408
    %v1410 = vrcp.pop %v1405
    %v1411 = vmul.f32 1.0, %v1410
    %v1412 = vtanh.pop %v1392
    %v1413 = vmul.f32 %v1409, %v1057
    %v1414 = vmul.f32 %v1407, %v1412
    %v1415 = vadd.f32 %v1413, %v1414
    %v1416 = vtanh.pop %v1415
    %v1417 = vmul.f32 %v1411, %v1416
    %s1418 = scalar_lea.vmem [#allocation8], 1024
    %v1419 = vld [vmem:[%s1418] sm:$0xff]
    %v1420 = vld [vmem:[%s1418 + $0x8] sm:$0xff]
    %v1421 = vld [vmem:[%s1418 + $0x10] sm:$0xff]
    %v1422 = vld [vmem:[%s1418 + $0x18] sm:$0xff]
    %v1423 = vld [vmem:[%s1418 + $0x20] sm:$0xff]
    %v1424 = vld [vmem:[%s1418 + $0x28] sm:$0xff]
    %v1425 = vld [vmem:[%s1418 + $0x30] sm:$0xff]
    %v1426 = vld [vmem:[%s1418 + $0x38] sm:$0xff]
    %v1427 = vld [vmem:[%s1418 + $0x40] sm:$0xff]
    %v1428 = vld [vmem:[%s1418 + $0x48] sm:$0xff]
    %v1429 = vld [vmem:[%s1418 + $0x50] sm:$0xff]
    %v1430 = vld [vmem:[%s1418 + $0x58] sm:$0xff]
    %v1431 = vld [vmem:[%s1418 + $0x60] sm:$0xff]
    %v1432 = vld [vmem:[%s1418 + $0x68] sm:$0xff]
    %v1433 = vld [vmem:[%s1418 + $0x70] sm:$0xff]
    %v1434 = vld [vmem:[%s1418 + $0x78] sm:$0xff]
    %v1435 = vld [vmem:[%s1418 + $0x80] sm:$0xff]
    %v1436 = vld [vmem:[%s1418 + $0x88] sm:$0xff]
    %v1437 = vld [vmem:[%s1418 + $0x90] sm:$0xff]
    %v1438 = vld [vmem:[%s1418 + $0x98] sm:$0xff]
    %v1439 = vld [vmem:[%s1418 + $0xa0] sm:$0xff]
    %v1440 = vld [vmem:[%s1418 + $0xa8] sm:$0xff]
    %v1441 = vld [vmem:[%s1418 + $0xb0] sm:$0xff]
    %v1442 = vld [vmem:[%s1418 + $0xb8] sm:$0xff]
    %v1443 = vld [vmem:[%s1418 + $0xc0] sm:$0xff]
    %v1444 = vld [vmem:[%s1418 + $0xc8] sm:$0xff]
    %v1445 = vld [vmem:[%s1418 + $0xd0] sm:$0xff]
    %v1446 = vld [vmem:[%s1418 + $0xd8] sm:$0xff]
    %v1447 = vld [vmem:[%s1418 + $0xe0] sm:$0xff]
    %v1448 = vld [vmem:[%s1418 + $0xe8] sm:$0xff]
    %v1449 = vld [vmem:[%s1418 + $0xf0] sm:$0xff]
    %v1450 = vld [vmem:[%s1418 + $0xf8] sm:$0xff]
    %v1451 = vld [vmem:[%s1418 + $0x100] sm:$0xff]
    %v1452 = vld [vmem:[%s1418 + $0x108] sm:$0xff]
    %v1453 = vld [vmem:[%s1418 + $0x110] sm:$0xff]
    %v1454 = vld [vmem:[%s1418 + $0x118] sm:$0xff]
    %v1455 = vld [vmem:[%s1418 + $0x120] sm:$0xff]
    %v1456 = vld [vmem:[%s1418 + $0x128] sm:$0xff]
    %v1457 = vld [vmem:[%s1418 + $0x130] sm:$0xff]
    %v1458 = vld [vmem:[%s1418 + $0x138] sm:$0xff]
    %v1459 = vld [vmem:[%s1418 + $0x140] sm:$0xff]
    %v1460 = vld [vmem:[%s1418 + $0x148] sm:$0xff]
    %v1461 = vld [vmem:[%s1418 + $0x150] sm:$0xff]
    %v1462 = vld [vmem:[%s1418 + $0x158] sm:$0xff]
    %v1463 = vld [vmem:[%s1418 + $0x160] sm:$0xff]
    %v1464 = vld [vmem:[%s1418 + $0x168] sm:$0xff]
    %v1465 = vld [vmem:[%s1418 + $0x170] sm:$0xff]
    %v1466 = vld [vmem:[%s1418 + $0x178] sm:$0xff]
    %v1467 = vld [vmem:[%s1418 + $0x180] sm:$0xff]
    %v1468 = vld [vmem:[%s1418 + $0x188] sm:$0xff]
    %v1469 = vld [vmem:[%s1418 + $0x190] sm:$0xff]
    %v1470 = vld [vmem:[%s1418 + $0x198] sm:$0xff]
    %v1471 = vld [vmem:[%s1418 + $0x1a0] sm:$0xff]
    %v1472 = vld [vmem:[%s1418 + $0x1a8] sm:$0xff]
    %v1473 = vld [vmem:[%s1418 + $0x1b0] sm:$0xff]
    %v1474 = vld [vmem:[%s1418 + $0x1b8] sm:$0xff]
    %v1475 = vld [vmem:[%s1418 + $0x1c0] sm:$0xff]
    %v1476 = vld [vmem:[%s1418 + $0x1c8] sm:$0xff]
    %v1477 = vld [vmem:[%s1418 + $0x1d0] sm:$0xff]
    %v1478 = vld [vmem:[%s1418 + $0x1d8] sm:$0xff]
    %v1479 = vld [vmem:[%s1418 + $0x1e0] sm:$0xff]
    %v1480 = vld [vmem:[%s1418 + $0x1e8] sm:$0xff]
    %v1481 = vld [vmem:[%s1418 + $0x1f0] sm:$0xff]
    %v1482 = vld [vmem:[%s1418 + $0x1f8] sm:$0xff]
    %v1483 = vld [vmem:[%s1418 + $0x200] sm:$0xff]
    %v1484 = vld [vmem:[%s1418 + $0x208] sm:$0xff]
    %v1485 = vld [vmem:[%s1418 + $0x210] sm:$0xff]
    %v1486 = vld [vmem:[%s1418 + $0x218] sm:$0xff]
    %v1487 = vld [vmem:[%s1418 + $0x220] sm:$0xff]
    %v1488 = vld [vmem:[%s1418 + $0x228] sm:$0xff]
    %v1489 = vld [vmem:[%s1418 + $0x230] sm:$0xff]
    %v1490 = vld [vmem:[%s1418 + $0x238] sm:$0xff]
    %v1491 = vld [vmem:[%s1418 + $0x240] sm:$0xff]
    %v1492 = vld [vmem:[%s1418 + $0x248] sm:$0xff]
    %v1493 = vld [vmem:[%s1418 + $0x250] sm:$0xff]
    %v1494 = vld [vmem:[%s1418 + $0x258] sm:$0xff]
    %v1495 = vld [vmem:[%s1418 + $0x260] sm:$0xff]
    %v1496 = vld [vmem:[%s1418 + $0x268] sm:$0xff]
    %v1497 = vld [vmem:[%s1418 + $0x270] sm:$0xff]
    %v1498 = vld [vmem:[%s1418 + $0x278] sm:$0xff]
    %v1499 = vld [vmem:[%s1418 + $0x280] sm:$0xff]
    %v1500 = vld [vmem:[%s1418 + $0x288] sm:$0xff]
    %v1501 = vld [vmem:[%s1418 + $0x290] sm:$0xff]
    %v1502 = vld [vmem:[%s1418 + $0x298] sm:$0xff]
    %v1503 = vld [vmem:[%s1418 + $0x2a0] sm:$0xff]
    %v1504 = vld [vmem:[%s1418 + $0x2a8] sm:$0xff]
    %v1505 = vld [vmem:[%s1418 + $0x2b0] sm:$0xff]
    %v1506 = vld [vmem:[%s1418 + $0x2b8] sm:$0xff]
    %v1507 = vld [vmem:[%s1418 + $0x2c0] sm:$0xff]
    %v1508 = vld [vmem:[%s1418 + $0x2c8] sm:$0xff]
    %v1509 = vld [vmem:[%s1418 + $0x2d0] sm:$0xff]
    %v1510 = vld [vmem:[%s1418 + $0x2d8] sm:$0xff]
    %v1511 = vld [vmem:[%s1418 + $0x2e0] sm:$0xff]
    %v1512 = vld [vmem:[%s1418 + $0x2e8] sm:$0xff]
    %v1513 = vld [vmem:[%s1418 + $0x2f0] sm:$0xff]
    %v1514 = vld [vmem:[%s1418 + $0x2f8] sm:$0xff]
    %v1515 = vld [vmem:[%s1418 + $0x300] sm:$0xff]
    %v1516 = vld [vmem:[%s1418 + $0x308] sm:$0xff]
    %v1517 = vld [vmem:[%s1418 + $0x310] sm:$0xff]
    %v1518 = vld [vmem:[%s1418 + $0x318] sm:$0xff]
    %v1519 = vld [vmem:[%s1418 + $0x320] sm:$0xff]
    %v1520 = vld [vmem:[%s1418 + $0x328] sm:$0xff]
    %v1521 = vld [vmem:[%s1418 + $0x330] sm:$0xff]
    %v1522 = vld [vmem:[%s1418 + $0x338] sm:$0xff]
    %v1523 = vld [vmem:[%s1418 + $0x340] sm:$0xff]
    %v1524 = vld [vmem:[%s1418 + $0x348] sm:$0xff]
    %v1525 = vld [vmem:[%s1418 + $0x350] sm:$0xff]
    %v1526 = vld [vmem:[%s1418 + $0x358] sm:$0xff]
    %v1527 = vld [vmem:[%s1418 + $0x360] sm:$0xff]
    %v1528 = vld [vmem:[%s1418 + $0x368] sm:$0xff]
    %v1529 = vld [vmem:[%s1418 + $0x370] sm:$0xff]
    %v1530 = vld [vmem:[%s1418 + $0x378] sm:$0xff]
    %v1531 = vld [vmem:[%s1418 + $0x380] sm:$0xff]
    %v1532 = vld [vmem:[%s1418 + $0x388] sm:$0xff]
    %v1533 = vld [vmem:[%s1418 + $0x390] sm:$0xff]
    %v1534 = vld [vmem:[%s1418 + $0x398] sm:$0xff]
    %v1535 = vld [vmem:[%s1418 + $0x3a0] sm:$0xff]
    %v1536 = vld [vmem:[%s1418 + $0x3a8] sm:$0xff]
    %v1537 = vld [vmem:[%s1418 + $0x3b0] sm:$0xff]
    %v1538 = vld [vmem:[%s1418 + $0x3b8] sm:$0xff]
    %v1539 = vld [vmem:[%s1418 + $0x3c0] sm:$0xff]
    %v1540 = vld [vmem:[%s1418 + $0x3c8] sm:$0xff]
    %v1541 = vld [vmem:[%s1418 + $0x3d0] sm:$0xff]
    %v1542 = vld [vmem:[%s1418 + $0x3d8] sm:$0xff]
    %v1543 = vld [vmem:[%s1418 + $0x3e0] sm:$0xff]
    %v1544 = vld [vmem:[%s1418 + $0x3e8] sm:$0xff]
    %v1545 = vld [vmem:[%s1418 + $0x3f0] sm:$0xff]
    %v1546 = vld [vmem:[%s1418 + $0x3f8] sm:$0xff]
    %v1547 = vlaneseq
    %v1548 = vshrl.u32 %v1547, 7
    %v1549 = vsub.s32 2, %v1548
    %v1550 = vrot.slane %v91, %v1549
    %v1551 = vlaneseq
    %v1552 = vshrl.u32 %v1551, 7
    %v1553 = vsub.s32 6, %v1552
    %v1554 = vrot.slane %v91, %v1553
    %v1555 = vlaneseq
    %v1556 = vshrl.u32 %v1555, 7
    %v1557 = vsub.s32 2, %v1556
    %v1558 = vrot.slane %v92, %v1557
    %v1559 = vlaneseq
    %v1560 = vshrl.u32 %v1559, 7
    %v1561 = vsub.s32 6, %v1560
    %v1562 = vrot.slane %v92, %v1561
    %v1567 = vlaneseq
    %v1568 = vshrl.u32 %v1567, 7
    %v1569 = vsub.s32 2, %v1568
    %v1570 = vrot.slane %v1550, %v1569
    %v1571 = vlaneseq
    %v1572 = vshrl.u32 %v1571, 7
    %v1573 = vsub.s32 2, %v1572
    %v1574 = vrot.slane %v1554, %v1573
    %v1575 = vlaneseq
    %v1576 = vshrl.u32 %v1575, 7
    %v1577 = vsub.s32 2, %v1576
    %v1578 = vrot.slane %v1558, %v1577
    %v1579 = vlaneseq
    %v1580 = vshrl.u32 %v1579, 7
    %v1581 = vsub.s32 2, %v1580
    %v1582 = vrot.slane %v1562, %v1581
    %1583 = vmatprep.subr.mxu0 %v1420
    %1584 = vmatpush1.msra.mxu0 %v1419
    %1585 = vmatprep.subr.mxu0 %v1424
    %1586 = vmatpush1.msra.mxu0 %v1423
    %1587 = vmatprep.subr.mxu0 %v1428
    %1588 = vmatpush1.msra.mxu0 %v1427
    %1589 = vmatprep.subr.mxu0 %v1432
    %1590 = vmatpush1.msra.mxu0 %v1431
    %1591 = vmatprep.subr.mxu0 %v1436
    %1592 = vmatpush1.msra.mxu0 %v1435
    %1593 = vmatprep.subr.mxu0 %v1440
    %1594 = vmatpush1.msra.mxu0 %v1439
    %1595 = vmatprep.subr.mxu0 %v1444
    %1596 = vmatpush1.msra.mxu0 %v1443
    %1597 = vmatprep.subr.mxu0 %v1448
    %1598 = vmatpush1.msra.mxu0 %v1447
    %1599 = vmatprep.subr.mxu0 %v1452
    %1600 = vmatpush1.msra.mxu0 %v1451
    %1601 = vmatprep.subr.mxu0 %v1456
    %1602 = vmatpush1.msra.mxu0 %v1455
    %1603 = vmatprep.subr.mxu0 %v1460
    %1604 = vmatpush1.msra.mxu0 %v1459
    %1605 = vmatprep.subr.mxu0 %v1464
    %1606 = vmatpush1.msra.mxu0 %v1463
    %1607 = vmatprep.subr.mxu0 %v1468
    %1608 = vmatpush1.msra.mxu0 %v1467
    %1609 = vmatprep.subr.mxu0 %v1472
    %1610 = vmatpush1.msra.mxu0 %v1471
    %1611 = vmatprep.subr.mxu0 %v1476
    %1612 = vmatpush1.msra.mxu0 %v1475
    %1613 = vmatprep.subr.mxu0 %v1480
    %1614 = vmatpush1.msra.mxu0 %v1479
    %1615 = vmatprep.subr.mxu0 %v1484
    %1616 = vmatpush1.msra.mxu0 %v1483
    %1617 = vmatprep.subr.mxu0 %v1488
    %1618 = vmatpush1.msra.mxu0 %v1487
    %1619 = vmatprep.subr.mxu0 %v1492
    %1620 = vmatpush1.msra.mxu0 %v1491
    %1621 = vmatprep.subr.mxu0 %v1496
    %1622 = vmatpush1.msra.mxu0 %v1495
    %1623 = vmatprep.subr.mxu0 %v1500
    %1624 = vmatpush1.msra.mxu0 %v1499
    %1625 = vmatprep.subr.mxu0 %v1504
    %1626 = vmatpush1.msra.mxu0 %v1503
    %1627 = vmatprep.subr.mxu0 %v1508
    %1628 = vmatpush1.msra.mxu0 %v1507
    %1629 = vmatprep.subr.mxu0 %v1512
    %1630 = vmatpush1.msra.mxu0 %v1511
    %1631 = vmatprep.subr.mxu0 %v1516
    %1632 = vmatpush1.msra.mxu0 %v1515
    %1633 = vmatprep.subr.mxu0 %v1520
    %1634 = vmatpush1.msra.mxu0 %v1519
    %1635 = vmatprep.subr.mxu0 %v1524
    %1636 = vmatpush1.msra.mxu0 %v1523
    %1637 = vmatprep.subr.mxu0 %v1528
    %1638 = vmatpush1.msra.mxu0 %v1527
    %1639 = vmatprep.subr.mxu0 %v1532
    %1640 = vmatpush1.msra.mxu0 %v1531
    %1641 = vmatprep.subr.mxu0 %v1536
    %1642 = vmatpush1.msra.mxu0 %v1535
    %1643 = vmatprep.subr.mxu0 %v1540
    %1644 = vmatpush1.msra.mxu0 %v1539
    %1645 = vmatprep.subr.mxu0 %v1544
    %1646 = vmatpush1.msra.mxu0 %v1543
    %1647 = vmatprep.mubr.f32.mxu0 0.0
    %1648 = vmatmul.mubr.f32.gmra.mrb[0].mxu0 %v1059
    %v1649 = vpop.f32.mrb[0].mxu0
    %v1650 = vadd.f32 %v1570, %v1649
    %v1651 = vpop.f32.mrb[0].mxu0
    %v1652 = vadd.f32 %v1574, %v1651
    %1653 = vdwg.mxu0
    %1654 = vmatprep.subr.mxu0 %v1422
    %1655 = vmatpush1.msra.mxu0 %v1421
    %1656 = vmatprep.subr.mxu0 %v1426
    %1657 = vmatpush1.msra.mxu0 %v1425
    %1658 = vmatprep.subr.mxu0 %v1430
    %1659 = vmatpush1.msra.mxu0 %v1429
    %1660 = vmatprep.subr.mxu0 %v1434
    %1661 = vmatpush1.msra.mxu0 %v1433
    %1662 = vmatprep.subr.mxu0 %v1438
    %1663 = vmatpush1.msra.mxu0 %v1437
    %1664 = vmatprep.subr.mxu0 %v1442
    %1665 = vmatpush1.msra.mxu0 %v1441
    %1666 = vmatprep.subr.mxu0 %v1446
    %1667 = vmatpush1.msra.mxu0 %v1445
    %1668 = vmatprep.subr.mxu0 %v1450
    %1669 = vmatpush1.msra.mxu0 %v1449
    %1670 = vmatprep.subr.mxu0 %v1454
    %1671 = vmatpush1.msra.mxu0 %v1453
    %1672 = vmatprep.subr.mxu0 %v1458
    %1673 = vmatpush1.msra.mxu0 %v1457
    %1674 = vmatprep.subr.mxu0 %v1462
    %1675 = vmatpush1.msra.mxu0 %v1461
    %1676 = vmatprep.subr.mxu0 %v1466
    %1677 = vmatpush1.msra.mxu0 %v1465
    %1678 = vmatprep.subr.mxu0 %v1470
    %1679 = vmatpush1.msra.mxu0 %v1469
    %1680 = vmatprep.subr.mxu0 %v1474
    %1681 = vmatpush1.msra.mxu0 %v1473
    %1682 = vmatprep.subr.mxu0 %v1478
    %1683 = vmatpush1.msra.mxu0 %v1477
    %1684 = vmatprep.subr.mxu0 %v1482
    %1685 = vmatpush1.msra.mxu0 %v1481
    %1686 = vmatprep.subr.mxu0 %v1486
    %1687 = vmatpush1.msra.mxu0 %v1485
    %1688 = vmatprep.subr.mxu0 %v1490
    %1689 = vmatpush1.msra.mxu0 %v1489
    %1690 = vmatprep.subr.mxu0 %v1494
    %1691 = vmatpush1.msra.mxu0 %v1493
    %1692 = vmatprep.subr.mxu0 %v1498
    %1693 = vmatpush1.msra.mxu0 %v1497
    %1694 = vmatprep.subr.mxu0 %v1502
    %1695 = vmatpush1.msra.mxu0 %v1501
    %1696 = vmatprep.subr.mxu0 %v1506
    %1697 = vmatpush1.msra.mxu0 %v1505
    %1698 = vmatprep.subr.mxu0 %v1510
    %1699 = vmatpush1.msra.mxu0 %v1509
    %1700 = vmatprep.subr.mxu0 %v1514
    %1701 = vmatpush1.msra.mxu0 %v1513
    %1702 = vmatprep.subr.mxu0 %v1518
    %1703 = vmatpush1.msra.mxu0 %v1517
    %1704 = vmatprep.subr.mxu0 %v1522
    %1705 = vmatpush1.msra.mxu0 %v1521
    %1706 = vmatprep.subr.mxu0 %v1526
    %1707 = vmatpush1.msra.mxu0 %v1525
    %1708 = vmatprep.subr.mxu0 %v1530
    %1709 = vmatpush1.msra.mxu0 %v1529
    %1710 = vmatprep.subr.mxu0 %v1534
    %1711 = vmatpush1.msra.mxu0 %v1533
    %1712 = vmatprep.subr.mxu0 %v1538
    %1713 = vmatpush1.msra.mxu0 %v1537
    %1714 = vmatprep.subr.mxu0 %v1542
    %1715 = vmatpush1.msra.mxu0 %v1541
    %1716 = vmatprep.subr.mxu0 %v1546
    %1717 = vmatpush1.msra.mxu0 %v1545
    %1718 = vmatprep.mubr.f32.mxu0 0.0
    %1719 = vmatmul.mubr.f32.gmra.mrb[0].mxu0 %v1059
    %v1720 = vpop.f32.mrb[0].mxu0
    %v1721 = vadd.f32 %v1578, %v1720
    %v1722 = vpop.f32.mrb[0].mxu0
    %v1723 = vadd.f32 %v1582, %v1722
    %1724 = vdwg.mxu0
    %v1725 = vxor.u32 %v1650, 2147483648
    %v1726 = vxor.u32 %v1652, 2147483648
    %v1727 = vxor.u32 %v1721, 2147483648
    %v1728 = vmul.f32 %v1725, 1.442695
    %v1729 = vpow.pop %v1728
    %v1730 = vmul.f32 %v1726, 1.442695
    %v1731 = vpow.pop %v1730
    %v1732 = vmul.f32 %v1727, 1.442695
    %v1733 = vpow.pop %v1732
    %v1734 = vadd.f32 %v1729, 1.0
    %v1735 = vadd.f32 %v1731, 1.0
    %v1736 = vadd.f32 %v1733, 1.0
    %v1737 = vrcp.pop %v1734
    %v1738 = vmul.f32 1.0, %v1737
    %v1739 = vrcp.pop %v1735
    %v1740 = vmul.f32 1.0, %v1739
    %v1741 = vrcp.pop %v1736
    %v1742 = vmul.f32 1.0, %v1741
    %v1743 = vtanh.pop %v1723
    %v1744 = vmul.f32 %v1740, 0.0
    %v1745 = vmul.f32 %v1738, %v1743
    %v1746 = vadd.f32 %v1744, %v1745
    %v1747 = vtanh.pop %v1746
    %v1748 = vmul.f32 %v1742, %v1747
    %v1750 = vrot.slane %v1247, 4
    %1752 = vmatprep.subr.mxu0 %v312
    %1753 = vmatpush1.msra.mxu0 %v311
    %1754 = vmatprep.subr.mxu0 %v316
    %1755 = vmatpush1.msra.mxu0 %v315
    %1756 = vmatprep.subr.mxu0 %v320
    %1757 = vmatpush1.msra.mxu0 %v319
    %1758 = vmatprep.subr.mxu0 %v324
    %1759 = vmatpush1.msra.mxu0 %v323
    %1760 = vmatprep.subr.mxu0 %v328
    %1761 = vmatpush1.msra.mxu0 %v327
    %1762 = vmatprep.subr.mxu0 %v332
    %1763 = vmatpush1.msra.mxu0 %v331
    %1764 = vmatprep.subr.mxu0 %v336
    %1765 = vmatpush1.msra.mxu0 %v335
    %1766 = vmatprep.subr.mxu0 %v340
    %1767 = vmatpush1.msra.mxu0 %v339
    %1768 = vmatprep.subr.mxu0 %v344
    %1769 = vmatpush1.msra.mxu0 %v343
    %1770 = vmatprep.subr.mxu0 %v348
    %1771 = vmatpush1.msra.mxu0 %v347
    %1772 = vmatprep.subr.mxu0 %v352
    %1773 = vmatpush1.msra.mxu0 %v351
    %1774 = vmatprep.subr.mxu0 %v356
    %1775 = vmatpush1.msra.mxu0 %v355
    %1776 = vmatprep.subr.mxu0 %v360
    %1777 = vmatpush1.msra.mxu0 %v359
    %1778 = vmatprep.subr.mxu0 %v364
    %1779 = vmatpush1.msra.mxu0 %v363
    %1780 = vmatprep.subr.mxu0 %v368
    %1781 = vmatpush1.msra.mxu0 %v367
    %1782 = vmatprep.subr.mxu0 %v372
    %1783 = vmatpush1.msra.mxu0 %v371
    %1784 = vmatprep.subr.mxu0 0.0
    %1785 = vmatpush1.msra.mxu0 0.0
    %1786 = vmatprep.subr.mxu0 0.0
    %1787 = vmatpush1.msra.mxu0 0.0
    %1788 = vmatprep.subr.mxu0 0.0
    %1789 = vmatpush1.msra.mxu0 0.0
    %1790 = vmatprep.subr.mxu0 0.0
    %1791 = vmatpush1.msra.mxu0 0.0
    %1792 = vmatprep.subr.mxu0 0.0
    %1793 = vmatpush1.msra.mxu0 0.0
    %1794 = vmatprep.subr.mxu0 0.0
    %1795 = vmatpush1.msra.mxu0 0.0
    %1796 = vmatprep.subr.mxu0 0.0
    %1797 = vmatpush1.msra.mxu0 0.0
    %1798 = vmatprep.subr.mxu0 0.0
    %1799 = vmatpush1.msra.mxu0 0.0
    %1800 = vmatprep.subr.mxu0 0.0
    %1801 = vmatpush1.msra.mxu0 0.0
    %1802 = vmatprep.subr.mxu0 0.0
    %1803 = vmatpush1.msra.mxu0 0.0
    %1804 = vmatprep.subr.mxu0 0.0
    %1805 = vmatpush1.msra.mxu0 0.0
    %1806 = vmatprep.subr.mxu0 0.0
    %1807 = vmatpush1.msra.mxu0 0.0
    %1808 = vmatprep.subr.mxu0 0.0
    %1809 = vmatpush1.msra.mxu0 0.0
    %1810 = vmatprep.subr.mxu0 0.0
    %1811 = vmatpush1.msra.mxu0 0.0
    %1812 = vmatprep.subr.mxu0 0.0
    %1813 = vmatpush1.msra.mxu0 0.0
    %1814 = vmatprep.subr.mxu0 0.0
    %1815 = vmatpush1.msra.mxu0 0.0
    %1816 = vmatprep.mubr.f32.mxu0 0.0
    %1817 = vmatmul.mubr.f32.gmra.mrb[0].mxu0 %v1750
    %v1818 = vpop.f32.mrb[0].mxu0
    %v1819 = vadd.f32 0.0, %v1818
    %v1820 = vpop.f32.mrb[0].mxu0
    %v1821 = vadd.f32 0.0, %v1820
    %1822 = vdwg.mxu0
    %1823 = vmatprep.subr.mxu0 %v314
    %1824 = vmatpush1.msra.mxu0 %v313
    %1825 = vmatprep.subr.mxu0 %v318
    %1826 = vmatpush1.msra.mxu0 %v317
    %1827 = vmatprep.subr.mxu0 %v322
    %1828 = vmatpush1.msra.mxu0 %v321
    %1829 = vmatprep.subr.mxu0 %v326
    %1830 = vmatpush1.msra.mxu0 %v325
    %1831 = vmatprep.subr.mxu0 %v330
    %1832 = vmatpush1.msra.mxu0 %v329
    %1833 = vmatprep.subr.mxu0 %v334
    %1834 = vmatpush1.msra.mxu0 %v333
    %1835 = vmatprep.subr.mxu0 %v338
    %1836 = vmatpush1.msra.mxu0 %v337
    %1837 = vmatprep.subr.mxu0 %v342
    %1838 = vmatpush1.msra.mxu0 %v341
    %1839 = vmatprep.subr.mxu0 %v346
    %1840 = vmatpush1.msra.mxu0 %v345
    %1841 = vmatprep.subr.mxu0 %v350
    %1842 = vmatpush1.msra.mxu0 %v349
    %1843 = vmatprep.subr.mxu0 %v354
    %1844 = vmatpush1.msra.mxu0 %v353
    %1845 = vmatprep.subr.mxu0 %v358
    %1846 = vmatpush1.msra.mxu0 %v357
    %1847 = vmatprep.subr.mxu0 %v362
    %1848 = vmatpush1.msra.mxu0 %v361
    %1849 = vmatprep.subr.mxu0 %v366
    %1850 = vmatpush1.msra.mxu0 %v365
    %1851 = vmatprep.subr.mxu0 %v370
    %1852 = vmatpush1.msra.mxu0 %v369
    %1853 = vmatprep.subr.mxu0 %v374
    %1854 = vmatpush1.msra.mxu0 %v373
    %1855 = vmatprep.subr.mxu0 0.0
    %1856 = vmatpush1.msra.mxu0 0.0
    %1857 = vmatprep.subr.mxu0 0.0
    %1858 = vmatpush1.msra.mxu0 0.0
    %1859 = vmatprep.subr.mxu0 0.0
    %1860 = vmatpush1.msra.mxu0 0.0
    %1861 = vmatprep.subr.mxu0 0.0
    %1862 = vmatpush1.msra.mxu0 0.0
    %1863 = vmatprep.subr.mxu0 0.0
    %1864 = vmatpush1.msra.mxu0 0.0
    %1865 = vmatprep.subr.mxu0 0.0
    %1866 = vmatpush1.msra.mxu0 0.0
    %1867 = vmatprep.subr.mxu0 0.0
    %1868 = vmatpush1.msra.mxu0 0.0
    %1869 = vmatprep.subr.mxu0 0.0
    %1870 = vmatpush1.msra.mxu0 0.0
    %1871 = vmatprep.subr.mxu0 0.0
    %1872 = vmatpush1.msra.mxu0 0.0
    %1873 = vmatprep.subr.mxu0 0.0
    %1874 = vmatpush1.msra.mxu0 0.0
    %1875 = vmatprep.subr.mxu0 0.0
    %1876 = vmatpush1.msra.mxu0 0.0
    %1877 = vmatprep.subr.mxu0 0.0
    %1878 = vmatpush1.msra.mxu0 0.0
    %1879 = vmatprep.subr.mxu0 0.0
    %1880 = vmatpush1.msra.mxu0 0.0
    %1881 = vmatprep.subr.mxu0 0.0
    %1882 = vmatpush1.msra.mxu0 0.0
    %1883 = vmatprep.subr.mxu0 0.0
    %1884 = vmatpush1.msra.mxu0 0.0
    %1885 = vmatprep.subr.mxu0 0.0
    %1886 = vmatpush1.msra.mxu0 0.0
    %1887 = vmatprep.mubr.f32.mxu0 0.0
    %1888 = vmatmul.mubr.f32.gmra.mrb[0].mxu0 %v1750
    %v1889 = vpop.f32.mrb[0].mxu0
    %v1890 = vadd.f32 0.0, %v1889
    %v1891 = vpop.f32.mrb[0].mxu0
    %v1892 = vadd.f32 0.0, %v1891
    %1893 = vdwg.mxu0
    %v1898 = vrot.slane %v1819, 2
    %v1899 = vrot.slane %v1821, 2
    %v1900 = vrot.slane %v1890, 2
    %v1901 = vrot.slane %v1892, 2
    %v1906 = vadd.f32 %v224, %v1898
    %v1907 = vadd.f32 %v226, %v1899
    %v1908 = vadd.f32 %v301, %v1900
    %v1909 = vadd.f32 %v303, %v1901
    %v1910 = vxor.u32 %v1906, 2147483648
    %v1911 = vxor.u32 %v1907, 2147483648
    %v1912 = vxor.u32 %v1908, 2147483648
    %v1913 = vmul.f32 %v1910, 1.442695
    %v1914 = vpow.pop %v1913
    %v1915 = vmul.f32 %v1911, 1.442695
    %v1916 = vpow.pop %v1915
    %v1917 = vmul.f32 %v1912, 1.442695
    %v1918 = vpow.pop %v1917
    %v1919 = vadd.f32 %v1914, 1.0
    %v1920 = vadd.f32 %v1916, 1.0
    %v1921 = vadd.f32 %v1918, 1.0
    %v1922 = vrcp.pop %v1919
    %v1923 = vmul.f32 1.0, %v1922
    %v1924 = vrcp.pop %v1920
    %v1925 = vmul.f32 1.0, %v1924
    %v1926 = vrcp.pop %v1921
    %v1927 = vmul.f32 1.0, %v1926
    %v1928 = vtanh.pop %v1909
    %v1930 = vrot.slane %v1245, 6
    %v1932 = vmul.f32 %v1925, %v1930
    %v1933 = vmul.f32 %v1923, %v1928
    %v1934 = vadd.f32 %v1932, %v1933
    %v1935 = vtanh.pop %v1934
    %v1936 = vmul.f32 %v1927, %v1935
    %v1938 = vrot.slane %v1417, 4
    %v1939 = vrot.slane %v1938, 4
    %1941 = vmatprep.subr.mxu0 %v731
    %1942 = vmatpush1.msra.mxu0 %v730
    %1943 = vmatprep.subr.mxu0 %v735
    %1944 = vmatpush1.msra.mxu0 %v734
    %1945 = vmatprep.subr.mxu0 %v739
    %1946 = vmatpush1.msra.mxu0 %v738
    %1947 = vmatprep.subr.mxu0 %v743
    %1948 = vmatpush1.msra.mxu0 %v742
    %1949 = vmatprep.subr.mxu0 %v747
    %1950 = vmatpush1.msra.mxu0 %v746
    %1951 = vmatprep.subr.mxu0 %v751
    %1952 = vmatpush1.msra.mxu0 %v750
    %1953 = vmatprep.subr.mxu0 %v755
    %1954 = vmatpush1.msra.mxu0 %v754
    %1955 = vmatprep.subr.mxu0 %v759
    %1956 = vmatpush1.msra.mxu0 %v758
    %1957 = vmatprep.subr.mxu0 %v763
    %1958 = vmatpush1.msra.mxu0 %v762
    %1959 = vmatprep.subr.mxu0 %v767
    %1960 = vmatpush1.msra.mxu0 %v766
    %1961 = vmatprep.subr.mxu0 %v771
    %1962 = vmatpush1.msra.mxu0 %v770
    %1963 = vmatprep.subr.mxu0 %v775
    %1964 = vmatpush1.msra.mxu0 %v774
    %1965 = vmatprep.subr.mxu0 %v779
    %1966 = vmatpush1.msra.mxu0 %v778
    %1967 = vmatprep.subr.mxu0 %v783
    %1968 = vmatpush1.msra.mxu0 %v782
    %1969 = vmatprep.subr.mxu0 %v787
    %1970 = vmatpush1.msra.mxu0 %v786
    %1971 = vmatprep.subr.mxu0 %v791
    %1972 = vmatpush1.msra.mxu0 %v790
    %1973 = vmatprep.subr.mxu0 %v795
    %1974 = vmatpush1.msra.mxu0 %v794
    %1975 = vmatprep.subr.mxu0 %v799
    %1976 = vmatpush1.msra.mxu0 %v798
    %1977 = vmatprep.subr.mxu0 %v803
    %1978 = vmatpush1.msra.mxu0 %v802
    %1979 = vmatprep.subr.mxu0 %v807
    %1980 = vmatpush1.msra.mxu0 %v806
    %1981 = vmatprep.subr.mxu0 %v811
    %1982 = vmatpush1.msra.mxu0 %v810
    %1983 = vmatprep.subr.mxu0 %v815
    %1984 = vmatpush1.msra.mxu0 %v814
    %1985 = vmatprep.subr.mxu0 %v819
    %1986 = vmatpush1.msra.mxu0 %v818
    %1987 = vmatprep.subr.mxu0 %v823
    %1988 = vmatpush1.msra.mxu0 %v822
    %1989 = vmatprep.subr.mxu0 %v827
    %1990 = vmatpush1.msra.mxu0 %v826
    %1991 = vmatprep.subr.mxu0 %v831
    %1992 = vmatpush1.msra.mxu0 %v830
    %1993 = vmatprep.subr.mxu0 %v835
    %1994 = vmatpush1.msra.mxu0 %v834
    %1995 = vmatprep.subr.mxu0 %v839
    %1996 = vmatpush1.msra.mxu0 %v838
    %1997 = vmatprep.subr.mxu0 %v843
    %1998 = vmatpush1.msra.mxu0 %v842
    %1999 = vmatprep.subr.mxu0 %v847
    %2000 = vmatpush1.msra.mxu0 %v846
    %2001 = vmatprep.subr.mxu0 %v851
    %2002 = vmatpush1.msra.mxu0 %v850
    %2003 = vmatprep.subr.mxu0 %v855
    %2004 = vmatpush1.msra.mxu0 %v854
    %2005 = vmatprep.mubr.f32.mxu0 %v1939
    %2006 = vmatmul.mubr.f32.gmra.mrb[0].mxu0 %v1750
    %v2007 = vpop.f32.mrb[0].mxu0
    %v2008 = vadd.f32 %v881, %v2007
    %v2009 = vpop.f32.mrb[0].mxu0
    %v2010 = vadd.f32 %v885, %v2009
    %2011 = vdwg.mxu0
    %2012 = vmatprep.subr.mxu0 %v733
    %2013 = vmatpush1.msra.mxu0 %v732
    %2014 = vmatprep.subr.mxu0 %v737
    %2015 = vmatpush1.msra.mxu0 %v736
    %2016 = vmatprep.subr.mxu0 %v741
    %2017 = vmatpush1.msra.mxu0 %v740
    %2018 = vmatprep.subr.mxu0 %v745
    %2019 = vmatpush1.msra.mxu0 %v744
    %2020 = vmatprep.subr.mxu0 %v749
    %2021 = vmatpush1.msra.mxu0 %v748
    %2022 = vmatprep.subr.mxu0 %v753
    %2023 = vmatpush1.msra.mxu0 %v752
    %2024 = vmatprep.subr.mxu0 %v757
    %2025 = vmatpush1.msra.mxu0 %v756
    %2026 = vmatprep.subr.mxu0 %v761
    %2027 = vmatpush1.msra.mxu0 %v760
    %2028 = vmatprep.subr.mxu0 %v765
    %2029 = vmatpush1.msra.mxu0 %v764
    %2030 = vmatprep.subr.mxu0 %v769
    %2031 = vmatpush1.msra.mxu0 %v768
    %2032 = vmatprep.subr.mxu0 %v773
    %2033 = vmatpush1.msra.mxu0 %v772
    %2034 = vmatprep.subr.mxu0 %v777
    %2035 = vmatpush1.msra.mxu0 %v776
    %2036 = vmatprep.subr.mxu0 %v781
    %2037 = vmatpush1.msra.mxu0 %v780
    %2038 = vmatprep.subr.mxu0 %v785
    %2039 = vmatpush1.msra.mxu0 %v784
    %2040 = vmatprep.subr.mxu0 %v789
    %2041 = vmatpush1.msra.mxu0 %v788
    %2042 = vmatprep.subr.mxu0 %v793
    %2043 = vmatpush1.msra.mxu0 %v792
    %2044 = vmatprep.subr.mxu0 %v797
    %2045 = vmatpush1.msra.mxu0 %v796
    %2046 = vmatprep.subr.mxu0 %v801
    %2047 = vmatpush1.msra.mxu0 %v800
    %2048 = vmatprep.subr.mxu0 %v805
    %2049 = vmatpush1.msra.mxu0 %v804
    %2050 = vmatprep.subr.mxu0 %v809
    %2051 = vmatpush1.msra.mxu0 %v808
    %2052 = vmatprep.subr.mxu0 %v813
    %2053 = vmatpush1.msra.mxu0 %v812
    %2054 = vmatprep.subr.mxu0 %v817
    %2055 = vmatpush1.msra.mxu0 %v816
    %2056 = vmatprep.subr.mxu0 %v821
    %2057 = vmatpush1.msra.mxu0 %v820
    %2058 = vmatprep.subr.mxu0 %v825
    %2059 = vmatpush1.msra.mxu0 %v824
    %2060 = vmatprep.subr.mxu0 %v829
    %2061 = vmatpush1.msra.mxu0 %v828
    %2062 = vmatprep.subr.mxu0 %v833
    %2063 = vmatpush1.msra.mxu0 %v832
    %2064 = vmatprep.subr.mxu0 %v837
    %2065 = vmatpush1.msra.mxu0 %v836
    %2066 = vmatprep.subr.mxu0 %v841
    %2067 = vmatpush1.msra.mxu0 %v840
    %2068 = vmatprep.subr.mxu0 %v845
    %2069 = vmatpush1.msra.mxu0 %v844
    %2070 = vmatprep.subr.mxu0 %v849
    %2071 = vmatpush1.msra.mxu0 %v848
    %2072 = vmatprep.subr.mxu0 %v853
    %2073 = vmatpush1.msra.mxu0 %v852
    %2074 = vmatprep.subr.mxu0 %v857
    %2075 = vmatpush1.msra.mxu0 %v856
    %2076 = vmatprep.mubr.f32.mxu0 %v1939
    %2077 = vmatmul.mubr.f32.gmra.mrb[0].mxu0 %v1750
    %v2078 = vpop.f32.mrb[0].mxu0
    %v2079 = vadd.f32 %v889, %v2078
    %v2080 = vpop.f32.mrb[0].mxu0
    %v2081 = vadd.f32 %v893, %v2080
    %2082 = vdwg.mxu0
    %v2083 = vxor.u32 %v2008, 2147483648
    %v2084 = vxor.u32 %v2010, 2147483648
    %v2085 = vxor.u32 %v2079, 2147483648
    %v2086 = vmul.f32 %v2083, 1.442695
    %v2087 = vpow.pop %v2086
    %v2088 = vmul.f32 %v2084, 1.442695
    %v2089 = vpow.pop %v2088
    %v2090 = vmul.f32 %v2085, 1.442695
    %v2091 = vpow.pop %v2090
    %v2092 = vadd.f32 %v2087, 1.0
    %v2093 = vadd.f32 %v2089, 1.0
    %v2094 = vadd.f32 %v2091, 1.0
    %v2095 = vrcp.pop %v2092
    %v2096 = vmul.f32 1.0, %v2095
    %v2097 = vrcp.pop %v2093
    %v2098 = vmul.f32 1.0, %v2097
    %v2099 = vrcp.pop %v2094
    %v2100 = vmul.f32 1.0, %v2099
    %v2101 = vtanh.pop %v2081
    %v2102 = vmul.f32 %v2098, %v1415
    %v2103 = vmul.f32 %v2096, %v2101
    %v2104 = vadd.f32 %v2102, %v2103
    %v2105 = vtanh.pop %v2104
    %v2106 = vmul.f32 %v2100, %v2105
    %2107 = vmatprep.subr.mxu0 %v1420
    %2108 = vmatpush1.msra.mxu0 %v1419
    %2109 = vmatprep.subr.mxu0 %v1424
    %2110 = vmatpush1.msra.mxu0 %v1423
    %2111 = vmatprep.subr.mxu0 %v1428
    %2112 = vmatpush1.msra.mxu0 %v1427
    %2113 = vmatprep.subr.mxu0 %v1432
    %2114 = vmatpush1.msra.mxu0 %v1431
    %2115 = vmatprep.subr.mxu0 %v1436
    %2116 = vmatpush1.msra.mxu0 %v1435
    %2117 = vmatprep.subr.mxu0 %v1440
    %2118 = vmatpush1.msra.mxu0 %v1439
    %2119 = vmatprep.subr.mxu0 %v1444
    %2120 = vmatpush1.msra.mxu0 %v1443
    %2121 = vmatprep.subr.mxu0 %v1448
    %2122 = vmatpush1.msra.mxu0 %v1447
    %2123 = vmatprep.subr.mxu0 %v1452
    %2124 = vmatpush1.msra.mxu0 %v1451
    %2125 = vmatprep.subr.mxu0 %v1456
    %2126 = vmatpush1.msra.mxu0 %v1455
    %2127 = vmatprep.subr.mxu0 %v1460
    %2128 = vmatpush1.msra.mxu0 %v1459
    %2129 = vmatprep.subr.mxu0 %v1464
    %2130 = vmatpush1.msra.mxu0 %v1463
    %2131 = vmatprep.subr.mxu0 %v1468
    %2132 = vmatpush1.msra.mxu0 %v1467
    %2133 = vmatprep.subr.mxu0 %v1472
    %2134 = vmatpush1.msra.mxu0 %v1471
    %2135 = vmatprep.subr.mxu0 %v1476
    %2136 = vmatpush1.msra.mxu0 %v1475
    %2137 = vmatprep.subr.mxu0 %v1480
    %2138 = vmatpush1.msra.mxu0 %v1479
    %2139 = vmatprep.subr.mxu0 %v1484
    %2140 = vmatpush1.msra.mxu0 %v1483
    %2141 = vmatprep.subr.mxu0 %v1488
    %2142 = vmatpush1.msra.mxu0 %v1487
    %2143 = vmatprep.subr.mxu0 %v1492
    %2144 = vmatpush1.msra.mxu0 %v1491
    %2145 = vmatprep.subr.mxu0 %v1496
    %2146 = vmatpush1.msra.mxu0 %v1495
    %2147 = vmatprep.subr.mxu0 %v1500
    %2148 = vmatpush1.msra.mxu0 %v1499
    %2149 = vmatprep.subr.mxu0 %v1504
    %2150 = vmatpush1.msra.mxu0 %v1503
    %2151 = vmatprep.subr.mxu0 %v1508
    %2152 = vmatpush1.msra.mxu0 %v1507
    %2153 = vmatprep.subr.mxu0 %v1512
    %2154 = vmatpush1.msra.mxu0 %v1511
    %2155 = vmatprep.subr.mxu0 %v1516
    %2156 = vmatpush1.msra.mxu0 %v1515
    %2157 = vmatprep.subr.mxu0 %v1520
    %2158 = vmatpush1.msra.mxu0 %v1519
    %2159 = vmatprep.subr.mxu0 %v1524
    %2160 = vmatpush1.msra.mxu0 %v1523
    %2161 = vmatprep.subr.mxu0 %v1528
    %2162 = vmatpush1.msra.mxu0 %v1527
    %2163 = vmatprep.subr.mxu0 %v1532
    %2164 = vmatpush1.msra.mxu0 %v1531
    %2165 = vmatprep.subr.mxu0 %v1536
    %2166 = vmatpush1.msra.mxu0 %v1535
    %2167 = vmatprep.subr.mxu0 %v1540
    %2168 = vmatpush1.msra.mxu0 %v1539
    %2169 = vmatprep.subr.mxu0 %v1544
    %2170 = vmatpush1.msra.mxu0 %v1543
    %2171 = vmatprep.mubr.f32.mxu0 %v1748
    %2172 = vmatmul.mubr.f32.gmra.mrb[0].mxu0 %v1417
    %v2173 = vpop.f32.mrb[0].mxu0
    %v2174 = vadd.f32 %v1570, %v2173
    %v2175 = vpop.f32.mrb[0].mxu0
    %v2176 = vadd.f32 %v1574, %v2175
    %2177 = vdwg.mxu0
    %2178 = vmatprep.subr.mxu0 %v1422
    %2179 = vmatpush1.msra.mxu0 %v1421
    %2180 = vmatprep.subr.mxu0 %v1426
    %2181 = vmatpush1.msra.mxu0 %v1425
    %2182 = vmatprep.subr.mxu0 %v1430
    %2183 = vmatpush1.msra.mxu0 %v1429
    %2184 = vmatprep.subr.mxu0 %v1434
    %2185 = vmatpush1.msra.mxu0 %v1433
    %2186 = vmatprep.subr.mxu0 %v1438
    %2187 = vmatpush1.msra.mxu0 %v1437
    %2188 = vmatprep.subr.mxu0 %v1442
    %2189 = vmatpush1.msra.mxu0 %v1441
    %2190 = vmatprep.subr.mxu0 %v1446
    %2191 = vmatpush1.msra.mxu0 %v1445
    %2192 = vmatprep.subr.mxu0 %v1450
    %2193 = vmatpush1.msra.mxu0 %v1449
    %2194 = vmatprep.subr.mxu0 %v1454
    %2195 = vmatpush1.msra.mxu0 %v1453
    %2196 = vmatprep.subr.mxu0 %v1458
    %2197 = vmatpush1.msra.mxu0 %v1457
    %2198 = vmatprep.subr.mxu0 %v1462
    %2199 = vmatpush1.msra.mxu0 %v1461
    %2200 = vmatprep.subr.mxu0 %v1466
    %2201 = vmatpush1.msra.mxu0 %v1465
    %2202 = vmatprep.subr.mxu0 %v1470
    %2203 = vmatpush1.msra.mxu0 %v1469
    %2204 = vmatprep.subr.mxu0 %v1474
    %2205 = vmatpush1.msra.mxu0 %v1473
    %2206 = vmatprep.subr.mxu0 %v1478
    %2207 = vmatpush1.msra.mxu0 %v1477
    %2208 = vmatprep.subr.mxu0 %v1482
    %2209 = vmatpush1.msra.mxu0 %v1481
    %2210 = vmatprep.subr.mxu0 %v1486
    %2211 = vmatpush1.msra.mxu0 %v1485
    %2212 = vmatprep.subr.mxu0 %v1490
    %2213 = vmatpush1.msra.mxu0 %v1489
    %2214 = vmatprep.subr.mxu0 %v1494
    %2215 = vmatpush1.msra.mxu0 %v1493
    %2216 = vmatprep.subr.mxu0 %v1498
    %2217 = vmatpush1.msra.mxu0 %v1497
    %2218 = vmatprep.subr.mxu0 %v1502
    %2219 = vmatpush1.msra.mxu0 %v1501
    %2220 = vmatprep.subr.mxu0 %v1506
    %2221 = vmatpush1.msra.mxu0 %v1505
    %2222 = vmatprep.subr.mxu0 %v1510
    %2223 = vmatpush1.msra.mxu0 %v1509
    %2224 = vmatprep.subr.mxu0 %v1514
    %2225 = vmatpush1.msra.mxu0 %v1513
    %2226 = vmatprep.subr.mxu0 %v1518
    %2227 = vmatpush1.msra.mxu0 %v1517
    %2228 = vmatprep.subr.mxu0 %v1522
    %2229 = vmatpush1.msra.mxu0 %v1521
    %2230 = vmatprep.subr.mxu0 %v1526
    %2231 = vmatpush1.msra.mxu0 %v1525
    %2232 = vmatprep.subr.mxu0 %v1530
    %2233 = vmatpush1.msra.mxu0 %v1529
    %2234 = vmatprep.subr.mxu0 %v1534
    %2235 = vmatpush1.msra.mxu0 %v1533
    %2236 = vmatprep.subr.mxu0 %v1538
    %2237 = vmatpush1.msra.mxu0 %v1537
    %2238 = vmatprep.subr.mxu0 %v1542
    %2239 = vmatpush1.msra.mxu0 %v1541
    %2240 = vmatprep.subr.mxu0 %v1546
    %2241 = vmatpush1.msra.mxu0 %v1545
    %2242 = vmatprep.mubr.f32.mxu0 %v1748
    %2243 = vmatmul.mubr.f32.gmra.mrb[0].mxu0 %v1417
    %v2244 = vpop.f32.mrb[0].mxu0
    %v2245 = vadd.f32 %v1578, %v2244
    %v2246 = vpop.f32.mrb[0].mxu0
    %v2247 = vadd.f32 %v1582, %v2246
    %2248 = vdwg.mxu0
    %v2249 = vxor.u32 %v2174, 2147483648
    %v2250 = vxor.u32 %v2176, 2147483648
    %v2251 = vxor.u32 %v2245, 2147483648
    %v2252 = vmul.f32 %v2249, 1.442695
    %v2253 = vpow.pop %v2252
    %v2254 = vmul.f32 %v2250, 1.442695
    %v2255 = vpow.pop %v2254
    %v2256 = vmul.f32 %v2251, 1.442695
    %v2257 = vpow.pop %v2256
    %v2258 = vadd.f32 %v2253, 1.0
    %v2259 = vadd.f32 %v2255, 1.0
    %v2260 = vadd.f32 %v2257, 1.0
    %v2261 = vrcp.pop %v2258
    %v2262 = vmul.f32 1.0, %v2261
    %v2263 = vrcp.pop %v2259
    %v2264 = vmul.f32 1.0, %v2263
    %v2265 = vrcp.pop %v2260
    %v2266 = vmul.f32 1.0, %v2265
    %v2267 = vtanh.pop %v2247
    %v2268 = vmul.f32 %v2264, %v1746
    %v2269 = vmul.f32 %v2262, %v2267
    %v2270 = vadd.f32 %v2268, %v2269
    %v2271 = vtanh.pop %v2270
    %v2272 = vmul.f32 %v2266, %v2271
    %s2273 = scalar_lea.vmem [#allocation8], 2048
    %v2274 = vld [vmem:[%s2273] sm:$0xff]
    %v2275 = vld [vmem:[%s2273 + $0x8] sm:$0xff]
    %v2276 = vld [vmem:[%s2273 + $0x10] sm:$0xff]
    %v2277 = vld [vmem:[%s2273 + $0x18] sm:$0xff]
    %v2278 = vld [vmem:[%s2273 + $0x20] sm:$0xff]
    %v2279 = vld [vmem:[%s2273 + $0x28] sm:$0xff]
    %v2280 = vld [vmem:[%s2273 + $0x30] sm:$0xff]
    %v2281 = vld [vmem:[%s2273 + $0x38] sm:$0xff]
    %v2282 = vld [vmem:[%s2273 + $0x40] sm:$0xff]
    %v2283 = vld [vmem:[%s2273 + $0x48] sm:$0xff]
    %v2284 = vld [vmem:[%s2273 + $0x50] sm:$0xff]
    %v2285 = vld [vmem:[%s2273 + $0x58] sm:$0xff]
    %v2286 = vld [vmem:[%s2273 + $0x60] sm:$0xff]
    %v2287 = vld [vmem:[%s2273 + $0x68] sm:$0xff]
    %v2288 = vld [vmem:[%s2273 + $0x70] sm:$0xff]
    %v2289 = vld [vmem:[%s2273 + $0x78] sm:$0xff]
    %v2290 = vld [vmem:[%s2273 + $0x80] sm:$0xff]
    %v2291 = vld [vmem:[%s2273 + $0x88] sm:$0xff]
    %v2292 = vld [vmem:[%s2273 + $0x90] sm:$0xff]
    %v2293 = vld [vmem:[%s2273 + $0x98] sm:$0xff]
    %v2294 = vld [vmem:[%s2273 + $0xa0] sm:$0xff]
    %v2295 = vld [vmem:[%s2273 + $0xa8] sm:$0xff]
    %v2296 = vld [vmem:[%s2273 + $0xb0] sm:$0xff]
    %v2297 = vld [vmem:[%s2273 + $0xb8] sm:$0xff]
    %v2298 = vld [vmem:[%s2273 + $0xc0] sm:$0xff]
    %v2299 = vld [vmem:[%s2273 + $0xc8] sm:$0xff]
    %v2300 = vld [vmem:[%s2273 + $0xd0] sm:$0xff]
    %v2301 = vld [vmem:[%s2273 + $0xd8] sm:$0xff]
    %v2302 = vld [vmem:[%s2273 + $0xe0] sm:$0xff]
    %v2303 = vld [vmem:[%s2273 + $0xe8] sm:$0xff]
    %v2304 = vld [vmem:[%s2273 + $0xf0] sm:$0xff]
    %v2305 = vld [vmem:[%s2273 + $0xf8] sm:$0xff]
    %v2306 = vld [vmem:[%s2273 + $0x100] sm:$0xff]
    %v2307 = vld [vmem:[%s2273 + $0x108] sm:$0xff]
    %v2308 = vld [vmem:[%s2273 + $0x110] sm:$0xff]
    %v2309 = vld [vmem:[%s2273 + $0x118] sm:$0xff]
    %v2310 = vld [vmem:[%s2273 + $0x120] sm:$0xff]
    %v2311 = vld [vmem:[%s2273 + $0x128] sm:$0xff]
    %v2312 = vld [vmem:[%s2273 + $0x130] sm:$0xff]
    %v2313 = vld [vmem:[%s2273 + $0x138] sm:$0xff]
    %v2314 = vld [vmem:[%s2273 + $0x140] sm:$0xff]
    %v2315 = vld [vmem:[%s2273 + $0x148] sm:$0xff]
    %v2316 = vld [vmem:[%s2273 + $0x150] sm:$0xff]
    %v2317 = vld [vmem:[%s2273 + $0x158] sm:$0xff]
    %v2318 = vld [vmem:[%s2273 + $0x160] sm:$0xff]
    %v2319 = vld [vmem:[%s2273 + $0x168] sm:$0xff]
    %v2320 = vld [vmem:[%s2273 + $0x170] sm:$0xff]
    %v2321 = vld [vmem:[%s2273 + $0x178] sm:$0xff]
    %v2322 = vld [vmem:[%s2273 + $0x180] sm:$0xff]
    %v2323 = vld [vmem:[%s2273 + $0x188] sm:$0xff]
    %v2324 = vld [vmem:[%s2273 + $0x190] sm:$0xff]
    %v2325 = vld [vmem:[%s2273 + $0x198] sm:$0xff]
    %v2326 = vld [vmem:[%s2273 + $0x1a0] sm:$0xff]
    %v2327 = vld [vmem:[%s2273 + $0x1a8] sm:$0xff]
    %v2328 = vld [vmem:[%s2273 + $0x1b0] sm:$0xff]
    %v2329 = vld [vmem:[%s2273 + $0x1b8] sm:$0xff]
    %v2330 = vld [vmem:[%s2273 + $0x1c0] sm:$0xff]
    %v2331 = vld [vmem:[%s2273 + $0x1c8] sm:$0xff]
    %v2332 = vld [vmem:[%s2273 + $0x1d0] sm:$0xff]
    %v2333 = vld [vmem:[%s2273 + $0x1d8] sm:$0xff]
    %v2334 = vld [vmem:[%s2273 + $0x1e0] sm:$0xff]
    %v2335 = vld [vmem:[%s2273 + $0x1e8] sm:$0xff]
    %v2336 = vld [vmem:[%s2273 + $0x1f0] sm:$0xff]
    %v2337 = vld [vmem:[%s2273 + $0x1f8] sm:$0xff]
    %v2338 = vld [vmem:[%s2273 + $0x200] sm:$0xff]
    %v2339 = vld [vmem:[%s2273 + $0x208] sm:$0xff]
    %v2340 = vld [vmem:[%s2273 + $0x210] sm:$0xff]
    %v2341 = vld [vmem:[%s2273 + $0x218] sm:$0xff]
    %v2342 = vld [vmem:[%s2273 + $0x220] sm:$0xff]
    %v2343 = vld [vmem:[%s2273 + $0x228] sm:$0xff]
    %v2344 = vld [vmem:[%s2273 + $0x230] sm:$0xff]
    %v2345 = vld [vmem:[%s2273 + $0x238] sm:$0xff]
    %v2346 = vld [vmem:[%s2273 + $0x240] sm:$0xff]
    %v2347 = vld [vmem:[%s2273 + $0x248] sm:$0xff]
    %v2348 = vld [vmem:[%s2273 + $0x250] sm:$0xff]
    %v2349 = vld [vmem:[%s2273 + $0x258] sm:$0xff]
    %v2350 = vld [vmem:[%s2273 + $0x260] sm:$0xff]
    %v2351 = vld [vmem:[%s2273 + $0x268] sm:$0xff]
    %v2352 = vld [vmem:[%s2273 + $0x270] sm:$0xff]
    %v2353 = vld [vmem:[%s2273 + $0x278] sm:$0xff]
    %v2354 = vld [vmem:[%s2273 + $0x280] sm:$0xff]
    %v2355 = vld [vmem:[%s2273 + $0x288] sm:$0xff]
    %v2356 = vld [vmem:[%s2273 + $0x290] sm:$0xff]
    %v2357 = vld [vmem:[%s2273 + $0x298] sm:$0xff]
    %v2358 = vld [vmem:[%s2273 + $0x2a0] sm:$0xff]
    %v2359 = vld [vmem:[%s2273 + $0x2a8] sm:$0xff]
    %v2360 = vld [vmem:[%s2273 + $0x2b0] sm:$0xff]
    %v2361 = vld [vmem:[%s2273 + $0x2b8] sm:$0xff]
    %v2362 = vld [vmem:[%s2273 + $0x2c0] sm:$0xff]
    %v2363 = vld [vmem:[%s2273 + $0x2c8] sm:$0xff]
    %v2364 = vld [vmem:[%s2273 + $0x2d0] sm:$0xff]
    %v2365 = vld [vmem:[%s2273 + $0x2d8] sm:$0xff]
    %v2366 = vld [vmem:[%s2273 + $0x2e0] sm:$0xff]
    %v2367 = vld [vmem:[%s2273 + $0x2e8] sm:$0xff]
    %v2368 = vld [vmem:[%s2273 + $0x2f0] sm:$0xff]
    %v2369 = vld [vmem:[%s2273 + $0x2f8] sm:$0xff]
    %v2370 = vld [vmem:[%s2273 + $0x300] sm:$0xff]
    %v2371 = vld [vmem:[%s2273 + $0x308] sm:$0xff]
    %v2372 = vld [vmem:[%s2273 + $0x310] sm:$0xff]
    %v2373 = vld [vmem:[%s2273 + $0x318] sm:$0xff]
    %v2374 = vld [vmem:[%s2273 + $0x320] sm:$0xff]
    %v2375 = vld [vmem:[%s2273 + $0x328] sm:$0xff]
    %v2376 = vld [vmem:[%s2273 + $0x330] sm:$0xff]
    %v2377 = vld [vmem:[%s2273 + $0x338] sm:$0xff]
    %v2378 = vld [vmem:[%s2273 + $0x340] sm:$0xff]
    %v2379 = vld [vmem:[%s2273 + $0x348] sm:$0xff]
    %v2380 = vld [vmem:[%s2273 + $0x350] sm:$0xff]
    %v2381 = vld [vmem:[%s2273 + $0x358] sm:$0xff]
    %v2382 = vld [vmem:[%s2273 + $0x360] sm:$0xff]
    %v2383 = vld [vmem:[%s2273 + $0x368] sm:$0xff]
    %v2384 = vld [vmem:[%s2273 + $0x370] sm:$0xff]
    %v2385 = vld [vmem:[%s2273 + $0x378] sm:$0xff]
    %v2386 = vld [vmem:[%s2273 + $0x380] sm:$0xff]
    %v2387 = vld [vmem:[%s2273 + $0x388] sm:$0xff]
    %v2388 = vld [vmem:[%s2273 + $0x390] sm:$0xff]
    %v2389 = vld [vmem:[%s2273 + $0x398] sm:$0xff]
    %v2390 = vld [vmem:[%s2273 + $0x3a0] sm:$0xff]
    %v2391 = vld [vmem:[%s2273 + $0x3a8] sm:$0xff]
    %v2392 = vld [vmem:[%s2273 + $0x3b0] sm:$0xff]
    %v2393 = vld [vmem:[%s2273 + $0x3b8] sm:$0xff]
    %v2394 = vld [vmem:[%s2273 + $0x3c0] sm:$0xff]
    %v2395 = vld [vmem:[%s2273 + $0x3c8] sm:$0xff]
    %v2396 = vld [vmem:[%s2273 + $0x3d0] sm:$0xff]
    %v2397 = vld [vmem:[%s2273 + $0x3d8] sm:$0xff]
    %v2398 = vld [vmem:[%s2273 + $0x3e0] sm:$0xff]
    %v2399 = vld [vmem:[%s2273 + $0x3e8] sm:$0xff]
    %v2400 = vld [vmem:[%s2273 + $0x3f0] sm:$0xff]
    %v2401 = vld [vmem:[%s2273 + $0x3f8] sm:$0xff]
    %v2402 = vlaneseq
    %v2403 = vshrl.u32 %v2402, 7
    %v2404 = vsub.s32 3, %v2403
    %v2405 = vrot.slane %v91, %v2404
    %v2406 = vlaneseq
    %v2407 = vshrl.u32 %v2406, 7
    %v2408 = vsub.s32 7, %v2407
    %v2409 = vrot.slane %v91, %v2408
    %v2410 = vlaneseq
    %v2411 = vshrl.u32 %v2410, 7
    %v2412 = vsub.s32 3, %v2411
    %v2413 = vrot.slane %v92, %v2412
    %v2414 = vlaneseq
    %v2415 = vshrl.u32 %v2414, 7
    %v2416 = vsub.s32 7, %v2415
    %v2417 = vrot.slane %v92, %v2416
    %v2422 = vlaneseq
    %v2423 = vshrl.u32 %v2422, 7
    %v2424 = vsub.s32 3, %v2423
    %v2425 = vrot.slane %v2405, %v2424
    %v2426 = vlaneseq
    %v2427 = vshrl.u32 %v2426, 7
    %v2428 = vsub.s32 3, %v2427
    %v2429 = vrot.slane %v2409, %v2428
    %v2430 = vlaneseq
    %v2431 = vshrl.u32 %v2430, 7
    %v2432 = vsub.s32 3, %v2431
    %v2433 = vrot.slane %v2413, %v2432
    %v2434 = vlaneseq
    %v2435 = vshrl.u32 %v2434, 7
    %v2436 = vsub.s32 3, %v2435
    %v2437 = vrot.slane %v2417, %v2436
    %2438 = vmatprep.subr.mxu0 %v2275
    %2439 = vmatpush1.msra.mxu0 %v2274
    %2440 = vmatprep.subr.mxu0 %v2279
    %2441 = vmatpush1.msra.mxu0 %v2278
    %2442 = vmatprep.subr.mxu0 %v2283
    %2443 = vmatpush1.msra.mxu0 %v2282
    %2444 = vmatprep.subr.mxu0 %v2287
    %2445 = vmatpush1.msra.mxu0 %v2286
    %2446 = vmatprep.subr.mxu0 %v2291
    %2447 = vmatpush1.msra.mxu0 %v2290
    %2448 = vmatprep.subr.mxu0 %v2295
    %2449 = vmatpush1.msra.mxu0 %v2294
    %2450 = vmatprep.subr.mxu0 %v2299
    %2451 = vmatpush1.msra.mxu0 %v2298
    %2452 = vmatprep.subr.mxu0 %v2303
    %2453 = vmatpush1.msra.mxu0 %v2302
    %2454 = vmatprep.subr.mxu0 %v2307
    %2455 = vmatpush1.msra.mxu0 %v2306
    %2456 = vmatprep.subr.mxu0 %v2311
    %2457 = vmatpush1.msra.mxu0 %v2310
    %2458 = vmatprep.subr.mxu0 %v2315
    %2459 = vmatpush1.msra.mxu0 %v2314
    %2460 = vmatprep.subr.mxu0 %v2319
    %2461 = vmatpush1.msra.mxu0 %v2318
    %2462 = vmatprep.subr.mxu0 %v2323
    %2463 = vmatpush1.msra.mxu0 %v2322
    %2464 = vmatprep.subr.mxu0 %v2327
    %2465 = vmatpush1.msra.mxu0 %v2326
    %2466 = vmatprep.subr.mxu0 %v2331
    %2467 = vmatpush1.msra.mxu0 %v2330
    %2468 = vmatprep.subr.mxu0 %v2335
    %2469 = vmatpush1.msra.mxu0 %v2334
    %2470 = vmatprep.subr.mxu0 %v2339
    %2471 = vmatpush1.msra.mxu0 %v2338
    %2472 = vmatprep.subr.mxu0 %v2343
    %2473 = vmatpush1.msra.mxu0 %v2342
    %2474 = vmatprep.subr.mxu0 %v2347
    %2475 = vmatpush1.msra.mxu0 %v2346
    %2476 = vmatprep.subr.mxu0 %v2351
    %2477 = vmatpush1.msra.mxu0 %v2350
    %2478 = vmatprep.subr.mxu0 %v2355
    %2479 = vmatpush1.msra.mxu0 %v2354
    %2480 = vmatprep.subr.mxu0 %v2359
    %2481 = vmatpush1.msra.mxu0 %v2358
    %2482 = vmatprep.subr.mxu0 %v2363
    %2483 = vmatpush1.msra.mxu0 %v2362
    %2484 = vmatprep.subr.mxu0 %v2367
    %2485 = vmatpush1.msra.mxu0 %v2366
    %2486 = vmatprep.subr.mxu0 %v2371
    %2487 = vmatpush1.msra.mxu0 %v2370
    %2488 = vmatprep.subr.mxu0 %v2375
    %2489 = vmatpush1.msra.mxu0 %v2374
    %2490 = vmatprep.subr.mxu0 %v2379
    %2491 = vmatpush1.msra.mxu0 %v2378
    %2492 = vmatprep.subr.mxu0 %v2383
    %2493 = vmatpush1.msra.mxu0 %v2382
    %2494 = vmatprep.subr.mxu0 %v2387
    %2495 = vmatpush1.msra.mxu0 %v2386
    %2496 = vmatprep.subr.mxu0 %v2391
    %2497 = vmatpush1.msra.mxu0 %v2390
    %2498 = vmatprep.subr.mxu0 %v2395
    %2499 = vmatpush1.msra.mxu0 %v2394
    %2500 = vmatprep.subr.mxu0 %v2399
    %2501 = vmatpush1.msra.mxu0 %v2398
    %2502 = vmatprep.mubr.f32.mxu0 0.0
    %2503 = vmatmul.mubr.f32.gmra.mrb[0].mxu0 %v1748
    %v2504 = vpop.f32.mrb[0].mxu0
    %v2505 = vadd.f32 %v2425, %v2504
    %v2506 = vpop.f32.mrb[0].mxu0
    %v2507 = vadd.f32 %v2429, %v2506
    %2508 = vdwg.mxu0
    %2509 = vmatprep.subr.mxu0 %v2277
    %2510 = vmatpush1.msra.mxu0 %v2276
    %2511 = vmatprep.subr.mxu0 %v2281
    %2512 = vmatpush1.msra.mxu0 %v2280
    %2513 = vmatprep.subr.mxu0 %v2285
    %2514 = vmatpush1.msra.mxu0 %v2284
    %2515 = vmatprep.subr.mxu0 %v2289
    %2516 = vmatpush1.msra.mxu0 %v2288
    %2517 = vmatprep.subr.mxu0 %v2293
    %2518 = vmatpush1.msra.mxu0 %v2292
    %2519 = vmatprep.subr.mxu0 %v2297
    %2520 = vmatpush1.msra.mxu0 %v2296
    %2521 = vmatprep.subr.mxu0 %v2301
    %2522 = vmatpush1.msra.mxu0 %v2300
    %2523 = vmatprep.subr.mxu0 %v2305
    %2524 = vmatpush1.msra.mxu0 %v2304
    %2525 = vmatprep.subr.mxu0 %v2309
    %2526 = vmatpush1.msra.mxu0 %v2308
    %2527 = vmatprep.subr.mxu0 %v2313
    %2528 = vmatpush1.msra.mxu0 %v2312
    %2529 = vmatprep.subr.mxu0 %v2317
    %2530 = vmatpush1.msra.mxu0 %v2316
    %2531 = vmatprep.subr.mxu0 %v2321
    %2532 = vmatpush1.msra.mxu0 %v2320
    %2533 = vmatprep.subr.mxu0 %v2325
    %2534 = vmatpush1.msra.mxu0 %v2324
    %2535 = vmatprep.subr.mxu0 %v2329
    %2536 = vmatpush1.msra.mxu0 %v2328
    %2537 = vmatprep.subr.mxu0 %v2333
    %2538 = vmatpush1.msra.mxu0 %v2332
    %2539 = vmatprep.subr.mxu0 %v2337
    %2540 = vmatpush1.msra.mxu0 %v2336
    %2541 = vmatprep.subr.mxu0 %v2341
    %2542 = vmatpush1.msra.mxu0 %v2340
    %2543 = vmatprep.subr.mxu0 %v2345
    %2544 = vmatpush1.msra.mxu0 %v2344
    %2545 = vmatprep.subr.mxu0 %v2349
    %2546 = vmatpush1.msra.mxu0 %v2348
    %2547 = vmatprep.subr.mxu0 %v2353
    %2548 = vmatpush1.msra.mxu0 %v2352
    %2549 = vmatprep.subr.mxu0 %v2357
    %2550 = vmatpush1.msra.mxu0 %v2356
    %2551 = vmatprep.subr.mxu0 %v2361
    %2552 = vmatpush1.msra.mxu0 %v2360
    %2553 = vmatprep.subr.mxu0 %v2365
    %2554 = vmatpush1.msra.mxu0 %v2364
    %2555 = vmatprep.subr.mxu0 %v2369
    %2556 = vmatpush1.msra.mxu0 %v2368
    %2557 = vmatprep.subr.mxu0 %v2373
    %2558 = vmatpush1.msra.mxu0 %v2372
    %2559 = vmatprep.subr.mxu0 %v2377
    %2560 = vmatpush1.msra.mxu0 %v2376
    %2561 = vmatprep.subr.mxu0 %v2381
    %2562 = vmatpush1.msra.mxu0 %v2380
    %2563 = vmatprep.subr.mxu0 %v2385
    %2564 = vmatpush1.msra.mxu0 %v2384
    %2565 = vmatprep.subr.mxu0 %v2389
    %2566 = vmatpush1.msra.mxu0 %v2388
    %2567 = vmatprep.subr.mxu0 %v2393
    %2568 = vmatpush1.msra.mxu0 %v2392
    %2569 = vmatprep.subr.mxu0 %v2397
    %2570 = vmatpush1.msra.mxu0 %v2396
    %2571 = vmatprep.subr.mxu0 %v2401
    %2572 = vmatpush1.msra.mxu0 %v2400
    %2573 = vmatprep.mubr.f32.mxu0 0.0
    %2574 = vmatmul.mubr.f32.gmra.mrb[0].mxu0 %v1748
    %v2575 = vpop.f32.mrb[0].mxu0
    %v2576 = vadd.f32 %v2433, %v2575
    %v2577 = vpop.f32.mrb[0].mxu0
    %v2578 = vadd.f32 %v2437, %v2577
    %2579 = vdwg.mxu0
    %v2580 = vxor.u32 %v2505, 2147483648
    %v2581 = vxor.u32 %v2507, 2147483648
    %v2582 = vxor.u32 %v2576, 2147483648
    %v2583 = vmul.f32 %v2580, 1.442695
    %v2584 = vpow.pop %v2583
    %v2585 = vmul.f32 %v2581, 1.442695
    %v2586 = vpow.pop %v2585
    %v2587 = vmul.f32 %v2582, 1.442695
    %v2588 = vpow.pop %v2587
    %v2589 = vadd.f32 %v2584, 1.0
    %v2590 = vadd.f32 %v2586, 1.0
    %v2591 = vadd.f32 %v2588, 1.0
    %v2592 = vrcp.pop %v2589
    %v2593 = vmul.f32 1.0, %v2592
    %v2594 = vrcp.pop %v2590
    %v2595 = vmul.f32 1.0, %v2594
    %v2596 = vrcp.pop %v2591
    %v2597 = vmul.f32 1.0, %v2596
    %v2598 = vtanh.pop %v2578
    %v2599 = vmul.f32 %v2595, 0.0
    %v2600 = vmul.f32 %v2593, %v2598
    %v2601 = vadd.f32 %v2599, %v2600
    %v2602 = vtanh.pop %v2601
    %v2603 = vmul.f32 %v2597, %v2602
    %v2605 = vrot.slane %v1936, 6
    %2607 = vmatprep.subr.mxu0 %v312
    %2608 = vmatpush1.msra.mxu0 %v311
    %2609 = vmatprep.subr.mxu0 %v316
    %2610 = vmatpush1.msra.mxu0 %v315
    %2611 = vmatprep.subr.mxu0 %v320
    %2612 = vmatpush1.msra.mxu0 %v319
    %2613 = vmatprep.subr.mxu0 %v324
    %2614 = vmatpush1.msra.mxu0 %v323
    %2615 = vmatprep.subr.mxu0 %v328
    %2616 = vmatpush1.msra.mxu0 %v327
    %2617 = vmatprep.subr.mxu0 %v332
    %2618 = vmatpush1.msra.mxu0 %v331
    %2619 = vmatprep.subr.mxu0 %v336
    %2620 = vmatpush1.msra.mxu0 %v335
    %2621 = vmatprep.subr.mxu0 %v340
    %2622 = vmatpush1.msra.mxu0 %v339
    %2623 = vmatprep.subr.mxu0 %v344
    %2624 = vmatpush1.msra.mxu0 %v343
    %2625 = vmatprep.subr.mxu0 %v348
    %2626 = vmatpush1.msra.mxu0 %v347
    %2627 = vmatprep.subr.mxu0 %v352
    %2628 = vmatpush1.msra.mxu0 %v351
    %2629 = vmatprep.subr.mxu0 %v356
    %2630 = vmatpush1.msra.mxu0 %v355
    %2631 = vmatprep.subr.mxu0 %v360
    %2632 = vmatpush1.msra.mxu0 %v359
    %2633 = vmatprep.subr.mxu0 %v364
    %2634 = vmatpush1.msra.mxu0 %v363
    %2635 = vmatprep.subr.mxu0 %v368
    %2636 = vmatpush1.msra.mxu0 %v367
    %2637 = vmatprep.subr.mxu0 %v372
    %2638 = vmatpush1.msra.mxu0 %v371
    %2639 = vmatprep.subr.mxu0 0.0
    %2640 = vmatpush1.msra.mxu0 0.0
    %2641 = vmatprep.subr.mxu0 0.0
    %2642 = vmatpush1.msra.mxu0 0.0
    %2643 = vmatprep.subr.mxu0 0.0
    %2644 = vmatpush1.msra.mxu0 0.0
    %2645 = vmatprep.subr.mxu0 0.0
    %2646 = vmatpush1.msra.mxu0 0.0
    %2647 = vmatprep.subr.mxu0 0.0
    %2648 = vmatpush1.msra.mxu0 0.0
    %2649 = vmatprep.subr.mxu0 0.0
    %2650 = vmatpush1.msra.mxu0 0.0
    %2651 = vmatprep.subr.mxu0 0.0
    %2652 = vmatpush1.msra.mxu0 0.0
    %2653 = vmatprep.subr.mxu0 0.0
    %2654 = vmatpush1.msra.mxu0 0.0
    %2655 = vmatprep.subr.mxu0 0.0
    %2656 = vmatpush1.msra.mxu0 0.0
    %2657 = vmatprep.subr.mxu0 0.0
    %2658 = vmatpush1.msra.mxu0 0.0
    %2659 = vmatprep.subr.mxu0 0.0
    %2660 = vmatpush1.msra.mxu0 0.0
    %2661 = vmatprep.subr.mxu0 0.0
    %2662 = vmatpush1.msra.mxu0 0.0
    %2663 = vmatprep.subr.mxu0 0.0
    %2664 = vmatpush1.msra.mxu0 0.0
    %2665 = vmatprep.subr.mxu0 0.0
    %2666 = vmatpush1.msra.mxu0 0.0
    %2667 = vmatprep.subr.mxu0 0.0
    %2668 = vmatpush1.msra.mxu0 0.0
    %2669 = vmatprep.subr.mxu0 0.0
    %2670 = vmatpush1.msra.mxu0 0.0
    %2671 = vmatprep.mubr.f32.mxu0 0.0
    %2672 = vmatmul.mubr.f32.gmra.mrb[0].mxu0 %v2605
    %v2673 = vpop.f32.mrb[0].mxu0
    %v2674 = vadd.f32 0.0, %v2673
    %v2675 = vpop.f32.mrb[0].mxu0
    %v2676 = vadd.f32 0.0, %v2675
    %2677 = vdwg.mxu0
    %2678 = vmatprep.subr.mxu0 %v314
    %2679 = vmatpush1.msra.mxu0 %v313
    %2680 = vmatprep.subr.mxu0 %v318
    %2681 = vmatpush1.msra.mxu0 %v317
    %2682 = vmatprep.subr.mxu0 %v322
    %2683 = vmatpush1.msra.mxu0 %v321
    %2684 = vmatprep.subr.mxu0 %v326
    %2685 = vmatpush1.msra.mxu0 %v325
    %2686 = vmatprep.subr.mxu0 %v330
    %2687 = vmatpush1.msra.mxu0 %v329
    %2688 = vmatprep.subr.mxu0 %v334
    %2689 = vmatpush1.msra.mxu0 %v333
    %2690 = vmatprep.subr.mxu0 %v338
    %2691 = vmatpush1.msra.mxu0 %v337
    %2692 = vmatprep.subr.mxu0 %v342
    %2693 = vmatpush1.msra.mxu0 %v341
    %2694 = vmatprep.subr.mxu0 %v346
    %2695 = vmatpush1.msra.mxu0 %v345
    %2696 = vmatprep.subr.mxu0 %v350
    %2697 = vmatpush1.msra.mxu0 %v349
    %2698 = vmatprep.subr.mxu0 %v354
    %2699 = vmatpush1.msra.mxu0 %v353
    %2700 = vmatprep.subr.mxu0 %v358
    %2701 = vmatpush1.msra.mxu0 %v357
    %2702 = vmatprep.subr.mxu0 %v362
    %2703 = vmatpush1.msra.mxu0 %v361
    %2704 = vmatprep.subr.mxu0 %v366
    %2705 = vmatpush1.msra.mxu0 %v365
    %2706 = vmatprep.subr.mxu0 %v370
    %2707 = vmatpush1.msra.mxu0 %v369
    %2708 = vmatprep.subr.mxu0 %v374
    %2709 = vmatpush1.msra.mxu0 %v373
    %2710 = vmatprep.subr.mxu0 0.0
    %2711 = vmatpush1.msra.mxu0 0.0
    %2712 = vmatprep.subr.mxu0 0.0
    %2713 = vmatpush1.msra.mxu0 0.0
    %2714 = vmatprep.subr.mxu0 0.0
    %2715 = vmatpush1.msra.mxu0 0.0
    %2716 = vmatprep.subr.mxu0 0.0
    %2717 = vmatpush1.msra.mxu0 0.0
    %2718 = vmatprep.subr.mxu0 0.0
    %2719 = vmatpush1.msra.mxu0 0.0
    %2720 = vmatprep.subr.mxu0 0.0
    %2721 = vmatpush1.msra.mxu0 0.0
    %2722 = vmatprep.subr.mxu0 0.0
    %2723 = vmatpush1.msra.mxu0 0.0
    %2724 = vmatprep.subr.mxu0 0.0
    %2725 = vmatpush1.msra.mxu0 0.0
    %2726 = vmatprep.subr.mxu0 0.0
    %2727 = vmatpush1.msra.mxu0 0.0
    %2728 = vmatprep.subr.mxu0 0.0
    %2729 = vmatpush1.msra.mxu0 0.0
    %2730 = vmatprep.subr.mxu0 0.0
    %2731 = vmatpush1.msra.mxu0 0.0
    %2732 = vmatprep.subr.mxu0 0.0
    %2733 = vmatpush1.msra.mxu0 0.0
    %2734 = vmatprep.subr.mxu0 0.0
    %2735 = vmatpush1.msra.mxu0 0.0
    %2736 = vmatprep.subr.mxu0 0.0
    %2737 = vmatpush1.msra.mxu0 0.0
    %2738 = vmatprep.subr.mxu0 0.0
    %2739 = vmatpush1.msra.mxu0 0.0
    %2740 = vmatprep.subr.mxu0 0.0
    %2741 = vmatpush1.msra.mxu0 0.0
    %2742 = vmatprep.mubr.f32.mxu0 0.0
    %2743 = vmatmul.mubr.f32.gmra.mrb[0].mxu0 %v2605
    %v2744 = vpop.f32.mrb[0].mxu0
    %v2745 = vadd.f32 0.0, %v2744
    %v2746 = vpop.f32.mrb[0].mxu0
    %v2747 = vadd.f32 0.0, %v2746
    %2748 = vdwg.mxu0
    %v2749 = vadd.f32 %v230, %v2674
    %v2750 = vadd.f32 %v232, %v2676
    %v2751 = vadd.f32 %v307, %v2745
    %v2752 = vadd.f32 %v309, %v2747
    %v2753 = vxor.u32 %v2749, 2147483648
    %v2754 = vxor.u32 %v2750, 2147483648
    %v2755 = vxor.u32 %v2751, 2147483648
    %v2756 = vmul.f32 %v2753, 1.442695
    %v2757 = vpow.pop %v2756
    %v2758 = vmul.f32 %v2754, 1.442695
    %v2759 = vpow.pop %v2758
    %v2760 = vmul.f32 %v2755, 1.442695
    %v2761 = vpow.pop %v2760
    %v2762 = vadd.f32 %v2757, 1.0
    %v2763 = vadd.f32 %v2759, 1.0
    %v2764 = vadd.f32 %v2761, 1.0
    %v2765 = vrcp.pop %v2762
    %v2766 = vmul.f32 1.0, %v2765
    %v2767 = vrcp.pop %v2763
    %v2768 = vmul.f32 1.0, %v2767
    %v2769 = vrcp.pop %v2764
    %v2770 = vmul.f32 1.0, %v2769
    %v2771 = vtanh.pop %v2752
    %v2773 = vrot.slane %v1934, 6
    %v2775 = vmul.f32 %v2768, %v2773
    %v2776 = vmul.f32 %v2766, %v2771
    %v2777 = vadd.f32 %v2775, %v2776
    %v2778 = vtanh.pop %v2777
    %v2779 = vmul.f32 %v2770, %v2778
    %v2781 = vrot.slane %v2106, 2
    %v2782 = vrot.slane %v2781, 6
    %2784 = vmatprep.subr.mxu0 %v731
    %2785 = vmatpush1.msra.mxu0 %v730
    %2786 = vmatprep.subr.mxu0 %v735
    %2787 = vmatpush1.msra.mxu0 %v734
    %2788 = vmatprep.subr.mxu0 %v739
    %2789 = vmatpush1.msra.mxu0 %v738
    %2790 = vmatprep.subr.mxu0 %v743
    %2791 = vmatpush1.msra.mxu0 %v742
    %2792 = vmatprep.subr.mxu0 %v747
    %2793 = vmatpush1.msra.mxu0 %v746
    %2794 = vmatprep.subr.mxu0 %v751
    %2795 = vmatpush1.msra.mxu0 %v750
    %2796 = vmatprep.subr.mxu0 %v755
    %2797 = vmatpush1.msra.mxu0 %v754
    %2798 = vmatprep.subr.mxu0 %v759
    %2799 = vmatpush1.msra.mxu0 %v758
    %2800 = vmatprep.subr.mxu0 %v763
    %2801 = vmatpush1.msra.mxu0 %v762
    %2802 = vmatprep.subr.mxu0 %v767
    %2803 = vmatpush1.msra.mxu0 %v766
    %2804 = vmatprep.subr.mxu0 %v771
    %2805 = vmatpush1.msra.mxu0 %v770
    %2806 = vmatprep.subr.mxu0 %v775
    %2807 = vmatpush1.msra.mxu0 %v774
    %2808 = vmatprep.subr.mxu0 %v779
    %2809 = vmatpush1.msra.mxu0 %v778
    %2810 = vmatprep.subr.mxu0 %v783
    %2811 = vmatpush1.msra.mxu0 %v782
    %2812 = vmatprep.subr.mxu0 %v787
    %2813 = vmatpush1.msra.mxu0 %v786
    %2814 = vmatprep.subr.mxu0 %v791
    %2815 = vmatpush1.msra.mxu0 %v790
    %2816 = vmatprep.subr.mxu0 %v795
    %2817 = vmatpush1.msra.mxu0 %v794
    %2818 = vmatprep.subr.mxu0 %v799
    %2819 = vmatpush1.msra.mxu0 %v798
    %2820 = vmatprep.subr.mxu0 %v803
    %2821 = vmatpush1.msra.mxu0 %v802
    %2822 = vmatprep.subr.mxu0 %v807
    %2823 = vmatpush1.msra.mxu0 %v806
    %2824 = vmatprep.subr.mxu0 %v811
    %2825 = vmatpush1.msra.mxu0 %v810
    %2826 = vmatprep.subr.mxu0 %v815
    %2827 = vmatpush1.msra.mxu0 %v814
    %2828 = vmatprep.subr.mxu0 %v819
    %2829 = vmatpush1.msra.mxu0 %v818
    %2830 = vmatprep.subr.mxu0 %v823
    %2831 = vmatpush1.msra.mxu0 %v822
    %2832 = vmatprep.subr.mxu0 %v827
    %2833 = vmatpush1.msra.mxu0 %v826
    %2834 = vmatprep.subr.mxu0 %v831
    %2835 = vmatpush1.msra.mxu0 %v830
    %2836 = vmatprep.subr.mxu0 %v835
    %2837 = vmatpush1.msra.mxu0 %v834
    %2838 = vmatprep.subr.mxu0 %v839
    %2839 = vmatpush1.msra.mxu0 %v838
    %2840 = vmatprep.subr.mxu0 %v843
    %2841 = vmatpush1.msra.mxu0 %v842
    %2842 = vmatprep.subr.mxu0 %v847
    %2843 = vmatpush1.msra.mxu0 %v846
    %2844 = vmatprep.subr.mxu0 %v851
    %2845 = vmatpush1.msra.mxu0 %v850
    %2846 = vmatprep.subr.mxu0 %v855
    %2847 = vmatpush1.msra.mxu0 %v854
    %2848 = vmatprep.mubr.f32.mxu0 %v2782
    %2849 = vmatmul.mubr.f32.gmra.mrb[0].mxu0 %v2605
    %v2850 = vpop.f32.mrb[0].mxu0
    %v2851 = vadd.f32 %v881, %v2850
    %v2852 = vpop.f32.mrb[0].mxu0
    %v2853 = vadd.f32 %v885, %v2852
    %2854 = vdwg.mxu0
    %2855 = vmatprep.subr.mxu0 %v733
    %2856 = vmatpush1.msra.mxu0 %v732
    %2857 = vmatprep.subr.mxu0 %v737
    %2858 = vmatpush1.msra.mxu0 %v736
    %2859 = vmatprep.subr.mxu0 %v741
    %2860 = vmatpush1.msra.mxu0 %v740
    %2861 = vmatprep.subr.mxu0 %v745
    %2862 = vmatpush1.msra.mxu0 %v744
    %2863 = vmatprep.subr.mxu0 %v749
    %2864 = vmatpush1.msra.mxu0 %v748
    %2865 = vmatprep.subr.mxu0 %v753
    %2866 = vmatpush1.msra.mxu0 %v752
    %2867 = vmatprep.subr.mxu0 %v757
    %2868 = vmatpush1.msra.mxu0 %v756
    %2869 = vmatprep.subr.mxu0 %v761
    %2870 = vmatpush1.msra.mxu0 %v760
    %2871 = vmatprep.subr.mxu0 %v765
    %2872 = vmatpush1.msra.mxu0 %v764
    %2873 = vmatprep.subr.mxu0 %v769
    %2874 = vmatpush1.msra.mxu0 %v768
    %2875 = vmatprep.subr.mxu0 %v773
    %2876 = vmatpush1.msra.mxu0 %v772
    %2877 = vmatprep.subr.mxu0 %v777
    %2878 = vmatpush1.msra.mxu0 %v776
    %2879 = vmatprep.subr.mxu0 %v781
    %2880 = vmatpush1.msra.mxu0 %v780
    %2881 = vmatprep.subr.mxu0 %v785
    %2882 = vmatpush1.msra.mxu0 %v784
    %2883 = vmatprep.subr.mxu0 %v789
    %2884 = vmatpush1.msra.mxu0 %v788
    %2885 = vmatprep.subr.mxu0 %v793
    %2886 = vmatpush1.msra.mxu0 %v792
    %2887 = vmatprep.subr.mxu0 %v797
    %2888 = vmatpush1.msra.mxu0 %v796
    %2889 = vmatprep.subr.mxu0 %v801
    %2890 = vmatpush1.msra.mxu0 %v800
    %2891 = vmatprep.subr.mxu0 %v805
    %2892 = vmatpush1.msra.mxu0 %v804
    %2893 = vmatprep.subr.mxu0 %v809
    %2894 = vmatpush1.msra.mxu0 %v808
    %2895 = vmatprep.subr.mxu0 %v813
    %2896 = vmatpush1.msra.mxu0 %v812
    %2897 = vmatprep.subr.mxu0 %v817
    %2898 = vmatpush1.msra.mxu0 %v816
    %2899 = vmatprep.subr.mxu0 %v821
    %2900 = vmatpush1.msra.mxu0 %v820
    %2901 = vmatprep.subr.mxu0 %v825
    %2902 = vmatpush1.msra.mxu0 %v824
    %2903 = vmatprep.subr.mxu0 %v829
    %2904 = vmatpush1.msra.mxu0 %v828
    %2905 = vmatprep.subr.mxu0 %v833
    %2906 = vmatpush1.msra.mxu0 %v832
    %2907 = vmatprep.subr.mxu0 %v837
    %2908 = vmatpush1.msra.mxu0 %v836
    %2909 = vmatprep.subr.mxu0 %v841
    %2910 = vmatpush1.msra.mxu0 %v840
    %2911 = vmatprep.subr.mxu0 %v845
    %2912 = vmatpush1.msra.mxu0 %v844
    %2913 = vmatprep.subr.mxu0 %v849
    %2914 = vmatpush1.msra.mxu0 %v848
    %2915 = vmatprep.subr.mxu0 %v853
    %2916 = vmatpush1.msra.mxu0 %v852
    %2917 = vmatprep.subr.mxu0 %v857
    %2918 = vmatpush1.msra.mxu0 %v856
    %2919 = vmatprep.mubr.f32.mxu0 %v2782
    %2920 = vmatmul.mubr.f32.gmra.mrb[0].mxu0 %v2605
    %v2921 = vpop.f32.mrb[0].mxu0
    %v2922 = vadd.f32 %v889, %v2921
    %v2923 = vpop.f32.mrb[0].mxu0
    %v2924 = vadd.f32 %v893, %v2923
    %2925 = vdwg.mxu0
    %v2926 = vxor.u32 %v2851, 2147483648
    %v2927 = vxor.u32 %v2853, 2147483648
    %v2928 = vxor.u32 %v2922, 2147483648
    %v2929 = vmul.f32 %v2926, 1.442695
    %v2930 = vpow.pop %v2929
    %v2931 = vmul.f32 %v2927, 1.442695
    %v2932 = vpow.pop %v2931
    %v2933 = vmul.f32 %v2928, 1.442695
    %v2934 = vpow.pop %v2933
    %v2935 = vadd.f32 %v2930, 1.0
    %v2936 = vadd.f32 %v2932, 1.0
    %v2937 = vadd.f32 %v2934, 1.0
    %v2938 = vrcp.pop %v2935
    %v2939 = vmul.f32 1.0, %v2938
    %v2940 = vrcp.pop %v2936
    %v2941 = vmul.f32 1.0, %v2940
    %v2942 = vrcp.pop %v2937
    %v2943 = vmul.f32 1.0, %v2942
    %v2944 = vtanh.pop %v2924
    %v2945 = vmul.f32 %v2941, %v2104
    %v2946 = vmul.f32 %v2939, %v2944
    %v2947 = vadd.f32 %v2945, %v2946
    %v2948 = vtanh.pop %v2947
    %v2949 = vmul.f32 %v2943, %v2948
    %2950 = vmatprep.subr.mxu0 %v1420
    %2951 = vmatpush1.msra.mxu0 %v1419
    %2952 = vmatprep.subr.mxu0 %v1424
    %2953 = vmatpush1.msra.mxu0 %v1423
    %2954 = vmatprep.subr.mxu0 %v1428
    %2955 = vmatpush1.msra.mxu0 %v1427
    %2956 = vmatprep.subr.mxu0 %v1432
    %2957 = vmatpush1.msra.mxu0 %v1431
    %2958 = vmatprep.subr.mxu0 %v1436
    %2959 = vmatpush1.msra.mxu0 %v1435
    %2960 = vmatprep.subr.mxu0 %v1440
    %2961 = vmatpush1.msra.mxu0 %v1439
    %2962 = vmatprep.subr.mxu0 %v1444
    %2963 = vmatpush1.msra.mxu0 %v1443
    %2964 = vmatprep.subr.mxu0 %v1448
    %2965 = vmatpush1.msra.mxu0 %v1447
    %2966 = vmatprep.subr.mxu0 %v1452
    %2967 = vmatpush1.msra.mxu0 %v1451
    %2968 = vmatprep.subr.mxu0 %v1456
    %2969 = vmatpush1.msra.mxu0 %v1455
    %2970 = vmatprep.subr.mxu0 %v1460
    %2971 = vmatpush1.msra.mxu0 %v1459
    %2972 = vmatprep.subr.mxu0 %v1464
    %2973 = vmatpush1.msra.mxu0 %v1463
    %2974 = vmatprep.subr.mxu0 %v1468
    %2975 = vmatpush1.msra.mxu0 %v1467
    %2976 = vmatprep.subr.mxu0 %v1472
    %2977 = vmatpush1.msra.mxu0 %v1471
    %2978 = vmatprep.subr.mxu0 %v1476
    %2979 = vmatpush1.msra.mxu0 %v1475
    %2980 = vmatprep.subr.mxu0 %v1480
    %2981 = vmatpush1.msra.mxu0 %v1479
    %2982 = vmatprep.subr.mxu0 %v1484
    %2983 = vmatpush1.msra.mxu0 %v1483
    %2984 = vmatprep.subr.mxu0 %v1488
    %2985 = vmatpush1.msra.mxu0 %v1487
    %2986 = vmatprep.subr.mxu0 %v1492
    %2987 = vmatpush1.msra.mxu0 %v1491
    %2988 = vmatprep.subr.mxu0 %v1496
    %2989 = vmatpush1.msra.mxu0 %v1495
    %2990 = vmatprep.subr.mxu0 %v1500
    %2991 = vmatpush1.msra.mxu0 %v1499
    %2992 = vmatprep.subr.mxu0 %v1504
    %2993 = vmatpush1.msra.mxu0 %v1503
    %2994 = vmatprep.subr.mxu0 %v1508
    %2995 = vmatpush1.msra.mxu0 %v1507
    %2996 = vmatprep.subr.mxu0 %v1512
    %2997 = vmatpush1.msra.mxu0 %v1511
    %2998 = vmatprep.subr.mxu0 %v1516
    %2999 = vmatpush1.msra.mxu0 %v1515
    %3000 = vmatprep.subr.mxu0 %v1520
    %3001 = vmatpush1.msra.mxu0 %v1519
    %3002 = vmatprep.subr.mxu0 %v1524
    %3003 = vmatpush1.msra.mxu0 %v1523
    %3004 = vmatprep.subr.mxu0 %v1528
    %3005 = vmatpush1.msra.mxu0 %v1527
    %3006 = vmatprep.subr.mxu0 %v1532
    %3007 = vmatpush1.msra.mxu0 %v1531
    %3008 = vmatprep.subr.mxu0 %v1536
    %3009 = vmatpush1.msra.mxu0 %v1535
    %3010 = vmatprep.subr.mxu0 %v1540
    %3011 = vmatpush1.msra.mxu0 %v1539
    %3012 = vmatprep.subr.mxu0 %v1544
    %3013 = vmatpush1.msra.mxu0 %v1543
    %3014 = vmatprep.mubr.f32.mxu0 %v2272
    %3015 = vmatmul.mubr.f32.gmra.mrb[0].mxu0 %v2106
    %v3016 = vpop.f32.mrb[0].mxu0
    %v3017 = vadd.f32 %v1570, %v3016
    %v3018 = vpop.f32.mrb[0].mxu0
    %v3019 = vadd.f32 %v1574, %v3018
    %3020 = vdwg.mxu0
    %3021 = vmatprep.subr.mxu0 %v1422
    %3022 = vmatpush1.msra.mxu0 %v1421
    %3023 = vmatprep.subr.mxu0 %v1426
    %3024 = vmatpush1.msra.mxu0 %v1425
    %3025 = vmatprep.subr.mxu0 %v1430
    %3026 = vmatpush1.msra.mxu0 %v1429
    %3027 = vmatprep.subr.mxu0 %v1434
    %3028 = vmatpush1.msra.mxu0 %v1433
    %3029 = vmatprep.subr.mxu0 %v1438
    %3030 = vmatpush1.msra.mxu0 %v1437
    %3031 = vmatprep.subr.mxu0 %v1442
    %3032 = vmatpush1.msra.mxu0 %v1441
    %3033 = vmatprep.subr.mxu0 %v1446
    %3034 = vmatpush1.msra.mxu0 %v1445
    %3035 = vmatprep.subr.mxu0 %v1450
    %3036 = vmatpush1.msra.mxu0 %v1449
    %3037 = vmatprep.subr.mxu0 %v1454
    %3038 = vmatpush1.msra.mxu0 %v1453
    %3039 = vmatprep.subr.mxu0 %v1458
    %3040 = vmatpush1.msra.mxu0 %v1457
    %3041 = vmatprep.subr.mxu0 %v1462
    %3042 = vmatpush1.msra.mxu0 %v1461
    %3043 = vmatprep.subr.mxu0 %v1466
    %3044 = vmatpush1.msra.mxu0 %v1465
    %3045 = vmatprep.subr.mxu0 %v1470
    %3046 = vmatpush1.msra.mxu0 %v1469
    %3047 = vmatprep.subr.mxu0 %v1474
    %3048 = vmatpush1.msra.mxu0 %v1473
    %3049 = vmatprep.subr.mxu0 %v1478
    %3050 = vmatpush1.msra.mxu0 %v1477
    %3051 = vmatprep.subr.mxu0 %v1482
    %3052 = vmatpush1.msra.mxu0 %v1481
    %3053 = vmatprep.subr.mxu0 %v1486
    %3054 = vmatpush1.msra.mxu0 %v1485
    %3055 = vmatprep.subr.mxu0 %v1490
    %3056 = vmatpush1.msra.mxu0 %v1489
    %3057 = vmatprep.subr.mxu0 %v1494
    %3058 = vmatpush1.msra.mxu0 %v1493
    %3059 = vmatprep.subr.mxu0 %v1498
    %3060 = vmatpush1.msra.mxu0 %v1497
    %3061 = vmatprep.subr.mxu0 %v1502
    %3062 = vmatpush1.msra.mxu0 %v1501
    %3063 = vmatprep.subr.mxu0 %v1506
    %3064 = vmatpush1.msra.mxu0 %v1505
    %3065 = vmatprep.subr.mxu0 %v1510
    %3066 = vmatpush1.msra.mxu0 %v1509
    %3067 = vmatprep.subr.mxu0 %v1514
    %3068 = vmatpush1.msra.mxu0 %v1513
    %3069 = vmatprep.subr.mxu0 %v1518
    %3070 = vmatpush1.msra.mxu0 %v1517
    %3071 = vmatprep.subr.mxu0 %v1522
    %3072 = vmatpush1.msra.mxu0 %v1521
    %3073 = vmatprep.subr.mxu0 %v1526
    %3074 = vmatpush1.msra.mxu0 %v1525
    %3075 = vmatprep.subr.mxu0 %v1530
    %3076 = vmatpush1.msra.mxu0 %v1529
    %3077 = vmatprep.subr.mxu0 %v1534
    %3078 = vmatpush1.msra.mxu0 %v1533
    %3079 = vmatprep.subr.mxu0 %v1538
    %3080 = vmatpush1.msra.mxu0 %v1537
    %3081 = vmatprep.subr.mxu0 %v1542
    %3082 = vmatpush1.msra.mxu0 %v1541
    %3083 = vmatprep.subr.mxu0 %v1546
    %3084 = vmatpush1.msra.mxu0 %v1545
    %3085 = vmatprep.mubr.f32.mxu0 %v2272
    %3086 = vmatmul.mubr.f32.gmra.mrb[0].mxu0 %v2106
    %v3087 = vpop.f32.mrb[0].mxu0
    %v3088 = vadd.f32 %v1578, %v3087
    %v3089 = vpop.f32.mrb[0].mxu0
    %v3090 = vadd.f32 %v1582, %v3089
    %3091 = vdwg.mxu0
    %v3092 = vxor.u32 %v3017, 2147483648
    %v3093 = vxor.u32 %v3019, 2147483648
    %v3094 = vxor.u32 %v3088, 2147483648
    %v3095 = vmul.f32 %v3092, 1.442695
    %v3096 = vpow.pop %v3095
    %v3097 = vmul.f32 %v3093, 1.442695
    %v3098 = vpow.pop %v3097
    %v3099 = vmul.f32 %v3094, 1.442695
    %v3100 = vpow.pop %v3099
    %v3101 = vadd.f32 %v3096, 1.0
    %v3102 = vadd.f32 %v3098, 1.0
    %v3103 = vadd.f32 %v3100, 1.0
    %v3104 = vrcp.pop %v3101
    %v3105 = vmul.f32 1.0, %v3104
    %v3106 = vrcp.pop %v3102
    %v3107 = vmul.f32 1.0, %v3106
    %v3108 = vrcp.pop %v3103
    %v3109 = vmul.f32 1.0, %v3108
    %v3110 = vtanh.pop %v3090
    %v3111 = vmul.f32 %v3107, %v2270
    %v3112 = vmul.f32 %v3105, %v3110
    %v3113 = vadd.f32 %v3111, %v3112
    %v3114 = vtanh.pop %v3113
    %v3115 = vmul.f32 %v3109, %v3114
    %3116 = vmatprep.subr.mxu0 %v2275
    %3117 = vmatpush1.msra.mxu0 %v2274
    %3118 = vmatprep.subr.mxu0 %v2279
    %3119 = vmatpush1.msra.mxu0 %v2278
    %3120 = vmatprep.subr.mxu0 %v2283
    %3121 = vmatpush1.msra.mxu0 %v2282
    %3122 = vmatprep.subr.mxu0 %v2287
    %3123 = vmatpush1.msra.mxu0 %v2286
    %3124 = vmatprep.subr.mxu0 %v2291
    %3125 = vmatpush1.msra.mxu0 %v2290
    %3126 = vmatprep.subr.mxu0 %v2295
    %3127 = vmatpush1.msra.mxu0 %v2294
    %3128 = vmatprep.subr.mxu0 %v2299
    %3129 = vmatpush1.msra.mxu0 %v2298
    %3130 = vmatprep.subr.mxu0 %v2303
    %3131 = vmatpush1.msra.mxu0 %v2302
    %3132 = vmatprep.subr.mxu0 %v2307
    %3133 = vmatpush1.msra.mxu0 %v2306
    %3134 = vmatprep.subr.mxu0 %v2311
    %3135 = vmatpush1.msra.mxu0 %v2310
    %3136 = vmatprep.subr.mxu0 %v2315
    %3137 = vmatpush1.msra.mxu0 %v2314
    %3138 = vmatprep.subr.mxu0 %v2319
    %3139 = vmatpush1.msra.mxu0 %v2318
    %3140 = vmatprep.subr.mxu0 %v2323
    %3141 = vmatpush1.msra.mxu0 %v2322
    %3142 = vmatprep.subr.mxu0 %v2327
    %3143 = vmatpush1.msra.mxu0 %v2326
    %3144 = vmatprep.subr.mxu0 %v2331
    %3145 = vmatpush1.msra.mxu0 %v2330
    %3146 = vmatprep.subr.mxu0 %v2335
    %3147 = vmatpush1.msra.mxu0 %v2334
    %3148 = vmatprep.subr.mxu0 %v2339
    %3149 = vmatpush1.msra.mxu0 %v2338
    %3150 = vmatprep.subr.mxu0 %v2343
    %3151 = vmatpush1.msra.mxu0 %v2342
    %3152 = vmatprep.subr.mxu0 %v2347
    %3153 = vmatpush1.msra.mxu0 %v2346
    %3154 = vmatprep.subr.mxu0 %v2351
    %3155 = vmatpush1.msra.mxu0 %v2350
    %3156 = vmatprep.subr.mxu0 %v2355
    %3157 = vmatpush1.msra.mxu0 %v2354
    %3158 = vmatprep.subr.mxu0 %v2359
    %3159 = vmatpush1.msra.mxu0 %v2358
    %3160 = vmatprep.subr.mxu0 %v2363
    %3161 = vmatpush1.msra.mxu0 %v2362
    %3162 = vmatprep.subr.mxu0 %v2367
    %3163 = vmatpush1.msra.mxu0 %v2366
    %3164 = vmatprep.subr.mxu0 %v2371
    %3165 = vmatpush1.msra.mxu0 %v2370
    %3166 = vmatprep.subr.mxu0 %v2375
    %3167 = vmatpush1.msra.mxu0 %v2374
    %3168 = vmatprep.subr.mxu0 %v2379
    %3169 = vmatpush1.msra.mxu0 %v2378
    %3170 = vmatprep.subr.mxu0 %v2383
    %3171 = vmatpush1.msra.mxu0 %v2382
    %3172 = vmatprep.subr.mxu0 %v2387
    %3173 = vmatpush1.msra.mxu0 %v2386
    %3174 = vmatprep.subr.mxu0 %v2391
    %3175 = vmatpush1.msra.mxu0 %v2390
    %3176 = vmatprep.subr.mxu0 %v2395
    %3177 = vmatpush1.msra.mxu0 %v2394
    %3178 = vmatprep.subr.mxu0 %v2399
    %3179 = vmatpush1.msra.mxu0 %v2398
    %3180 = vmatprep.mubr.f32.mxu0 %v2603
    %3181 = vmatmul.mubr.f32.gmra.mrb[0].mxu0 %v2272
    %v3182 = vpop.f32.mrb[0].mxu0
    %v3183 = vadd.f32 %v2425, %v3182
    %v3184 = vpop.f32.mrb[0].mxu0
    %v3185 = vadd.f32 %v2429, %v3184
    %3186 = vdwg.mxu0
    %3187 = vmatprep.subr.mxu0 %v2277
    %3188 = vmatpush1.msra.mxu0 %v2276
    %3189 = vmatprep.subr.mxu0 %v2281
    %3190 = vmatpush1.msra.mxu0 %v2280
    %3191 = vmatprep.subr.mxu0 %v2285
    %3192 = vmatpush1.msra.mxu0 %v2284
    %3193 = vmatprep.subr.mxu0 %v2289
    %3194 = vmatpush1.msra.mxu0 %v2288
    %3195 = vmatprep.subr.mxu0 %v2293
    %3196 = vmatpush1.msra.mxu0 %v2292
    %3197 = vmatprep.subr.mxu0 %v2297
    %3198 = vmatpush1.msra.mxu0 %v2296
    %3199 = vmatprep.subr.mxu0 %v2301
    %3200 = vmatpush1.msra.mxu0 %v2300
    %3201 = vmatprep.subr.mxu0 %v2305
    %3202 = vmatpush1.msra.mxu0 %v2304
    %3203 = vmatprep.subr.mxu0 %v2309
    %3204 = vmatpush1.msra.mxu0 %v2308
    %3205 = vmatprep.subr.mxu0 %v2313
    %3206 = vmatpush1.msra.mxu0 %v2312
    %3207 = vmatprep.subr.mxu0 %v2317
    %3208 = vmatpush1.msra.mxu0 %v2316
    %3209 = vmatprep.subr.mxu0 %v2321
    %3210 = vmatpush1.msra.mxu0 %v2320
    %3211 = vmatprep.subr.mxu0 %v2325
    %3212 = vmatpush1.msra.mxu0 %v2324
    %3213 = vmatprep.subr.mxu0 %v2329
    %3214 = vmatpush1.msra.mxu0 %v2328
    %3215 = vmatprep.subr.mxu0 %v2333
    %3216 = vmatpush1.msra.mxu0 %v2332
    %3217 = vmatprep.subr.mxu0 %v2337
    %3218 = vmatpush1.msra.mxu0 %v2336
    %3219 = vmatprep.subr.mxu0 %v2341
    %3220 = vmatpush1.msra.mxu0 %v2340
    %3221 = vmatprep.subr.mxu0 %v2345
    %3222 = vmatpush1.msra.mxu0 %v2344
    %3223 = vmatprep.subr.mxu0 %v2349
    %3224 = vmatpush1.msra.mxu0 %v2348
    %3225 = vmatprep.subr.mxu0 %v2353
    %3226 = vmatpush1.msra.mxu0 %v2352
    %3227 = vmatprep.subr.mxu0 %v2357
    %3228 = vmatpush1.msra.mxu0 %v2356
    %3229 = vmatprep.subr.mxu0 %v2361
    %3230 = vmatpush1.msra.mxu0 %v2360
    %3231 = vmatprep.subr.mxu0 %v2365
    %3232 = vmatpush1.msra.mxu0 %v2364
    %3233 = vmatprep.subr.mxu0 %v2369
    %3234 = vmatpush1.msra.mxu0 %v2368
    %3235 = vmatprep.subr.mxu0 %v2373
    %3236 = vmatpush1.msra.mxu0 %v2372
    %3237 = vmatprep.subr.mxu0 %v2377
    %3238 = vmatpush1.msra.mxu0 %v2376
    %3239 = vmatprep.subr.mxu0 %v2381
    %3240 = vmatpush1.msra.mxu0 %v2380
    %3241 = vmatprep.subr.mxu0 %v2385
    %3242 = vmatpush1.msra.mxu0 %v2384
    %3243 = vmatprep.subr.mxu0 %v2389
    %3244 = vmatpush1.msra.mxu0 %v2388
    %3245 = vmatprep.subr.mxu0 %v2393
    %3246 = vmatpush1.msra.mxu0 %v2392
    %3247 = vmatprep.subr.mxu0 %v2397
    %3248 = vmatpush1.msra.mxu0 %v2396
    %3249 = vmatprep.subr.mxu0 %v2401
    %3250 = vmatpush1.msra.mxu0 %v2400
    %3251 = vmatprep.mubr.f32.mxu0 %v2603
    %3252 = vmatmul.mubr.f32.gmra.mrb[0].mxu0 %v2272
    %v3253 = vpop.f32.mrb[0].mxu0
    %v3254 = vadd.f32 %v2433, %v3253
    %v3255 = vpop.f32.mrb[0].mxu0
    %v3256 = vadd.f32 %v2437, %v3255
    %3257 = vdwg.mxu0
    %v3258 = vxor.u32 %v3183, 2147483648
    %v3259 = vxor.u32 %v3185, 2147483648
    %v3260 = vxor.u32 %v3254, 2147483648
    %v3261 = vmul.f32 %v3258, 1.442695
    %v3262 = vpow.pop %v3261
    %v3263 = vmul.f32 %v3259, 1.442695
    %v3264 = vpow.pop %v3263
    %v3265 = vmul.f32 %v3260, 1.442695
    %v3266 = vpow.pop %v3265
    %v3267 = vadd.f32 %v3262, 1.0
    %v3268 = vadd.f32 %v3264, 1.0
    %v3269 = vadd.f32 %v3266, 1.0
    %v3270 = vrcp.pop %v3267
    %v3271 = vmul.f32 1.0, %v3270
    %v3272 = vrcp.pop %v3268
    %v3273 = vmul.f32 1.0, %v3272
    %v3274 = vrcp.pop %v3269
    %v3275 = vmul.f32 1.0, %v3274
    %v3276 = vtanh.pop %v3256
    %v3277 = vmul.f32 %v3273, %v2601
    %v3278 = vmul.f32 %v3271, %v3276
    %v3279 = vadd.f32 %v3277, %v3278
    %v3280 = vtanh.pop %v3279
    %v3281 = vmul.f32 %v3275, %v3280
    %3282 = vmatprep.subr.mxu0 %v312
    %3283 = vmatpush1.msra.mxu0 %v311
    %3284 = vmatprep.subr.mxu0 %v316
    %3285 = vmatpush1.msra.mxu0 %v315
    %3286 = vmatprep.subr.mxu0 %v320
    %3287 = vmatpush1.msra.mxu0 %v319
    %3288 = vmatprep.subr.mxu0 %v324
    %3289 = vmatpush1.msra.mxu0 %v323
    %3290 = vmatprep.subr.mxu0 %v328
    %3291 = vmatpush1.msra.mxu0 %v327
    %3292 = vmatprep.subr.mxu0 %v332
    %3293 = vmatpush1.msra.mxu0 %v331
    %3294 = vmatprep.subr.mxu0 %v336
    %3295 = vmatpush1.msra.mxu0 %v335
    %3296 = vmatprep.subr.mxu0 %v340
    %3297 = vmatpush1.msra.mxu0 %v339
    %3298 = vmatprep.subr.mxu0 %v344
    %3299 = vmatpush1.msra.mxu0 %v343
    %3300 = vmatprep.subr.mxu0 %v348
    %3301 = vmatpush1.msra.mxu0 %v347
    %3302 = vmatprep.subr.mxu0 %v352
    %3303 = vmatpush1.msra.mxu0 %v351
    %3304 = vmatprep.subr.mxu0 %v356
    %3305 = vmatpush1.msra.mxu0 %v355
    %3306 = vmatprep.subr.mxu0 %v360
    %3307 = vmatpush1.msra.mxu0 %v359
    %3308 = vmatprep.subr.mxu0 %v364
    %3309 = vmatpush1.msra.mxu0 %v363
    %3310 = vmatprep.subr.mxu0 %v368
    %3311 = vmatpush1.msra.mxu0 %v367
    %3312 = vmatprep.subr.mxu0 %v372
    %3313 = vmatpush1.msra.mxu0 %v371
    %3314 = vmatprep.subr.mxu0 0.0
    %3315 = vmatpush1.msra.mxu0 0.0
    %3316 = vmatprep.subr.mxu0 0.0
    %3317 = vmatpush1.msra.mxu0 0.0
    %3318 = vmatprep.subr.mxu0 0.0
    %3319 = vmatpush1.msra.mxu0 0.0
    %3320 = vmatprep.subr.mxu0 0.0
    %3321 = vmatpush1.msra.mxu0 0.0
    %3322 = vmatprep.subr.mxu0 0.0
    %3323 = vmatpush1.msra.mxu0 0.0
    %3324 = vmatprep.subr.mxu0 0.0
    %3325 = vmatpush1.msra.mxu0 0.0
    %3326 = vmatprep.subr.mxu0 0.0
    %3327 = vmatpush1.msra.mxu0 0.0
    %3328 = vmatprep.subr.mxu0 0.0
    %3329 = vmatpush1.msra.mxu0 0.0
    %3330 = vmatprep.subr.mxu0 0.0
    %3331 = vmatpush1.msra.mxu0 0.0
    %3332 = vmatprep.subr.mxu0 0.0
    %3333 = vmatpush1.msra.mxu0 0.0
    %3334 = vmatprep.subr.mxu0 0.0
    %3335 = vmatpush1.msra.mxu0 0.0
    %3336 = vmatprep.subr.mxu0 0.0
    %3337 = vmatpush1.msra.mxu0 0.0
    %3338 = vmatprep.subr.mxu0 0.0
    %3339 = vmatpush1.msra.mxu0 0.0
    %3340 = vmatprep.subr.mxu0 0.0
    %3341 = vmatpush1.msra.mxu0 0.0
    %3342 = vmatprep.subr.mxu0 0.0
    %3343 = vmatpush1.msra.mxu0 0.0
    %3344 = vmatprep.subr.mxu0 0.0
    %3345 = vmatpush1.msra.mxu0 0.0
    %3346 = vmatprep.mubr.f32.mxu0 0.0
    %3347 = vmatmul.mubr.f32.gmra.mrb[0].mxu0 %v2779
    %v3348 = vpop.f32.mrb[0].mxu0
    %v3349 = vadd.f32 0.0, %v3348
    %v3350 = vpop.f32.mrb[0].mxu0
    %v3351 = vadd.f32 0.0, %v3350
    %3352 = vdwg.mxu0
    %3353 = vmatprep.subr.mxu0 %v314
    %3354 = vmatpush1.msra.mxu0 %v313
    %3355 = vmatprep.subr.mxu0 %v318
    %3356 = vmatpush1.msra.mxu0 %v317
    %3357 = vmatprep.subr.mxu0 %v322
    %3358 = vmatpush1.msra.mxu0 %v321
    %3359 = vmatprep.subr.mxu0 %v326
    %3360 = vmatpush1.msra.mxu0 %v325
    %3361 = vmatprep.subr.mxu0 %v330
    %3362 = vmatpush1.msra.mxu0 %v329
    %3363 = vmatprep.subr.mxu0 %v334
    %3364 = vmatpush1.msra.mxu0 %v333
    %3365 = vmatprep.subr.mxu0 %v338
    %3366 = vmatpush1.msra.mxu0 %v337
    %3367 = vmatprep.subr.mxu0 %v342
    %3368 = vmatpush1.msra.mxu0 %v341
    %3369 = vmatprep.subr.mxu0 %v346
    %3370 = vmatpush1.msra.mxu0 %v345
    %3371 = vmatprep.subr.mxu0 %v350
    %3372 = vmatpush1.msra.mxu0 %v349
    %3373 = vmatprep.subr.mxu0 %v354
    %3374 = vmatpush1.msra.mxu0 %v353
    %3375 = vmatprep.subr.mxu0 %v358
    %3376 = vmatpush1.msra.mxu0 %v357
    %3377 = vmatprep.subr.mxu0 %v362
    %3378 = vmatpush1.msra.mxu0 %v361
    %3379 = vmatprep.subr.mxu0 %v366
    %3380 = vmatpush1.msra.mxu0 %v365
    %3381 = vmatprep.subr.mxu0 %v370
    %3382 = vmatpush1.msra.mxu0 %v369
    %3383 = vmatprep.subr.mxu0 %v374
    %3384 = vmatpush1.msra.mxu0 %v373
    %3385 = vmatprep.subr.mxu0 0.0
    %3386 = vmatpush1.msra.mxu0 0.0
    %3387 = vmatprep.subr.mxu0 0.0
    %3388 = vmatpush1.msra.mxu0 0.0
    %3389 = vmatprep.subr.mxu0 0.0
    %3390 = vmatpush1.msra.mxu0 0.0
    %3391 = vmatprep.subr.mxu0 0.0
    %3392 = vmatpush1.msra.mxu0 0.0
    %3393 = vmatprep.subr.mxu0 0.0
    %3394 = vmatpush1.msra.mxu0 0.0
    %3395 = vmatprep.subr.mxu0 0.0
    %3396 = vmatpush1.msra.mxu0 0.0
    %3397 = vmatprep.subr.mxu0 0.0
    %3398 = vmatpush1.msra.mxu0 0.0
    %3399 = vmatprep.subr.mxu0 0.0
    %3400 = vmatpush1.msra.mxu0 0.0
    %3401 = vmatprep.subr.mxu0 0.0
    %3402 = vmatpush1.msra.mxu0 0.0
    %3403 = vmatprep.subr.mxu0 0.0
    %3404 = vmatpush1.msra.mxu0 0.0
    %3405 = vmatprep.subr.mxu0 0.0
    %3406 = vmatpush1.msra.mxu0 0.0
    %3407 = vmatprep.subr.mxu0 0.0
    %3408 = vmatpush1.msra.mxu0 0.0
    %3409 = vmatprep.subr.mxu0 0.0
    %3410 = vmatpush1.msra.mxu0 0.0
    %3411 = vmatprep.subr.mxu0 0.0
    %3412 = vmatpush1.msra.mxu0 0.0
    %3413 = vmatprep.subr.mxu0 0.0
    %3414 = vmatpush1.msra.mxu0 0.0
    %3415 = vmatprep.subr.mxu0 0.0
    %3416 = vmatpush1.msra.mxu0 0.0
    %3417 = vmatprep.mubr.f32.mxu0 0.0
    %3418 = vmatmul.mubr.f32.gmra.mrb[0].mxu0 %v2779
    %v3419 = vpop.f32.mrb[0].mxu0
    %v3420 = vadd.f32 0.0, %v3419
    %v3421 = vpop.f32.mrb[0].mxu0
    %v3422 = vadd.f32 0.0, %v3421
    %3423 = vdwg.mxu0
    %v3428 = vrot.slane %v3349, 6
    %v3429 = vrot.slane %v3351, 6
    %v3430 = vrot.slane %v3420, 6
    %v3431 = vrot.slane %v3422, 6
    %v3436 = vadd.f32 %v230, %v3428
    %v3437 = vadd.f32 %v232, %v3429
    %v3438 = vadd.f32 %v307, %v3430
    %v3439 = vadd.f32 %v309, %v3431
    %v3440 = vxor.u32 %v3436, 2147483648
    %v3441 = vxor.u32 %v3437, 2147483648
    %v3442 = vxor.u32 %v3438, 2147483648
    %v3443 = vmul.f32 %v3440, 1.442695
    %v3444 = vpow.pop %v3443
    %v3445 = vmul.f32 %v3441, 1.442695
    %v3446 = vpow.pop %v3445
    %v3447 = vmul.f32 %v3442, 1.442695
    %v3448 = vpow.pop %v3447
    %v3449 = vadd.f32 %v3444, 1.0
    %v3450 = vadd.f32 %v3446, 1.0
    %v3451 = vadd.f32 %v3448, 1.0
    %v3452 = vrcp.pop %v3449
    %v3453 = vmul.f32 1.0, %v3452
    %v3454 = vrcp.pop %v3450
    %v3455 = vmul.f32 1.0, %v3454
    %v3456 = vrcp.pop %v3451
    %v3457 = vmul.f32 1.0, %v3456
    %v3458 = vtanh.pop %v3439
    %v3460 = vrot.slane %v2777, 6
    %v3462 = vmul.f32 %v3455, %v3460
    %v3463 = vmul.f32 %v3453, %v3458
    %v3464 = vadd.f32 %v3462, %v3463
    %v3465 = vtanh.pop %v3464
    %v3466 = vmul.f32 %v3457, %v3465
    %3467 = vmatprep.subr.mxu0 %v731
    %3468 = vmatpush1.msra.mxu0 %v730
    %3469 = vmatprep.subr.mxu0 %v735
    %3470 = vmatpush1.msra.mxu0 %v734
    %3471 = vmatprep.subr.mxu0 %v739
    %3472 = vmatpush1.msra.mxu0 %v738
    %3473 = vmatprep.subr.mxu0 %v743
    %3474 = vmatpush1.msra.mxu0 %v742
    %3475 = vmatprep.subr.mxu0 %v747
    %3476 = vmatpush1.msra.mxu0 %v746
    %3477 = vmatprep.subr.mxu0 %v751
    %3478 = vmatpush1.msra.mxu0 %v750
    %3479 = vmatprep.subr.mxu0 %v755
    %3480 = vmatpush1.msra.mxu0 %v754
    %3481 = vmatprep.subr.mxu0 %v759
    %3482 = vmatpush1.msra.mxu0 %v758
    %3483 = vmatprep.subr.mxu0 %v763
    %3484 = vmatpush1.msra.mxu0 %v762
    %3485 = vmatprep.subr.mxu0 %v767
    %3486 = vmatpush1.msra.mxu0 %v766
    %3487 = vmatprep.subr.mxu0 %v771
    %3488 = vmatpush1.msra.mxu0 %v770
    %3489 = vmatprep.subr.mxu0 %v775
    %3490 = vmatpush1.msra.mxu0 %v774
    %3491 = vmatprep.subr.mxu0 %v779
    %3492 = vmatpush1.msra.mxu0 %v778
    %3493 = vmatprep.subr.mxu0 %v783
    %3494 = vmatpush1.msra.mxu0 %v782
    %3495 = vmatprep.subr.mxu0 %v787
    %3496 = vmatpush1.msra.mxu0 %v786
    %3497 = vmatprep.subr.mxu0 %v791
    %3498 = vmatpush1.msra.mxu0 %v790
    %3499 = vmatprep.subr.mxu0 %v795
    %3500 = vmatpush1.msra.mxu0 %v794
    %3501 = vmatprep.subr.mxu0 %v799
    %3502 = vmatpush1.msra.mxu0 %v798
    %3503 = vmatprep.subr.mxu0 %v803
    %3504 = vmatpush1.msra.mxu0 %v802
    %3505 = vmatprep.subr.mxu0 %v807
    %3506 = vmatpush1.msra.mxu0 %v806
    %3507 = vmatprep.subr.mxu0 %v811
    %3508 = vmatpush1.msra.mxu0 %v810
    %3509 = vmatprep.subr.mxu0 %v815
    %3510 = vmatpush1.msra.mxu0 %v814
    %3511 = vmatprep.subr.mxu0 %v819
    %3512 = vmatpush1.msra.mxu0 %v818
    %3513 = vmatprep.subr.mxu0 %v823
    %3514 = vmatpush1.msra.mxu0 %v822
    %3515 = vmatprep.subr.mxu0 %v827
    %3516 = vmatpush1.msra.mxu0 %v826
    %3517 = vmatprep.subr.mxu0 %v831
    %3518 = vmatpush1.msra.mxu0 %v830
    %3519 = vmatprep.subr.mxu0 %v835
    %3520 = vmatpush1.msra.mxu0 %v834
    %3521 = vmatprep.subr.mxu0 %v839
    %3522 = vmatpush1.msra.mxu0 %v838
    %3523 = vmatprep.subr.mxu0 %v843
    %3524 = vmatpush1.msra.mxu0 %v842
    %3525 = vmatprep.subr.mxu0 %v847
    %3526 = vmatpush1.msra.mxu0 %v846
    %3527 = vmatprep.subr.mxu0 %v851
    %3528 = vmatpush1.msra.mxu0 %v850
    %3529 = vmatprep.subr.mxu0 %v855
    %3530 = vmatpush1.msra.mxu0 %v854
    %3531 = vmatprep.mubr.f32.mxu0 %v2949
    %3532 = vmatmul.mubr.f32.gmra.mrb[0].mxu0 %v2779
    %v3533 = vpop.f32.mrb[0].mxu0
    %v3534 = vadd.f32 %v881, %v3533
    %v3535 = vpop.f32.mrb[0].mxu0
    %v3536 = vadd.f32 %v885, %v3535
    %3537 = vdwg.mxu0
    %3538 = vmatprep.subr.mxu0 %v733
    %3539 = vmatpush1.msra.mxu0 %v732
    %3540 = vmatprep.subr.mxu0 %v737
    %3541 = vmatpush1.msra.mxu0 %v736
    %3542 = vmatprep.subr.mxu0 %v741
    %3543 = vmatpush1.msra.mxu0 %v740
    %3544 = vmatprep.subr.mxu0 %v745
    %3545 = vmatpush1.msra.mxu0 %v744
    %3546 = vmatprep.subr.mxu0 %v749
    %3547 = vmatpush1.msra.mxu0 %v748
    %3548 = vmatprep.subr.mxu0 %v753
    %3549 = vmatpush1.msra.mxu0 %v752
    %3550 = vmatprep.subr.mxu0 %v757
    %3551 = vmatpush1.msra.mxu0 %v756
    %3552 = vmatprep.subr.mxu0 %v761
    %3553 = vmatpush1.msra.mxu0 %v760
    %3554 = vmatprep.subr.mxu0 %v765
    %3555 = vmatpush1.msra.mxu0 %v764
    %3556 = vmatprep.subr.mxu0 %v769
    %3557 = vmatpush1.msra.mxu0 %v768
    %3558 = vmatprep.subr.mxu0 %v773
    %3559 = vmatpush1.msra.mxu0 %v772
    %3560 = vmatprep.subr.mxu0 %v777
    %3561 = vmatpush1.msra.mxu0 %v776
    %3562 = vmatprep.subr.mxu0 %v781
    %3563 = vmatpush1.msra.mxu0 %v780
    %3564 = vmatprep.subr.mxu0 %v785
    %3565 = vmatpush1.msra.mxu0 %v784
    %3566 = vmatprep.subr.mxu0 %v789
    %3567 = vmatpush1.msra.mxu0 %v788
    %3568 = vmatprep.subr.mxu0 %v793
    %3569 = vmatpush1.msra.mxu0 %v792
    %3570 = vmatprep.subr.mxu0 %v797
    %3571 = vmatpush1.msra.mxu0 %v796
    %3572 = vmatprep.subr.mxu0 %v801
    %3573 = vmatpush1.msra.mxu0 %v800
    %3574 = vmatprep.subr.mxu0 %v805
    %3575 = vmatpush1.msra.mxu0 %v804
    %3576 = vmatprep.subr.mxu0 %v809
    %3577 = vmatpush1.msra.mxu0 %v808
    %3578 = vmatprep.subr.mxu0 %v813
    %3579 = vmatpush1.msra.mxu0 %v812
    %3580 = vmatprep.subr.mxu0 %v817
    %3581 = vmatpush1.msra.mxu0 %v816
    %3582 = vmatprep.subr.mxu0 %v821
    %3583 = vmatpush1.msra.mxu0 %v820
    %3584 = vmatprep.subr.mxu0 %v825
    %3585 = vmatpush1.msra.mxu0 %v824
    %3586 = vmatprep.subr.mxu0 %v829
    %3587 = vmatpush1.msra.mxu0 %v828
    %3588 = vmatprep.subr.mxu0 %v833
    %3589 = vmatpush1.msra.mxu0 %v832
    %3590 = vmatprep.subr.mxu0 %v837
    %3591 = vmatpush1.msra.mxu0 %v836
    %3592 = vmatprep.subr.mxu0 %v841
    %3593 = vmatpush1.msra.mxu0 %v840
    %3594 = vmatprep.subr.mxu0 %v845
    %3595 = vmatpush1.msra.mxu0 %v844
    %3596 = vmatprep.subr.mxu0 %v849
    %3597 = vmatpush1.msra.mxu0 %v848
    %3598 = vmatprep.subr.mxu0 %v853
    %3599 = vmatpush1.msra.mxu0 %v852
    %3600 = vmatprep.subr.mxu0 %v857
    %3601 = vmatpush1.msra.mxu0 %v856
    %3602 = vmatprep.mubr.f32.mxu0 %v2949
    %3603 = vmatmul.mubr.f32.gmra.mrb[0].mxu0 %v2779
    %v3604 = vpop.f32.mrb[0].mxu0
    %v3605 = vadd.f32 %v889, %v3604
    %v3606 = vpop.f32.mrb[0].mxu0
    %v3607 = vadd.f32 %v893, %v3606
    %3608 = vdwg.mxu0
    %v3609 = vxor.u32 %v3534, 2147483648
    %v3610 = vxor.u32 %v3536, 2147483648
    %v3611 = vxor.u32 %v3605, 2147483648
    %v3612 = vmul.f32 %v3609, 1.442695
    %v3613 = vpow.pop %v3612
    %v3614 = vmul.f32 %v3610, 1.442695
    %v3615 = vpow.pop %v3614
    %v3616 = vmul.f32 %v3611, 1.442695
    %v3617 = vpow.pop %v3616
    %v3618 = vadd.f32 %v3613, 1.0
    %v3619 = vadd.f32 %v3615, 1.0
    %v3620 = vadd.f32 %v3617, 1.0
    %v3621 = vrcp.pop %v3618
    %v3622 = vmul.f32 1.0, %v3621
    %v3623 = vrcp.pop %v3619
    %v3624 = vmul.f32 1.0, %v3623
    %v3625 = vrcp.pop %v3620
    %v3626 = vmul.f32 1.0, %v3625
    %v3627 = vtanh.pop %v3607
    %v3628 = vmul.f32 %v3624, %v2947
    %v3629 = vmul.f32 %v3622, %v3627
    %v3630 = vadd.f32 %v3628, %v3629
    %v3631 = vtanh.pop %v3630
    %v3632 = vmul.f32 %v3626, %v3631
    %3633 = vmatprep.subr.mxu0 %v1420
    %3634 = vmatpush1.msra.mxu0 %v1419
    %3635 = vmatprep.subr.mxu0 %v1424
    %3636 = vmatpush1.msra.mxu0 %v1423
    %3637 = vmatprep.subr.mxu0 %v1428
    %3638 = vmatpush1.msra.mxu0 %v1427
    %3639 = vmatprep.subr.mxu0 %v1432
    %3640 = vmatpush1.msra.mxu0 %v1431
    %3641 = vmatprep.subr.mxu0 %v1436
    %3642 = vmatpush1.msra.mxu0 %v1435
    %3643 = vmatprep.subr.mxu0 %v1440
    %3644 = vmatpush1.msra.mxu0 %v1439
    %3645 = vmatprep.subr.mxu0 %v1444
    %3646 = vmatpush1.msra.mxu0 %v1443
    %3647 = vmatprep.subr.mxu0 %v1448
    %3648 = vmatpush1.msra.mxu0 %v1447
    %3649 = vmatprep.subr.mxu0 %v1452
    %3650 = vmatpush1.msra.mxu0 %v1451
    %3651 = vmatprep.subr.mxu0 %v1456
    %3652 = vmatpush1.msra.mxu0 %v1455
    %3653 = vmatprep.subr.mxu0 %v1460
    %3654 = vmatpush1.msra.mxu0 %v1459
    %3655 = vmatprep.subr.mxu0 %v1464
    %3656 = vmatpush1.msra.mxu0 %v1463
    %3657 = vmatprep.subr.mxu0 %v1468
    %3658 = vmatpush1.msra.mxu0 %v1467
    %3659 = vmatprep.subr.mxu0 %v1472
    %3660 = vmatpush1.msra.mxu0 %v1471
    %3661 = vmatprep.subr.mxu0 %v1476
    %3662 = vmatpush1.msra.mxu0 %v1475
    %3663 = vmatprep.subr.mxu0 %v1480
    %3664 = vmatpush1.msra.mxu0 %v1479
    %3665 = vmatprep.subr.mxu0 %v1484
    %3666 = vmatpush1.msra.mxu0 %v1483
    %3667 = vmatprep.subr.mxu0 %v1488
    %3668 = vmatpush1.msra.mxu0 %v1487
    %3669 = vmatprep.subr.mxu0 %v1492
    %3670 = vmatpush1.msra.mxu0 %v1491
    %3671 = vmatprep.subr.mxu0 %v1496
    %3672 = vmatpush1.msra.mxu0 %v1495
    %3673 = vmatprep.subr.mxu0 %v1500
    %3674 = vmatpush1.msra.mxu0 %v1499
    %3675 = vmatprep.subr.mxu0 %v1504
    %3676 = vmatpush1.msra.mxu0 %v1503
    %3677 = vmatprep.subr.mxu0 %v1508
    %3678 = vmatpush1.msra.mxu0 %v1507
    %3679 = vmatprep.subr.mxu0 %v1512
    %3680 = vmatpush1.msra.mxu0 %v1511
    %3681 = vmatprep.subr.mxu0 %v1516
    %3682 = vmatpush1.msra.mxu0 %v1515
    %3683 = vmatprep.subr.mxu0 %v1520
    %3684 = vmatpush1.msra.mxu0 %v1519
    %3685 = vmatprep.subr.mxu0 %v1524
    %3686 = vmatpush1.msra.mxu0 %v1523
    %3687 = vmatprep.subr.mxu0 %v1528
    %3688 = vmatpush1.msra.mxu0 %v1527
    %3689 = vmatprep.subr.mxu0 %v1532
    %3690 = vmatpush1.msra.mxu0 %v1531
    %3691 = vmatprep.subr.mxu0 %v1536
    %3692 = vmatpush1.msra.mxu0 %v1535
    %3693 = vmatprep.subr.mxu0 %v1540
    %3694 = vmatpush1.msra.mxu0 %v1539
    %3695 = vmatprep.subr.mxu0 %v1544
    %3696 = vmatpush1.msra.mxu0 %v1543
    %3697 = vmatprep.mubr.f32.mxu0 %v3115
    %3698 = vmatmul.mubr.f32.gmra.mrb[0].mxu0 %v2949
    %v3699 = vpop.f32.mrb[0].mxu0
    %v3700 = vadd.f32 %v1570, %v3699
    %v3701 = vpop.f32.mrb[0].mxu0
    %v3702 = vadd.f32 %v1574, %v3701
    %3703 = vdwg.mxu0
    %3704 = vmatprep.subr.mxu0 %v1422
    %3705 = vmatpush1.msra.mxu0 %v1421
    %3706 = vmatprep.subr.mxu0 %v1426
    %3707 = vmatpush1.msra.mxu0 %v1425
    %3708 = vmatprep.subr.mxu0 %v1430
    %3709 = vmatpush1.msra.mxu0 %v1429
    %3710 = vmatprep.subr.mxu0 %v1434
    %3711 = vmatpush1.msra.mxu0 %v1433
    %3712 = vmatprep.subr.mxu0 %v1438
    %3713 = vmatpush1.msra.mxu0 %v1437
    %3714 = vmatprep.subr.mxu0 %v1442
    %3715 = vmatpush1.msra.mxu0 %v1441
    %3716 = vmatprep.subr.mxu0 %v1446
    %3717 = vmatpush1.msra.mxu0 %v1445
    %3718 = vmatprep.subr.mxu0 %v1450
    %3719 = vmatpush1.msra.mxu0 %v1449
    %3720 = vmatprep.subr.mxu0 %v1454
    %3721 = vmatpush1.msra.mxu0 %v1453
    %3722 = vmatprep.subr.mxu0 %v1458
    %3723 = vmatpush1.msra.mxu0 %v1457
    %3724 = vmatprep.subr.mxu0 %v1462
    %3725 = vmatpush1.msra.mxu0 %v1461
    %3726 = vmatprep.subr.mxu0 %v1466
    %3727 = vmatpush1.msra.mxu0 %v1465
    %3728 = vmatprep.subr.mxu0 %v1470
    %3729 = vmatpush1.msra.mxu0 %v1469
    %3730 = vmatprep.subr.mxu0 %v1474
    %3731 = vmatpush1.msra.mxu0 %v1473
    %3732 = vmatprep.subr.mxu0 %v1478
    %3733 = vmatpush1.msra.mxu0 %v1477
    %3734 = vmatprep.subr.mxu0 %v1482
    %3735 = vmatpush1.msra.mxu0 %v1481
    %3736 = vmatprep.subr.mxu0 %v1486
    %3737 = vmatpush1.msra.mxu0 %v1485
    %3738 = vmatprep.subr.mxu0 %v1490
    %3739 = vmatpush1.msra.mxu0 %v1489
    %3740 = vmatprep.subr.mxu0 %v1494
    %3741 = vmatpush1.msra.mxu0 %v1493
    %3742 = vmatprep.subr.mxu0 %v1498
    %3743 = vmatpush1.msra.mxu0 %v1497
    %3744 = vmatprep.subr.mxu0 %v1502
    %3745 = vmatpush1.msra.mxu0 %v1501
    %3746 = vmatprep.subr.mxu0 %v1506
    %3747 = vmatpush1.msra.mxu0 %v1505
    %3748 = vmatprep.subr.mxu0 %v1510
    %3749 = vmatpush1.msra.mxu0 %v1509
    %3750 = vmatprep.subr.mxu0 %v1514
    %3751 = vmatpush1.msra.mxu0 %v1513
    %3752 = vmatprep.subr.mxu0 %v1518
    %3753 = vmatpush1.msra.mxu0 %v1517
    %3754 = vmatprep.subr.mxu0 %v1522
    %3755 = vmatpush1.msra.mxu0 %v1521
    %3756 = vmatprep.subr.mxu0 %v1526
    %3757 = vmatpush1.msra.mxu0 %v1525
    %3758 = vmatprep.subr.mxu0 %v1530
    %3759 = vmatpush1.msra.mxu0 %v1529
    %3760 = vmatprep.subr.mxu0 %v1534
    %3761 = vmatpush1.msra.mxu0 %v1533
    %3762 = vmatprep.subr.mxu0 %v1538
    %3763 = vmatpush1.msra.mxu0 %v1537
    %3764 = vmatprep.subr.mxu0 %v1542
    %3765 = vmatpush1.msra.mxu0 %v1541
    %3766 = vmatprep.subr.mxu0 %v1546
    %3767 = vmatpush1.msra.mxu0 %v1545
    %3768 = vmatprep.mubr.f32.mxu0 %v3115
    %3769 = vmatmul.mubr.f32.gmra.mrb[0].mxu0 %v2949
    %v3770 = vpop.f32.mrb[0].mxu0
    %v3771 = vadd.f32 %v1578, %v3770
    %v3772 = vpop.f32.mrb[0].mxu0
    %v3773 = vadd.f32 %v1582, %v3772
    %3774 = vdwg.mxu0
    %v3775 = vxor.u32 %v3700, 2147483648
    %v3776 = vxor.u32 %v3702, 2147483648
    %v3777 = vxor.u32 %v3771, 2147483648
    %v3778 = vmul.f32 %v3775, 1.442695
    %v3779 = vpow.pop %v3778
    %v3780 = vmul.f32 %v3776, 1.442695
    %v3781 = vpow.pop %v3780
    %v3782 = vmul.f32 %v3777, 1.442695
    %v3783 = vpow.pop %v3782
    %v3784 = vadd.f32 %v3779, 1.0
    %v3785 = vadd.f32 %v3781, 1.0
    %v3786 = vadd.f32 %v3783, 1.0
    %v3787 = vrcp.pop %v3784
    %v3788 = vmul.f32 1.0, %v3787
    %v3789 = vrcp.pop %v3785
    %v3790 = vmul.f32 1.0, %v3789
    %v3791 = vrcp.pop %v3786
    %v3792 = vmul.f32 1.0, %v3791
    %v3793 = vtanh.pop %v3773
    %v3794 = vmul.f32 %v3790, %v3113
    %v3795 = vmul.f32 %v3788, %v3793
    %v3796 = vadd.f32 %v3794, %v3795
    %v3797 = vtanh.pop %v3796
    %v3798 = vmul.f32 %v3792, %v3797
    %3799 = vmatprep.subr.mxu0 %v2275
    %3800 = vmatpush1.msra.mxu0 %v2274
    %3801 = vmatprep.subr.mxu0 %v2279
    %3802 = vmatpush1.msra.mxu0 %v2278
    %3803 = vmatprep.subr.mxu0 %v2283
    %3804 = vmatpush1.msra.mxu0 %v2282
    %3805 = vmatprep.subr.mxu0 %v2287
    %3806 = vmatpush1.msra.mxu0 %v2286
    %3807 = vmatprep.subr.mxu0 %v2291
    %3808 = vmatpush1.msra.mxu0 %v2290
    %3809 = vmatprep.subr.mxu0 %v2295
    %3810 = vmatpush1.msra.mxu0 %v2294
    %3811 = vmatprep.subr.mxu0 %v2299
    %3812 = vmatpush1.msra.mxu0 %v2298
    %3813 = vmatprep.subr.mxu0 %v2303
    %3814 = vmatpush1.msra.mxu0 %v2302
    %3815 = vmatprep.subr.mxu0 %v2307
    %3816 = vmatpush1.msra.mxu0 %v2306
    %3817 = vmatprep.subr.mxu0 %v2311
    %3818 = vmatpush1.msra.mxu0 %v2310
    %3819 = vmatprep.subr.mxu0 %v2315
    %3820 = vmatpush1.msra.mxu0 %v2314
    %3821 = vmatprep.subr.mxu0 %v2319
    %3822 = vmatpush1.msra.mxu0 %v2318
    %3823 = vmatprep.subr.mxu0 %v2323
    %3824 = vmatpush1.msra.mxu0 %v2322
    %3825 = vmatprep.subr.mxu0 %v2327
    %3826 = vmatpush1.msra.mxu0 %v2326
    %3827 = vmatprep.subr.mxu0 %v2331
    %3828 = vmatpush1.msra.mxu0 %v2330
    %3829 = vmatprep.subr.mxu0 %v2335
    %3830 = vmatpush1.msra.mxu0 %v2334
    %3831 = vmatprep.subr.mxu0 %v2339
    %3832 = vmatpush1.msra.mxu0 %v2338
    %3833 = vmatprep.subr.mxu0 %v2343
    %3834 = vmatpush1.msra.mxu0 %v2342
    %3835 = vmatprep.subr.mxu0 %v2347
    %3836 = vmatpush1.msra.mxu0 %v2346
    %3837 = vmatprep.subr.mxu0 %v2351
    %3838 = vmatpush1.msra.mxu0 %v2350
    %3839 = vmatprep.subr.mxu0 %v2355
    %3840 = vmatpush1.msra.mxu0 %v2354
    %3841 = vmatprep.subr.mxu0 %v2359
    %3842 = vmatpush1.msra.mxu0 %v2358
    %3843 = vmatprep.subr.mxu0 %v2363
    %3844 = vmatpush1.msra.mxu0 %v2362
    %3845 = vmatprep.subr.mxu0 %v2367
    %3846 = vmatpush1.msra.mxu0 %v2366
    %3847 = vmatprep.subr.mxu0 %v2371
    %3848 = vmatpush1.msra.mxu0 %v2370
    %3849 = vmatprep.subr.mxu0 %v2375
    %3850 = vmatpush1.msra.mxu0 %v2374
    %3851 = vmatprep.subr.mxu0 %v2379
    %3852 = vmatpush1.msra.mxu0 %v2378
    %3853 = vmatprep.subr.mxu0 %v2383
    %3854 = vmatpush1.msra.mxu0 %v2382
    %3855 = vmatprep.subr.mxu0 %v2387
    %3856 = vmatpush1.msra.mxu0 %v2386
    %3857 = vmatprep.subr.mxu0 %v2391
    %3858 = vmatpush1.msra.mxu0 %v2390
    %3859 = vmatprep.subr.mxu0 %v2395
    %3860 = vmatpush1.msra.mxu0 %v2394
    %3861 = vmatprep.subr.mxu0 %v2399
    %3862 = vmatpush1.msra.mxu0 %v2398
    %3863 = vmatprep.mubr.f32.mxu0 %v3281
    %3864 = vmatmul.mubr.f32.gmra.mrb[0].mxu0 %v3115
    %v3865 = vpop.f32.mrb[0].mxu0
    %v3866 = vadd.f32 %v2425, %v3865
    %v3867 = vpop.f32.mrb[0].mxu0
    %v3868 = vadd.f32 %v2429, %v3867
    %3869 = vdwg.mxu0
    %3870 = vmatprep.subr.mxu0 %v2277
    %3871 = vmatpush1.msra.mxu0 %v2276
    %3872 = vmatprep.subr.mxu0 %v2281
    %3873 = vmatpush1.msra.mxu0 %v2280
    %3874 = vmatprep.subr.mxu0 %v2285
    %3875 = vmatpush1.msra.mxu0 %v2284
    %3876 = vmatprep.subr.mxu0 %v2289
    %3877 = vmatpush1.msra.mxu0 %v2288
    %3878 = vmatprep.subr.mxu0 %v2293
    %3879 = vmatpush1.msra.mxu0 %v2292
    %3880 = vmatprep.subr.mxu0 %v2297
    %3881 = vmatpush1.msra.mxu0 %v2296
    %3882 = vmatprep.subr.mxu0 %v2301
    %3883 = vmatpush1.msra.mxu0 %v2300
    %3884 = vmatprep.subr.mxu0 %v2305
    %3885 = vmatpush1.msra.mxu0 %v2304
    %3886 = vmatprep.subr.mxu0 %v2309
    %3887 = vmatpush1.msra.mxu0 %v2308
    %3888 = vmatprep.subr.mxu0 %v2313
    %3889 = vmatpush1.msra.mxu0 %v2312
    %3890 = vmatprep.subr.mxu0 %v2317
    %3891 = vmatpush1.msra.mxu0 %v2316
    %3892 = vmatprep.subr.mxu0 %v2321
    %3893 = vmatpush1.msra.mxu0 %v2320
    %3894 = vmatprep.subr.mxu0 %v2325
    %3895 = vmatpush1.msra.mxu0 %v2324
    %3896 = vmatprep.subr.mxu0 %v2329
    %3897 = vmatpush1.msra.mxu0 %v2328
    %3898 = vmatprep.subr.mxu0 %v2333
    %3899 = vmatpush1.msra.mxu0 %v2332
    %3900 = vmatprep.subr.mxu0 %v2337
    %3901 = vmatpush1.msra.mxu0 %v2336
    %3902 = vmatprep.subr.mxu0 %v2341
    %3903 = vmatpush1.msra.mxu0 %v2340
    %3904 = vmatprep.subr.mxu0 %v2345
    %3905 = vmatpush1.msra.mxu0 %v2344
    %3906 = vmatprep.subr.mxu0 %v2349
    %3907 = vmatpush1.msra.mxu0 %v2348
    %3908 = vmatprep.subr.mxu0 %v2353
    %3909 = vmatpush1.msra.mxu0 %v2352
    %3910 = vmatprep.subr.mxu0 %v2357
    %3911 = vmatpush1.msra.mxu0 %v2356
    %3912 = vmatprep.subr.mxu0 %v2361
    %3913 = vmatpush1.msra.mxu0 %v2360
    %3914 = vmatprep.subr.mxu0 %v2365
    %3915 = vmatpush1.msra.mxu0 %v2364
    %3916 = vmatprep.subr.mxu0 %v2369
    %3917 = vmatpush1.msra.mxu0 %v2368
    %3918 = vmatprep.subr.mxu0 %v2373
    %3919 = vmatpush1.msra.mxu0 %v2372
    %3920 = vmatprep.subr.mxu0 %v2377
    %3921 = vmatpush1.msra.mxu0 %v2376
    %3922 = vmatprep.subr.mxu0 %v2381
    %3923 = vmatpush1.msra.mxu0 %v2380
    %3924 = vmatprep.subr.mxu0 %v2385
    %3925 = vmatpush1.msra.mxu0 %v2384
    %3926 = vmatprep.subr.mxu0 %v2389
    %3927 = vmatpush1.msra.mxu0 %v2388
    %3928 = vmatprep.subr.mxu0 %v2393
    %3929 = vmatpush1.msra.mxu0 %v2392
    %3930 = vmatprep.subr.mxu0 %v2397
    %3931 = vmatpush1.msra.mxu0 %v2396
    %3932 = vmatprep.subr.mxu0 %v2401
    %3933 = vmatpush1.msra.mxu0 %v2400
    %3934 = vmatprep.mubr.f32.mxu0 %v3281
    %3935 = vmatmul.mubr.f32.gmra.mrb[0].mxu0 %v3115
    %v3936 = vpop.f32.mrb[0].mxu0
    %v3937 = vadd.f32 %v2433, %v3936
    %v3938 = vpop.f32.mrb[0].mxu0
    %v3939 = vadd.f32 %v2437, %v3938
    %3940 = vdwg.mxu0
    %v3941 = vxor.u32 %v3866, 2147483648
    %v3942 = vxor.u32 %v3868, 2147483648
    %v3943 = vxor.u32 %v3937, 2147483648
    %v3944 = vmul.f32 %v3941, 1.442695
    %v3945 = vpow.pop %v3944
    %v3946 = vmul.f32 %v3942, 1.442695
    %v3947 = vpow.pop %v3946
    %v3948 = vmul.f32 %v3943, 1.442695
    %v3949 = vpow.pop %v3948
    %v3950 = vadd.f32 %v3945, 1.0
    %v3951 = vadd.f32 %v3947, 1.0
    %v3952 = vadd.f32 %v3949, 1.0
    %v3953 = vrcp.pop %v3950
    %v3954 = vmul.f32 1.0, %v3953
    %v3955 = vrcp.pop %v3951
    %v3956 = vmul.f32 1.0, %v3955
    %v3957 = vrcp.pop %v3952
    %v3958 = vmul.f32 1.0, %v3957
    %v3959 = vtanh.pop %v3939
    %v3960 = vmul.f32 %v3956, %v3279
    %v3961 = vmul.f32 %v3954, %v3959
    %v3962 = vadd.f32 %v3960, %v3961
    %v3963 = vtanh.pop %v3962
    %v3964 = vmul.f32 %v3958, %v3963
    %v3966 = vrot.slane %v3466, 2
    %3968 = vmatprep.subr.mxu0 %v312
    %3969 = vmatpush1.msra.mxu0 %v311
    %3970 = vmatprep.subr.mxu0 %v316
    %3971 = vmatpush1.msra.mxu0 %v315
    %3972 = vmatprep.subr.mxu0 %v320
    %3973 = vmatpush1.msra.mxu0 %v319
    %3974 = vmatprep.subr.mxu0 %v324
    %3975 = vmatpush1.msra.mxu0 %v323
    %3976 = vmatprep.subr.mxu0 %v328
    %3977 = vmatpush1.msra.mxu0 %v327
    %3978 = vmatprep.subr.mxu0 %v332
    %3979 = vmatpush1.msra.mxu0 %v331
    %3980 = vmatprep.subr.mxu0 %v336
    %3981 = vmatpush1.msra.mxu0 %v335
    %3982 = vmatprep.subr.mxu0 %v340
    %3983 = vmatpush1.msra.mxu0 %v339
    %3984 = vmatprep.subr.mxu0 %v344
    %3985 = vmatpush1.msra.mxu0 %v343
    %3986 = vmatprep.subr.mxu0 %v348
    %3987 = vmatpush1.msra.mxu0 %v347
    %3988 = vmatprep.subr.mxu0 %v352
    %3989 = vmatpush1.msra.mxu0 %v351
    %3990 = vmatprep.subr.mxu0 %v356
    %3991 = vmatpush1.msra.mxu0 %v355
    %3992 = vmatprep.subr.mxu0 %v360
    %3993 = vmatpush1.msra.mxu0 %v359
    %3994 = vmatprep.subr.mxu0 %v364
    %3995 = vmatpush1.msra.mxu0 %v363
    %3996 = vmatprep.subr.mxu0 %v368
    %3997 = vmatpush1.msra.mxu0 %v367
    %3998 = vmatprep.subr.mxu0 %v372
    %3999 = vmatpush1.msra.mxu0 %v371
    %4000 = vmatprep.subr.mxu0 0.0
    %4001 = vmatpush1.msra.mxu0 0.0
    %4002 = vmatprep.subr.mxu0 0.0
    %4003 = vmatpush1.msra.mxu0 0.0
    %4004 = vmatprep.subr.mxu0 0.0
    %4005 = vmatpush1.msra.mxu0 0.0
    %4006 = vmatprep.subr.mxu0 0.0
    %4007 = vmatpush1.msra.mxu0 0.0
    %4008 = vmatprep.subr.mxu0 0.0
    %4009 = vmatpush1.msra.mxu0 0.0
    %4010 = vmatprep.subr.mxu0 0.0
    %4011 = vmatpush1.msra.mxu0 0.0
    %4012 = vmatprep.subr.mxu0 0.0
    %4013 = vmatpush1.msra.mxu0 0.0
    %4014 = vmatprep.subr.mxu0 0.0
    %4015 = vmatpush1.msra.mxu0 0.0
    %4016 = vmatprep.subr.mxu0 0.0
    %4017 = vmatpush1.msra.mxu0 0.0
    %4018 = vmatprep.subr.mxu0 0.0
    %4019 = vmatpush1.msra.mxu0 0.0
    %4020 = vmatprep.subr.mxu0 0.0
    %4021 = vmatpush1.msra.mxu0 0.0
    %4022 = vmatprep.subr.mxu0 0.0
    %4023 = vmatpush1.msra.mxu0 0.0
    %4024 = vmatprep.subr.mxu0 0.0
    %4025 = vmatpush1.msra.mxu0 0.0
    %4026 = vmatprep.subr.mxu0 0.0
    %4027 = vmatpush1.msra.mxu0 0.0
    %4028 = vmatprep.subr.mxu0 0.0
    %4029 = vmatpush1.msra.mxu0 0.0
    %4030 = vmatprep.subr.mxu0 0.0
    %4031 = vmatpush1.msra.mxu0 0.0
    %4032 = vmatprep.mubr.f32.mxu0 0.0
    %4033 = vmatmul.mubr.f32.gmra.mrb[0].mxu0 %v3966
    %v4034 = vpop.f32.mrb[0].mxu0
    %v4035 = vadd.f32 0.0, %v4034
    %v4036 = vpop.f32.mrb[0].mxu0
    %v4037 = vadd.f32 0.0, %v4036
    %4038 = vdwg.mxu0
    %4039 = vmatprep.subr.mxu0 %v314
    %4040 = vmatpush1.msra.mxu0 %v313
    %4041 = vmatprep.subr.mxu0 %v318
    %4042 = vmatpush1.msra.mxu0 %v317
    %4043 = vmatprep.subr.mxu0 %v322
    %4044 = vmatpush1.msra.mxu0 %v321
    %4045 = vmatprep.subr.mxu0 %v326
    %4046 = vmatpush1.msra.mxu0 %v325
    %4047 = vmatprep.subr.mxu0 %v330
    %4048 = vmatpush1.msra.mxu0 %v329
    %4049 = vmatprep.subr.mxu0 %v334
    %4050 = vmatpush1.msra.mxu0 %v333
    %4051 = vmatprep.subr.mxu0 %v338
    %4052 = vmatpush1.msra.mxu0 %v337
    %4053 = vmatprep.subr.mxu0 %v342
    %4054 = vmatpush1.msra.mxu0 %v341
    %4055 = vmatprep.subr.mxu0 %v346
    %4056 = vmatpush1.msra.mxu0 %v345
    %4057 = vmatprep.subr.mxu0 %v350
    %4058 = vmatpush1.msra.mxu0 %v349
    %4059 = vmatprep.subr.mxu0 %v354
    %4060 = vmatpush1.msra.mxu0 %v353
    %4061 = vmatprep.subr.mxu0 %v358
    %4062 = vmatpush1.msra.mxu0 %v357
    %4063 = vmatprep.subr.mxu0 %v362
    %4064 = vmatpush1.msra.mxu0 %v361
    %4065 = vmatprep.subr.mxu0 %v366
    %4066 = vmatpush1.msra.mxu0 %v365
    %4067 = vmatprep.subr.mxu0 %v370
    %4068 = vmatpush1.msra.mxu0 %v369
    %4069 = vmatprep.subr.mxu0 %v374
    %4070 = vmatpush1.msra.mxu0 %v373
    %4071 = vmatprep.subr.mxu0 0.0
    %4072 = vmatpush1.msra.mxu0 0.0
    %4073 = vmatprep.subr.mxu0 0.0
    %4074 = vmatpush1.msra.mxu0 0.0
    %4075 = vmatprep.subr.mxu0 0.0
    %4076 = vmatpush1.msra.mxu0 0.0
    %4077 = vmatprep.subr.mxu0 0.0
    %4078 = vmatpush1.msra.mxu0 0.0
    %4079 = vmatprep.subr.mxu0 0.0
    %4080 = vmatpush1.msra.mxu0 0.0
    %4081 = vmatprep.subr.mxu0 0.0
    %4082 = vmatpush1.msra.mxu0 0.0
    %4083 = vmatprep.subr.mxu0 0.0
    %4084 = vmatpush1.msra.mxu0 0.0
    %4085 = vmatprep.subr.mxu0 0.0
    %4086 = vmatpush1.msra.mxu0 0.0
    %4087 = vmatprep.subr.mxu0 0.0
    %4088 = vmatpush1.msra.mxu0 0.0
    %4089 = vmatprep.subr.mxu0 0.0
    %4090 = vmatpush1.msra.mxu0 0.0
    %4091 = vmatprep.subr.mxu0 0.0
    %4092 = vmatpush1.msra.mxu0 0.0
    %4093 = vmatprep.subr.mxu0 0.0
    %4094 = vmatpush1.msra.mxu0 0.0
    %4095 = vmatprep.subr.mxu0 0.0
    %4096 = vmatpush1.msra.mxu0 0.0
    %4097 = vmatprep.subr.mxu0 0.0
    %4098 = vmatpush1.msra.mxu0 0.0
    %4099 = vmatprep.subr.mxu0 0.0
    %4100 = vmatpush1.msra.mxu0 0.0
    %4101 = vmatprep.subr.mxu0 0.0
    %4102 = vmatpush1.msra.mxu0 0.0
    %4103 = vmatprep.mubr.f32.mxu0 0.0
    %4104 = vmatmul.mubr.f32.gmra.mrb[0].mxu0 %v3966
    %v4105 = vpop.f32.mrb[0].mxu0
    %v4106 = vadd.f32 0.0, %v4105
    %v4107 = vpop.f32.mrb[0].mxu0
    %v4108 = vadd.f32 0.0, %v4107
    %4109 = vdwg.mxu0
    %v4114 = vrot.slane %v4035, 4
    %v4115 = vrot.slane %v4037, 4
    %v4116 = vrot.slane %v4106, 4
    %v4117 = vrot.slane %v4108, 4
    %v4122 = vadd.f32 %v230, %v4114
    %v4123 = vadd.f32 %v232, %v4115
    %v4124 = vadd.f32 %v307, %v4116
    %v4125 = vadd.f32 %v309, %v4117
    %v4126 = vxor.u32 %v4122, 2147483648
    %v4127 = vxor.u32 %v4123, 2147483648
    %v4128 = vxor.u32 %v4124, 2147483648
    %v4129 = vmul.f32 %v4126, 1.442695
    %v4130 = vpow.pop %v4129
    %v4131 = vmul.f32 %v4127, 1.442695
    %v4132 = vpow.pop %v4131
    %v4133 = vmul.f32 %v4128, 1.442695
    %v4134 = vpow.pop %v4133
    %v4135 = vadd.f32 %v4130, 1.0
    %v4136 = vadd.f32 %v4132, 1.0
    %v4137 = vadd.f32 %v4134, 1.0
    %v4138 = vrcp.pop %v4135
    %v4139 = vmul.f32 1.0, %v4138
    %v4140 = vrcp.pop %v4136
    %v4141 = vmul.f32 1.0, %v4140
    %v4142 = vrcp.pop %v4137
    %v4143 = vmul.f32 1.0, %v4142
    %v4144 = vtanh.pop %v4125
    %v4146 = vrot.slane %v3464, 6
    %v4148 = vmul.f32 %v4141, %v4146
    %v4149 = vmul.f32 %v4139, %v4144
    %v4150 = vadd.f32 %v4148, %v4149
    %v4151 = vtanh.pop %v4150
    %v4152 = vmul.f32 %v4143, %v4151
    %v4154 = vrot.slane %v3632, 6
    %v4155 = vrot.slane %v4154, 2
    %4157 = vmatprep.subr.mxu0 %v731
    %4158 = vmatpush1.msra.mxu0 %v730
    %4159 = vmatprep.subr.mxu0 %v735
    %4160 = vmatpush1.msra.mxu0 %v734
    %4161 = vmatprep.subr.mxu0 %v739
    %4162 = vmatpush1.msra.mxu0 %v738
    %4163 = vmatprep.subr.mxu0 %v743
    %4164 = vmatpush1.msra.mxu0 %v742
    %4165 = vmatprep.subr.mxu0 %v747
    %4166 = vmatpush1.msra.mxu0 %v746
    %4167 = vmatprep.subr.mxu0 %v751
    %4168 = vmatpush1.msra.mxu0 %v750
    %4169 = vmatprep.subr.mxu0 %v755
    %4170 = vmatpush1.msra.mxu0 %v754
    %4171 = vmatprep.subr.mxu0 %v759
    %4172 = vmatpush1.msra.mxu0 %v758
    %4173 = vmatprep.subr.mxu0 %v763
    %4174 = vmatpush1.msra.mxu0 %v762
    %4175 = vmatprep.subr.mxu0 %v767
    %4176 = vmatpush1.msra.mxu0 %v766
    %4177 = vmatprep.subr.mxu0 %v771
    %4178 = vmatpush1.msra.mxu0 %v770
    %4179 = vmatprep.subr.mxu0 %v775
    %4180 = vmatpush1.msra.mxu0 %v774
    %4181 = vmatprep.subr.mxu0 %v779
    %4182 = vmatpush1.msra.mxu0 %v778
    %4183 = vmatprep.subr.mxu0 %v783
    %4184 = vmatpush1.msra.mxu0 %v782
    %4185 = vmatprep.subr.mxu0 %v787
    %4186 = vmatpush1.msra.mxu0 %v786
    %4187 = vmatprep.subr.mxu0 %v791
    %4188 = vmatpush1.msra.mxu0 %v790
    %4189 = vmatprep.subr.mxu0 %v795
    %4190 = vmatpush1.msra.mxu0 %v794
    %4191 = vmatprep.subr.mxu0 %v799
    %4192 = vmatpush1.msra.mxu0 %v798
    %4193 = vmatprep.subr.mxu0 %v803
    %4194 = vmatpush1.msra.mxu0 %v802
    %4195 = vmatprep.subr.mxu0 %v807
    %4196 = vmatpush1.msra.mxu0 %v806
    %4197 = vmatprep.subr.mxu0 %v811
    %4198 = vmatpush1.msra.mxu0 %v810
    %4199 = vmatprep.subr.mxu0 %v815
    %4200 = vmatpush1.msra.mxu0 %v814
    %4201 = vmatprep.subr.mxu0 %v819
    %4202 = vmatpush1.msra.mxu0 %v818
    %4203 = vmatprep.subr.mxu0 %v823
    %4204 = vmatpush1.msra.mxu0 %v822
    %4205 = vmatprep.subr.mxu0 %v827
    %4206 = vmatpush1.msra.mxu0 %v826
    %4207 = vmatprep.subr.mxu0 %v831
    %4208 = vmatpush1.msra.mxu0 %v830
    %4209 = vmatprep.subr.mxu0 %v835
    %4210 = vmatpush1.msra.mxu0 %v834
    %4211 = vmatprep.subr.mxu0 %v839
    %4212 = vmatpush1.msra.mxu0 %v838
    %4213 = vmatprep.subr.mxu0 %v843
    %4214 = vmatpush1.msra.mxu0 %v842
    %4215 = vmatprep.subr.mxu0 %v847
    %4216 = vmatpush1.msra.mxu0 %v846
    %4217 = vmatprep.subr.mxu0 %v851
    %4218 = vmatpush1.msra.mxu0 %v850
    %4219 = vmatprep.subr.mxu0 %v855
    %4220 = vmatpush1.msra.mxu0 %v854
    %4221 = vmatprep.mubr.f32.mxu0 %v4155
    %4222 = vmatmul.mubr.f32.gmra.mrb[0].mxu0 %v3966
    %v4223 = vpop.f32.mrb[0].mxu0
    %v4224 = vadd.f32 %v881, %v4223
    %v4225 = vpop.f32.mrb[0].mxu0
    %v4226 = vadd.f32 %v885, %v4225
    %4227 = vdwg.mxu0
    %4228 = vmatprep.subr.mxu0 %v733
    %4229 = vmatpush1.msra.mxu0 %v732
    %4230 = vmatprep.subr.mxu0 %v737
    %4231 = vmatpush1.msra.mxu0 %v736
    %4232 = vmatprep.subr.mxu0 %v741
    %4233 = vmatpush1.msra.mxu0 %v740
    %4234 = vmatprep.subr.mxu0 %v745
    %4235 = vmatpush1.msra.mxu0 %v744
    %4236 = vmatprep.subr.mxu0 %v749
    %4237 = vmatpush1.msra.mxu0 %v748
    %4238 = vmatprep.subr.mxu0 %v753
    %4239 = vmatpush1.msra.mxu0 %v752
    %4240 = vmatprep.subr.mxu0 %v757
    %4241 = vmatpush1.msra.mxu0 %v756
    %4242 = vmatprep.subr.mxu0 %v761
    %4243 = vmatpush1.msra.mxu0 %v760
    %4244 = vmatprep.subr.mxu0 %v765
    %4245 = vmatpush1.msra.mxu0 %v764
    %4246 = vmatprep.subr.mxu0 %v769
    %4247 = vmatpush1.msra.mxu0 %v768
    %4248 = vmatprep.subr.mxu0 %v773
    %4249 = vmatpush1.msra.mxu0 %v772
    %4250 = vmatprep.subr.mxu0 %v777
    %4251 = vmatpush1.msra.mxu0 %v776
    %4252 = vmatprep.subr.mxu0 %v781
    %4253 = vmatpush1.msra.mxu0 %v780
    %4254 = vmatprep.subr.mxu0 %v785
    %4255 = vmatpush1.msra.mxu0 %v784
    %4256 = vmatprep.subr.mxu0 %v789
    %4257 = vmatpush1.msra.mxu0 %v788
    %4258 = vmatprep.subr.mxu0 %v793
    %4259 = vmatpush1.msra.mxu0 %v792
    %4260 = vmatprep.subr.mxu0 %v797
    %4261 = vmatpush1.msra.mxu0 %v796
    %4262 = vmatprep.subr.mxu0 %v801
    %4263 = vmatpush1.msra.mxu0 %v800
    %4264 = vmatprep.subr.mxu0 %v805
    %4265 = vmatpush1.msra.mxu0 %v804
    %4266 = vmatprep.subr.mxu0 %v809
    %4267 = vmatpush1.msra.mxu0 %v808
    %4268 = vmatprep.subr.mxu0 %v813
    %4269 = vmatpush1.msra.mxu0 %v812
    %4270 = vmatprep.subr.mxu0 %v817
    %4271 = vmatpush1.msra.mxu0 %v816
    %4272 = vmatprep.subr.mxu0 %v821
    %4273 = vmatpush1.msra.mxu0 %v820
    %4274 = vmatprep.subr.mxu0 %v825
    %4275 = vmatpush1.msra.mxu0 %v824
    %4276 = vmatprep.subr.mxu0 %v829
    %4277 = vmatpush1.msra.mxu0 %v828
    %4278 = vmatprep.subr.mxu0 %v833
    %4279 = vmatpush1.msra.mxu0 %v832
    %4280 = vmatprep.subr.mxu0 %v837
    %4281 = vmatpush1.msra.mxu0 %v836
    %4282 = vmatprep.subr.mxu0 %v841
    %4283 = vmatpush1.msra.mxu0 %v840
    %4284 = vmatprep.subr.mxu0 %v845
    %4285 = vmatpush1.msra.mxu0 %v844
    %4286 = vmatprep.subr.mxu0 %v849
    %4287 = vmatpush1.msra.mxu0 %v848
    %4288 = vmatprep.subr.mxu0 %v853
    %4289 = vmatpush1.msra.mxu0 %v852
    %4290 = vmatprep.subr.mxu0 %v857
    %4291 = vmatpush1.msra.mxu0 %v856
    %4292 = vmatprep.mubr.f32.mxu0 %v4155
    %4293 = vmatmul.mubr.f32.gmra.mrb[0].mxu0 %v3966
    %v4294 = vpop.f32.mrb[0].mxu0
    %v4295 = vadd.f32 %v889, %v4294
    %v4296 = vpop.f32.mrb[0].mxu0
    %v4297 = vadd.f32 %v893, %v4296
    %4298 = vdwg.mxu0
    %v4299 = vxor.u32 %v4224, 2147483648
    %v4300 = vxor.u32 %v4226, 2147483648
    %v4301 = vxor.u32 %v4295, 2147483648
    %v4302 = vmul.f32 %v4299, 1.442695
    %v4303 = vpow.pop %v4302
    %v4304 = vmul.f32 %v4300, 1.442695
    %v4305 = vpow.pop %v4304
    %v4306 = vmul.f32 %v4301, 1.442695
    %v4307 = vpow.pop %v4306
    %v4308 = vadd.f32 %v4303, 1.0
    %v4309 = vadd.f32 %v4305, 1.0
    %v4310 = vadd.f32 %v4307, 1.0
    %v4311 = vrcp.pop %v4308
    %v4312 = vmul.f32 1.0, %v4311
    %v4313 = vrcp.pop %v4309
    %v4314 = vmul.f32 1.0, %v4313
    %v4315 = vrcp.pop %v4310
    %v4316 = vmul.f32 1.0, %v4315
    %v4317 = vtanh.pop %v4297
    %v4318 = vmul.f32 %v4314, %v3630
    %v4319 = vmul.f32 %v4312, %v4317
    %v4320 = vadd.f32 %v4318, %v4319
    %v4321 = vtanh.pop %v4320
    %v4322 = vmul.f32 %v4316, %v4321
    %4323 = vmatprep.subr.mxu0 %v1420
    %4324 = vmatpush1.msra.mxu0 %v1419
    %4325 = vmatprep.subr.mxu0 %v1424
    %4326 = vmatpush1.msra.mxu0 %v1423
    %4327 = vmatprep.subr.mxu0 %v1428
    %4328 = vmatpush1.msra.mxu0 %v1427
    %4329 = vmatprep.subr.mxu0 %v1432
    %4330 = vmatpush1.msra.mxu0 %v1431
    %4331 = vmatprep.subr.mxu0 %v1436
    %4332 = vmatpush1.msra.mxu0 %v1435
    %4333 = vmatprep.subr.mxu0 %v1440
    %4334 = vmatpush1.msra.mxu0 %v1439
    %4335 = vmatprep.subr.mxu0 %v1444
    %4336 = vmatpush1.msra.mxu0 %v1443
    %4337 = vmatprep.subr.mxu0 %v1448
    %4338 = vmatpush1.msra.mxu0 %v1447
    %4339 = vmatprep.subr.mxu0 %v1452
    %4340 = vmatpush1.msra.mxu0 %v1451
    %4341 = vmatprep.subr.mxu0 %v1456
    %4342 = vmatpush1.msra.mxu0 %v1455
    %4343 = vmatprep.subr.mxu0 %v1460
    %4344 = vmatpush1.msra.mxu0 %v1459
    %4345 = vmatprep.subr.mxu0 %v1464
    %4346 = vmatpush1.msra.mxu0 %v1463
    %4347 = vmatprep.subr.mxu0 %v1468
    %4348 = vmatpush1.msra.mxu0 %v1467
    %4349 = vmatprep.subr.mxu0 %v1472
    %4350 = vmatpush1.msra.mxu0 %v1471
    %4351 = vmatprep.subr.mxu0 %v1476
    %4352 = vmatpush1.msra.mxu0 %v1475
    %4353 = vmatprep.subr.mxu0 %v1480
    %4354 = vmatpush1.msra.mxu0 %v1479
    %4355 = vmatprep.subr.mxu0 %v1484
    %4356 = vmatpush1.msra.mxu0 %v1483
    %4357 = vmatprep.subr.mxu0 %v1488
    %4358 = vmatpush1.msra.mxu0 %v1487
    %4359 = vmatprep.subr.mxu0 %v1492
    %4360 = vmatpush1.msra.mxu0 %v1491
    %4361 = vmatprep.subr.mxu0 %v1496
    %4362 = vmatpush1.msra.mxu0 %v1495
    %4363 = vmatprep.subr.mxu0 %v1500
    %4364 = vmatpush1.msra.mxu0 %v1499
    %4365 = vmatprep.subr.mxu0 %v1504
    %4366 = vmatpush1.msra.mxu0 %v1503
    %4367 = vmatprep.subr.mxu0 %v1508
    %4368 = vmatpush1.msra.mxu0 %v1507
    %4369 = vmatprep.subr.mxu0 %v1512
    %4370 = vmatpush1.msra.mxu0 %v1511
    %4371 = vmatprep.subr.mxu0 %v1516
    %4372 = vmatpush1.msra.mxu0 %v1515
    %4373 = vmatprep.subr.mxu0 %v1520
    %4374 = vmatpush1.msra.mxu0 %v1519
    %4375 = vmatprep.subr.mxu0 %v1524
    %4376 = vmatpush1.msra.mxu0 %v1523
    %4377 = vmatprep.subr.mxu0 %v1528
    %4378 = vmatpush1.msra.mxu0 %v1527
    %4379 = vmatprep.subr.mxu0 %v1532
    %4380 = vmatpush1.msra.mxu0 %v1531
    %4381 = vmatprep.subr.mxu0 %v1536
    %4382 = vmatpush1.msra.mxu0 %v1535
    %4383 = vmatprep.subr.mxu0 %v1540
    %4384 = vmatpush1.msra.mxu0 %v1539
    %4385 = vmatprep.subr.mxu0 %v1544
    %4386 = vmatpush1.msra.mxu0 %v1543
    %4387 = vmatprep.mubr.f32.mxu0 %v3798
    %4388 = vmatmul.mubr.f32.gmra.mrb[0].mxu0 %v3632
    %v4389 = vpop.f32.mrb[0].mxu0
    %v4390 = vadd.f32 %v1570, %v4389
    %v4391 = vpop.f32.mrb[0].mxu0
    %v4392 = vadd.f32 %v1574, %v4391
    %4393 = vdwg.mxu0
    %4394 = vmatprep.subr.mxu0 %v1422
    %4395 = vmatpush1.msra.mxu0 %v1421
    %4396 = vmatprep.subr.mxu0 %v1426
    %4397 = vmatpush1.msra.mxu0 %v1425
    %4398 = vmatprep.subr.mxu0 %v1430
    %4399 = vmatpush1.msra.mxu0 %v1429
    %4400 = vmatprep.subr.mxu0 %v1434
    %4401 = vmatpush1.msra.mxu0 %v1433
    %4402 = vmatprep.subr.mxu0 %v1438
    %4403 = vmatpush1.msra.mxu0 %v1437
    %4404 = vmatprep.subr.mxu0 %v1442
    %4405 = vmatpush1.msra.mxu0 %v1441
    %4406 = vmatprep.subr.mxu0 %v1446
    %4407 = vmatpush1.msra.mxu0 %v1445
    %4408 = vmatprep.subr.mxu0 %v1450
    %4409 = vmatpush1.msra.mxu0 %v1449
    %4410 = vmatprep.subr.mxu0 %v1454
    %4411 = vmatpush1.msra.mxu0 %v1453
    %4412 = vmatprep.subr.mxu0 %v1458
    %4413 = vmatpush1.msra.mxu0 %v1457
    %4414 = vmatprep.subr.mxu0 %v1462
    %4415 = vmatpush1.msra.mxu0 %v1461
    %4416 = vmatprep.subr.mxu0 %v1466
    %4417 = vmatpush1.msra.mxu0 %v1465
    %4418 = vmatprep.subr.mxu0 %v1470
    %4419 = vmatpush1.msra.mxu0 %v1469
    %4420 = vmatprep.subr.mxu0 %v1474
    %4421 = vmatpush1.msra.mxu0 %v1473
    %4422 = vmatprep.subr.mxu0 %v1478
    %4423 = vmatpush1.msra.mxu0 %v1477
    %4424 = vmatprep.subr.mxu0 %v1482
    %4425 = vmatpush1.msra.mxu0 %v1481
    %4426 = vmatprep.subr.mxu0 %v1486
    %4427 = vmatpush1.msra.mxu0 %v1485
    %4428 = vmatprep.subr.mxu0 %v1490
    %4429 = vmatpush1.msra.mxu0 %v1489
    %4430 = vmatprep.subr.mxu0 %v1494
    %4431 = vmatpush1.msra.mxu0 %v1493
    %4432 = vmatprep.subr.mxu0 %v1498
    %4433 = vmatpush1.msra.mxu0 %v1497
    %4434 = vmatprep.subr.mxu0 %v1502
    %4435 = vmatpush1.msra.mxu0 %v1501
    %4436 = vmatprep.subr.mxu0 %v1506
    %4437 = vmatpush1.msra.mxu0 %v1505
    %4438 = vmatprep.subr.mxu0 %v1510
    %4439 = vmatpush1.msra.mxu0 %v1509
    %4440 = vmatprep.subr.mxu0 %v1514
    %4441 = vmatpush1.msra.mxu0 %v1513
    %4442 = vmatprep.subr.mxu0 %v1518
    %4443 = vmatpush1.msra.mxu0 %v1517
    %4444 = vmatprep.subr.mxu0 %v1522
    %4445 = vmatpush1.msra.mxu0 %v1521
    %4446 = vmatprep.subr.mxu0 %v1526
    %4447 = vmatpush1.msra.mxu0 %v1525
    %4448 = vmatprep.subr.mxu0 %v1530
    %4449 = vmatpush1.msra.mxu0 %v1529
    %4450 = vmatprep.subr.mxu0 %v1534
    %4451 = vmatpush1.msra.mxu0 %v1533
    %4452 = vmatprep.subr.mxu0 %v1538
    %4453 = vmatpush1.msra.mxu0 %v1537
    %4454 = vmatprep.subr.mxu0 %v1542
    %4455 = vmatpush1.msra.mxu0 %v1541
    %4456 = vmatprep.subr.mxu0 %v1546
    %4457 = vmatpush1.msra.mxu0 %v1545
    %4458 = vmatprep.mubr.f32.mxu0 %v3798
    %4459 = vmatmul.mubr.f32.gmra.mrb[0].mxu0 %v3632
    %v4460 = vpop.f32.mrb[0].mxu0
    %v4461 = vadd.f32 %v1578, %v4460
    %v4462 = vpop.f32.mrb[0].mxu0
    %v4463 = vadd.f32 %v1582, %v4462
    %4464 = vdwg.mxu0
    %v4465 = vxor.u32 %v4390, 2147483648
    %v4466 = vxor.u32 %v4392, 2147483648
    %v4467 = vxor.u32 %v4461, 2147483648
    %v4468 = vmul.f32 %v4465, 1.442695
    %v4469 = vpow.pop %v4468
    %v4470 = vmul.f32 %v4466, 1.442695
    %v4471 = vpow.pop %v4470
    %v4472 = vmul.f32 %v4467, 1.442695
    %v4473 = vpow.pop %v4472
    %v4474 = vadd.f32 %v4469, 1.0
    %v4475 = vadd.f32 %v4471, 1.0
    %v4476 = vadd.f32 %v4473, 1.0
    %v4477 = vrcp.pop %v4474
    %v4478 = vmul.f32 1.0, %v4477
    %v4479 = vrcp.pop %v4475
    %v4480 = vmul.f32 1.0, %v4479
    %v4481 = vrcp.pop %v4476
    %v4482 = vmul.f32 1.0, %v4481
    %v4483 = vtanh.pop %v4463
    %v4484 = vmul.f32 %v4480, %v3796
    %v4485 = vmul.f32 %v4478, %v4483
    %v4486 = vadd.f32 %v4484, %v4485
    %v4487 = vtanh.pop %v4486
    %v4488 = vmul.f32 %v4482, %v4487
    %4489 = vmatprep.subr.mxu0 %v2275
    %4490 = vmatpush1.msra.mxu0 %v2274
    %4491 = vmatprep.subr.mxu0 %v2279
    %4492 = vmatpush1.msra.mxu0 %v2278
    %4493 = vmatprep.subr.mxu0 %v2283
    %4494 = vmatpush1.msra.mxu0 %v2282
    %4495 = vmatprep.subr.mxu0 %v2287
    %4496 = vmatpush1.msra.mxu0 %v2286
    %4497 = vmatprep.subr.mxu0 %v2291
    %4498 = vmatpush1.msra.mxu0 %v2290
    %4499 = vmatprep.subr.mxu0 %v2295
    %4500 = vmatpush1.msra.mxu0 %v2294
    %4501 = vmatprep.subr.mxu0 %v2299
    %4502 = vmatpush1.msra.mxu0 %v2298
    %4503 = vmatprep.subr.mxu0 %v2303
    %4504 = vmatpush1.msra.mxu0 %v2302
    %4505 = vmatprep.subr.mxu0 %v2307
    %4506 = vmatpush1.msra.mxu0 %v2306
    %4507 = vmatprep.subr.mxu0 %v2311
    %4508 = vmatpush1.msra.mxu0 %v2310
    %4509 = vmatprep.subr.mxu0 %v2315
    %4510 = vmatpush1.msra.mxu0 %v2314
    %4511 = vmatprep.subr.mxu0 %v2319
    %4512 = vmatpush1.msra.mxu0 %v2318
    %4513 = vmatprep.subr.mxu0 %v2323
    %4514 = vmatpush1.msra.mxu0 %v2322
    %4515 = vmatprep.subr.mxu0 %v2327
    %4516 = vmatpush1.msra.mxu0 %v2326
    %4517 = vmatprep.subr.mxu0 %v2331
    %4518 = vmatpush1.msra.mxu0 %v2330
    %4519 = vmatprep.subr.mxu0 %v2335
    %4520 = vmatpush1.msra.mxu0 %v2334
    %4521 = vmatprep.subr.mxu0 %v2339
    %4522 = vmatpush1.msra.mxu0 %v2338
    %4523 = vmatprep.subr.mxu0 %v2343
    %4524 = vmatpush1.msra.mxu0 %v2342
    %4525 = vmatprep.subr.mxu0 %v2347
    %4526 = vmatpush1.msra.mxu0 %v2346
    %4527 = vmatprep.subr.mxu0 %v2351
    %4528 = vmatpush1.msra.mxu0 %v2350
    %4529 = vmatprep.subr.mxu0 %v2355
    %4530 = vmatpush1.msra.mxu0 %v2354
    %4531 = vmatprep.subr.mxu0 %v2359
    %4532 = vmatpush1.msra.mxu0 %v2358
    %4533 = vmatprep.subr.mxu0 %v2363
    %4534 = vmatpush1.msra.mxu0 %v2362
    %4535 = vmatprep.subr.mxu0 %v2367
    %4536 = vmatpush1.msra.mxu0 %v2366
    %4537 = vmatprep.subr.mxu0 %v2371
    %4538 = vmatpush1.msra.mxu0 %v2370
    %4539 = vmatprep.subr.mxu0 %v2375
    %4540 = vmatpush1.msra.mxu0 %v2374
    %4541 = vmatprep.subr.mxu0 %v2379
    %4542 = vmatpush1.msra.mxu0 %v2378
    %4543 = vmatprep.subr.mxu0 %v2383
    %4544 = vmatpush1.msra.mxu0 %v2382
    %4545 = vmatprep.subr.mxu0 %v2387
    %4546 = vmatpush1.msra.mxu0 %v2386
    %4547 = vmatprep.subr.mxu0 %v2391
    %4548 = vmatpush1.msra.mxu0 %v2390
    %4549 = vmatprep.subr.mxu0 %v2395
    %4550 = vmatpush1.msra.mxu0 %v2394
    %4551 = vmatprep.subr.mxu0 %v2399
    %4552 = vmatpush1.msra.mxu0 %v2398
    %4553 = vmatprep.mubr.f32.mxu0 %v3964
    %4554 = vmatmul.mubr.f32.gmra.mrb[0].mxu0 %v3798
    %v4555 = vpop.f32.mrb[0].mxu0
    %v4556 = vadd.f32 %v2425, %v4555
    %v4557 = vpop.f32.mrb[0].mxu0
    %v4558 = vadd.f32 %v2429, %v4557
    %4559 = vdwg.mxu0
    %4560 = vmatprep.subr.mxu0 %v2277
    %4561 = vmatpush1.msra.mxu0 %v2276
    %4562 = vmatprep.subr.mxu0 %v2281
    %4563 = vmatpush1.msra.mxu0 %v2280
    %4564 = vmatprep.subr.mxu0 %v2285
    %4565 = vmatpush1.msra.mxu0 %v2284
    %4566 = vmatprep.subr.mxu0 %v2289
    %4567 = vmatpush1.msra.mxu0 %v2288
    %4568 = vmatprep.subr.mxu0 %v2293
    %4569 = vmatpush1.msra.mxu0 %v2292
    %4570 = vmatprep.subr.mxu0 %v2297
    %4571 = vmatpush1.msra.mxu0 %v2296
    %4572 = vmatprep.subr.mxu0 %v2301
    %4573 = vmatpush1.msra.mxu0 %v2300
    %4574 = vmatprep.subr.mxu0 %v2305
    %4575 = vmatpush1.msra.mxu0 %v2304
    %4576 = vmatprep.subr.mxu0 %v2309
    %4577 = vmatpush1.msra.mxu0 %v2308
    %4578 = vmatprep.subr.mxu0 %v2313
    %4579 = vmatpush1.msra.mxu0 %v2312
    %4580 = vmatprep.subr.mxu0 %v2317
    %4581 = vmatpush1.msra.mxu0 %v2316
    %4582 = vmatprep.subr.mxu0 %v2321
    %4583 = vmatpush1.msra.mxu0 %v2320
    %4584 = vmatprep.subr.mxu0 %v2325
    %4585 = vmatpush1.msra.mxu0 %v2324
    %4586 = vmatprep.subr.mxu0 %v2329
    %4587 = vmatpush1.msra.mxu0 %v2328
    %4588 = vmatprep.subr.mxu0 %v2333
    %4589 = vmatpush1.msra.mxu0 %v2332
    %4590 = vmatprep.subr.mxu0 %v2337
    %4591 = vmatpush1.msra.mxu0 %v2336
    %4592 = vmatprep.subr.mxu0 %v2341
    %4593 = vmatpush1.msra.mxu0 %v2340
    %4594 = vmatprep.subr.mxu0 %v2345
    %4595 = vmatpush1.msra.mxu0 %v2344
    %4596 = vmatprep.subr.mxu0 %v2349
    %4597 = vmatpush1.msra.mxu0 %v2348
    %4598 = vmatprep.subr.mxu0 %v2353
    %4599 = vmatpush1.msra.mxu0 %v2352
    %4600 = vmatprep.subr.mxu0 %v2357
    %4601 = vmatpush1.msra.mxu0 %v2356
    %4602 = vmatprep.subr.mxu0 %v2361
    %4603 = vmatpush1.msra.mxu0 %v2360
    %4604 = vmatprep.subr.mxu0 %v2365
    %4605 = vmatpush1.msra.mxu0 %v2364
    %4606 = vmatprep.subr.mxu0 %v2369
    %4607 = vmatpush1.msra.mxu0 %v2368
    %4608 = vmatprep.subr.mxu0 %v2373
    %4609 = vmatpush1.msra.mxu0 %v2372
    %4610 = vmatprep.subr.mxu0 %v2377
    %4611 = vmatpush1.msra.mxu0 %v2376
    %4612 = vmatprep.subr.mxu0 %v2381
    %4613 = vmatpush1.msra.mxu0 %v2380
    %4614 = vmatprep.subr.mxu0 %v2385
    %4615 = vmatpush1.msra.mxu0 %v2384
    %4616 = vmatprep.subr.mxu0 %v2389
    %4617 = vmatpush1.msra.mxu0 %v2388
    %4618 = vmatprep.subr.mxu0 %v2393
    %4619 = vmatpush1.msra.mxu0 %v2392
    %4620 = vmatprep.subr.mxu0 %v2397
    %4621 = vmatpush1.msra.mxu0 %v2396
    %4622 = vmatprep.subr.mxu0 %v2401
    %4623 = vmatpush1.msra.mxu0 %v2400
    %4624 = vmatprep.mubr.f32.mxu0 %v3964
    %4625 = vmatmul.mubr.f32.gmra.mrb[0].mxu0 %v3798
    %v4626 = vpop.f32.mrb[0].mxu0
    %v4627 = vadd.f32 %v2433, %v4626
    %v4628 = vpop.f32.mrb[0].mxu0
    %v4629 = vadd.f32 %v2437, %v4628
    %4630 = vdwg.mxu0
    %v4631 = vxor.u32 %v4556, 2147483648
    %v4632 = vxor.u32 %v4558, 2147483648
    %v4633 = vxor.u32 %v4627, 2147483648
    %v4634 = vmul.f32 %v4631, 1.442695
    %v4635 = vpow.pop %v4634
    %v4636 = vmul.f32 %v4632, 1.442695
    %v4637 = vpow.pop %v4636
    %v4638 = vmul.f32 %v4633, 1.442695
    %v4639 = vpow.pop %v4638
    %v4640 = vadd.f32 %v4635, 1.0
    %v4641 = vadd.f32 %v4637, 1.0
    %v4642 = vadd.f32 %v4639, 1.0
    %v4643 = vrcp.pop %v4640
    %v4644 = vmul.f32 1.0, %v4643
    %v4645 = vrcp.pop %v4641
    %v4646 = vmul.f32 1.0, %v4645
    %v4647 = vrcp.pop %v4642
    %v4648 = vmul.f32 1.0, %v4647
    %v4649 = vtanh.pop %v4629
    %v4650 = vmul.f32 %v4646, %v3962
    %v4651 = vmul.f32 %v4644, %v4649
    %v4652 = vadd.f32 %v4650, %v4651
    %v4653 = vtanh.pop %v4652
    %v4654 = vmul.f32 %v4648, %v4653
    %v4656 = vrot.slane %v4152, 4
    %4658 = vmatprep.subr.mxu0 %v312
    %4659 = vmatpush1.msra.mxu0 %v311
    %4660 = vmatprep.subr.mxu0 %v316
    %4661 = vmatpush1.msra.mxu0 %v315
    %4662 = vmatprep.subr.mxu0 %v320
    %4663 = vmatpush1.msra.mxu0 %v319
    %4664 = vmatprep.subr.mxu0 %v324
    %4665 = vmatpush1.msra.mxu0 %v323
    %4666 = vmatprep.subr.mxu0 %v328
    %4667 = vmatpush1.msra.mxu0 %v327
    %4668 = vmatprep.subr.mxu0 %v332
    %4669 = vmatpush1.msra.mxu0 %v331
    %4670 = vmatprep.subr.mxu0 %v336
    %4671 = vmatpush1.msra.mxu0 %v335
    %4672 = vmatprep.subr.mxu0 %v340
    %4673 = vmatpush1.msra.mxu0 %v339
    %4674 = vmatprep.subr.mxu0 %v344
    %4675 = vmatpush1.msra.mxu0 %v343
    %4676 = vmatprep.subr.mxu0 %v348
    %4677 = vmatpush1.msra.mxu0 %v347
    %4678 = vmatprep.subr.mxu0 %v352
    %4679 = vmatpush1.msra.mxu0 %v351
    %4680 = vmatprep.subr.mxu0 %v356
    %4681 = vmatpush1.msra.mxu0 %v355
    %4682 = vmatprep.subr.mxu0 %v360
    %4683 = vmatpush1.msra.mxu0 %v359
    %4684 = vmatprep.subr.mxu0 %v364
    %4685 = vmatpush1.msra.mxu0 %v363
    %4686 = vmatprep.subr.mxu0 %v368
    %4687 = vmatpush1.msra.mxu0 %v367
    %4688 = vmatprep.subr.mxu0 %v372
    %4689 = vmatpush1.msra.mxu0 %v371
    %4690 = vmatprep.subr.mxu0 0.0
    %4691 = vmatpush1.msra.mxu0 0.0
    %4692 = vmatprep.subr.mxu0 0.0
    %4693 = vmatpush1.msra.mxu0 0.0
    %4694 = vmatprep.subr.mxu0 0.0
    %4695 = vmatpush1.msra.mxu0 0.0
    %4696 = vmatprep.subr.mxu0 0.0
    %4697 = vmatpush1.msra.mxu0 0.0
    %4698 = vmatprep.subr.mxu0 0.0
    %4699 = vmatpush1.msra.mxu0 0.0
    %4700 = vmatprep.subr.mxu0 0.0
    %4701 = vmatpush1.msra.mxu0 0.0
    %4702 = vmatprep.subr.mxu0 0.0
    %4703 = vmatpush1.msra.mxu0 0.0
    %4704 = vmatprep.subr.mxu0 0.0
    %4705 = vmatpush1.msra.mxu0 0.0
    %4706 = vmatprep.subr.mxu0 0.0
    %4707 = vmatpush1.msra.mxu0 0.0
    %4708 = vmatprep.subr.mxu0 0.0
    %4709 = vmatpush1.msra.mxu0 0.0
    %4710 = vmatprep.subr.mxu0 0.0
    %4711 = vmatpush1.msra.mxu0 0.0
    %4712 = vmatprep.subr.mxu0 0.0
    %4713 = vmatpush1.msra.mxu0 0.0
    %4714 = vmatprep.subr.mxu0 0.0
    %4715 = vmatpush1.msra.mxu0 0.0
    %4716 = vmatprep.subr.mxu0 0.0
    %4717 = vmatpush1.msra.mxu0 0.0
    %4718 = vmatprep.subr.mxu0 0.0
    %4719 = vmatpush1.msra.mxu0 0.0
    %4720 = vmatprep.subr.mxu0 0.0
    %4721 = vmatpush1.msra.mxu0 0.0
    %4722 = vmatprep.mubr.f32.mxu0 0.0
    %4723 = vmatmul.mubr.f32.gmra.mrb[0].mxu0 %v4656
    %v4724 = vpop.f32.mrb[0].mxu0
    %v4725 = vadd.f32 0.0, %v4724
    %v4726 = vpop.f32.mrb[0].mxu0
    %v4727 = vadd.f32 0.0, %v4726
    %4728 = vdwg.mxu0
    %4729 = vmatprep.subr.mxu0 %v314
    %4730 = vmatpush1.msra.mxu0 %v313
    %4731 = vmatprep.subr.mxu0 %v318
    %4732 = vmatpush1.msra.mxu0 %v317
    %4733 = vmatprep.subr.mxu0 %v322
    %4734 = vmatpush1.msra.mxu0 %v321
    %4735 = vmatprep.subr.mxu0 %v326
    %4736 = vmatpush1.msra.mxu0 %v325
    %4737 = vmatprep.subr.mxu0 %v330
    %4738 = vmatpush1.msra.mxu0 %v329
    %4739 = vmatprep.subr.mxu0 %v334
    %4740 = vmatpush1.msra.mxu0 %v333
    %4741 = vmatprep.subr.mxu0 %v338
    %4742 = vmatpush1.msra.mxu0 %v337
    %4743 = vmatprep.subr.mxu0 %v342
    %4744 = vmatpush1.msra.mxu0 %v341
    %4745 = vmatprep.subr.mxu0 %v346
    %4746 = vmatpush1.msra.mxu0 %v345
    %4747 = vmatprep.subr.mxu0 %v350
    %4748 = vmatpush1.msra.mxu0 %v349
    %4749 = vmatprep.subr.mxu0 %v354
    %4750 = vmatpush1.msra.mxu0 %v353
    %4751 = vmatprep.subr.mxu0 %v358
    %4752 = vmatpush1.msra.mxu0 %v357
    %4753 = vmatprep.subr.mxu0 %v362
    %4754 = vmatpush1.msra.mxu0 %v361
    %4755 = vmatprep.subr.mxu0 %v366
    %4756 = vmatpush1.msra.mxu0 %v365
    %4757 = vmatprep.subr.mxu0 %v370
    %4758 = vmatpush1.msra.mxu0 %v369
    %4759 = vmatprep.subr.mxu0 %v374
    %4760 = vmatpush1.msra.mxu0 %v373
    %4761 = vmatprep.subr.mxu0 0.0
    %4762 = vmatpush1.msra.mxu0 0.0
    %4763 = vmatprep.subr.mxu0 0.0
    %4764 = vmatpush1.msra.mxu0 0.0
    %4765 = vmatprep.subr.mxu0 0.0
    %4766 = vmatpush1.msra.mxu0 0.0
    %4767 = vmatprep.subr.mxu0 0.0
    %4768 = vmatpush1.msra.mxu0 0.0
    %4769 = vmatprep.subr.mxu0 0.0
    %4770 = vmatpush1.msra.mxu0 0.0
    %4771 = vmatprep.subr.mxu0 0.0
    %4772 = vmatpush1.msra.mxu0 0.0
    %4773 = vmatprep.subr.mxu0 0.0
    %4774 = vmatpush1.msra.mxu0 0.0
    %4775 = vmatprep.subr.mxu0 0.0
    %4776 = vmatpush1.msra.mxu0 0.0
    %4777 = vmatprep.subr.mxu0 0.0
    %4778 = vmatpush1.msra.mxu0 0.0
    %4779 = vmatprep.subr.mxu0 0.0
    %4780 = vmatpush1.msra.mxu0 0.0
    %4781 = vmatprep.subr.mxu0 0.0
    %4782 = vmatpush1.msra.mxu0 0.0
    %4783 = vmatprep.subr.mxu0 0.0
    %4784 = vmatpush1.msra.mxu0 0.0
    %4785 = vmatprep.subr.mxu0 0.0
    %4786 = vmatpush1.msra.mxu0 0.0
    %4787 = vmatprep.subr.mxu0 0.0
    %4788 = vmatpush1.msra.mxu0 0.0
    %4789 = vmatprep.subr.mxu0 0.0
    %4790 = vmatpush1.msra.mxu0 0.0
    %4791 = vmatprep.subr.mxu0 0.0
    %4792 = vmatpush1.msra.mxu0 0.0
    %4793 = vmatprep.mubr.f32.mxu0 0.0
    %4794 = vmatmul.mubr.f32.gmra.mrb[0].mxu0 %v4656
    %v4795 = vpop.f32.mrb[0].mxu0
    %v4796 = vadd.f32 0.0, %v4795
    %v4797 = vpop.f32.mrb[0].mxu0
    %v4798 = vadd.f32 0.0, %v4797
    %4799 = vdwg.mxu0
    %v4804 = vrot.slane %v4725, 2
    %v4805 = vrot.slane %v4727, 2
    %v4806 = vrot.slane %v4796, 2
    %v4807 = vrot.slane %v4798, 2
    %v4812 = vadd.f32 %v230, %v4804
    %v4813 = vadd.f32 %v232, %v4805
    %v4814 = vadd.f32 %v307, %v4806
    %v4815 = vadd.f32 %v309, %v4807
    %v4816 = vxor.u32 %v4812, 2147483648
    %v4817 = vxor.u32 %v4813, 2147483648
    %v4818 = vxor.u32 %v4814, 2147483648
    %v4819 = vmul.f32 %v4816, 1.442695
    %v4820 = vpow.pop %v4819
    %v4821 = vmul.f32 %v4817, 1.442695
    %v4822 = vpow.pop %v4821
    %v4823 = vmul.f32 %v4818, 1.442695
    %v4824 = vpow.pop %v4823
    %v4825 = vadd.f32 %v4820, 1.0
    %v4826 = vadd.f32 %v4822, 1.0
    %v4827 = vadd.f32 %v4824, 1.0
    %v4828 = vrcp.pop %v4825
    %v4829 = vmul.f32 1.0, %v4828
    %v4830 = vrcp.pop %v4826
    %v4831 = vmul.f32 1.0, %v4830
    %v4832 = vrcp.pop %v4827
    %v4833 = vmul.f32 1.0, %v4832
    %v4834 = vtanh.pop %v4815
    %v4836 = vrot.slane %v4150, 6
    %v4838 = vmul.f32 %v4831, %v4836
    %v4839 = vmul.f32 %v4829, %v4834
    %v4840 = vadd.f32 %v4838, %v4839
    %v4841 = vtanh.pop %v4840
    %v4842 = vmul.f32 %v4833, %v4841
    %v4844 = vrot.slane %v4322, 4
    %v4845 = vrot.slane %v4844, 4
    %4847 = vmatprep.subr.mxu0 %v731
    %4848 = vmatpush1.msra.mxu0 %v730
    %4849 = vmatprep.subr.mxu0 %v735
    %4850 = vmatpush1.msra.mxu0 %v734
    %4851 = vmatprep.subr.mxu0 %v739
    %4852 = vmatpush1.msra.mxu0 %v738
    %4853 = vmatprep.subr.mxu0 %v743
    %4854 = vmatpush1.msra.mxu0 %v742
    %4855 = vmatprep.subr.mxu0 %v747
    %4856 = vmatpush1.msra.mxu0 %v746
    %4857 = vmatprep.subr.mxu0 %v751
    %4858 = vmatpush1.msra.mxu0 %v750
    %4859 = vmatprep.subr.mxu0 %v755
    %4860 = vmatpush1.msra.mxu0 %v754
    %4861 = vmatprep.subr.mxu0 %v759
    %4862 = vmatpush1.msra.mxu0 %v758
    %4863 = vmatprep.subr.mxu0 %v763
    %4864 = vmatpush1.msra.mxu0 %v762
    %4865 = vmatprep.subr.mxu0 %v767
    %4866 = vmatpush1.msra.mxu0 %v766
    %4867 = vmatprep.subr.mxu0 %v771
    %4868 = vmatpush1.msra.mxu0 %v770
    %4869 = vmatprep.subr.mxu0 %v775
    %4870 = vmatpush1.msra.mxu0 %v774
    %4871 = vmatprep.subr.mxu0 %v779
    %4872 = vmatpush1.msra.mxu0 %v778
    %4873 = vmatprep.subr.mxu0 %v783
    %4874 = vmatpush1.msra.mxu0 %v782
    %4875 = vmatprep.subr.mxu0 %v787
    %4876 = vmatpush1.msra.mxu0 %v786
    %4877 = vmatprep.subr.mxu0 %v791
    %4878 = vmatpush1.msra.mxu0 %v790
    %4879 = vmatprep.subr.mxu0 %v795
    %4880 = vmatpush1.msra.mxu0 %v794
    %4881 = vmatprep.subr.mxu0 %v799
    %4882 = vmatpush1.msra.mxu0 %v798
    %4883 = vmatprep.subr.mxu0 %v803
    %4884 = vmatpush1.msra.mxu0 %v802
    %4885 = vmatprep.subr.mxu0 %v807
    %4886 = vmatpush1.msra.mxu0 %v806
    %4887 = vmatprep.subr.mxu0 %v811
    %4888 = vmatpush1.msra.mxu0 %v810
    %4889 = vmatprep.subr.mxu0 %v815
    %4890 = vmatpush1.msra.mxu0 %v814
    %4891 = vmatprep.subr.mxu0 %v819
    %4892 = vmatpush1.msra.mxu0 %v818
    %4893 = vmatprep.subr.mxu0 %v823
    %4894 = vmatpush1.msra.mxu0 %v822
    %4895 = vmatprep.subr.mxu0 %v827
    %4896 = vmatpush1.msra.mxu0 %v826
    %4897 = vmatprep.subr.mxu0 %v831
    %4898 = vmatpush1.msra.mxu0 %v830
    %4899 = vmatprep.subr.mxu0 %v835
    %4900 = vmatpush1.msra.mxu0 %v834
    %4901 = vmatprep.subr.mxu0 %v839
    %4902 = vmatpush1.msra.mxu0 %v838
    %4903 = vmatprep.subr.mxu0 %v843
    %4904 = vmatpush1.msra.mxu0 %v842
    %4905 = vmatprep.subr.mxu0 %v847
    %4906 = vmatpush1.msra.mxu0 %v846
    %4907 = vmatprep.subr.mxu0 %v851
    %4908 = vmatpush1.msra.mxu0 %v850
    %4909 = vmatprep.subr.mxu0 %v855
    %4910 = vmatpush1.msra.mxu0 %v854
    %4911 = vmatprep.mubr.f32.mxu0 %v4845
    %4912 = vmatmul.mubr.f32.gmra.mrb[0].mxu0 %v4656
    %v4913 = vpop.f32.mrb[0].mxu0
    %v4914 = vadd.f32 %v881, %v4913
    %v4915 = vpop.f32.mrb[0].mxu0
    %v4916 = vadd.f32 %v885, %v4915
    %4917 = vdwg.mxu0
    %4918 = vmatprep.subr.mxu0 %v733
    %4919 = vmatpush1.msra.mxu0 %v732
    %4920 = vmatprep.subr.mxu0 %v737
    %4921 = vmatpush1.msra.mxu0 %v736
    %4922 = vmatprep.subr.mxu0 %v741
    %4923 = vmatpush1.msra.mxu0 %v740
    %4924 = vmatprep.subr.mxu0 %v745
    %4925 = vmatpush1.msra.mxu0 %v744
    %4926 = vmatprep.subr.mxu0 %v749
    %4927 = vmatpush1.msra.mxu0 %v748
    %4928 = vmatprep.subr.mxu0 %v753
    %4929 = vmatpush1.msra.mxu0 %v752
    %4930 = vmatprep.subr.mxu0 %v757
    %4931 = vmatpush1.msra.mxu0 %v756
    %4932 = vmatprep.subr.mxu0 %v761
    %4933 = vmatpush1.msra.mxu0 %v760
    %4934 = vmatprep.subr.mxu0 %v765
    %4935 = vmatpush1.msra.mxu0 %v764
    %4936 = vmatprep.subr.mxu0 %v769
    %4937 = vmatpush1.msra.mxu0 %v768
    %4938 = vmatprep.subr.mxu0 %v773
    %4939 = vmatpush1.msra.mxu0 %v772
    %4940 = vmatprep.subr.mxu0 %v777
    %4941 = vmatpush1.msra.mxu0 %v776
    %4942 = vmatprep.subr.mxu0 %v781
    %4943 = vmatpush1.msra.mxu0 %v780
    %4944 = vmatprep.subr.mxu0 %v785
    %4945 = vmatpush1.msra.mxu0 %v784
    %4946 = vmatprep.subr.mxu0 %v789
    %4947 = vmatpush1.msra.mxu0 %v788
    %4948 = vmatprep.subr.mxu0 %v793
    %4949 = vmatpush1.msra.mxu0 %v792
    %4950 = vmatprep.subr.mxu0 %v797
    %4951 = vmatpush1.msra.mxu0 %v796
    %4952 = vmatprep.subr.mxu0 %v801
    %4953 = vmatpush1.msra.mxu0 %v800
    %4954 = vmatprep.subr.mxu0 %v805
    %4955 = vmatpush1.msra.mxu0 %v804
    %4956 = vmatprep.subr.mxu0 %v809
    %4957 = vmatpush1.msra.mxu0 %v808
    %4958 = vmatprep.subr.mxu0 %v813
    %4959 = vmatpush1.msra.mxu0 %v812
    %4960 = vmatprep.subr.mxu0 %v817
    %4961 = vmatpush1.msra.mxu0 %v816
    %4962 = vmatprep.subr.mxu0 %v821
    %4963 = vmatpush1.msra.mxu0 %v820
    %4964 = vmatprep.subr.mxu0 %v825
    %4965 = vmatpush1.msra.mxu0 %v824
    %4966 = vmatprep.subr.mxu0 %v829
    %4967 = vmatpush1.msra.mxu0 %v828
    %4968 = vmatprep.subr.mxu0 %v833
    %4969 = vmatpush1.msra.mxu0 %v832
    %4970 = vmatprep.subr.mxu0 %v837
    %4971 = vmatpush1.msra.mxu0 %v836
    %4972 = vmatprep.subr.mxu0 %v841
    %4973 = vmatpush1.msra.mxu0 %v840
    %4974 = vmatprep.subr.mxu0 %v845
    %4975 = vmatpush1.msra.mxu0 %v844
    %4976 = vmatprep.subr.mxu0 %v849
    %4977 = vmatpush1.msra.mxu0 %v848
    %4978 = vmatprep.subr.mxu0 %v853
    %4979 = vmatpush1.msra.mxu0 %v852
    %4980 = vmatprep.subr.mxu0 %v857
    %4981 = vmatpush1.msra.mxu0 %v856
    %4982 = vmatprep.mubr.f32.mxu0 %v4845
    %4983 = vmatmul.mubr.f32.gmra.mrb[0].mxu0 %v4656
    %v4984 = vpop.f32.mrb[0].mxu0
    %v4985 = vadd.f32 %v889, %v4984
    %v4986 = vpop.f32.mrb[0].mxu0
    %v4987 = vadd.f32 %v893, %v4986
    %4988 = vdwg.mxu0
    %v4989 = vxor.u32 %v4914, 2147483648
    %v4990 = vxor.u32 %v4916, 2147483648
    %v4991 = vxor.u32 %v4985, 2147483648
    %v4992 = vmul.f32 %v4989, 1.442695
    %v4993 = vpow.pop %v4992
    %v4994 = vmul.f32 %v4990, 1.442695
    %v4995 = vpow.pop %v4994
    %v4996 = vmul.f32 %v4991, 1.442695
    %v4997 = vpow.pop %v4996
    %v4998 = vadd.f32 %v4993, 1.0
    %v4999 = vadd.f32 %v4995, 1.0
    %v5000 = vadd.f32 %v4997, 1.0
    %v5001 = vrcp.pop %v4998
    %v5002 = vmul.f32 1.0, %v5001
    %v5003 = vrcp.pop %v4999
    %v5004 = vmul.f32 1.0, %v5003
    %v5005 = vrcp.pop %v5000
    %v5006 = vmul.f32 1.0, %v5005
    %v5007 = vtanh.pop %v4987
    %v5008 = vmul.f32 %v5004, %v4320
    %v5009 = vmul.f32 %v5002, %v5007
    %v5010 = vadd.f32 %v5008, %v5009
    %v5011 = vtanh.pop %v5010
    %v5012 = vmul.f32 %v5006, %v5011
    %5013 = vmatprep.subr.mxu0 %v1420
    %5014 = vmatpush1.msra.mxu0 %v1419
    %5015 = vmatprep.subr.mxu0 %v1424
    %5016 = vmatpush1.msra.mxu0 %v1423
    %5017 = vmatprep.subr.mxu0 %v1428
    %5018 = vmatpush1.msra.mxu0 %v1427
    %5019 = vmatprep.subr.mxu0 %v1432
    %5020 = vmatpush1.msra.mxu0 %v1431
    %5021 = vmatprep.subr.mxu0 %v1436
    %5022 = vmatpush1.msra.mxu0 %v1435
    %5023 = vmatprep.subr.mxu0 %v1440
    %5024 = vmatpush1.msra.mxu0 %v1439
    %5025 = vmatprep.subr.mxu0 %v1444
    %5026 = vmatpush1.msra.mxu0 %v1443
    %5027 = vmatprep.subr.mxu0 %v1448
    %5028 = vmatpush1.msra.mxu0 %v1447
    %5029 = vmatprep.subr.mxu0 %v1452
    %5030 = vmatpush1.msra.mxu0 %v1451
    %5031 = vmatprep.subr.mxu0 %v1456
    %5032 = vmatpush1.msra.mxu0 %v1455
    %5033 = vmatprep.subr.mxu0 %v1460
    %5034 = vmatpush1.msra.mxu0 %v1459
    %5035 = vmatprep.subr.mxu0 %v1464
    %5036 = vmatpush1.msra.mxu0 %v1463
    %5037 = vmatprep.subr.mxu0 %v1468
    %5038 = vmatpush1.msra.mxu0 %v1467
    %5039 = vmatprep.subr.mxu0 %v1472
    %5040 = vmatpush1.msra.mxu0 %v1471
    %5041 = vmatprep.subr.mxu0 %v1476
    %5042 = vmatpush1.msra.mxu0 %v1475
    %5043 = vmatprep.subr.mxu0 %v1480
    %5044 = vmatpush1.msra.mxu0 %v1479
    %5045 = vmatprep.subr.mxu0 %v1484
    %5046 = vmatpush1.msra.mxu0 %v1483
    %5047 = vmatprep.subr.mxu0 %v1488
    %5048 = vmatpush1.msra.mxu0 %v1487
    %5049 = vmatprep.subr.mxu0 %v1492
    %5050 = vmatpush1.msra.mxu0 %v1491
    %5051 = vmatprep.subr.mxu0 %v1496
    %5052 = vmatpush1.msra.mxu0 %v1495
    %5053 = vmatprep.subr.mxu0 %v1500
    %5054 = vmatpush1.msra.mxu0 %v1499
    %5055 = vmatprep.subr.mxu0 %v1504
    %5056 = vmatpush1.msra.mxu0 %v1503
    %5057 = vmatprep.subr.mxu0 %v1508
    %5058 = vmatpush1.msra.mxu0 %v1507
    %5059 = vmatprep.subr.mxu0 %v1512
    %5060 = vmatpush1.msra.mxu0 %v1511
    %5061 = vmatprep.subr.mxu0 %v1516
    %5062 = vmatpush1.msra.mxu0 %v1515
    %5063 = vmatprep.subr.mxu0 %v1520
    %5064 = vmatpush1.msra.mxu0 %v1519
    %5065 = vmatprep.subr.mxu0 %v1524
    %5066 = vmatpush1.msra.mxu0 %v1523
    %5067 = vmatprep.subr.mxu0 %v1528
    %5068 = vmatpush1.msra.mxu0 %v1527
    %5069 = vmatprep.subr.mxu0 %v1532
    %5070 = vmatpush1.msra.mxu0 %v1531
    %5071 = vmatprep.subr.mxu0 %v1536
    %5072 = vmatpush1.msra.mxu0 %v1535
    %5073 = vmatprep.subr.mxu0 %v1540
    %5074 = vmatpush1.msra.mxu0 %v1539
    %5075 = vmatprep.subr.mxu0 %v1544
    %5076 = vmatpush1.msra.mxu0 %v1543
    %5077 = vmatprep.mubr.f32.mxu0 %v4488
    %5078 = vmatmul.mubr.f32.gmra.mrb[0].mxu0 %v4322
    %v5079 = vpop.f32.mrb[0].mxu0
    %v5080 = vadd.f32 %v1570, %v5079
    %v5081 = vpop.f32.mrb[0].mxu0
    %v5082 = vadd.f32 %v1574, %v5081
    %5083 = vdwg.mxu0
    %5084 = vmatprep.subr.mxu0 %v1422
    %5085 = vmatpush1.msra.mxu0 %v1421
    %5086 = vmatprep.subr.mxu0 %v1426
    %5087 = vmatpush1.msra.mxu0 %v1425
    %5088 = vmatprep.subr.mxu0 %v1430
    %5089 = vmatpush1.msra.mxu0 %v1429
    %5090 = vmatprep.subr.mxu0 %v1434
    %5091 = vmatpush1.msra.mxu0 %v1433
    %5092 = vmatprep.subr.mxu0 %v1438
    %5093 = vmatpush1.msra.mxu0 %v1437
    %5094 = vmatprep.subr.mxu0 %v1442
    %5095 = vmatpush1.msra.mxu0 %v1441
    %5096 = vmatprep.subr.mxu0 %v1446
    %5097 = vmatpush1.msra.mxu0 %v1445
    %5098 = vmatprep.subr.mxu0 %v1450
    %5099 = vmatpush1.msra.mxu0 %v1449
    %5100 = vmatprep.subr.mxu0 %v1454
    %5101 = vmatpush1.msra.mxu0 %v1453
    %5102 = vmatprep.subr.mxu0 %v1458
    %5103 = vmatpush1.msra.mxu0 %v1457
    %5104 = vmatprep.subr.mxu0 %v1462
    %5105 = vmatpush1.msra.mxu0 %v1461
    %5106 = vmatprep.subr.mxu0 %v1466
    %5107 = vmatpush1.msra.mxu0 %v1465
    %5108 = vmatprep.subr.mxu0 %v1470
    %5109 = vmatpush1.msra.mxu0 %v1469
    %5110 = vmatprep.subr.mxu0 %v1474
    %5111 = vmatpush1.msra.mxu0 %v1473
    %5112 = vmatprep.subr.mxu0 %v1478
    %5113 = vmatpush1.msra.mxu0 %v1477
    %5114 = vmatprep.subr.mxu0 %v1482
    %5115 = vmatpush1.msra.mxu0 %v1481
    %5116 = vmatprep.subr.mxu0 %v1486
    %5117 = vmatpush1.msra.mxu0 %v1485
    %5118 = vmatprep.subr.mxu0 %v1490
    %5119 = vmatpush1.msra.mxu0 %v1489
    %5120 = vmatprep.subr.mxu0 %v1494
    %5121 = vmatpush1.msra.mxu0 %v1493
    %5122 = vmatprep.subr.mxu0 %v1498
    %5123 = vmatpush1.msra.mxu0 %v1497
    %5124 = vmatprep.subr.mxu0 %v1502
    %5125 = vmatpush1.msra.mxu0 %v1501
    %5126 = vmatprep.subr.mxu0 %v1506
    %5127 = vmatpush1.msra.mxu0 %v1505
    %5128 = vmatprep.subr.mxu0 %v1510
    %5129 = vmatpush1.msra.mxu0 %v1509
    %5130 = vmatprep.subr.mxu0 %v1514
    %5131 = vmatpush1.msra.mxu0 %v1513
    %5132 = vmatprep.subr.mxu0 %v1518
    %5133 = vmatpush1.msra.mxu0 %v1517
    %5134 = vmatprep.subr.mxu0 %v1522
    %5135 = vmatpush1.msra.mxu0 %v1521
    %5136 = vmatprep.subr.mxu0 %v1526
    %5137 = vmatpush1.msra.mxu0 %v1525
    %5138 = vmatprep.subr.mxu0 %v1530
    %5139 = vmatpush1.msra.mxu0 %v1529
    %5140 = vmatprep.subr.mxu0 %v1534
    %5141 = vmatpush1.msra.mxu0 %v1533
    %5142 = vmatprep.subr.mxu0 %v1538
    %5143 = vmatpush1.msra.mxu0 %v1537
    %5144 = vmatprep.subr.mxu0 %v1542
    %5145 = vmatpush1.msra.mxu0 %v1541
    %5146 = vmatprep.subr.mxu0 %v1546
    %5147 = vmatpush1.msra.mxu0 %v1545
    %5148 = vmatprep.mubr.f32.mxu0 %v4488
    %5149 = vmatmul.mubr.f32.gmra.mrb[0].mxu0 %v4322
    %v5150 = vpop.f32.mrb[0].mxu0
    %v5151 = vadd.f32 %v1578, %v5150
    %v5152 = vpop.f32.mrb[0].mxu0
    %v5153 = vadd.f32 %v1582, %v5152
    %5154 = vdwg.mxu0
    %v5155 = vxor.u32 %v5080, 2147483648
    %v5156 = vxor.u32 %v5082, 2147483648
    %v5157 = vxor.u32 %v5151, 2147483648
    %v5158 = vmul.f32 %v5155, 1.442695
    %v5159 = vpow.pop %v5158
    %v5160 = vmul.f32 %v5156, 1.442695
    %v5161 = vpow.pop %v5160
    %v5162 = vmul.f32 %v5157, 1.442695
    %v5163 = vpow.pop %v5162
    %v5164 = vadd.f32 %v5159, 1.0
    %v5165 = vadd.f32 %v5161, 1.0
    %v5166 = vadd.f32 %v5163, 1.0
    %v5167 = vrcp.pop %v5164
    %v5168 = vmul.f32 1.0, %v5167
    %v5169 = vrcp.pop %v5165
    %v5170 = vmul.f32 1.0, %v5169
    %v5171 = vrcp.pop %v5166
    %v5172 = vmul.f32 1.0, %v5171
    %v5173 = vtanh.pop %v5153
    %v5174 = vmul.f32 %v5170, %v4486
    %v5175 = vmul.f32 %v5168, %v5173
    %v5176 = vadd.f32 %v5174, %v5175
    %v5177 = vtanh.pop %v5176
    %v5178 = vmul.f32 %v5172, %v5177
    %5179 = vmatprep.subr.mxu0 %v2275
    %5180 = vmatpush1.msra.mxu0 %v2274
    %5181 = vmatprep.subr.mxu0 %v2279
    %5182 = vmatpush1.msra.mxu0 %v2278
    %5183 = vmatprep.subr.mxu0 %v2283
    %5184 = vmatpush1.msra.mxu0 %v2282
    %5185 = vmatprep.subr.mxu0 %v2287
    %5186 = vmatpush1.msra.mxu0 %v2286
    %5187 = vmatprep.subr.mxu0 %v2291
    %5188 = vmatpush1.msra.mxu0 %v2290
    %5189 = vmatprep.subr.mxu0 %v2295
    %5190 = vmatpush1.msra.mxu0 %v2294
    %5191 = vmatprep.subr.mxu0 %v2299
    %5192 = vmatpush1.msra.mxu0 %v2298
    %5193 = vmatprep.subr.mxu0 %v2303
    %5194 = vmatpush1.msra.mxu0 %v2302
    %5195 = vmatprep.subr.mxu0 %v2307
    %5196 = vmatpush1.msra.mxu0 %v2306
    %5197 = vmatprep.subr.mxu0 %v2311
    %5198 = vmatpush1.msra.mxu0 %v2310
    %5199 = vmatprep.subr.mxu0 %v2315
    %5200 = vmatpush1.msra.mxu0 %v2314
    %5201 = vmatprep.subr.mxu0 %v2319
    %5202 = vmatpush1.msra.mxu0 %v2318
    %5203 = vmatprep.subr.mxu0 %v2323
    %5204 = vmatpush1.msra.mxu0 %v2322
    %5205 = vmatprep.subr.mxu0 %v2327
    %5206 = vmatpush1.msra.mxu0 %v2326
    %5207 = vmatprep.subr.mxu0 %v2331
    %5208 = vmatpush1.msra.mxu0 %v2330
    %5209 = vmatprep.subr.mxu0 %v2335
    %5210 = vmatpush1.msra.mxu0 %v2334
    %5211 = vmatprep.subr.mxu0 %v2339
    %5212 = vmatpush1.msra.mxu0 %v2338
    %5213 = vmatprep.subr.mxu0 %v2343
    %5214 = vmatpush1.msra.mxu0 %v2342
    %5215 = vmatprep.subr.mxu0 %v2347
    %5216 = vmatpush1.msra.mxu0 %v2346
    %5217 = vmatprep.subr.mxu0 %v2351
    %5218 = vmatpush1.msra.mxu0 %v2350
    %5219 = vmatprep.subr.mxu0 %v2355
    %5220 = vmatpush1.msra.mxu0 %v2354
    %5221 = vmatprep.subr.mxu0 %v2359
    %5222 = vmatpush1.msra.mxu0 %v2358
    %5223 = vmatprep.subr.mxu0 %v2363
    %5224 = vmatpush1.msra.mxu0 %v2362
    %5225 = vmatprep.subr.mxu0 %v2367
    %5226 = vmatpush1.msra.mxu0 %v2366
    %5227 = vmatprep.subr.mxu0 %v2371
    %5228 = vmatpush1.msra.mxu0 %v2370
    %5229 = vmatprep.subr.mxu0 %v2375
    %5230 = vmatpush1.msra.mxu0 %v2374
    %5231 = vmatprep.subr.mxu0 %v2379
    %5232 = vmatpush1.msra.mxu0 %v2378
    %5233 = vmatprep.subr.mxu0 %v2383
    %5234 = vmatpush1.msra.mxu0 %v2382
    %5235 = vmatprep.subr.mxu0 %v2387
    %5236 = vmatpush1.msra.mxu0 %v2386
    %5237 = vmatprep.subr.mxu0 %v2391
    %5238 = vmatpush1.msra.mxu0 %v2390
    %5239 = vmatprep.subr.mxu0 %v2395
    %5240 = vmatpush1.msra.mxu0 %v2394
    %5241 = vmatprep.subr.mxu0 %v2399
    %5242 = vmatpush1.msra.mxu0 %v2398
    %5243 = vmatprep.mubr.f32.mxu0 %v4654
    %5244 = vmatmul.mubr.f32.gmra.mrb[0].mxu0 %v4488
    %v5245 = vpop.f32.mrb[0].mxu0
    %v5246 = vadd.f32 %v2425, %v5245
    %v5247 = vpop.f32.mrb[0].mxu0
    %v5248 = vadd.f32 %v2429, %v5247
    %5249 = vdwg.mxu0
    %5250 = vmatprep.subr.mxu0 %v2277
    %5251 = vmatpush1.msra.mxu0 %v2276
    %5252 = vmatprep.subr.mxu0 %v2281
    %5253 = vmatpush1.msra.mxu0 %v2280
    %5254 = vmatprep.subr.mxu0 %v2285
    %5255 = vmatpush1.msra.mxu0 %v2284
    %5256 = vmatprep.subr.mxu0 %v2289
    %5257 = vmatpush1.msra.mxu0 %v2288
    %5258 = vmatprep.subr.mxu0 %v2293
    %5259 = vmatpush1.msra.mxu0 %v2292
    %5260 = vmatprep.subr.mxu0 %v2297
    %5261 = vmatpush1.msra.mxu0 %v2296
    %5262 = vmatprep.subr.mxu0 %v2301
    %5263 = vmatpush1.msra.mxu0 %v2300
    %5264 = vmatprep.subr.mxu0 %v2305
    %5265 = vmatpush1.msra.mxu0 %v2304
    %5266 = vmatprep.subr.mxu0 %v2309
    %5267 = vmatpush1.msra.mxu0 %v2308
    %5268 = vmatprep.subr.mxu0 %v2313
    %5269 = vmatpush1.msra.mxu0 %v2312
    %5270 = vmatprep.subr.mxu0 %v2317
    %5271 = vmatpush1.msra.mxu0 %v2316
    %5272 = vmatprep.subr.mxu0 %v2321
    %5273 = vmatpush1.msra.mxu0 %v2320
    %5274 = vmatprep.subr.mxu0 %v2325
    %5275 = vmatpush1.msra.mxu0 %v2324
    %5276 = vmatprep.subr.mxu0 %v2329
    %5277 = vmatpush1.msra.mxu0 %v2328
    %5278 = vmatprep.subr.mxu0 %v2333
    %5279 = vmatpush1.msra.mxu0 %v2332
    %5280 = vmatprep.subr.mxu0 %v2337
    %5281 = vmatpush1.msra.mxu0 %v2336
    %5282 = vmatprep.subr.mxu0 %v2341
    %5283 = vmatpush1.msra.mxu0 %v2340
    %5284 = vmatprep.subr.mxu0 %v2345
    %5285 = vmatpush1.msra.mxu0 %v2344
    %5286 = vmatprep.subr.mxu0 %v2349
    %5287 = vmatpush1.msra.mxu0 %v2348
    %5288 = vmatprep.subr.mxu0 %v2353
    %5289 = vmatpush1.msra.mxu0 %v2352
    %5290 = vmatprep.subr.mxu0 %v2357
    %5291 = vmatpush1.msra.mxu0 %v2356
    %5292 = vmatprep.subr.mxu0 %v2361
    %5293 = vmatpush1.msra.mxu0 %v2360
    %5294 = vmatprep.subr.mxu0 %v2365
    %5295 = vmatpush1.msra.mxu0 %v2364
    %5296 = vmatprep.subr.mxu0 %v2369
    %5297 = vmatpush1.msra.mxu0 %v2368
    %5298 = vmatprep.subr.mxu0 %v2373
    %5299 = vmatpush1.msra.mxu0 %v2372
    %5300 = vmatprep.subr.mxu0 %v2377
    %5301 = vmatpush1.msra.mxu0 %v2376
    %5302 = vmatprep.subr.mxu0 %v2381
    %5303 = vmatpush1.msra.mxu0 %v2380
    %5304 = vmatprep.subr.mxu0 %v2385
    %5305 = vmatpush1.msra.mxu0 %v2384
    %5306 = vmatprep.subr.mxu0 %v2389
    %5307 = vmatpush1.msra.mxu0 %v2388
    %5308 = vmatprep.subr.mxu0 %v2393
    %5309 = vmatpush1.msra.mxu0 %v2392
    %5310 = vmatprep.subr.mxu0 %v2397
    %5311 = vmatpush1.msra.mxu0 %v2396
    %5312 = vmatprep.subr.mxu0 %v2401
    %5313 = vmatpush1.msra.mxu0 %v2400
    %5314 = vmatprep.mubr.f32.mxu0 %v4654
    %5315 = vmatmul.mubr.f32.gmra.mrb[0].mxu0 %v4488
    %v5316 = vpop.f32.mrb[0].mxu0
    %v5317 = vadd.f32 %v2433, %v5316
    %v5318 = vpop.f32.mrb[0].mxu0
    %v5319 = vadd.f32 %v2437, %v5318
    %5320 = vdwg.mxu0
    %v5321 = vxor.u32 %v5246, 2147483648
    %v5322 = vxor.u32 %v5248, 2147483648
    %v5323 = vxor.u32 %v5317, 2147483648
    %v5324 = vmul.f32 %v5321, 1.442695
    %v5325 = vpow.pop %v5324
    %v5326 = vmul.f32 %v5322, 1.442695
    %v5327 = vpow.pop %v5326
    %v5328 = vmul.f32 %v5323, 1.442695
    %v5329 = vpow.pop %v5328
    %v5330 = vadd.f32 %v5325, 1.0
    %v5331 = vadd.f32 %v5327, 1.0
    %v5332 = vadd.f32 %v5329, 1.0
    %v5333 = vrcp.pop %v5330
    %v5334 = vmul.f32 1.0, %v5333
    %v5335 = vrcp.pop %v5331
    %v5336 = vmul.f32 1.0, %v5335
    %v5337 = vrcp.pop %v5332
    %v5338 = vmul.f32 1.0, %v5337
    %v5339 = vtanh.pop %v5319
    %v5340 = vmul.f32 %v5336, %v4652
    %v5341 = vmul.f32 %v5334, %v5339
    %v5342 = vadd.f32 %v5340, %v5341
    %v5343 = vtanh.pop %v5342
    %v5344 = vmul.f32 %v5338, %v5343
    %v5346 = vrot.slane %v5012, 2
    %v5348 = vrot.slane %v4842, 6
    %v5349 = vrot.slane %v5346, 6
    %5352 = vmatprep.subr.mxu0 %v731
    %5353 = vmatpush1.msra.mxu0 %v730
    %5354 = vmatprep.subr.mxu0 %v735
    %5355 = vmatpush1.msra.mxu0 %v734
    %5356 = vmatprep.subr.mxu0 %v739
    %5357 = vmatpush1.msra.mxu0 %v738
    %5358 = vmatprep.subr.mxu0 %v743
    %5359 = vmatpush1.msra.mxu0 %v742
    %5360 = vmatprep.subr.mxu0 %v747
    %5361 = vmatpush1.msra.mxu0 %v746
    %5362 = vmatprep.subr.mxu0 %v751
    %5363 = vmatpush1.msra.mxu0 %v750
    %5364 = vmatprep.subr.mxu0 %v755
    %5365 = vmatpush1.msra.mxu0 %v754
    %5366 = vmatprep.subr.mxu0 %v759
    %5367 = vmatpush1.msra.mxu0 %v758
    %5368 = vmatprep.subr.mxu0 %v763
    %5369 = vmatpush1.msra.mxu0 %v762
    %5370 = vmatprep.subr.mxu0 %v767
    %5371 = vmatpush1.msra.mxu0 %v766
    %5372 = vmatprep.subr.mxu0 %v771
    %5373 = vmatpush1.msra.mxu0 %v770
    %5374 = vmatprep.subr.mxu0 %v775
    %5375 = vmatpush1.msra.mxu0 %v774
    %5376 = vmatprep.subr.mxu0 %v779
    %5377 = vmatpush1.msra.mxu0 %v778
    %5378 = vmatprep.subr.mxu0 %v783
    %5379 = vmatpush1.msra.mxu0 %v782
    %5380 = vmatprep.subr.mxu0 %v787
    %5381 = vmatpush1.msra.mxu0 %v786
    %5382 = vmatprep.subr.mxu0 %v791
    %5383 = vmatpush1.msra.mxu0 %v790
    %5384 = vmatprep.subr.mxu0 %v795
    %5385 = vmatpush1.msra.mxu0 %v794
    %5386 = vmatprep.subr.mxu0 %v799
    %5387 = vmatpush1.msra.mxu0 %v798
    %5388 = vmatprep.subr.mxu0 %v803
    %5389 = vmatpush1.msra.mxu0 %v802
    %5390 = vmatprep.subr.mxu0 %v807
    %5391 = vmatpush1.msra.mxu0 %v806
    %5392 = vmatprep.subr.mxu0 %v811
    %5393 = vmatpush1.msra.mxu0 %v810
    %5394 = vmatprep.subr.mxu0 %v815
    %5395 = vmatpush1.msra.mxu0 %v814
    %5396 = vmatprep.subr.mxu0 %v819
    %5397 = vmatpush1.msra.mxu0 %v818
    %5398 = vmatprep.subr.mxu0 %v823
    %5399 = vmatpush1.msra.mxu0 %v822
    %5400 = vmatprep.subr.mxu0 %v827
    %5401 = vmatpush1.msra.mxu0 %v826
    %5402 = vmatprep.subr.mxu0 %v831
    %5403 = vmatpush1.msra.mxu0 %v830
    %5404 = vmatprep.subr.mxu0 %v835
    %5405 = vmatpush1.msra.mxu0 %v834
    %5406 = vmatprep.subr.mxu0 %v839
    %5407 = vmatpush1.msra.mxu0 %v838
    %5408 = vmatprep.subr.mxu0 %v843
    %5409 = vmatpush1.msra.mxu0 %v842
    %5410 = vmatprep.subr.mxu0 %v847
    %5411 = vmatpush1.msra.mxu0 %v846
    %5412 = vmatprep.subr.mxu0 %v851
    %5413 = vmatpush1.msra.mxu0 %v850
    %5414 = vmatprep.subr.mxu0 %v855
    %5415 = vmatpush1.msra.mxu0 %v854
    %5416 = vmatprep.mubr.f32.mxu0 %v5349
    %5417 = vmatmul.mubr.f32.gmra.mrb[0].mxu0 %v5348
    %v5418 = vpop.f32.mrb[0].mxu0
    %v5419 = vadd.f32 %v881, %v5418
    %v5420 = vpop.f32.mrb[0].mxu0
    %v5421 = vadd.f32 %v885, %v5420
    %5422 = vdwg.mxu0
    %5423 = vmatprep.subr.mxu0 %v733
    %5424 = vmatpush1.msra.mxu0 %v732
    %5425 = vmatprep.subr.mxu0 %v737
    %5426 = vmatpush1.msra.mxu0 %v736
    %5427 = vmatprep.subr.mxu0 %v741
    %5428 = vmatpush1.msra.mxu0 %v740
    %5429 = vmatprep.subr.mxu0 %v745
    %5430 = vmatpush1.msra.mxu0 %v744
    %5431 = vmatprep.subr.mxu0 %v749
    %5432 = vmatpush1.msra.mxu0 %v748
    %5433 = vmatprep.subr.mxu0 %v753
    %5434 = vmatpush1.msra.mxu0 %v752
    %5435 = vmatprep.subr.mxu0 %v757
    %5436 = vmatpush1.msra.mxu0 %v756
    %5437 = vmatprep.subr.mxu0 %v761
    %5438 = vmatpush1.msra.mxu0 %v760
    %5439 = vmatprep.subr.mxu0 %v765
    %5440 = vmatpush1.msra.mxu0 %v764
    %5441 = vmatprep.subr.mxu0 %v769
    %5442 = vmatpush1.msra.mxu0 %v768
    %5443 = vmatprep.subr.mxu0 %v773
    %5444 = vmatpush1.msra.mxu0 %v772
    %5445 = vmatprep.subr.mxu0 %v777
    %5446 = vmatpush1.msra.mxu0 %v776
    %5447 = vmatprep.subr.mxu0 %v781
    %5448 = vmatpush1.msra.mxu0 %v780
    %5449 = vmatprep.subr.mxu0 %v785
    %5450 = vmatpush1.msra.mxu0 %v784
    %5451 = vmatprep.subr.mxu0 %v789
    %5452 = vmatpush1.msra.mxu0 %v788
    %5453 = vmatprep.subr.mxu0 %v793
    %5454 = vmatpush1.msra.mxu0 %v792
    %5455 = vmatprep.subr.mxu0 %v797
    %5456 = vmatpush1.msra.mxu0 %v796
    %5457 = vmatprep.subr.mxu0 %v801
    %5458 = vmatpush1.msra.mxu0 %v800
    %5459 = vmatprep.subr.mxu0 %v805
    %5460 = vmatpush1.msra.mxu0 %v804
    %5461 = vmatprep.subr.mxu0 %v809
    %5462 = vmatpush1.msra.mxu0 %v808
    %5463 = vmatprep.subr.mxu0 %v813
    %5464 = vmatpush1.msra.mxu0 %v812
    %5465 = vmatprep.subr.mxu0 %v817
    %5466 = vmatpush1.msra.mxu0 %v816
    %5467 = vmatprep.subr.mxu0 %v821
    %5468 = vmatpush1.msra.mxu0 %v820
    %5469 = vmatprep.subr.mxu0 %v825
    %5470 = vmatpush1.msra.mxu0 %v824
    %5471 = vmatprep.subr.mxu0 %v829
    %5472 = vmatpush1.msra.mxu0 %v828
    %5473 = vmatprep.subr.mxu0 %v833
    %5474 = vmatpush1.msra.mxu0 %v832
    %5475 = vmatprep.subr.mxu0 %v837
    %5476 = vmatpush1.msra.mxu0 %v836
    %5477 = vmatprep.subr.mxu0 %v841
    %5478 = vmatpush1.msra.mxu0 %v840
    %5479 = vmatprep.subr.mxu0 %v845
    %5480 = vmatpush1.msra.mxu0 %v844
    %5481 = vmatprep.subr.mxu0 %v849
    %5482 = vmatpush1.msra.mxu0 %v848
    %5483 = vmatprep.subr.mxu0 %v853
    %5484 = vmatpush1.msra.mxu0 %v852
    %5485 = vmatprep.subr.mxu0 %v857
    %5486 = vmatpush1.msra.mxu0 %v856
    %5487 = vmatprep.mubr.f32.mxu0 %v5349
    %5488 = vmatmul.mubr.f32.gmra.mrb[0].mxu0 %v5348
    %v5489 = vpop.f32.mrb[0].mxu0
    %v5490 = vadd.f32 %v889, %v5489
    %v5491 = vpop.f32.mrb[0].mxu0
    %v5492 = vadd.f32 %v893, %v5491
    %5493 = vdwg.mxu0
    %v5494 = vxor.u32 %v5419, 2147483648
    %v5495 = vxor.u32 %v5421, 2147483648
    %v5496 = vxor.u32 %v5490, 2147483648
    %v5497 = vmul.f32 %v5494, 1.442695
    %v5498 = vpow.pop %v5497
    %v5499 = vmul.f32 %v5495, 1.442695
    %v5500 = vpow.pop %v5499
    %v5501 = vmul.f32 %v5496, 1.442695
    %v5502 = vpow.pop %v5501
    %v5503 = vadd.f32 %v5498, 1.0
    %v5504 = vadd.f32 %v5500, 1.0
    %v5505 = vadd.f32 %v5502, 1.0
    %v5506 = vrcp.pop %v5503
    %v5507 = vmul.f32 1.0, %v5506
    %v5508 = vrcp.pop %v5504
    %v5509 = vmul.f32 1.0, %v5508
    %v5510 = vrcp.pop %v5505
    %v5511 = vmul.f32 1.0, %v5510
    %v5512 = vtanh.pop %v5492
    %v5513 = vmul.f32 %v5509, %v5010
    %v5514 = vmul.f32 %v5507, %v5512
    %v5515 = vadd.f32 %v5513, %v5514
    %v5516 = vtanh.pop %v5515
    %v5517 = vmul.f32 %v5511, %v5516
    %5518 = vmatprep.subr.mxu0 %v1420
    %5519 = vmatpush1.msra.mxu0 %v1419
    %5520 = vmatprep.subr.mxu0 %v1424
    %5521 = vmatpush1.msra.mxu0 %v1423
    %5522 = vmatprep.subr.mxu0 %v1428
    %5523 = vmatpush1.msra.mxu0 %v1427
    %5524 = vmatprep.subr.mxu0 %v1432
    %5525 = vmatpush1.msra.mxu0 %v1431
    %5526 = vmatprep.subr.mxu0 %v1436
    %5527 = vmatpush1.msra.mxu0 %v1435
    %5528 = vmatprep.subr.mxu0 %v1440
    %5529 = vmatpush1.msra.mxu0 %v1439
    %5530 = vmatprep.subr.mxu0 %v1444
    %5531 = vmatpush1.msra.mxu0 %v1443
    %5532 = vmatprep.subr.mxu0 %v1448
    %5533 = vmatpush1.msra.mxu0 %v1447
    %5534 = vmatprep.subr.mxu0 %v1452
    %5535 = vmatpush1.msra.mxu0 %v1451
    %5536 = vmatprep.subr.mxu0 %v1456
    %5537 = vmatpush1.msra.mxu0 %v1455
    %5538 = vmatprep.subr.mxu0 %v1460
    %5539 = vmatpush1.msra.mxu0 %v1459
    %5540 = vmatprep.subr.mxu0 %v1464
    %5541 = vmatpush1.msra.mxu0 %v1463
    %5542 = vmatprep.subr.mxu0 %v1468
    %5543 = vmatpush1.msra.mxu0 %v1467
    %5544 = vmatprep.subr.mxu0 %v1472
    %5545 = vmatpush1.msra.mxu0 %v1471
    %5546 = vmatprep.subr.mxu0 %v1476
    %5547 = vmatpush1.msra.mxu0 %v1475
    %5548 = vmatprep.subr.mxu0 %v1480
    %5549 = vmatpush1.msra.mxu0 %v1479
    %5550 = vmatprep.subr.mxu0 %v1484
    %5551 = vmatpush1.msra.mxu0 %v1483
    %5552 = vmatprep.subr.mxu0 %v1488
    %5553 = vmatpush1.msra.mxu0 %v1487
    %5554 = vmatprep.subr.mxu0 %v1492
    %5555 = vmatpush1.msra.mxu0 %v1491
    %5556 = vmatprep.subr.mxu0 %v1496
    %5557 = vmatpush1.msra.mxu0 %v1495
    %5558 = vmatprep.subr.mxu0 %v1500
    %5559 = vmatpush1.msra.mxu0 %v1499
    %5560 = vmatprep.subr.mxu0 %v1504
    %5561 = vmatpush1.msra.mxu0 %v1503
    %5562 = vmatprep.subr.mxu0 %v1508
    %5563 = vmatpush1.msra.mxu0 %v1507
    %5564 = vmatprep.subr.mxu0 %v1512
    %5565 = vmatpush1.msra.mxu0 %v1511
    %5566 = vmatprep.subr.mxu0 %v1516
    %5567 = vmatpush1.msra.mxu0 %v1515
    %5568 = vmatprep.subr.mxu0 %v1520
    %5569 = vmatpush1.msra.mxu0 %v1519
    %5570 = vmatprep.subr.mxu0 %v1524
    %5571 = vmatpush1.msra.mxu0 %v1523
    %5572 = vmatprep.subr.mxu0 %v1528
    %5573 = vmatpush1.msra.mxu0 %v1527
    %5574 = vmatprep.subr.mxu0 %v1532
    %5575 = vmatpush1.msra.mxu0 %v1531
    %5576 = vmatprep.subr.mxu0 %v1536
    %5577 = vmatpush1.msra.mxu0 %v1535
    %5578 = vmatprep.subr.mxu0 %v1540
    %5579 = vmatpush1.msra.mxu0 %v1539
    %5580 = vmatprep.subr.mxu0 %v1544
    %5581 = vmatpush1.msra.mxu0 %v1543
    %5582 = vmatprep.mubr.f32.mxu0 %v5178
    %5583 = vmatmul.mubr.f32.gmra.mrb[0].mxu0 %v5012
    %v5584 = vpop.f32.mrb[0].mxu0
    %v5585 = vadd.f32 %v1570, %v5584
    %v5586 = vpop.f32.mrb[0].mxu0
    %v5587 = vadd.f32 %v1574, %v5586
    %5588 = vdwg.mxu0
    %5589 = vmatprep.subr.mxu0 %v1422
    %5590 = vmatpush1.msra.mxu0 %v1421
    %5591 = vmatprep.subr.mxu0 %v1426
    %5592 = vmatpush1.msra.mxu0 %v1425
    %5593 = vmatprep.subr.mxu0 %v1430
    %5594 = vmatpush1.msra.mxu0 %v1429
    %5595 = vmatprep.subr.mxu0 %v1434
    %5596 = vmatpush1.msra.mxu0 %v1433
    %5597 = vmatprep.subr.mxu0 %v1438
    %5598 = vmatpush1.msra.mxu0 %v1437
    %5599 = vmatprep.subr.mxu0 %v1442
    %5600 = vmatpush1.msra.mxu0 %v1441
    %5601 = vmatprep.subr.mxu0 %v1446
    %5602 = vmatpush1.msra.mxu0 %v1445
    %5603 = vmatprep.subr.mxu0 %v1450
    %5604 = vmatpush1.msra.mxu0 %v1449
    %5605 = vmatprep.subr.mxu0 %v1454
    %5606 = vmatpush1.msra.mxu0 %v1453
    %5607 = vmatprep.subr.mxu0 %v1458
    %5608 = vmatpush1.msra.mxu0 %v1457
    %5609 = vmatprep.subr.mxu0 %v1462
    %5610 = vmatpush1.msra.mxu0 %v1461
    %5611 = vmatprep.subr.mxu0 %v1466
    %5612 = vmatpush1.msra.mxu0 %v1465
    %5613 = vmatprep.subr.mxu0 %v1470
    %5614 = vmatpush1.msra.mxu0 %v1469
    %5615 = vmatprep.subr.mxu0 %v1474
    %5616 = vmatpush1.msra.mxu0 %v1473
    %5617 = vmatprep.subr.mxu0 %v1478
    %5618 = vmatpush1.msra.mxu0 %v1477
    %5619 = vmatprep.subr.mxu0 %v1482
    %5620 = vmatpush1.msra.mxu0 %v1481
    %5621 = vmatprep.subr.mxu0 %v1486
    %5622 = vmatpush1.msra.mxu0 %v1485
    %5623 = vmatprep.subr.mxu0 %v1490
    %5624 = vmatpush1.msra.mxu0 %v1489
    %5625 = vmatprep.subr.mxu0 %v1494
    %5626 = vmatpush1.msra.mxu0 %v1493
    %5627 = vmatprep.subr.mxu0 %v1498
    %5628 = vmatpush1.msra.mxu0 %v1497
    %5629 = vmatprep.subr.mxu0 %v1502
    %5630 = vmatpush1.msra.mxu0 %v1501
    %5631 = vmatprep.subr.mxu0 %v1506
    %5632 = vmatpush1.msra.mxu0 %v1505
    %5633 = vmatprep.subr.mxu0 %v1510
    %5634 = vmatpush1.msra.mxu0 %v1509
    %5635 = vmatprep.subr.mxu0 %v1514
    %5636 = vmatpush1.msra.mxu0 %v1513
    %5637 = vmatprep.subr.mxu0 %v1518
    %5638 = vmatpush1.msra.mxu0 %v1517
    %5639 = vmatprep.subr.mxu0 %v1522
    %5640 = vmatpush1.msra.mxu0 %v1521
    %5641 = vmatprep.subr.mxu0 %v1526
    %5642 = vmatpush1.msra.mxu0 %v1525
    %5643 = vmatprep.subr.mxu0 %v1530
    %5644 = vmatpush1.msra.mxu0 %v1529
    %5645 = vmatprep.subr.mxu0 %v1534
    %5646 = vmatpush1.msra.mxu0 %v1533
    %5647 = vmatprep.subr.mxu0 %v1538
    %5648 = vmatpush1.msra.mxu0 %v1537
    %5649 = vmatprep.subr.mxu0 %v1542
    %5650 = vmatpush1.msra.mxu0 %v1541
    %5651 = vmatprep.subr.mxu0 %v1546
    %5652 = vmatpush1.msra.mxu0 %v1545
    %5653 = vmatprep.mubr.f32.mxu0 %v5178
    %5654 = vmatmul.mubr.f32.gmra.mrb[0].mxu0 %v5012
    %v5655 = vpop.f32.mrb[0].mxu0
    %v5656 = vadd.f32 %v1578, %v5655
    %v5657 = vpop.f32.mrb[0].mxu0
    %v5658 = vadd.f32 %v1582, %v5657
    %5659 = vdwg.mxu0
    %v5660 = vxor.u32 %v5585, 2147483648
    %v5661 = vxor.u32 %v5587, 2147483648
    %v5662 = vxor.u32 %v5656, 2147483648
    %v5663 = vmul.f32 %v5660, 1.442695
    %v5664 = vpow.pop %v5663
    %v5665 = vmul.f32 %v5661, 1.442695
    %v5666 = vpow.pop %v5665
    %v5667 = vmul.f32 %v5662, 1.442695
    %v5668 = vpow.pop %v5667
    %v5669 = vadd.f32 %v5664, 1.0
    %v5670 = vadd.f32 %v5666, 1.0
    %v5671 = vadd.f32 %v5668, 1.0
    %v5672 = vrcp.pop %v5669
    %v5673 = vmul.f32 1.0, %v5672
    %v5674 = vrcp.pop %v5670
    %v5675 = vmul.f32 1.0, %v5674
    %v5676 = vrcp.pop %v5671
    %v5677 = vmul.f32 1.0, %v5676
    %v5678 = vtanh.pop %v5658
    %v5679 = vmul.f32 %v5675, %v5176
    %v5680 = vmul.f32 %v5673, %v5678
    %v5681 = vadd.f32 %v5679, %v5680
    %v5682 = vtanh.pop %v5681
    %v5683 = vmul.f32 %v5677, %v5682
    %5684 = vmatprep.subr.mxu0 %v2275
    %5685 = vmatpush1.msra.mxu0 %v2274
    %5686 = vmatprep.subr.mxu0 %v2279
    %5687 = vmatpush1.msra.mxu0 %v2278
    %5688 = vmatprep.subr.mxu0 %v2283
    %5689 = vmatpush1.msra.mxu0 %v2282
    %5690 = vmatprep.subr.mxu0 %v2287
    %5691 = vmatpush1.msra.mxu0 %v2286
    %5692 = vmatprep.subr.mxu0 %v2291
    %5693 = vmatpush1.msra.mxu0 %v2290
    %5694 = vmatprep.subr.mxu0 %v2295
    %5695 = vmatpush1.msra.mxu0 %v2294
    %5696 = vmatprep.subr.mxu0 %v2299
    %5697 = vmatpush1.msra.mxu0 %v2298
    %5698 = vmatprep.subr.mxu0 %v2303
    %5699 = vmatpush1.msra.mxu0 %v2302
    %5700 = vmatprep.subr.mxu0 %v2307
    %5701 = vmatpush1.msra.mxu0 %v2306
    %5702 = vmatprep.subr.mxu0 %v2311
    %5703 = vmatpush1.msra.mxu0 %v2310
    %5704 = vmatprep.subr.mxu0 %v2315
    %5705 = vmatpush1.msra.mxu0 %v2314
    %5706 = vmatprep.subr.mxu0 %v2319
    %5707 = vmatpush1.msra.mxu0 %v2318
    %5708 = vmatprep.subr.mxu0 %v2323
    %5709 = vmatpush1.msra.mxu0 %v2322
    %5710 = vmatprep.subr.mxu0 %v2327
    %5711 = vmatpush1.msra.mxu0 %v2326
    %5712 = vmatprep.subr.mxu0 %v2331
    %5713 = vmatpush1.msra.mxu0 %v2330
    %5714 = vmatprep.subr.mxu0 %v2335
    %5715 = vmatpush1.msra.mxu0 %v2334
    %5716 = vmatprep.subr.mxu0 %v2339
    %5717 = vmatpush1.msra.mxu0 %v2338
    %5718 = vmatprep.subr.mxu0 %v2343
    %5719 = vmatpush1.msra.mxu0 %v2342
    %5720 = vmatprep.subr.mxu0 %v2347
    %5721 = vmatpush1.msra.mxu0 %v2346
    %5722 = vmatprep.subr.mxu0 %v2351
    %5723 = vmatpush1.msra.mxu0 %v2350
    %5724 = vmatprep.subr.mxu0 %v2355
    %5725 = vmatpush1.msra.mxu0 %v2354
    %5726 = vmatprep.subr.mxu0 %v2359
    %5727 = vmatpush1.msra.mxu0 %v2358
    %5728 = vmatprep.subr.mxu0 %v2363
    %5729 = vmatpush1.msra.mxu0 %v2362
    %5730 = vmatprep.subr.mxu0 %v2367
    %5731 = vmatpush1.msra.mxu0 %v2366
    %5732 = vmatprep.subr.mxu0 %v2371
    %5733 = vmatpush1.msra.mxu0 %v2370
    %5734 = vmatprep.subr.mxu0 %v2375
    %5735 = vmatpush1.msra.mxu0 %v2374
    %5736 = vmatprep.subr.mxu0 %v2379
    %5737 = vmatpush1.msra.mxu0 %v2378
    %5738 = vmatprep.subr.mxu0 %v2383
    %5739 = vmatpush1.msra.mxu0 %v2382
    %5740 = vmatprep.subr.mxu0 %v2387
    %5741 = vmatpush1.msra.mxu0 %v2386
    %5742 = vmatprep.subr.mxu0 %v2391
    %5743 = vmatpush1.msra.mxu0 %v2390
    %5744 = vmatprep.subr.mxu0 %v2395
    %5745 = vmatpush1.msra.mxu0 %v2394
    %5746 = vmatprep.subr.mxu0 %v2399
    %5747 = vmatpush1.msra.mxu0 %v2398
    %5748 = vmatprep.mubr.f32.mxu0 %v5344
    %5749 = vmatmul.mubr.f32.gmra.mrb[0].mxu0 %v5178
    %v5750 = vpop.f32.mrb[0].mxu0
    %v5751 = vadd.f32 %v2425, %v5750
    %v5752 = vpop.f32.mrb[0].mxu0
    %v5753 = vadd.f32 %v2429, %v5752
    %5754 = vdwg.mxu0
    %5755 = vmatprep.subr.mxu0 %v2277
    %5756 = vmatpush1.msra.mxu0 %v2276
    %5757 = vmatprep.subr.mxu0 %v2281
    %5758 = vmatpush1.msra.mxu0 %v2280
    %5759 = vmatprep.subr.mxu0 %v2285
    %5760 = vmatpush1.msra.mxu0 %v2284
    %5761 = vmatprep.subr.mxu0 %v2289
    %5762 = vmatpush1.msra.mxu0 %v2288
    %5763 = vmatprep.subr.mxu0 %v2293
    %5764 = vmatpush1.msra.mxu0 %v2292
    %5765 = vmatprep.subr.mxu0 %v2297
    %5766 = vmatpush1.msra.mxu0 %v2296
    %5767 = vmatprep.subr.mxu0 %v2301
    %5768 = vmatpush1.msra.mxu0 %v2300
    %5769 = vmatprep.subr.mxu0 %v2305
    %5770 = vmatpush1.msra.mxu0 %v2304
    %5771 = vmatprep.subr.mxu0 %v2309
    %5772 = vmatpush1.msra.mxu0 %v2308
    %5773 = vmatprep.subr.mxu0 %v2313
    %5774 = vmatpush1.msra.mxu0 %v2312
    %5775 = vmatprep.subr.mxu0 %v2317
    %5776 = vmatpush1.msra.mxu0 %v2316
    %5777 = vmatprep.subr.mxu0 %v2321
    %5778 = vmatpush1.msra.mxu0 %v2320
    %5779 = vmatprep.subr.mxu0 %v2325
    %5780 = vmatpush1.msra.mxu0 %v2324
    %5781 = vmatprep.subr.mxu0 %v2329
    %5782 = vmatpush1.msra.mxu0 %v2328
    %5783 = vmatprep.subr.mxu0 %v2333
    %5784 = vmatpush1.msra.mxu0 %v2332
    %5785 = vmatprep.subr.mxu0 %v2337
    %5786 = vmatpush1.msra.mxu0 %v2336
    %5787 = vmatprep.subr.mxu0 %v2341
    %5788 = vmatpush1.msra.mxu0 %v2340
    %5789 = vmatprep.subr.mxu0 %v2345
    %5790 = vmatpush1.msra.mxu0 %v2344
    %5791 = vmatprep.subr.mxu0 %v2349
    %5792 = vmatpush1.msra.mxu0 %v2348
    %5793 = vmatprep.subr.mxu0 %v2353
    %5794 = vmatpush1.msra.mxu0 %v2352
    %5795 = vmatprep.subr.mxu0 %v2357
    %5796 = vmatpush1.msra.mxu0 %v2356
    %5797 = vmatprep.subr.mxu0 %v2361
    %5798 = vmatpush1.msra.mxu0 %v2360
    %5799 = vmatprep.subr.mxu0 %v2365
    %5800 = vmatpush1.msra.mxu0 %v2364
    %5801 = vmatprep.subr.mxu0 %v2369
    %5802 = vmatpush1.msra.mxu0 %v2368
    %5803 = vmatprep.subr.mxu0 %v2373
    %5804 = vmatpush1.msra.mxu0 %v2372
    %5805 = vmatprep.subr.mxu0 %v2377
    %5806 = vmatpush1.msra.mxu0 %v2376
    %5807 = vmatprep.subr.mxu0 %v2381
    %5808 = vmatpush1.msra.mxu0 %v2380
    %5809 = vmatprep.subr.mxu0 %v2385
    %5810 = vmatpush1.msra.mxu0 %v2384
    %5811 = vmatprep.subr.mxu0 %v2389
    %5812 = vmatpush1.msra.mxu0 %v2388
    %5813 = vmatprep.subr.mxu0 %v2393
    %5814 = vmatpush1.msra.mxu0 %v2392
    %5815 = vmatprep.subr.mxu0 %v2397
    %5816 = vmatpush1.msra.mxu0 %v2396
    %5817 = vmatprep.subr.mxu0 %v2401
    %5818 = vmatpush1.msra.mxu0 %v2400
    %5819 = vmatprep.mubr.f32.mxu0 %v5344
    %5820 = vmatmul.mubr.f32.gmra.mrb[0].mxu0 %v5178
    %v5821 = vpop.f32.mrb[0].mxu0
    %v5822 = vadd.f32 %v2433, %v5821
    %v5823 = vpop.f32.mrb[0].mxu0
    %v5824 = vadd.f32 %v2437, %v5823
    %5825 = vdwg.mxu0
    %v5826 = vxor.u32 %v5751, 2147483648
    %v5827 = vxor.u32 %v5753, 2147483648
    %v5828 = vxor.u32 %v5822, 2147483648
    %v5829 = vmul.f32 %v5826, 1.442695
    %v5830 = vpow.pop %v5829
    %v5831 = vmul.f32 %v5827, 1.442695
    %v5832 = vpow.pop %v5831
    %v5833 = vmul.f32 %v5828, 1.442695
    %v5834 = vpow.pop %v5833
    %v5835 = vadd.f32 %v5830, 1.0
    %v5836 = vadd.f32 %v5832, 1.0
    %v5837 = vadd.f32 %v5834, 1.0
    %v5838 = vrcp.pop %v5835
    %v5839 = vmul.f32 1.0, %v5838
    %v5840 = vrcp.pop %v5836
    %v5841 = vmul.f32 1.0, %v5840
    %v5842 = vrcp.pop %v5837
    %v5843 = vmul.f32 1.0, %v5842
    %v5844 = vtanh.pop %v5824
    %v5845 = vmul.f32 %v5841, %v5342
    %v5846 = vmul.f32 %v5839, %v5844
    %v5847 = vadd.f32 %v5845, %v5846
    %v5848 = vtanh.pop %v5847
    %v5849 = vmul.f32 %v5843, %v5848
    %5850 = vmatprep.subr.mxu0 %v1420
    %5851 = vmatpush1.msra.mxu0 %v1419
    %5852 = vmatprep.subr.mxu0 %v1424
    %5853 = vmatpush1.msra.mxu0 %v1423
    %5854 = vmatprep.subr.mxu0 %v1428
    %5855 = vmatpush1.msra.mxu0 %v1427
    %5856 = vmatprep.subr.mxu0 %v1432
    %5857 = vmatpush1.msra.mxu0 %v1431
    %5858 = vmatprep.subr.mxu0 %v1436
    %5859 = vmatpush1.msra.mxu0 %v1435
    %5860 = vmatprep.subr.mxu0 %v1440
    %5861 = vmatpush1.msra.mxu0 %v1439
    %5862 = vmatprep.subr.mxu0 %v1444
    %5863 = vmatpush1.msra.mxu0 %v1443
    %5864 = vmatprep.subr.mxu0 %v1448
    %5865 = vmatpush1.msra.mxu0 %v1447
    %5866 = vmatprep.subr.mxu0 %v1452
    %5867 = vmatpush1.msra.mxu0 %v1451
    %5868 = vmatprep.subr.mxu0 %v1456
    %5869 = vmatpush1.msra.mxu0 %v1455
    %5870 = vmatprep.subr.mxu0 %v1460
    %5871 = vmatpush1.msra.mxu0 %v1459
    %5872 = vmatprep.subr.mxu0 %v1464
    %5873 = vmatpush1.msra.mxu0 %v1463
    %5874 = vmatprep.subr.mxu0 %v1468
    %5875 = vmatpush1.msra.mxu0 %v1467
    %5876 = vmatprep.subr.mxu0 %v1472
    %5877 = vmatpush1.msra.mxu0 %v1471
    %5878 = vmatprep.subr.mxu0 %v1476
    %5879 = vmatpush1.msra.mxu0 %v1475
    %5880 = vmatprep.subr.mxu0 %v1480
    %5881 = vmatpush1.msra.mxu0 %v1479
    %5882 = vmatprep.subr.mxu0 %v1484
    %5883 = vmatpush1.msra.mxu0 %v1483
    %5884 = vmatprep.subr.mxu0 %v1488
    %5885 = vmatpush1.msra.mxu0 %v1487
    %5886 = vmatprep.subr.mxu0 %v1492
    %5887 = vmatpush1.msra.mxu0 %v1491
    %5888 = vmatprep.subr.mxu0 %v1496
    %5889 = vmatpush1.msra.mxu0 %v1495
    %5890 = vmatprep.subr.mxu0 %v1500
    %5891 = vmatpush1.msra.mxu0 %v1499
    %5892 = vmatprep.subr.mxu0 %v1504
    %5893 = vmatpush1.msra.mxu0 %v1503
    %5894 = vmatprep.subr.mxu0 %v1508
    %5895 = vmatpush1.msra.mxu0 %v1507
    %5896 = vmatprep.subr.mxu0 %v1512
    %5897 = vmatpush1.msra.mxu0 %v1511
    %5898 = vmatprep.subr.mxu0 %v1516
    %5899 = vmatpush1.msra.mxu0 %v1515
    %5900 = vmatprep.subr.mxu0 %v1520
    %5901 = vmatpush1.msra.mxu0 %v1519
    %5902 = vmatprep.subr.mxu0 %v1524
    %5903 = vmatpush1.msra.mxu0 %v1523
    %5904 = vmatprep.subr.mxu0 %v1528
    %5905 = vmatpush1.msra.mxu0 %v1527
    %5906 = vmatprep.subr.mxu0 %v1532
    %5907 = vmatpush1.msra.mxu0 %v1531
    %5908 = vmatprep.subr.mxu0 %v1536
    %5909 = vmatpush1.msra.mxu0 %v1535
    %5910 = vmatprep.subr.mxu0 %v1540
    %5911 = vmatpush1.msra.mxu0 %v1539
    %5912 = vmatprep.subr.mxu0 %v1544
    %5913 = vmatpush1.msra.mxu0 %v1543
    %5914 = vmatprep.mubr.f32.mxu0 %v5683
    %5915 = vmatmul.mubr.f32.gmra.mrb[0].mxu0 %v5517
    %v5916 = vpop.f32.mrb[0].mxu0
    %v5917 = vadd.f32 %v1570, %v5916
    %v5918 = vpop.f32.mrb[0].mxu0
    %v5919 = vadd.f32 %v1574, %v5918
    %5920 = vdwg.mxu0
    %5921 = vmatprep.subr.mxu0 %v1422
    %5922 = vmatpush1.msra.mxu0 %v1421
    %5923 = vmatprep.subr.mxu0 %v1426
    %5924 = vmatpush1.msra.mxu0 %v1425
    %5925 = vmatprep.subr.mxu0 %v1430
    %5926 = vmatpush1.msra.mxu0 %v1429
    %5927 = vmatprep.subr.mxu0 %v1434
    %5928 = vmatpush1.msra.mxu0 %v1433
    %5929 = vmatprep.subr.mxu0 %v1438
    %5930 = vmatpush1.msra.mxu0 %v1437
    %5931 = vmatprep.subr.mxu0 %v1442
    %5932 = vmatpush1.msra.mxu0 %v1441
    %5933 = vmatprep.subr.mxu0 %v1446
    %5934 = vmatpush1.msra.mxu0 %v1445
    %5935 = vmatprep.subr.mxu0 %v1450
    %5936 = vmatpush1.msra.mxu0 %v1449
    %5937 = vmatprep.subr.mxu0 %v1454
    %5938 = vmatpush1.msra.mxu0 %v1453
    %5939 = vmatprep.subr.mxu0 %v1458
    %5940 = vmatpush1.msra.mxu0 %v1457
    %5941 = vmatprep.subr.mxu0 %v1462
    %5942 = vmatpush1.msra.mxu0 %v1461
    %5943 = vmatprep.subr.mxu0 %v1466
    %5944 = vmatpush1.msra.mxu0 %v1465
    %5945 = vmatprep.subr.mxu0 %v1470
    %5946 = vmatpush1.msra.mxu0 %v1469
    %5947 = vmatprep.subr.mxu0 %v1474
    %5948 = vmatpush1.msra.mxu0 %v1473
    %5949 = vmatprep.subr.mxu0 %v1478
    %5950 = vmatpush1.msra.mxu0 %v1477
    %5951 = vmatprep.subr.mxu0 %v1482
    %5952 = vmatpush1.msra.mxu0 %v1481
    %5953 = vmatprep.subr.mxu0 %v1486
    %5954 = vmatpush1.msra.mxu0 %v1485
    %5955 = vmatprep.subr.mxu0 %v1490
    %5956 = vmatpush1.msra.mxu0 %v1489
    %5957 = vmatprep.subr.mxu0 %v1494
    %5958 = vmatpush1.msra.mxu0 %v1493
    %5959 = vmatprep.subr.mxu0 %v1498
    %5960 = vmatpush1.msra.mxu0 %v1497
    %5961 = vmatprep.subr.mxu0 %v1502
    %5962 = vmatpush1.msra.mxu0 %v1501
    %5963 = vmatprep.subr.mxu0 %v1506
    %5964 = vmatpush1.msra.mxu0 %v1505
    %5965 = vmatprep.subr.mxu0 %v1510
    %5966 = vmatpush1.msra.mxu0 %v1509
    %5967 = vmatprep.subr.mxu0 %v1514
    %5968 = vmatpush1.msra.mxu0 %v1513
    %5969 = vmatprep.subr.mxu0 %v1518
    %5970 = vmatpush1.msra.mxu0 %v1517
    %5971 = vmatprep.subr.mxu0 %v1522
    %5972 = vmatpush1.msra.mxu0 %v1521
    %5973 = vmatprep.subr.mxu0 %v1526
    %5974 = vmatpush1.msra.mxu0 %v1525
    %5975 = vmatprep.subr.mxu0 %v1530
    %5976 = vmatpush1.msra.mxu0 %v1529
    %5977 = vmatprep.subr.mxu0 %v1534
    %5978 = vmatpush1.msra.mxu0 %v1533
    %5979 = vmatprep.subr.mxu0 %v1538
    %5980 = vmatpush1.msra.mxu0 %v1537
    %5981 = vmatprep.subr.mxu0 %v1542
    %5982 = vmatpush1.msra.mxu0 %v1541
    %5983 = vmatprep.subr.mxu0 %v1546
    %5984 = vmatpush1.msra.mxu0 %v1545
    %5985 = vmatprep.mubr.f32.mxu0 %v5683
    %5986 = vmatmul.mubr.f32.gmra.mrb[0].mxu0 %v5517
    %v5987 = vpop.f32.mrb[0].mxu0
    %v5988 = vadd.f32 %v1578, %v5987
    %v5989 = vpop.f32.mrb[0].mxu0
    %v5990 = vadd.f32 %v1582, %v5989
    %5991 = vdwg.mxu0
    %v5992 = vxor.u32 %v5917, 2147483648
    %v5993 = vxor.u32 %v5919, 2147483648
    %v5994 = vxor.u32 %v5988, 2147483648
    %v5995 = vmul.f32 %v5992, 1.442695
    %v5996 = vpow.pop %v5995
    %v5997 = vmul.f32 %v5993, 1.442695
    %v5998 = vpow.pop %v5997
    %v5999 = vmul.f32 %v5994, 1.442695
    %v6000 = vpow.pop %v5999
    %v6001 = vadd.f32 %v5996, 1.0
    %v6002 = vadd.f32 %v5998, 1.0
    %v6003 = vadd.f32 %v6000, 1.0
    %v6004 = vrcp.pop %v6001
    %v6005 = vmul.f32 1.0, %v6004
    %v6006 = vrcp.pop %v6002
    %v6007 = vmul.f32 1.0, %v6006
    %v6008 = vrcp.pop %v6003
    %v6009 = vmul.f32 1.0, %v6008
    %v6010 = vtanh.pop %v5990
    %v6011 = vmul.f32 %v6007, %v5681
    %v6012 = vmul.f32 %v6005, %v6010
    %v6013 = vadd.f32 %v6011, %v6012
    %v6014 = vtanh.pop %v6013
    %v6015 = vmul.f32 %v6009, %v6014
    %6016 = vmatprep.subr.mxu0 %v2275
    %6017 = vmatpush1.msra.mxu0 %v2274
    %6018 = vmatprep.subr.mxu0 %v2279
    %6019 = vmatpush1.msra.mxu0 %v2278
    %6020 = vmatprep.subr.mxu0 %v2283
    %6021 = vmatpush1.msra.mxu0 %v2282
    %6022 = vmatprep.subr.mxu0 %v2287
    %6023 = vmatpush1.msra.mxu0 %v2286
    %6024 = vmatprep.subr.mxu0 %v2291
    %6025 = vmatpush1.msra.mxu0 %v2290
    %6026 = vmatprep.subr.mxu0 %v2295
    %6027 = vmatpush1.msra.mxu0 %v2294
    %6028 = vmatprep.subr.mxu0 %v2299
    %6029 = vmatpush1.msra.mxu0 %v2298
    %6030 = vmatprep.subr.mxu0 %v2303
    %6031 = vmatpush1.msra.mxu0 %v2302
    %6032 = vmatprep.subr.mxu0 %v2307
    %6033 = vmatpush1.msra.mxu0 %v2306
    %6034 = vmatprep.subr.mxu0 %v2311
    %6035 = vmatpush1.msra.mxu0 %v2310
    %6036 = vmatprep.subr.mxu0 %v2315
    %6037 = vmatpush1.msra.mxu0 %v2314
    %6038 = vmatprep.subr.mxu0 %v2319
    %6039 = vmatpush1.msra.mxu0 %v2318
    %6040 = vmatprep.subr.mxu0 %v2323
    %6041 = vmatpush1.msra.mxu0 %v2322
    %6042 = vmatprep.subr.mxu0 %v2327
    %6043 = vmatpush1.msra.mxu0 %v2326
    %6044 = vmatprep.subr.mxu0 %v2331
    %6045 = vmatpush1.msra.mxu0 %v2330
    %6046 = vmatprep.subr.mxu0 %v2335
    %6047 = vmatpush1.msra.mxu0 %v2334
    %6048 = vmatprep.subr.mxu0 %v2339
    %6049 = vmatpush1.msra.mxu0 %v2338
    %6050 = vmatprep.subr.mxu0 %v2343
    %6051 = vmatpush1.msra.mxu0 %v2342
    %6052 = vmatprep.subr.mxu0 %v2347
    %6053 = vmatpush1.msra.mxu0 %v2346
    %6054 = vmatprep.subr.mxu0 %v2351
    %6055 = vmatpush1.msra.mxu0 %v2350
    %6056 = vmatprep.subr.mxu0 %v2355
    %6057 = vmatpush1.msra.mxu0 %v2354
    %6058 = vmatprep.subr.mxu0 %v2359
    %6059 = vmatpush1.msra.mxu0 %v2358
    %6060 = vmatprep.subr.mxu0 %v2363
    %6061 = vmatpush1.msra.mxu0 %v2362
    %6062 = vmatprep.subr.mxu0 %v2367
    %6063 = vmatpush1.msra.mxu0 %v2366
    %6064 = vmatprep.subr.mxu0 %v2371
    %6065 = vmatpush1.msra.mxu0 %v2370
    %6066 = vmatprep.subr.mxu0 %v2375
    %6067 = vmatpush1.msra.mxu0 %v2374
    %6068 = vmatprep.subr.mxu0 %v2379
    %6069 = vmatpush1.msra.mxu0 %v2378
    %6070 = vmatprep.subr.mxu0 %v2383
    %6071 = vmatpush1.msra.mxu0 %v2382
    %6072 = vmatprep.subr.mxu0 %v2387
    %6073 = vmatpush1.msra.mxu0 %v2386
    %6074 = vmatprep.subr.mxu0 %v2391
    %6075 = vmatpush1.msra.mxu0 %v2390
    %6076 = vmatprep.subr.mxu0 %v2395
    %6077 = vmatpush1.msra.mxu0 %v2394
    %6078 = vmatprep.subr.mxu0 %v2399
    %6079 = vmatpush1.msra.mxu0 %v2398
    %6080 = vmatprep.mubr.f32.mxu0 %v5849
    %6081 = vmatmul.mubr.f32.gmra.mrb[0].mxu0 %v5683
    %v6082 = vpop.f32.mrb[0].mxu0
    %v6083 = vadd.f32 %v2425, %v6082
    %v6084 = vpop.f32.mrb[0].mxu0
    %v6085 = vadd.f32 %v2429, %v6084
    %6086 = vdwg.mxu0
    %6087 = vmatprep.subr.mxu0 %v2277
    %6088 = vmatpush1.msra.mxu0 %v2276
    %6089 = vmatprep.subr.mxu0 %v2281
    %6090 = vmatpush1.msra.mxu0 %v2280
    %6091 = vmatprep.subr.mxu0 %v2285
    %6092 = vmatpush1.msra.mxu0 %v2284
    %6093 = vmatprep.subr.mxu0 %v2289
    %6094 = vmatpush1.msra.mxu0 %v2288
    %6095 = vmatprep.subr.mxu0 %v2293
    %6096 = vmatpush1.msra.mxu0 %v2292
    %6097 = vmatprep.subr.mxu0 %v2297
    %6098 = vmatpush1.msra.mxu0 %v2296
    %6099 = vmatprep.subr.mxu0 %v2301
    %6100 = vmatpush1.msra.mxu0 %v2300
    %6101 = vmatprep.subr.mxu0 %v2305
    %6102 = vmatpush1.msra.mxu0 %v2304
    %6103 = vmatprep.subr.mxu0 %v2309
    %6104 = vmatpush1.msra.mxu0 %v2308
    %6105 = vmatprep.subr.mxu0 %v2313
    %6106 = vmatpush1.msra.mxu0 %v2312
    %6107 = vmatprep.subr.mxu0 %v2317
    %6108 = vmatpush1.msra.mxu0 %v2316
    %6109 = vmatprep.subr.mxu0 %v2321
    %6110 = vmatpush1.msra.mxu0 %v2320
    %6111 = vmatprep.subr.mxu0 %v2325
    %6112 = vmatpush1.msra.mxu0 %v2324
    %6113 = vmatprep.subr.mxu0 %v2329
    %6114 = vmatpush1.msra.mxu0 %v2328
    %6115 = vmatprep.subr.mxu0 %v2333
    %6116 = vmatpush1.msra.mxu0 %v2332
    %6117 = vmatprep.subr.mxu0 %v2337
    %6118 = vmatpush1.msra.mxu0 %v2336
    %6119 = vmatprep.subr.mxu0 %v2341
    %6120 = vmatpush1.msra.mxu0 %v2340
    %6121 = vmatprep.subr.mxu0 %v2345
    %6122 = vmatpush1.msra.mxu0 %v2344
    %6123 = vmatprep.subr.mxu0 %v2349
    %6124 = vmatpush1.msra.mxu0 %v2348
    %6125 = vmatprep.subr.mxu0 %v2353
    %6126 = vmatpush1.msra.mxu0 %v2352
    %6127 = vmatprep.subr.mxu0 %v2357
    %6128 = vmatpush1.msra.mxu0 %v2356
    %6129 = vmatprep.subr.mxu0 %v2361
    %6130 = vmatpush1.msra.mxu0 %v2360
    %6131 = vmatprep.subr.mxu0 %v2365
    %6132 = vmatpush1.msra.mxu0 %v2364
    %6133 = vmatprep.subr.mxu0 %v2369
    %6134 = vmatpush1.msra.mxu0 %v2368
    %6135 = vmatprep.subr.mxu0 %v2373
    %6136 = vmatpush1.msra.mxu0 %v2372
    %6137 = vmatprep.subr.mxu0 %v2377
    %6138 = vmatpush1.msra.mxu0 %v2376
    %6139 = vmatprep.subr.mxu0 %v2381
    %6140 = vmatpush1.msra.mxu0 %v2380
    %6141 = vmatprep.subr.mxu0 %v2385
    %6142 = vmatpush1.msra.mxu0 %v2384
    %6143 = vmatprep.subr.mxu0 %v2389
    %6144 = vmatpush1.msra.mxu0 %v2388
    %6145 = vmatprep.subr.mxu0 %v2393
    %6146 = vmatpush1.msra.mxu0 %v2392
    %6147 = vmatprep.subr.mxu0 %v2397
    %6148 = vmatpush1.msra.mxu0 %v2396
    %6149 = vmatprep.subr.mxu0 %v2401
    %6150 = vmatpush1.msra.mxu0 %v2400
    %6151 = vmatprep.mubr.f32.mxu0 %v5849
    %6152 = vmatmul.mubr.f32.gmra.mrb[0].mxu0 %v5683
    %v6153 = vpop.f32.mrb[0].mxu0
    %v6154 = vadd.f32 %v2433, %v6153
    %v6155 = vpop.f32.mrb[0].mxu0
    %v6156 = vadd.f32 %v2437, %v6155
    %6157 = vdwg.mxu0
    %v6158 = vxor.u32 %v6083, 2147483648
    %v6159 = vxor.u32 %v6085, 2147483648
    %v6160 = vxor.u32 %v6154, 2147483648
    %v6161 = vmul.f32 %v6158, 1.442695
    %v6162 = vpow.pop %v6161
    %v6163 = vmul.f32 %v6159, 1.442695
    %v6164 = vpow.pop %v6163
    %v6165 = vmul.f32 %v6160, 1.442695
    %v6166 = vpow.pop %v6165
    %v6167 = vadd.f32 %v6162, 1.0
    %v6168 = vadd.f32 %v6164, 1.0
    %v6169 = vadd.f32 %v6166, 1.0
    %v6170 = vrcp.pop %v6167
    %v6171 = vmul.f32 1.0, %v6170
    %v6172 = vrcp.pop %v6168
    %v6173 = vmul.f32 1.0, %v6172
    %v6174 = vrcp.pop %v6169
    %v6175 = vmul.f32 1.0, %v6174
    %v6176 = vtanh.pop %v6156
    %v6177 = vmul.f32 %v6173, %v5847
    %v6178 = vmul.f32 %v6171, %v6176
    %v6179 = vadd.f32 %v6177, %v6178
    %v6180 = vtanh.pop %v6179
    %v6181 = vmul.f32 %v6175, %v6180
    %6182 = vmatprep.subr.mxu0 %v2275
    %6183 = vmatpush1.msra.mxu0 %v2274
    %6184 = vmatprep.subr.mxu0 %v2279
    %6185 = vmatpush1.msra.mxu0 %v2278
    %6186 = vmatprep.subr.mxu0 %v2283
    %6187 = vmatpush1.msra.mxu0 %v2282
    %6188 = vmatprep.subr.mxu0 %v2287
    %6189 = vmatpush1.msra.mxu0 %v2286
    %6190 = vmatprep.subr.mxu0 %v2291
    %6191 = vmatpush1.msra.mxu0 %v2290
    %6192 = vmatprep.subr.mxu0 %v2295
    %6193 = vmatpush1.msra.mxu0 %v2294
    %6194 = vmatprep.subr.mxu0 %v2299
    %6195 = vmatpush1.msra.mxu0 %v2298
    %6196 = vmatprep.subr.mxu0 %v2303
    %6197 = vmatpush1.msra.mxu0 %v2302
    %6198 = vmatprep.subr.mxu0 %v2307
    %6199 = vmatpush1.msra.mxu0 %v2306
    %6200 = vmatprep.subr.mxu0 %v2311
    %6201 = vmatpush1.msra.mxu0 %v2310
    %6202 = vmatprep.subr.mxu0 %v2315
    %6203 = vmatpush1.msra.mxu0 %v2314
    %6204 = vmatprep.subr.mxu0 %v2319
    %6205 = vmatpush1.msra.mxu0 %v2318
    %6206 = vmatprep.subr.mxu0 %v2323
    %6207 = vmatpush1.msra.mxu0 %v2322
    %6208 = vmatprep.subr.mxu0 %v2327
    %6209 = vmatpush1.msra.mxu0 %v2326
    %6210 = vmatprep.subr.mxu0 %v2331
    %6211 = vmatpush1.msra.mxu0 %v2330
    %6212 = vmatprep.subr.mxu0 %v2335
    %6213 = vmatpush1.msra.mxu0 %v2334
    %6214 = vmatprep.subr.mxu0 %v2339
    %6215 = vmatpush1.msra.mxu0 %v2338
    %6216 = vmatprep.subr.mxu0 %v2343
    %6217 = vmatpush1.msra.mxu0 %v2342
    %6218 = vmatprep.subr.mxu0 %v2347
    %6219 = vmatpush1.msra.mxu0 %v2346
    %6220 = vmatprep.subr.mxu0 %v2351
    %6221 = vmatpush1.msra.mxu0 %v2350
    %6222 = vmatprep.subr.mxu0 %v2355
    %6223 = vmatpush1.msra.mxu0 %v2354
    %6224 = vmatprep.subr.mxu0 %v2359
    %6225 = vmatpush1.msra.mxu0 %v2358
    %6226 = vmatprep.subr.mxu0 %v2363
    %6227 = vmatpush1.msra.mxu0 %v2362
    %6228 = vmatprep.subr.mxu0 %v2367
    %6229 = vmatpush1.msra.mxu0 %v2366
    %6230 = vmatprep.subr.mxu0 %v2371
    %6231 = vmatpush1.msra.mxu0 %v2370
    %6232 = vmatprep.subr.mxu0 %v2375
    %6233 = vmatpush1.msra.mxu0 %v2374
    %6234 = vmatprep.subr.mxu0 %v2379
    %6235 = vmatpush1.msra.mxu0 %v2378
    %6236 = vmatprep.subr.mxu0 %v2383
    %6237 = vmatpush1.msra.mxu0 %v2382
    %6238 = vmatprep.subr.mxu0 %v2387
    %6239 = vmatpush1.msra.mxu0 %v2386
    %6240 = vmatprep.subr.mxu0 %v2391
    %6241 = vmatpush1.msra.mxu0 %v2390
    %6242 = vmatprep.subr.mxu0 %v2395
    %6243 = vmatpush1.msra.mxu0 %v2394
    %6244 = vmatprep.subr.mxu0 %v2399
    %6245 = vmatpush1.msra.mxu0 %v2398
    %6246 = vmatprep.mubr.f32.mxu0 %v6181
    %6247 = vmatmul.mubr.f32.gmra.mrb[0].mxu0 %v6015
    %v6248 = vpop.f32.mrb[0].mxu0
    %v6249 = vadd.f32 %v2425, %v6248
    %v6250 = vpop.f32.mrb[0].mxu0
    %v6251 = vadd.f32 %v2429, %v6250
    %6252 = vdwg.mxu0
    %6253 = vmatprep.subr.mxu0 %v2277
    %6254 = vmatpush1.msra.mxu0 %v2276
    %6255 = vmatprep.subr.mxu0 %v2281
    %6256 = vmatpush1.msra.mxu0 %v2280
    %6257 = vmatprep.subr.mxu0 %v2285
    %6258 = vmatpush1.msra.mxu0 %v2284
    %6259 = vmatprep.subr.mxu0 %v2289
    %6260 = vmatpush1.msra.mxu0 %v2288
    %6261 = vmatprep.subr.mxu0 %v2293
    %6262 = vmatpush1.msra.mxu0 %v2292
    %6263 = vmatprep.subr.mxu0 %v2297
    %6264 = vmatpush1.msra.mxu0 %v2296
    %6265 = vmatprep.subr.mxu0 %v2301
    %6266 = vmatpush1.msra.mxu0 %v2300
    %6267 = vmatprep.subr.mxu0 %v2305
    %6268 = vmatpush1.msra.mxu0 %v2304
    %6269 = vmatprep.subr.mxu0 %v2309
    %6270 = vmatpush1.msra.mxu0 %v2308
    %6271 = vmatprep.subr.mxu0 %v2313
    %6272 = vmatpush1.msra.mxu0 %v2312
    %6273 = vmatprep.subr.mxu0 %v2317
    %6274 = vmatpush1.msra.mxu0 %v2316
    %6275 = vmatprep.subr.mxu0 %v2321
    %6276 = vmatpush1.msra.mxu0 %v2320
    %6277 = vmatprep.subr.mxu0 %v2325
    %6278 = vmatpush1.msra.mxu0 %v2324
    %6279 = vmatprep.subr.mxu0 %v2329
    %6280 = vmatpush1.msra.mxu0 %v2328
    %6281 = vmatprep.subr.mxu0 %v2333
    %6282 = vmatpush1.msra.mxu0 %v2332
    %6283 = vmatprep.subr.mxu0 %v2337
    %6284 = vmatpush1.msra.mxu0 %v2336
    %6285 = vmatprep.subr.mxu0 %v2341
    %6286 = vmatpush1.msra.mxu0 %v2340
    %6287 = vmatprep.subr.mxu0 %v2345
    %6288 = vmatpush1.msra.mxu0 %v2344
    %6289 = vmatprep.subr.mxu0 %v2349
    %6290 = vmatpush1.msra.mxu0 %v2348
    %6291 = vmatprep.subr.mxu0 %v2353
    %6292 = vmatpush1.msra.mxu0 %v2352
    %6293 = vmatprep.subr.mxu0 %v2357
    %6294 = vmatpush1.msra.mxu0 %v2356
    %6295 = vmatprep.subr.mxu0 %v2361
    %6296 = vmatpush1.msra.mxu0 %v2360
    %6297 = vmatprep.subr.mxu0 %v2365
    %6298 = vmatpush1.msra.mxu0 %v2364
    %6299 = vmatprep.subr.mxu0 %v2369
    %6300 = vmatpush1.msra.mxu0 %v2368
    %6301 = vmatprep.subr.mxu0 %v2373
    %6302 = vmatpush1.msra.mxu0 %v2372
    %6303 = vmatprep.subr.mxu0 %v2377
    %6304 = vmatpush1.msra.mxu0 %v2376
    %6305 = vmatprep.subr.mxu0 %v2381
    %6306 = vmatpush1.msra.mxu0 %v2380
    %6307 = vmatprep.subr.mxu0 %v2385
    %6308 = vmatpush1.msra.mxu0 %v2384
    %6309 = vmatprep.subr.mxu0 %v2389
    %6310 = vmatpush1.msra.mxu0 %v2388
    %6311 = vmatprep.subr.mxu0 %v2393
    %6312 = vmatpush1.msra.mxu0 %v2392
    %6313 = vmatprep.subr.mxu0 %v2397
    %6314 = vmatpush1.msra.mxu0 %v2396
    %6315 = vmatprep.subr.mxu0 %v2401
    %6316 = vmatpush1.msra.mxu0 %v2400
    %6317 = vmatprep.mubr.f32.mxu0 %v6181
    %6318 = vmatmul.mubr.f32.gmra.mrb[0].mxu0 %v6015
    %v6319 = vpop.f32.mrb[0].mxu0
    %v6320 = vadd.f32 %v2433, %v6319
    %v6321 = vpop.f32.mrb[0].mxu0
    %v6322 = vadd.f32 %v2437, %v6321
    %6323 = vdwg.mxu0
    %v6324 = vxor.u32 %v6249, 2147483648
    %v6325 = vxor.u32 %v6251, 2147483648
    %v6326 = vxor.u32 %v6320, 2147483648
    %v6327 = vmul.f32 %v6324, 1.442695
    %v6328 = vpow.pop %v6327
    %v6329 = vmul.f32 %v6325, 1.442695
    %v6330 = vpow.pop %v6329
    %v6331 = vmul.f32 %v6326, 1.442695
    %v6332 = vpow.pop %v6331
    %v6333 = vadd.f32 %v6328, 1.0
    %v6334 = vadd.f32 %v6330, 1.0
    %v6335 = vadd.f32 %v6332, 1.0
    %v6336 = vrcp.pop %v6333
    %v6337 = vmul.f32 1.0, %v6336
    %v6338 = vrcp.pop %v6334
    %v6339 = vmul.f32 1.0, %v6338
    %v6340 = vrcp.pop %v6335
    %v6341 = vmul.f32 1.0, %v6340
    %v6342 = vtanh.pop %v6322
    %v6343 = vmul.f32 %v6339, %v6179
    %v6344 = vmul.f32 %v6337, %v6342
    %v6345 = vadd.f32 %v6343, %v6344
    %v6346 = vtanh.pop %v6345
    %v6347 = vmul.f32 %v6341, %v6346
    %v6348 = vld [vmem:[#allocation11] sm:$0x1]
    %v6349 = vld [vmem:[#allocation2] sm:$0x1]
    %v6351 = vlaneseq
    %v6352 = vshrl.u32 %v6351, 7
    %v6353 = vsub.s32 0, %v6352
    %v6354 = vrot.slane %v6348, %v6353
    %v6356 = vmul.f32 %v2603, %v6354
    %vm6357 = vcmask 1041408
    %v6358 = vsel %vm6357, %v6356, 0.0
    %6359 = vadd.xlane.f32.xlu0 %v6358
    %v6360 = vpop.xlane.xlu0 %6359
    %v6361 = vmul.f32 %v3281, %v6354
    %v6362 = vsel %vm6357, %v6361, 0.0
    %6363 = vadd.xlane.f32.xlu0 %v6362
    %v6364 = vpop.xlane.xlu0 %6363
    %v6365 = vmul.f32 %v3964, %v6354
    %v6366 = vsel %vm6357, %v6365, 0.0
    %6367 = vadd.xlane.f32.xlu0 %v6366
    %v6368 = vpop.xlane.xlu0 %6367
    %v6369 = vmul.f32 %v4654, %v6354
    %v6370 = vsel %vm6357, %v6369, 0.0
    %6371 = vadd.xlane.f32.xlu0 %v6370
    %v6372 = vpop.xlane.xlu0 %6371
    %v6373 = vmul.f32 %v5344, %v6354
    %v6374 = vsel %vm6357, %v6373, 0.0
    %6375 = vadd.xlane.f32.xlu0 %v6374
    %v6376 = vpop.xlane.xlu0 %6375
    %v6377 = vmul.f32 %v5849, %v6354
    %v6378 = vsel %vm6357, %v6377, 0.0
    %6379 = vadd.xlane.f32.xlu0 %v6378
    %v6380 = vpop.xlane.xlu0 %6379
    %v6381 = vmul.f32 %v6181, %v6354
    %v6382 = vsel %vm6357, %v6381, 0.0
    %6383 = vadd.xlane.f32.xlu0 %v6382
    %v6384 = vpop.xlane.xlu0 %6383
    %v6385 = vmul.f32 %v6347, %v6354
    %v6386 = vsel %vm6357, %v6385, 0.0
    %6387 = vadd.xlane.f32.xlu0 %v6386
    %v6388 = vpop.xlane.xlu0 %6387
    %vm6389 = vcmask 7168
    %v6390 = vsel %vm6389, %v6360, %v6364
    %vm6391 = vcmask 15360
    %v6392 = vsel %vm6391, %v6390, %v6368
    %vm6393 = vcmask 23552
    %v6394 = vsel %vm6393, %v6392, %v6372
    %vm6395 = vcmask 31744
    %v6396 = vsel %vm6395, %v6394, %v6376
    %vm6397 = vcmask 39936
    %v6398 = vsel %vm6397, %v6396, %v6380
    %vm6399 = vcmask 48128
    %v6400 = vsel %vm6399, %v6398, %v6384
    %v6401 = vsel %vm137, %v6400, %v6388
    %v6403 = vlaneseq
    %v6404 = vshrl.u32 %v6403, 7
    %v6405 = vsub.s32 0, %v6404
    %v6406 = vrot.slane %v6349, %v6405
    %6407 = vset.pattern.permute.xlu0 0
    %6408 = vperm.xlu0 %6407, %v6406
    %v6409 = vpop.permute.xlu0 %6408
    %v6411 = vadd.f32 %v6401, %v6409
    %vm6412 = vcmask 58368
    %6413 = vst.msk [vmem:[#allocation12] sm:$0x3] %vm6412, %v6411
    // Predicated region
    $region50: #{tpu_custom_call.1} parent=1 // pred_check
      _
    $region51: #{tpu_custom_call.1} parent=1 // pred_check_branch
      %6415 = sbr.rel (0) target = $region53
    $region52: #{tpu_custom_call.1} parent=1 // pred_region
      %s6417 = ssub.s32 32, 32
      %6418 = vsyncadd [#allocation5], %s6417
      %s6420 = sshll.u32 [#allocation12], 4
      %s6421 = int_to_ptr.vmem [resolvable:$true] %s6420
      %6423 = dma.vmem_to_hbm [thread:$0]  %s6421, 32, %s7, [#allocation5]
    $region53: #{tpu_custom_call.1} parent=1 // pred_fallthru
      _
    // Predicated region
    $region54: #{tpu_custom_call.1} parent=1 // pred_check
      _
    $region55: #{tpu_custom_call.1} parent=1 // pred_check_branch
      %6425 = sbr.rel (0) target = $region57
    $region56: #{tpu_custom_call.1} parent=1 // pred_region
      %6426 = dma.done [#allocation5], 32
    $region57: #{tpu_custom_call.1} parent=1 // pred_fallthru
      _
    %6427 = vsyncpa [#allocation4], 1
    %6428 = vsyncpa [#allocation7], 1
    %6429 = vsyncpa [#allocation10], 1
    %6430 = vsyncpa [#allocation5], 1

</llo_original>
